<compile_context>
chip_gen: v7x
topology: tpu7x:2x2x1
jax: 0.10.0
libtpu: 0.0.40
codegen_flags: <defaults>
</compile_context>

<pallas_src>
import functools

import jax
import jax.numpy as jnp
from jax.experimental import pallas as pl
from jax.experimental.pallas import tpu as pltpu

# ---------------------------------------------------------------------------
# hyper-parameters (small, consistent with Seq2Seq.__init__)
# ---------------------------------------------------------------------------
INPUT_SIZE  = 40            # src vocab
OUTPUT_SIZE = 48            # tgt vocab
WORD_VEC    = 16            # word_vec_size
HIDDEN      = 32            # hidden_size
N_LAYERS    = 2             # n_layers
B           = 2
T_SRC       = 8
T_TGT       = 8
H_ENC_CELL  = HIDDEN // 2   # per-direction cell size of the bidirectional encoder
GATES       = 4 * HIDDEN    # 128 gate lanes (i, f, g, o)

assert WORD_VEC <= HIDDEN   # layer-0 encoder weights are row-padded to HIDDEN


def _vmem_spec():
    return pl.BlockSpec(memory_space=pltpu.MemorySpace.VMEM)


# ---------------------------------------------------------------------------
# fused Seq2Seq forward kernel
# ---------------------------------------------------------------------------
def _lstm_cell_update(gates, c, hidden):
    """gates: (B, 4*hidden) in i,f,g,o order; c: (B, hidden)."""
    i = jax.nn.sigmoid(gates[:, 0 * hidden:1 * hidden])
    f = jax.nn.sigmoid(gates[:, 1 * hidden:2 * hidden])
    g = jnp.tanh(gates[:, 2 * hidden:3 * hidden])
    o = jax.nn.sigmoid(gates[:, 3 * hidden:4 * hidden])
    c_new = f * c + i * g
    h_new = o * jnp.tanh(c_new)
    return h_new, c_new


def _seq2seq_kernel(xe_ref, xd_ref, amask_ref,
                    ewxf_ref, ewxb_ref, eb_ref, ewh_ref,
                    dwxe_ref, dwx_ref, dwh_ref, db_ref,
                    attn_ref, catw_ref, catb_ref, genw_ref, genb_ref,
                    out_ref, *, n_layers, t_src, t_tgt, bsz, hidden):
    f32 = jnp.float32
    hc = hidden // 2

    # ----------------------- encoder: fused bidirectional LSTM stack -----------------
    # xe: (t_src*bsz, hidden), time-major rows, feature dim zero-padded to `hidden`.
    x_flat = xe_ref[...]
    enc_h_final, enc_c_final = [], []
    for l in range(n_layers):
        wxf, wxb = ewxf_ref[l], ewxb_ref[l]                 # (hidden, 4*hidden)
        wh, bias = ewh_ref[l], eb_ref[l]                    # (hidden, 4*hidden), (1, 4*hidden)
        # hoisted, recurrence-independent input projection (one matmul per direction)
        gxf = jnp.dot(x_flat, wxf, preferred_element_type=f32)      # (t_src*bsz, 4*hidden)
        gxb = jnp.dot(x_flat, wxb, preferred_element_type=f32)
        gxf_t = [gxf[t * bsz:(t + 1) * bsz] for t in range(t_src)]
        gxb_t = [gxb[t * bsz:(t + 1) * bsz] for t in range(t_src)]
        # fwd + bwd run together: state layout [fwd | bwd], gates interleaved per gate,
        # so one (B, hidden) @ (hidden, 4*hidden) matmul drives both directions.
        h = jnp.zeros((bsz, hidden), f32)
        c = jnp.zeros((bsz, hidden), f32)
        ys_f = [None] * t_src
        ys_b = [None] * t_src
        for s in range(t_src):
            rs = t_src - 1 - s
            gates = (gxf_t[s] + gxb_t[rs] + bias
                     + jnp.dot(h, wh, preferred_element_type=f32))
            h, c = _lstm_cell_update(gates, c, hidden)
            ys_f[s] = h[:, :hc]                             # forward hidden at position s
            ys_b[rs] = h[:, hc:]                            # backward hidden at position rs
        enc_h_final.append(h)                               # == merged [h_fwd | h_bwd]
        enc_c_final.append(c)
        y_seq = [jnp.concatenate([ys_f[t], ys_b[t]], axis=-1) for t in range(t_src)]
        x_flat = jnp.concatenate(y_seq, axis=0)             # next layer input (t_src*bsz, hidden)

    h_enc = x_flat                                          # encoder outputs, row = t*bsz + b
    h_enc_t = h_enc.T                                       # (hidden, t_src*bsz), one transpose
    amask = amask_ref[...]                                  # (bsz, t_src*bsz) additive mask

    # ----------------------- decoder + attention + concat/tanh, unrolled -------------
    # hoisted projection of the decoder embeddings (layer-0 emb part of W_ih)
    gx_emb = jnp.dot(xd_ref[...], dwxe_ref[...], preferred_element_type=f32)
    gx_emb_t = [gx_emb[t * bsz:(t + 1) * bsz] for t in range(t_tgt)]
    attn_w = attn_ref[...]
    cat_w, cat_b = catw_ref[...], catb_ref[...]

    h_dec = list(enc_h_final)                               # fast_merge_encoder_hiddens
    c_dec = list(enc_c_final)
    h_tilde = jnp.zeros((bsz, hidden), f32)                 # h_{t-1}~ is zeros at t=0
    tilde_rows = []
    for t in range(t_tgt):
        x_in = h_tilde                                      # layer-0 "input" = h_{t-1}~
        for l in range(n_layers):
            gates = (jnp.dot(x_in, dwx_ref[l], preferred_element_type=f32)
                     + jnp.dot(h_dec[l], dwh_ref[l], preferred_element_type=f32)
                     + db_ref[l])
            if l == 0:
                gates = gates + gx_emb_t[t]                 # hoisted emb_t contribution
            h_new, c_new = _lstm_cell_update(gates, c_dec[l], hidden)
            h_dec[l], c_dec[l] = h_new, c_new
            x_in = h_new
        dec_out = x_in                                      # top-layer hidden (B, H)

        # attention: batch flattened into MXU rows; amask keeps only same-batch keys
        q = jnp.dot(dec_out, attn_w, preferred_element_type=f32)          # (B, H)
        scores = jnp.dot(q, h_enc_t, preferred_element_type=f32) + amask  # (B, t_src*bsz)
        m = jnp.max(scores, axis=-1, keepdims=True)
        e = jnp.exp(scores - m)
        w = e / jnp.sum(e, axis=-1, keepdims=True)
        ctx = jnp.dot(w, h_enc, preferred_element_type=f32)               # (B, H)

        # tanh(Linear_{2H->H}(cat([dec_out, ctx])))
        cat_in = jnp.concatenate([dec_out, ctx], axis=-1)                 # (B, 2H)
        h_tilde = jnp.tanh(jnp.dot(cat_in, cat_w, preferred_element_type=f32) + cat_b)
        tilde_rows.append(h_tilde)

    # ----------------------- generator epilogue: one matmul + log_softmax ------------
    ht = jnp.concatenate(tilde_rows, axis=0)                # (t_tgt*bsz, hidden)
    logits = jnp.dot(ht, genw_ref[...], preferred_element_type=f32) + genb_ref[...]
    m = jnp.max(logits, axis=-1, keepdims=True)
    z = logits - m
    out_ref[...] = z - jnp.log(jnp.sum(jnp.exp(z), axis=-1, keepdims=True))


# ---------------------------------------------------------------------------
# parameter init (PyTorch layout) and one-time packing into kernel layout
# ---------------------------------------------------------------------------
def init_params(key):
    params = {}
    counter = [0]

    def nxt():
        counter[0] += 1
        return jax.random.fold_in(key, counter[0])

    def w(shape, scale=0.1):
        return scale * jax.random.normal(nxt(), shape, jnp.float32)

    params["emb_enc"] = w((INPUT_SIZE, WORD_VEC), 1.0)
    params["emb_dec"] = w((OUTPUT_SIZE, WORD_VEC), 1.0)
    # encoder: bidirectional LSTM, per-direction hidden = HIDDEN // 2
    for l in range(N_LAYERS):
        in_dim = WORD_VEC if l == 0 else HIDDEN
        for d in ("f", "b"):
            params[f"enc_wih_{l}_{d}"] = w((4 * H_ENC_CELL, in_dim))
            params[f"enc_whh_{l}_{d}"] = w((4 * H_ENC_CELL, H_ENC_CELL))
            params[f"enc_b_{l}_{d}"]   = w((1, 4 * H_ENC_CELL))      # b_ih + b_hh combined
    # decoder: unidirectional LSTM, layer-0 input = word_vec + hidden
    for l in range(N_LAYERS):
        in_dim = WORD_VEC + HIDDEN if l == 0 else HIDDEN
        params[f"dec_wih_{l}"] = w((4 * HIDDEN, in_dim))
        params[f"dec_whh_{l}"] = w((4 * HIDDEN, HIDDEN))
        params[f"dec_b_{l}"]   = w((1, 4 * HIDDEN))
    params["attn_w"]   = w((HIDDEN, HIDDEN))                 # Linear(H, H, bias=False)
    params["concat_w"] = w((HIDDEN, 2 * HIDDEN))             # Linear(2H, H)
    params["concat_b"] = w((1, HIDDEN))
    params["gen_w"]    = w((OUTPUT_SIZE, HIDDEN))            # Linear(H, V)
    params["gen_b"]    = w((1, OUTPUT_SIZE))
    return params


def pack_params(p):
    """Pack PyTorch-layout weights into the fused-kernel layout (done once, off the hot path).

    Encoder (per layer): both directions share one 128-wide, gate-interleaved gate space:
    gate k (i,f,g,o) occupies columns [k*H, (k+1)*H); the forward direction uses the first
    H/2 of those columns, the backward direction the second half.  The recurrent weight is
    block-structured so a single (B, H) @ (H, 4H) matmul drives both directions, with the
    carried state laid out [h_fwd | h_bwd] (which is exactly the merged decoder init state).
    """
    hc = H_ENC_CELL
    pk = {"emb_enc": p["emb_enc"], "emb_dec": p["emb_dec"]}

    def pack_enc_layer(l):
        wih_f, wih_b = p[f"enc_wih_{l}_f"], p[f"enc_wih_{l}_b"]
        whh_f, whh_b = p[f"enc_whh_{l}_f"], p[f"enc_whh_{l}_b"]
        bf, bb = p[f"enc_b_{l}_f"], p[f"enc_b_{l}_b"]
        in_dim = wih_f.shape[1]
        wxf = jnp.zeros((HIDDEN, GATES), jnp.float32)        # rows zero-padded to HIDDEN
        wxb = jnp.zeros((HIDDEN, GATES), jnp.float32)
        wh = jnp.zeros((HIDDEN, GATES), jnp.float32)
        b = jnp.zeros((1, GATES), jnp.float32)
        for k in range(4):                                   # gate order i, f, g, o
            cf = slice(k * HIDDEN, k * HIDDEN + hc)          # fwd columns of gate k
            cb = slice(k * HIDDEN + hc, (k + 1) * HIDDEN)    # bwd columns of gate k
            rows = slice(k * hc, (k + 1) * hc)
            wxf = wxf.at[:in_dim, cf].set(wih_f[rows].T)
            wxb = wxb.at[:in_dim, cb].set(wih_b[rows].T)
            wh = wh.at[:hc, cf].set(whh_f[rows].T)           # h_fwd rows -> fwd gates
            wh = wh.at[hc:, cb].set(whh_b[rows].T)           # h_bwd rows -> bwd gates
            b = b.at[:, cf].set(bf[:, rows])
            b = b.at[:, cb].set(bb[:, rows])
        return wxf, wxb, wh, b

    enc = [pack_enc_layer(l) for l in range(N_LAYERS)]
    pk["enc_wx_f"] = jnp.stack([e[0] for e in enc])          # (L, HIDDEN, 4H)
    pk["enc_wx_b"] = jnp.stack([e[1] for e in enc])
    pk["enc_wh"]   = jnp.stack([e[2] for e in enc])
    pk["enc_b"]    = jnp.stack([e[3] for e in enc])          # (L, 1, 4H)

    # decoder: plain pre-transposed weights; layer-0 W_ih is split into the emb part
    # (hoisted out of the recurrence) and the h_tilde part (stays in the time loop).
    w0 = p["dec_wih_0"].T                                    # (W + H, 4H)
    pk["dec_wx_e"] = w0[:WORD_VEC]                           # (W, 4H)
    dec_wx = [w0[WORD_VEC:]]                                 # (H, 4H)
    dec_wh = [p["dec_whh_0"].T]
    dec_b = [p["dec_b_0"]]
    for l in range(1, N_LAYERS):
        dec_wx.append(p[f"dec_wih_{l}"].T)
        dec_wh.append(p[f"dec_whh_{l}"].T)
        dec_b.append(p[f"dec_b_{l}"])
    pk["dec_wx"] = jnp.stack(dec_wx)                         # (L, H, 4H)
    pk["dec_wh"] = jnp.stack(dec_wh)
    pk["dec_b"]  = jnp.stack(dec_b)                          # (L, 1, 4H)

    pk["attn_wT"]   = p["attn_w"].T                          # (H, H)
    pk["concat_wT"] = p["concat_w"].T                        # (2H, H)
    pk["concat_b"]  = p["concat_b"]                          # (1, H)
    pk["gen_wT"]    = p["gen_w"].T                           # (H, V)
    pk["gen_b"]     = p["gen_b"]                             # (1, V)
    return pk


# ---------------------------------------------------------------------------
# wrapper: embedding gathers + layout prep in XLA, one fused pallas_call
# ---------------------------------------------------------------------------
def seq2seq_forward(packed, src_ids, tgt_ids):
    bsz, t_src = src_ids.shape
    _, t_tgt = tgt_ids.shape

    # time-major, flattened activations so every in-kernel matmul is a plain 2-D MXU op
    x_enc = packed["emb_enc"][src_ids.T].reshape(t_src * bsz, WORD_VEC)
    x_enc = jnp.pad(x_enc, ((0, 0), (0, HIDDEN - WORD_VEC)))     # match padded layer-0 weights
    x_dec = packed["emb_dec"][tgt_ids.T].reshape(t_tgt * bsz, WORD_VEC)

    # additive attention mask: query row b only attends to encoder rows of batch b.
    # TODO(synk): fold a source-length padding mask in here for variable-length batches.
    col_b = jnp.arange(t_src * bsz, dtype=jnp.int32) % bsz
    amask = jnp.where(col_b[None, :] == jnp.arange(bsz, dtype=jnp.int32)[:, None],
                      0.0, -1e30).astype(jnp.float32)

    args = (x_enc, x_dec, amask,
            packed["enc_wx_f"], packed["enc_wx_b"], packed["enc_b"], packed["enc_wh"],
            packed["dec_wx_e"], packed["dec_wx"], packed["dec_wh"], packed["dec_b"],
            packed["attn_wT"], packed["concat_wT"], packed["concat_b"],
            packed["gen_wT"], packed["gen_b"])

    kernel = functools.partial(_seq2seq_kernel, n_layers=N_LAYERS, t_src=t_src,
                               t_tgt=t_tgt, bsz=bsz, hidden=HIDDEN)
    y_flat = pl.pallas_call(
        kernel,
        out_shape=jax.ShapeDtypeStruct((t_tgt * bsz, OUTPUT_SIZE), jnp.float32),
        in_specs=[_vmem_spec()] * len(args),
        out_specs=_vmem_spec(),
    )(*args)
    # rows are time-major (row = t*bsz + b) -> (B, T_tgt, V) log-probs
    return y_flat.reshape(t_tgt, bsz, OUTPUT_SIZE).transpose(1, 0, 2)


# ---------------------------------------------------------------------------
# pure-JAX reference (PyTorch-layout weights) used only for a correctness check
# ---------------------------------------------------------------------------
def _reference_forward(p, src_ids, tgt_ids):
    def lstm_dir(x_seq, w_ih, w_hh, b, reverse):
        bsz, t_len, _ = x_seq.shape
        hid = w_hh.shape[1]
        h = jnp.zeros((bsz, hid), jnp.float32)
        c = jnp.zeros((bsz, hid), jnp.float32)
        outs = [None] * t_len
        order = range(t_len - 1, -1, -1) if reverse else range(t_len)
        for t in order:
            gates = x_seq[:, t] @ w_ih.T + h @ w_hh.T + b
            i, f, g, o = jnp.split(gates, 4, axis=-1)
            i, f, o = jax.nn.sigmoid(i), jax.nn.sigmoid(f), jax.nn.sigmoid(o)
            g = jnp.tanh(g)
            c = f * c + i * g
            h = o * jnp.tanh(c)
            outs[t] = h
        return jnp.stack(outs, 1), h, c

    emb_enc = p["emb_enc"][src_ids]
    emb_dec = p["emb_dec"][tgt_ids]
    inp = emb_enc
    h0, c0 = [], []
    for l in range(N_LAYERS):
        yf, hf, cf = lstm_dir(inp, p[f"enc_wih_{l}_f"], p[f"enc_whh_{l}_f"],
                              p[f"enc_b_{l}_f"], False)
        yb, hb, cb = lstm_dir(inp, p[f"enc_wih_{l}_b"], p[f"enc_whh_{l}_b"],
                              p[f"enc_b_{l}_b"], True)
        inp = jnp.concatenate([yf, yb], -1)
        h0.append(jnp.concatenate([hf, hb], -1))
        c0.append(jnp.concatenate([cf, cb], -1))
    h_enc = inp

    bsz, t_tgt = tgt_ids.shape
    h_tilde_prev = jnp.zeros((bsz, HIDDEN), jnp.float32)
    h_dec, c_dec = list(h0), list(c0)
    outs = []
    for t in range(t_tgt):
        x = jnp.concatenate([emb_dec[:, t], h_tilde_prev], -1)
        for l in range(N_LAYERS):
            gates = x @ p[f"dec_wih_{l}"].T + h_dec[l] @ p[f"dec_whh_{l}"].T + p[f"dec_b_{l}"]
            i, f, g, o = jnp.split(gates, 4, -1)
            i, f, o = jax.nn.sigmoid(i), jax.nn.sigmoid(f), jax.nn.sigmoid(o)
            g = jnp.tanh(g)
            c_dec[l] = f * c_dec[l] + i * g
            h_dec[l] = o * jnp.tanh(c_dec[l])
            x = h_dec[l]
        q = x @ p["attn_w"].T
        scores = jnp.einsum("bh,bth->bt", q, h_enc)
        w = jax.nn.softmax(scores, -1)
        ctx = jnp.einsum("bt,bth->bh", w, h_enc)
        h_tilde_prev = jnp.tanh(jnp.concatenate([x, ctx], -1) @ p["concat_w"].T
                                + p["concat_b"])
        outs.append(h_tilde_prev)
    ht = jnp.stack(outs, 1)
    logits = ht @ p["gen_w"].T + p["gen_b"]
    return jax.nn.log_softmax(logits, -1)


if __name__ == "__main__":
    key = jax.random.PRNGKey(0)
    params = init_params(key)
    packed = pack_params(params)                              # one-time weight packing
    k_src, k_tgt = jax.random.split(jax.random.fold_in(key, 999))
    src = jax.random.randint(k_src, (B, T_SRC), 0, INPUT_SIZE, dtype=jnp.int32)
    tgt = jax.random.randint(k_tgt, (B, T_TGT), 0, OUTPUT_SIZE, dtype=jnp.int32)

    fwd = jax.jit(seq2seq_forward)
    y_hat = jax.block_until_ready(fwd(packed, src, tgt))

    assert y_hat.shape == (B, T_TGT, OUTPUT_SIZE)
    assert bool(jnp.all(jnp.isfinite(y_hat)))
    # rows are log-probs -> exp sums to 1
    assert bool(jnp.allclose(jnp.sum(jnp.exp(y_hat), axis=-1), 1.0, atol=1e-3))
    # matches the straight (PyTorch-layout) reference
    y_ref = _reference_forward(params, src, tgt)
    assert bool(jnp.max(jnp.abs(y_hat - y_ref)) < 1e-2)
    print("KERNEL_OK")
</pallas_src>

<mosaic_0001>
module attributes {stable_mosaic.version = 11 : i64} {
  func.func @_seq2seq_kernel(%arg0: memref<16x32xf32, #tpu.memory_space<vmem>>, %arg1: memref<16x16xf32, #tpu.memory_space<vmem>>, %arg2: memref<2x16xf32, #tpu.memory_space<vmem>>, %arg3: memref<2x32x128xf32, #tpu.memory_space<vmem>>, %arg4: memref<2x32x128xf32, #tpu.memory_space<vmem>>, %arg5: memref<2x1x128xf32, #tpu.memory_space<vmem>>, %arg6: memref<2x32x128xf32, #tpu.memory_space<vmem>>, %arg7: memref<16x128xf32, #tpu.memory_space<vmem>>, %arg8: memref<2x32x128xf32, #tpu.memory_space<vmem>>, %arg9: memref<2x32x128xf32, #tpu.memory_space<vmem>>, %arg10: memref<2x1x128xf32, #tpu.memory_space<vmem>>, %arg11: memref<32x32xf32, #tpu.memory_space<vmem>>, %arg12: memref<64x32xf32, #tpu.memory_space<vmem>>, %arg13: memref<1x32xf32, #tpu.memory_space<vmem>>, %arg14: memref<32x48xf32, #tpu.memory_space<vmem>>, %arg15: memref<1x48xf32, #tpu.memory_space<vmem>>, %arg16: memref<16x48xf32, #tpu.memory_space<vmem>>) attributes {dimension_semantics = [], scalar_prefetch = 0 : i64, scratch_operands = 0 : i64, tpu.core_type = #tpu.core_type<tc>} {
    %c0 = arith.constant 0 : index
    %c0_0 = arith.constant 0 : index
    %0 = vector.load %arg0[%c0, %c0_0] : memref<16x32xf32, #tpu.memory_space<vmem>>, vector<16x32xf32>
    %c0_1 = arith.constant 0 : index
    %c0_2 = arith.constant 0 : index
    %c0_3 = arith.constant 0 : index
    %1 = vector.load %arg3[%c0_1, %c0_2, %c0_3] : memref<2x32x128xf32, #tpu.memory_space<vmem>>, vector<1x32x128xf32>
    %2 = vector.shape_cast %1 : vector<1x32x128xf32> to vector<32x128xf32>
    %c0_4 = arith.constant 0 : index
    %c0_5 = arith.constant 0 : index
    %c0_6 = arith.constant 0 : index
    %3 = vector.load %arg4[%c0_4, %c0_5, %c0_6] : memref<2x32x128xf32, #tpu.memory_space<vmem>>, vector<1x32x128xf32>
    %4 = vector.shape_cast %3 : vector<1x32x128xf32> to vector<32x128xf32>
    %c0_7 = arith.constant 0 : index
    %c0_8 = arith.constant 0 : index
    %c0_9 = arith.constant 0 : index
    %5 = vector.load %arg6[%c0_7, %c0_8, %c0_9] : memref<2x32x128xf32, #tpu.memory_space<vmem>>, vector<1x32x128xf32>
    %6 = vector.shape_cast %5 : vector<1x32x128xf32> to vector<32x128xf32>
    %c0_10 = arith.constant 0 : index
    %c0_11 = arith.constant 0 : index
    %c0_12 = arith.constant 0 : index
    %7 = vector.load %arg5[%c0_10, %c0_11, %c0_12] : memref<2x1x128xf32, #tpu.memory_space<vmem>>, vector<1x1x128xf32>
    %8 = vector.shape_cast %7 : vector<1x1x128xf32> to vector<1x128xf32>
    %cst = arith.constant dense<0.000000e+00> : vector<16x128xf32>
    %9 = tpu.matmul %0, %2, %cst {dimension_numbers = #tpu.dot_dimension_numbers<[1], [0], [0], [1], [0, 0, 1, 1], [], []>} : vector<16x32xf32>, vector<32x128xf32>, vector<16x128xf32> -> vector<16x128xf32>
    %cst_13 = arith.constant dense<0.000000e+00> : vector<16x128xf32>
    %10 = tpu.matmul %0, %4, %cst_13 {dimension_numbers = #tpu.dot_dimension_numbers<[1], [0], [0], [1], [0, 0, 1, 1], [], []>} : vector<16x32xf32>, vector<32x128xf32>, vector<16x128xf32> -> vector<16x128xf32>
    %11 = vector.extract_strided_slice %9 {offsets = [0, 0], sizes = [2, 128], strides = [1, 1]} : vector<16x128xf32> to vector<2x128xf32>
    %12 = vector.extract_strided_slice %9 {offsets = [2, 0], sizes = [2, 128], strides = [1, 1]} : vector<16x128xf32> to vector<2x128xf32>
    %13 = vector.extract_strided_slice %9 {offsets = [4, 0], sizes = [2, 128], strides = [1, 1]} : vector<16x128xf32> to vector<2x128xf32>
    %14 = vector.extract_strided_slice %9 {offsets = [6, 0], sizes = [2, 128], strides = [1, 1]} : vector<16x128xf32> to vector<2x128xf32>
    %15 = vector.extract_strided_slice %9 {offsets = [8, 0], sizes = [2, 128], strides = [1, 1]} : vector<16x128xf32> to vector<2x128xf32>
    %16 = vector.extract_strided_slice %9 {offsets = [10, 0], sizes = [2, 128], strides = [1, 1]} : vector<16x128xf32> to vector<2x128xf32>
    %17 = vector.extract_strided_slice %9 {offsets = [12, 0], sizes = [2, 128], strides = [1, 1]} : vector<16x128xf32> to vector<2x128xf32>
    %18 = vector.extract_strided_slice %9 {offsets = [14, 0], sizes = [2, 128], strides = [1, 1]} : vector<16x128xf32> to vector<2x128xf32>
    %19 = vector.extract_strided_slice %10 {offsets = [0, 0], sizes = [2, 128], strides = [1, 1]} : vector<16x128xf32> to vector<2x128xf32>
    %20 = vector.extract_strided_slice %10 {offsets = [2, 0], sizes = [2, 128], strides = [1, 1]} : vector<16x128xf32> to vector<2x128xf32>
    %21 = vector.extract_strided_slice %10 {offsets = [4, 0], sizes = [2, 128], strides = [1, 1]} : vector<16x128xf32> to vector<2x128xf32>
    %22 = vector.extract_strided_slice %10 {offsets = [6, 0], sizes = [2, 128], strides = [1, 1]} : vector<16x128xf32> to vector<2x128xf32>
    %23 = vector.extract_strided_slice %10 {offsets = [8, 0], sizes = [2, 128], strides = [1, 1]} : vector<16x128xf32> to vector<2x128xf32>
    %24 = vector.extract_strided_slice %10 {offsets = [10, 0], sizes = [2, 128], strides = [1, 1]} : vector<16x128xf32> to vector<2x128xf32>
    %25 = vector.extract_strided_slice %10 {offsets = [12, 0], sizes = [2, 128], strides = [1, 1]} : vector<16x128xf32> to vector<2x128xf32>
    %26 = vector.extract_strided_slice %10 {offsets = [14, 0], sizes = [2, 128], strides = [1, 1]} : vector<16x128xf32> to vector<2x128xf32>
    %cst_14 = arith.constant 0.000000e+00 : f32
    %27 = vector.broadcast %cst_14 : f32 to vector<2x32xf32>
    %cst_15 = arith.constant 0.000000e+00 : f32
    %28 = vector.broadcast %cst_15 : f32 to vector<2x32xf32>
    %29 = arith.addf %11, %26 : vector<2x128xf32>
    %30 = vector.broadcast %8 : vector<1x128xf32> to vector<2x128xf32>
    %31 = arith.addf %29, %30 : vector<2x128xf32>
    %cst_16 = arith.constant dense<0.000000e+00> : vector<2x128xf32>
    %32 = tpu.matmul %27, %6, %cst_16 {dimension_numbers = #tpu.dot_dimension_numbers<[1], [0], [0], [1], [0, 0, 1, 1], [], []>} : vector<2x32xf32>, vector<32x128xf32>, vector<2x128xf32> -> vector<2x128xf32>
    %33 = arith.addf %31, %32 : vector<2x128xf32>
    %34 = vector.extract_strided_slice %33 {offsets = [0, 0], sizes = [2, 32], strides = [1, 1]} : vector<2x128xf32> to vector<2x32xf32>
    %35 = arith.negf %34 : vector<2x32xf32>
    %36 = math.exp %35 : vector<2x32xf32>
    %cst_17 = arith.constant 1.000000e+00 : f32
    %37 = vector.broadcast %cst_17 : f32 to vector<2x32xf32>
    %38 = arith.addf %37, %36 : vector<2x32xf32>
    %39 = arith.divf %37, %38 : vector<2x32xf32>
    %40 = vector.extract_strided_slice %33 {offsets = [0, 32], sizes = [2, 32], strides = [1, 1]} : vector<2x128xf32> to vector<2x32xf32>
    %41 = arith.negf %40 : vector<2x32xf32>
    %42 = math.exp %41 : vector<2x32xf32>
    %cst_18 = arith.constant 1.000000e+00 : f32
    %43 = vector.broadcast %cst_18 : f32 to vector<2x32xf32>
    %44 = arith.addf %43, %42 : vector<2x32xf32>
    %45 = arith.divf %43, %44 : vector<2x32xf32>
    %46 = vector.extract_strided_slice %33 {offsets = [0, 64], sizes = [2, 32], strides = [1, 1]} : vector<2x128xf32> to vector<2x32xf32>
    %47 = math.tanh %46 : vector<2x32xf32>
    %48 = vector.extract_strided_slice %33 {offsets = [0, 96], sizes = [2, 32], strides = [1, 1]} : vector<2x128xf32> to vector<2x32xf32>
    %49 = arith.negf %48 : vector<2x32xf32>
    %50 = math.exp %49 : vector<2x32xf32>
    %cst_19 = arith.constant 1.000000e+00 : f32
    %51 = vector.broadcast %cst_19 : f32 to vector<2x32xf32>
    %52 = arith.addf %51, %50 : vector<2x32xf32>
    %53 = arith.divf %51, %52 : vector<2x32xf32>
    %54 = arith.mulf %45, %28 : vector<2x32xf32>
    %55 = arith.mulf %39, %47 : vector<2x32xf32>
    %56 = arith.addf %54, %55 : vector<2x32xf32>
    %57 = math.tanh %56 : vector<2x32xf32>
    %58 = arith.mulf %53, %57 : vector<2x32xf32>
    %59 = vector.extract_strided_slice %58 {offsets = [0, 0], sizes = [2, 16], strides = [1, 1]} : vector<2x32xf32> to vector<2x16xf32>
    %60 = vector.extract_strided_slice %58 {offsets = [0, 16], sizes = [2, 16], strides = [1, 1]} : vector<2x32xf32> to vector<2x16xf32>
    %61 = arith.addf %12, %25 : vector<2x128xf32>
    %62 = vector.broadcast %8 : vector<1x128xf32> to vector<2x128xf32>
    %63 = arith.addf %61, %62 : vector<2x128xf32>
    %cst_20 = arith.constant dense<0.000000e+00> : vector<2x128xf32>
    %64 = tpu.matmul %58, %6, %cst_20 {dimension_numbers = #tpu.dot_dimension_numbers<[1], [0], [0], [1], [0, 0, 1, 1], [], []>} : vector<2x32xf32>, vector<32x128xf32>, vector<2x128xf32> -> vector<2x128xf32>
    %65 = arith.addf %63, %64 : vector<2x128xf32>
    %66 = vector.extract_strided_slice %65 {offsets = [0, 0], sizes = [2, 32], strides = [1, 1]} : vector<2x128xf32> to vector<2x32xf32>
    %67 = arith.negf %66 : vector<2x32xf32>
    %68 = math.exp %67 : vector<2x32xf32>
    %cst_21 = arith.constant 1.000000e+00 : f32
    %69 = vector.broadcast %cst_21 : f32 to vector<2x32xf32>
    %70 = arith.addf %69, %68 : vector<2x32xf32>
    %71 = arith.divf %69, %70 : vector<2x32xf32>
    %72 = vector.extract_strided_slice %65 {offsets = [0, 32], sizes = [2, 32], strides = [1, 1]} : vector<2x128xf32> to vector<2x32xf32>
    %73 = arith.negf %72 : vector<2x32xf32>
    %74 = math.exp %73 : vector<2x32xf32>
    %cst_22 = arith.constant 1.000000e+00 : f32
    %75 = vector.broadcast %cst_22 : f32 to vector<2x32xf32>
    %76 = arith.addf %75, %74 : vector<2x32xf32>
    %77 = arith.divf %75, %76 : vector<2x32xf32>
    %78 = vector.extract_strided_slice %65 {offsets = [0, 64], sizes = [2, 32], strides = [1, 1]} : vector<2x128xf32> to vector<2x32xf32>
    %79 = math.tanh %78 : vector<2x32xf32>
    %80 = vector.extract_strided_slice %65 {offsets = [0, 96], sizes = [2, 32], strides = [1, 1]} : vector<2x128xf32> to vector<2x32xf32>
    %81 = arith.negf %80 : vector<2x32xf32>
    %82 = math.exp %81 : vector<2x32xf32>
    %cst_23 = arith.constant 1.000000e+00 : f32
    %83 = vector.broadcast %cst_23 : f32 to vector<2x32xf32>
    %84 = arith.addf %83, %82 : vector<2x32xf32>
    %85 = arith.divf %83, %84 : vector<2x32xf32>
    %86 = arith.mulf %77, %56 : vector<2x32xf32>
    %87 = arith.mulf %71, %79 : vector<2x32xf32>
    %88 = arith.addf %86, %87 : vector<2x32xf32>
    %89 = math.tanh %88 : vector<2x32xf32>
    %90 = arith.mulf %85, %89 : vector<2x32xf32>
    %91 = vector.extract_strided_slice %90 {offsets = [0, 0], sizes = [2, 16], strides = [1, 1]} : vector<2x32xf32> to vector<2x16xf32>
    %92 = vector.extract_strided_slice %90 {offsets = [0, 16], sizes = [2, 16], strides = [1, 1]} : vector<2x32xf32> to vector<2x16xf32>
    %93 = arith.addf %13, %24 : vector<2x128xf32>
    %94 = vector.broadcast %8 : vector<1x128xf32> to vector<2x128xf32>
    %95 = arith.addf %93, %94 : vector<2x128xf32>
    %cst_24 = arith.constant dense<0.000000e+00> : vector<2x128xf32>
    %96 = tpu.matmul %90, %6, %cst_24 {dimension_numbers = #tpu.dot_dimension_numbers<[1], [0], [0], [1], [0, 0, 1, 1], [], []>} : vector<2x32xf32>, vector<32x128xf32>, vector<2x128xf32> -> vector<2x128xf32>
    %97 = arith.addf %95, %96 : vector<2x128xf32>
    %98 = vector.extract_strided_slice %97 {offsets = [0, 0], sizes = [2, 32], strides = [1, 1]} : vector<2x128xf32> to vector<2x32xf32>
    %99 = arith.negf %98 : vector<2x32xf32>
    %100 = math.exp %99 : vector<2x32xf32>
    %cst_25 = arith.constant 1.000000e+00 : f32
    %101 = vector.broadcast %cst_25 : f32 to vector<2x32xf32>
    %102 = arith.addf %101, %100 : vector<2x32xf32>
    %103 = arith.divf %101, %102 : vector<2x32xf32>
    %104 = vector.extract_strided_slice %97 {offsets = [0, 32], sizes = [2, 32], strides = [1, 1]} : vector<2x128xf32> to vector<2x32xf32>
    %105 = arith.negf %104 : vector<2x32xf32>
    %106 = math.exp %105 : vector<2x32xf32>
    %cst_26 = arith.constant 1.000000e+00 : f32
    %107 = vector.broadcast %cst_26 : f32 to vector<2x32xf32>
    %108 = arith.addf %107, %106 : vector<2x32xf32>
    %109 = arith.divf %107, %108 : vector<2x32xf32>
    %110 = vector.extract_strided_slice %97 {offsets = [0, 64], sizes = [2, 32], strides = [1, 1]} : vector<2x128xf32> to vector<2x32xf32>
    %111 = math.tanh %110 : vector<2x32xf32>
    %112 = vector.extract_strided_slice %97 {offsets = [0, 96], sizes = [2, 32], strides = [1, 1]} : vector<2x128xf32> to vector<2x32xf32>
    %113 = arith.negf %112 : vector<2x32xf32>
    %114 = math.exp %113 : vector<2x32xf32>
    %cst_27 = arith.constant 1.000000e+00 : f32
    %115 = vector.broadcast %cst_27 : f32 to vector<2x32xf32>
    %116 = arith.addf %115, %114 : vector<2x32xf32>
    %117 = arith.divf %115, %116 : vector<2x32xf32>
    %118 = arith.mulf %109, %88 : vector<2x32xf32>
    %119 = arith.mulf %103, %111 : vector<2x32xf32>
    %120 = arith.addf %118, %119 : vector<2x32xf32>
    %121 = math.tanh %120 : vector<2x32xf32>
    %122 = arith.mulf %117, %121 : vector<2x32xf32>
    %123 = vector.extract_strided_slice %122 {offsets = [0, 0], sizes = [2, 16], strides = [1, 1]} : vector<2x32xf32> to vector<2x16xf32>
    %124 = vector.extract_strided_slice %122 {offsets = [0, 16], sizes = [2, 16], strides = [1, 1]} : vector<2x32xf32> to vector<2x16xf32>
    %125 = arith.addf %14, %23 : vector<2x128xf32>
    %126 = vector.broadcast %8 : vector<1x128xf32> to vector<2x128xf32>
    %127 = arith.addf %125, %126 : vector<2x128xf32>
    %cst_28 = arith.constant dense<0.000000e+00> : vector<2x128xf32>
    %128 = tpu.matmul %122, %6, %cst_28 {dimension_numbers = #tpu.dot_dimension_numbers<[1], [0], [0], [1], [0, 0, 1, 1], [], []>} : vector<2x32xf32>, vector<32x128xf32>, vector<2x128xf32> -> vector<2x128xf32>
    %129 = arith.addf %127, %128 : vector<2x128xf32>
    %130 = vector.extract_strided_slice %129 {offsets = [0, 0], sizes = [2, 32], strides = [1, 1]} : vector<2x128xf32> to vector<2x32xf32>
    %131 = arith.negf %130 : vector<2x32xf32>
    %132 = math.exp %131 : vector<2x32xf32>
    %cst_29 = arith.constant 1.000000e+00 : f32
    %133 = vector.broadcast %cst_29 : f32 to vector<2x32xf32>
    %134 = arith.addf %133, %132 : vector<2x32xf32>
    %135 = arith.divf %133, %134 : vector<2x32xf32>
    %136 = vector.extract_strided_slice %129 {offsets = [0, 32], sizes = [2, 32], strides = [1, 1]} : vector<2x128xf32> to vector<2x32xf32>
    %137 = arith.negf %136 : vector<2x32xf32>
    %138 = math.exp %137 : vector<2x32xf32>
    %cst_30 = arith.constant 1.000000e+00 : f32
    %139 = vector.broadcast %cst_30 : f32 to vector<2x32xf32>
    %140 = arith.addf %139, %138 : vector<2x32xf32>
    %141 = arith.divf %139, %140 : vector<2x32xf32>
    %142 = vector.extract_strided_slice %129 {offsets = [0, 64], sizes = [2, 32], strides = [1, 1]} : vector<2x128xf32> to vector<2x32xf32>
    %143 = math.tanh %142 : vector<2x32xf32>
    %144 = vector.extract_strided_slice %129 {offsets = [0, 96], sizes = [2, 32], strides = [1, 1]} : vector<2x128xf32> to vector<2x32xf32>
    %145 = arith.negf %144 : vector<2x32xf32>
    %146 = math.exp %145 : vector<2x32xf32>
    %cst_31 = arith.constant 1.000000e+00 : f32
    %147 = vector.broadcast %cst_31 : f32 to vector<2x32xf32>
    %148 = arith.addf %147, %146 : vector<2x32xf32>
    %149 = arith.divf %147, %148 : vector<2x32xf32>
    %150 = arith.mulf %141, %120 : vector<2x32xf32>
    %151 = arith.mulf %135, %143 : vector<2x32xf32>
    %152 = arith.addf %150, %151 : vector<2x32xf32>
    %153 = math.tanh %152 : vector<2x32xf32>
    %154 = arith.mulf %149, %153 : vector<2x32xf32>
    %155 = vector.extract_strided_slice %154 {offsets = [0, 0], sizes = [2, 16], strides = [1, 1]} : vector<2x32xf32> to vector<2x16xf32>
    %156 = vector.extract_strided_slice %154 {offsets = [0, 16], sizes = [2, 16], strides = [1, 1]} : vector<2x32xf32> to vector<2x16xf32>
    %157 = arith.addf %15, %22 : vector<2x128xf32>
    %158 = vector.broadcast %8 : vector<1x128xf32> to vector<2x128xf32>
    %159 = arith.addf %157, %158 : vector<2x128xf32>
    %cst_32 = arith.constant dense<0.000000e+00> : vector<2x128xf32>
    %160 = tpu.matmul %154, %6, %cst_32 {dimension_numbers = #tpu.dot_dimension_numbers<[1], [0], [0], [1], [0, 0, 1, 1], [], []>} : vector<2x32xf32>, vector<32x128xf32>, vector<2x128xf32> -> vector<2x128xf32>
    %161 = arith.addf %159, %160 : vector<2x128xf32>
    %162 = vector.extract_strided_slice %161 {offsets = [0, 0], sizes = [2, 32], strides = [1, 1]} : vector<2x128xf32> to vector<2x32xf32>
    %163 = arith.negf %162 : vector<2x32xf32>
    %164 = math.exp %163 : vector<2x32xf32>
    %cst_33 = arith.constant 1.000000e+00 : f32
    %165 = vector.broadcast %cst_33 : f32 to vector<2x32xf32>
    %166 = arith.addf %165, %164 : vector<2x32xf32>
    %167 = arith.divf %165, %166 : vector<2x32xf32>
    %168 = vector.extract_strided_slice %161 {offsets = [0, 32], sizes = [2, 32], strides = [1, 1]} : vector<2x128xf32> to vector<2x32xf32>
    %169 = arith.negf %168 : vector<2x32xf32>
    %170 = math.exp %169 : vector<2x32xf32>
    %cst_34 = arith.constant 1.000000e+00 : f32
    %171 = vector.broadcast %cst_34 : f32 to vector<2x32xf32>
    %172 = arith.addf %171, %170 : vector<2x32xf32>
    %173 = arith.divf %171, %172 : vector<2x32xf32>
    %174 = vector.extract_strided_slice %161 {offsets = [0, 64], sizes = [2, 32], strides = [1, 1]} : vector<2x128xf32> to vector<2x32xf32>
    %175 = math.tanh %174 : vector<2x32xf32>
    %176 = vector.extract_strided_slice %161 {offsets = [0, 96], sizes = [2, 32], strides = [1, 1]} : vector<2x128xf32> to vector<2x32xf32>
    %177 = arith.negf %176 : vector<2x32xf32>
    %178 = math.exp %177 : vector<2x32xf32>
    %cst_35 = arith.constant 1.000000e+00 : f32
    %179 = vector.broadcast %cst_35 : f32 to vector<2x32xf32>
    %180 = arith.addf %179, %178 : vector<2x32xf32>
    %181 = arith.divf %179, %180 : vector<2x32xf32>
    %182 = arith.mulf %173, %152 : vector<2x32xf32>
    %183 = arith.mulf %167, %175 : vector<2x32xf32>
    %184 = arith.addf %182, %183 : vector<2x32xf32>
    %185 = math.tanh %184 : vector<2x32xf32>
    %186 = arith.mulf %181, %185 : vector<2x32xf32>
    %187 = vector.extract_strided_slice %186 {offsets = [0, 0], sizes = [2, 16], strides = [1, 1]} : vector<2x32xf32> to vector<2x16xf32>
    %188 = vector.extract_strided_slice %186 {offsets = [0, 16], sizes = [2, 16], strides = [1, 1]} : vector<2x32xf32> to vector<2x16xf32>
    %189 = arith.addf %16, %21 : vector<2x128xf32>
    %190 = vector.broadcast %8 : vector<1x128xf32> to vector<2x128xf32>
    %191 = arith.addf %189, %190 : vector<2x128xf32>
    %cst_36 = arith.constant dense<0.000000e+00> : vector<2x128xf32>
    %192 = tpu.matmul %186, %6, %cst_36 {dimension_numbers = #tpu.dot_dimension_numbers<[1], [0], [0], [1], [0, 0, 1, 1], [], []>} : vector<2x32xf32>, vector<32x128xf32>, vector<2x128xf32> -> vector<2x128xf32>
    %193 = arith.addf %191, %192 : vector<2x128xf32>
    %194 = vector.extract_strided_slice %193 {offsets = [0, 0], sizes = [2, 32], strides = [1, 1]} : vector<2x128xf32> to vector<2x32xf32>
    %195 = arith.negf %194 : vector<2x32xf32>
    %196 = math.exp %195 : vector<2x32xf32>
    %cst_37 = arith.constant 1.000000e+00 : f32
    %197 = vector.broadcast %cst_37 : f32 to vector<2x32xf32>
    %198 = arith.addf %197, %196 : vector<2x32xf32>
    %199 = arith.divf %197, %198 : vector<2x32xf32>
    %200 = vector.extract_strided_slice %193 {offsets = [0, 32], sizes = [2, 32], strides = [1, 1]} : vector<2x128xf32> to vector<2x32xf32>
    %201 = arith.negf %200 : vector<2x32xf32>
    %202 = math.exp %201 : vector<2x32xf32>
    %cst_38 = arith.constant 1.000000e+00 : f32
    %203 = vector.broadcast %cst_38 : f32 to vector<2x32xf32>
    %204 = arith.addf %203, %202 : vector<2x32xf32>
    %205 = arith.divf %203, %204 : vector<2x32xf32>
    %206 = vector.extract_strided_slice %193 {offsets = [0, 64], sizes = [2, 32], strides = [1, 1]} : vector<2x128xf32> to vector<2x32xf32>
    %207 = math.tanh %206 : vector<2x32xf32>
    %208 = vector.extract_strided_slice %193 {offsets = [0, 96], sizes = [2, 32], strides = [1, 1]} : vector<2x128xf32> to vector<2x32xf32>
    %209 = arith.negf %208 : vector<2x32xf32>
    %210 = math.exp %209 : vector<2x32xf32>
    %cst_39 = arith.constant 1.000000e+00 : f32
    %211 = vector.broadcast %cst_39 : f32 to vector<2x32xf32>
    %212 = arith.addf %211, %210 : vector<2x32xf32>
    %213 = arith.divf %211, %212 : vector<2x32xf32>
    %214 = arith.mulf %205, %184 : vector<2x32xf32>
    %215 = arith.mulf %199, %207 : vector<2x32xf32>
    %216 = arith.addf %214, %215 : vector<2x32xf32>
    %217 = math.tanh %216 : vector<2x32xf32>
    %218 = arith.mulf %213, %217 : vector<2x32xf32>
    %219 = vector.extract_strided_slice %218 {offsets = [0, 0], sizes = [2, 16], strides = [1, 1]} : vector<2x32xf32> to vector<2x16xf32>
    %220 = vector.extract_strided_slice %218 {offsets = [0, 16], sizes = [2, 16], strides = [1, 1]} : vector<2x32xf32> to vector<2x16xf32>
    %221 = arith.addf %17, %20 : vector<2x128xf32>
    %222 = vector.broadcast %8 : vector<1x128xf32> to vector<2x128xf32>
    %223 = arith.addf %221, %222 : vector<2x128xf32>
    %cst_40 = arith.constant dense<0.000000e+00> : vector<2x128xf32>
    %224 = tpu.matmul %218, %6, %cst_40 {dimension_numbers = #tpu.dot_dimension_numbers<[1], [0], [0], [1], [0, 0, 1, 1], [], []>} : vector<2x32xf32>, vector<32x128xf32>, vector<2x128xf32> -> vector<2x128xf32>
    %225 = arith.addf %223, %224 : vector<2x128xf32>
    %226 = vector.extract_strided_slice %225 {offsets = [0, 0], sizes = [2, 32], strides = [1, 1]} : vector<2x128xf32> to vector<2x32xf32>
    %227 = arith.negf %226 : vector<2x32xf32>
    %228 = math.exp %227 : vector<2x32xf32>
    %cst_41 = arith.constant 1.000000e+00 : f32
    %229 = vector.broadcast %cst_41 : f32 to vector<2x32xf32>
    %230 = arith.addf %229, %228 : vector<2x32xf32>
    %231 = arith.divf %229, %230 : vector<2x32xf32>
    %232 = vector.extract_strided_slice %225 {offsets = [0, 32], sizes = [2, 32], strides = [1, 1]} : vector<2x128xf32> to vector<2x32xf32>
    %233 = arith.negf %232 : vector<2x32xf32>
    %234 = math.exp %233 : vector<2x32xf32>
    %cst_42 = arith.constant 1.000000e+00 : f32
    %235 = vector.broadcast %cst_42 : f32 to vector<2x32xf32>
    %236 = arith.addf %235, %234 : vector<2x32xf32>
    %237 = arith.divf %235, %236 : vector<2x32xf32>
    %238 = vector.extract_strided_slice %225 {offsets = [0, 64], sizes = [2, 32], strides = [1, 1]} : vector<2x128xf32> to vector<2x32xf32>
    %239 = math.tanh %238 : vector<2x32xf32>
    %240 = vector.extract_strided_slice %225 {offsets = [0, 96], sizes = [2, 32], strides = [1, 1]} : vector<2x128xf32> to vector<2x32xf32>
    %241 = arith.negf %240 : vector<2x32xf32>
    %242 = math.exp %241 : vector<2x32xf32>
    %cst_43 = arith.constant 1.000000e+00 : f32
    %243 = vector.broadcast %cst_43 : f32 to vector<2x32xf32>
    %244 = arith.addf %243, %242 : vector<2x32xf32>
    %245 = arith.divf %243, %244 : vector<2x32xf32>
    %246 = arith.mulf %237, %216 : vector<2x32xf32>
    %247 = arith.mulf %231, %239 : vector<2x32xf32>
    %248 = arith.addf %246, %247 : vector<2x32xf32>
    %249 = math.tanh %248 : vector<2x32xf32>
    %250 = arith.mulf %245, %249 : vector<2x32xf32>
    %251 = vector.extract_strided_slice %250 {offsets = [0, 0], sizes = [2, 16], strides = [1, 1]} : vector<2x32xf32> to vector<2x16xf32>
    %252 = vector.extract_strided_slice %250 {offsets = [0, 16], sizes = [2, 16], strides = [1, 1]} : vector<2x32xf32> to vector<2x16xf32>
    %253 = arith.addf %18, %19 : vector<2x128xf32>
    %254 = vector.broadcast %8 : vector<1x128xf32> to vector<2x128xf32>
    %255 = arith.addf %253, %254 : vector<2x128xf32>
    %cst_44 = arith.constant dense<0.000000e+00> : vector<2x128xf32>
    %256 = tpu.matmul %250, %6, %cst_44 {dimension_numbers = #tpu.dot_dimension_numbers<[1], [0], [0], [1], [0, 0, 1, 1], [], []>} : vector<2x32xf32>, vector<32x128xf32>, vector<2x128xf32> -> vector<2x128xf32>
    %257 = arith.addf %255, %256 : vector<2x128xf32>
    %258 = vector.extract_strided_slice %257 {offsets = [0, 0], sizes = [2, 32], strides = [1, 1]} : vector<2x128xf32> to vector<2x32xf32>
    %259 = arith.negf %258 : vector<2x32xf32>
    %260 = math.exp %259 : vector<2x32xf32>
    %cst_45 = arith.constant 1.000000e+00 : f32
    %261 = vector.broadcast %cst_45 : f32 to vector<2x32xf32>
    %262 = arith.addf %261, %260 : vector<2x32xf32>
    %263 = arith.divf %261, %262 : vector<2x32xf32>
    %264 = vector.extract_strided_slice %257 {offsets = [0, 32], sizes = [2, 32], strides = [1, 1]} : vector<2x128xf32> to vector<2x32xf32>
    %265 = arith.negf %264 : vector<2x32xf32>
    %266 = math.exp %265 : vector<2x32xf32>
    %cst_46 = arith.constant 1.000000e+00 : f32
    %267 = vector.broadcast %cst_46 : f32 to vector<2x32xf32>
    %268 = arith.addf %267, %266 : vector<2x32xf32>
    %269 = arith.divf %267, %268 : vector<2x32xf32>
    %270 = vector.extract_strided_slice %257 {offsets = [0, 64], sizes = [2, 32], strides = [1, 1]} : vector<2x128xf32> to vector<2x32xf32>
    %271 = math.tanh %270 : vector<2x32xf32>
    %272 = vector.extract_strided_slice %257 {offsets = [0, 96], sizes = [2, 32], strides = [1, 1]} : vector<2x128xf32> to vector<2x32xf32>
    %273 = arith.negf %272 : vector<2x32xf32>
    %274 = math.exp %273 : vector<2x32xf32>
    %cst_47 = arith.constant 1.000000e+00 : f32
    %275 = vector.broadcast %cst_47 : f32 to vector<2x32xf32>
    %276 = arith.addf %275, %274 : vector<2x32xf32>
    %277 = arith.divf %275, %276 : vector<2x32xf32>
    %278 = arith.mulf %269, %248 : vector<2x32xf32>
    %279 = arith.mulf %263, %271 : vector<2x32xf32>
    %280 = arith.addf %278, %279 : vector<2x32xf32>
    %281 = math.tanh %280 : vector<2x32xf32>
    %282 = arith.mulf %277, %281 : vector<2x32xf32>
    %283 = vector.extract_strided_slice %282 {offsets = [0, 0], sizes = [2, 16], strides = [1, 1]} : vector<2x32xf32> to vector<2x16xf32>
    %284 = vector.extract_strided_slice %282 {offsets = [0, 16], sizes = [2, 16], strides = [1, 1]} : vector<2x32xf32> to vector<2x16xf32>
    %285 = tpu.concatenate %59, %284 in 1 : vector<2x16xf32>, vector<2x16xf32> -> vector<2x32xf32>
    %286 = tpu.concatenate %91, %252 in 1 : vector<2x16xf32>, vector<2x16xf32> -> vector<2x32xf32>
    %287 = tpu.concatenate %123, %220 in 1 : vector<2x16xf32>, vector<2x16xf32> -> vector<2x32xf32>
    %288 = tpu.concatenate %155, %188 in 1 : vector<2x16xf32>, vector<2x16xf32> -> vector<2x32xf32>
    %289 = tpu.concatenate %187, %156 in 1 : vector<2x16xf32>, vector<2x16xf32> -> vector<2x32xf32>
    %290 = tpu.concatenate %219, %124 in 1 : vector<2x16xf32>, vector<2x16xf32> -> vector<2x32xf32>
    %291 = tpu.concatenate %251, %92 in 1 : vector<2x16xf32>, vector<2x16xf32> -> vector<2x32xf32>
    %292 = tpu.concatenate %283, %60 in 1 : vector<2x16xf32>, vector<2x16xf32> -> vector<2x32xf32>
    %293 = tpu.concatenate %285, %286, %287, %288, %289, %290, %291, %292 in 0 : vector<2x32xf32>, vector<2x32xf32>, vector<2x32xf32>, vector<2x32xf32>, vector<2x32xf32>, vector<2x32xf32>, vector<2x32xf32>, vector<2x32xf32> -> vector<16x32xf32>
    %c1 = arith.constant 1 : index
    %c0_48 = arith.constant 0 : index
    %c0_49 = arith.constant 0 : index
    %294 = vector.load %arg3[%c1, %c0_48, %c0_49] : memref<2x32x128xf32, #tpu.memory_space<vmem>>, vector<1x32x128xf32>
    %295 = vector.shape_cast %294 : vector<1x32x128xf32> to vector<32x128xf32>
    %c1_50 = arith.constant 1 : index
    %c0_51 = arith.constant 0 : index
    %c0_52 = arith.constant 0 : index
    %296 = vector.load %arg4[%c1_50, %c0_51, %c0_52] : memref<2x32x128xf32, #tpu.memory_space<vmem>>, vector<1x32x128xf32>
    %297 = vector.shape_cast %296 : vector<1x32x128xf32> to vector<32x128xf32>
    %c1_53 = arith.constant 1 : index
    %c0_54 = arith.constant 0 : index
    %c0_55 = arith.constant 0 : index
    %298 = vector.load %arg6[%c1_53, %c0_54, %c0_55] : memref<2x32x128xf32, #tpu.memory_space<vmem>>, vector<1x32x128xf32>
    %299 = vector.shape_cast %298 : vector<1x32x128xf32> to vector<32x128xf32>
    %c1_56 = arith.constant 1 : index
    %c0_57 = arith.constant 0 : index
    %c0_58 = arith.constant 0 : index
    %300 = vector.load %arg5[%c1_56, %c0_57, %c0_58] : memref<2x1x128xf32, #tpu.memory_space<vmem>>, vector<1x1x128xf32>
    %301 = vector.shape_cast %300 : vector<1x1x128xf32> to vector<1x128xf32>
    %cst_59 = arith.constant dense<0.000000e+00> : vector<16x128xf32>
    %302 = tpu.matmul %293, %295, %cst_59 {dimension_numbers = #tpu.dot_dimension_numbers<[1], [0], [0], [1], [0, 0, 1, 1], [], []>} : vector<16x32xf32>, vector<32x128xf32>, vector<16x128xf32> -> vector<16x128xf32>
    %cst_60 = arith.constant dense<0.000000e+00> : vector<16x128xf32>
    %303 = tpu.matmul %293, %297, %cst_60 {dimension_numbers = #tpu.dot_dimension_numbers<[1], [0], [0], [1], [0, 0, 1, 1], [], []>} : vector<16x32xf32>, vector<32x128xf32>, vector<16x128xf32> -> vector<16x128xf32>
    %304 = vector.extract_strided_slice %302 {offsets = [0, 0], sizes = [2, 128], strides = [1, 1]} : vector<16x128xf32> to vector<2x128xf32>
    %305 = vector.extract_strided_slice %302 {offsets = [2, 0], sizes = [2, 128], strides = [1, 1]} : vector<16x128xf32> to vector<2x128xf32>
    %306 = vector.extract_strided_slice %302 {offsets = [4, 0], sizes = [2, 128], strides = [1, 1]} : vector<16x128xf32> to vector<2x128xf32>
    %307 = vector.extract_strided_slice %302 {offsets = [6, 0], sizes = [2, 128], strides = [1, 1]} : vector<16x128xf32> to vector<2x128xf32>
    %308 = vector.extract_strided_slice %302 {offsets = [8, 0], sizes = [2, 128], strides = [1, 1]} : vector<16x128xf32> to vector<2x128xf32>
    %309 = vector.extract_strided_slice %302 {offsets = [10, 0], sizes = [2, 128], strides = [1, 1]} : vector<16x128xf32> to vector<2x128xf32>
    %310 = vector.extract_strided_slice %302 {offsets = [12, 0], sizes = [2, 128], strides = [1, 1]} : vector<16x128xf32> to vector<2x128xf32>
    %311 = vector.extract_strided_slice %302 {offsets = [14, 0], sizes = [2, 128], strides = [1, 1]} : vector<16x128xf32> to vector<2x128xf32>
    %312 = vector.extract_strided_slice %303 {offsets = [0, 0], sizes = [2, 128], strides = [1, 1]} : vector<16x128xf32> to vector<2x128xf32>
    %313 = vector.extract_strided_slice %303 {offsets = [2, 0], sizes = [2, 128], strides = [1, 1]} : vector<16x128xf32> to vector<2x128xf32>
    %314 = vector.extract_strided_slice %303 {offsets = [4, 0], sizes = [2, 128], strides = [1, 1]} : vector<16x128xf32> to vector<2x128xf32>
    %315 = vector.extract_strided_slice %303 {offsets = [6, 0], sizes = [2, 128], strides = [1, 1]} : vector<16x128xf32> to vector<2x128xf32>
    %316 = vector.extract_strided_slice %303 {offsets = [8, 0], sizes = [2, 128], strides = [1, 1]} : vector<16x128xf32> to vector<2x128xf32>
    %317 = vector.extract_strided_slice %303 {offsets = [10, 0], sizes = [2, 128], strides = [1, 1]} : vector<16x128xf32> to vector<2x128xf32>
    %318 = vector.extract_strided_slice %303 {offsets = [12, 0], sizes = [2, 128], strides = [1, 1]} : vector<16x128xf32> to vector<2x128xf32>
    %319 = vector.extract_strided_slice %303 {offsets = [14, 0], sizes = [2, 128], strides = [1, 1]} : vector<16x128xf32> to vector<2x128xf32>
    %cst_61 = arith.constant 0.000000e+00 : f32
    %320 = vector.broadcast %cst_61 : f32 to vector<2x32xf32>
    %cst_62 = arith.constant 0.000000e+00 : f32
    %321 = vector.broadcast %cst_62 : f32 to vector<2x32xf32>
    %322 = arith.addf %304, %319 : vector<2x128xf32>
    %323 = vector.broadcast %301 : vector<1x128xf32> to vector<2x128xf32>
    %324 = arith.addf %322, %323 : vector<2x128xf32>
    %cst_63 = arith.constant dense<0.000000e+00> : vector<2x128xf32>
    %325 = tpu.matmul %320, %299, %cst_63 {dimension_numbers = #tpu.dot_dimension_numbers<[1], [0], [0], [1], [0, 0, 1, 1], [], []>} : vector<2x32xf32>, vector<32x128xf32>, vector<2x128xf32> -> vector<2x128xf32>
    %326 = arith.addf %324, %325 : vector<2x128xf32>
    %327 = vector.extract_strided_slice %326 {offsets = [0, 0], sizes = [2, 32], strides = [1, 1]} : vector<2x128xf32> to vector<2x32xf32>
    %328 = arith.negf %327 : vector<2x32xf32>
    %329 = math.exp %328 : vector<2x32xf32>
    %cst_64 = arith.constant 1.000000e+00 : f32
    %330 = vector.broadcast %cst_64 : f32 to vector<2x32xf32>
    %331 = arith.addf %330, %329 : vector<2x32xf32>
    %332 = arith.divf %330, %331 : vector<2x32xf32>
    %333 = vector.extract_strided_slice %326 {offsets = [0, 32], sizes = [2, 32], strides = [1, 1]} : vector<2x128xf32> to vector<2x32xf32>
    %334 = arith.negf %333 : vector<2x32xf32>
    %335 = math.exp %334 : vector<2x32xf32>
    %cst_65 = arith.constant 1.000000e+00 : f32
    %336 = vector.broadcast %cst_65 : f32 to vector<2x32xf32>
    %337 = arith.addf %336, %335 : vector<2x32xf32>
    %338 = arith.divf %336, %337 : vector<2x32xf32>
    %339 = vector.extract_strided_slice %326 {offsets = [0, 64], sizes = [2, 32], strides = [1, 1]} : vector<2x128xf32> to vector<2x32xf32>
    %340 = math.tanh %339 : vector<2x32xf32>
    %341 = vector.extract_strided_slice %326 {offsets = [0, 96], sizes = [2, 32], strides = [1, 1]} : vector<2x128xf32> to vector<2x32xf32>
    %342 = arith.negf %341 : vector<2x32xf32>
    %343 = math.exp %342 : vector<2x32xf32>
    %cst_66 = arith.constant 1.000000e+00 : f32
    %344 = vector.broadcast %cst_66 : f32 to vector<2x32xf32>
    %345 = arith.addf %344, %343 : vector<2x32xf32>
    %346 = arith.divf %344, %345 : vector<2x32xf32>
    %347 = arith.mulf %338, %321 : vector<2x32xf32>
    %348 = arith.mulf %332, %340 : vector<2x32xf32>
    %349 = arith.addf %347, %348 : vector<2x32xf32>
    %350 = math.tanh %349 : vector<2x32xf32>
    %351 = arith.mulf %346, %350 : vector<2x32xf32>
    %352 = vector.extract_strided_slice %351 {offsets = [0, 0], sizes = [2, 16], strides = [1, 1]} : vector<2x32xf32> to vector<2x16xf32>
    %353 = vector.extract_strided_slice %351 {offsets = [0, 16], sizes = [2, 16], strides = [1, 1]} : vector<2x32xf32> to vector<2x16xf32>
    %354 = arith.addf %305, %318 : vector<2x128xf32>
    %355 = vector.broadcast %301 : vector<1x128xf32> to vector<2x128xf32>
    %356 = arith.addf %354, %355 : vector<2x128xf32>
    %cst_67 = arith.constant dense<0.000000e+00> : vector<2x128xf32>
    %357 = tpu.matmul %351, %299, %cst_67 {dimension_numbers = #tpu.dot_dimension_numbers<[1], [0], [0], [1], [0, 0, 1, 1], [], []>} : vector<2x32xf32>, vector<32x128xf32>, vector<2x128xf32> -> vector<2x128xf32>
    %358 = arith.addf %356, %357 : vector<2x128xf32>
    %359 = vector.extract_strided_slice %358 {offsets = [0, 0], sizes = [2, 32], strides = [1, 1]} : vector<2x128xf32> to vector<2x32xf32>
    %360 = arith.negf %359 : vector<2x32xf32>
    %361 = math.exp %360 : vector<2x32xf32>
    %cst_68 = arith.constant 1.000000e+00 : f32
    %362 = vector.broadcast %cst_68 : f32 to vector<2x32xf32>
    %363 = arith.addf %362, %361 : vector<2x32xf32>
    %364 = arith.divf %362, %363 : vector<2x32xf32>
    %365 = vector.extract_strided_slice %358 {offsets = [0, 32], sizes = [2, 32], strides = [1, 1]} : vector<2x128xf32> to vector<2x32xf32>
    %366 = arith.negf %365 : vector<2x32xf32>
    %367 = math.exp %366 : vector<2x32xf32>
    %cst_69 = arith.constant 1.000000e+00 : f32
    %368 = vector.broadcast %cst_69 : f32 to vector<2x32xf32>
    %369 = arith.addf %368, %367 : vector<2x32xf32>
    %370 = arith.divf %368, %369 : vector<2x32xf32>
    %371 = vector.extract_strided_slice %358 {offsets = [0, 64], sizes = [2, 32], strides = [1, 1]} : vector<2x128xf32> to vector<2x32xf32>
    %372 = math.tanh %371 : vector<2x32xf32>
    %373 = vector.extract_strided_slice %358 {offsets = [0, 96], sizes = [2, 32], strides = [1, 1]} : vector<2x128xf32> to vector<2x32xf32>
    %374 = arith.negf %373 : vector<2x32xf32>
    %375 = math.exp %374 : vector<2x32xf32>
    %cst_70 = arith.constant 1.000000e+00 : f32
    %376 = vector.broadcast %cst_70 : f32 to vector<2x32xf32>
    %377 = arith.addf %376, %375 : vector<2x32xf32>
    %378 = arith.divf %376, %377 : vector<2x32xf32>
    %379 = arith.mulf %370, %349 : vector<2x32xf32>
    %380 = arith.mulf %364, %372 : vector<2x32xf32>
    %381 = arith.addf %379, %380 : vector<2x32xf32>
    %382 = math.tanh %381 : vector<2x32xf32>
    %383 = arith.mulf %378, %382 : vector<2x32xf32>
    %384 = vector.extract_strided_slice %383 {offsets = [0, 0], sizes = [2, 16], strides = [1, 1]} : vector<2x32xf32> to vector<2x16xf32>
    %385 = vector.extract_strided_slice %383 {offsets = [0, 16], sizes = [2, 16], strides = [1, 1]} : vector<2x32xf32> to vector<2x16xf32>
    %386 = arith.addf %306, %317 : vector<2x128xf32>
    %387 = vector.broadcast %301 : vector<1x128xf32> to vector<2x128xf32>
    %388 = arith.addf %386, %387 : vector<2x128xf32>
    %cst_71 = arith.constant dense<0.000000e+00> : vector<2x128xf32>
    %389 = tpu.matmul %383, %299, %cst_71 {dimension_numbers = #tpu.dot_dimension_numbers<[1], [0], [0], [1], [0, 0, 1, 1], [], []>} : vector<2x32xf32>, vector<32x128xf32>, vector<2x128xf32> -> vector<2x128xf32>
    %390 = arith.addf %388, %389 : vector<2x128xf32>
    %391 = vector.extract_strided_slice %390 {offsets = [0, 0], sizes = [2, 32], strides = [1, 1]} : vector<2x128xf32> to vector<2x32xf32>
    %392 = arith.negf %391 : vector<2x32xf32>
    %393 = math.exp %392 : vector<2x32xf32>
    %cst_72 = arith.constant 1.000000e+00 : f32
    %394 = vector.broadcast %cst_72 : f32 to vector<2x32xf32>
    %395 = arith.addf %394, %393 : vector<2x32xf32>
    %396 = arith.divf %394, %395 : vector<2x32xf32>
    %397 = vector.extract_strided_slice %390 {offsets = [0, 32], sizes = [2, 32], strides = [1, 1]} : vector<2x128xf32> to vector<2x32xf32>
    %398 = arith.negf %397 : vector<2x32xf32>
    %399 = math.exp %398 : vector<2x32xf32>
    %cst_73 = arith.constant 1.000000e+00 : f32
    %400 = vector.broadcast %cst_73 : f32 to vector<2x32xf32>
    %401 = arith.addf %400, %399 : vector<2x32xf32>
    %402 = arith.divf %400, %401 : vector<2x32xf32>
    %403 = vector.extract_strided_slice %390 {offsets = [0, 64], sizes = [2, 32], strides = [1, 1]} : vector<2x128xf32> to vector<2x32xf32>
    %404 = math.tanh %403 : vector<2x32xf32>
    %405 = vector.extract_strided_slice %390 {offsets = [0, 96], sizes = [2, 32], strides = [1, 1]} : vector<2x128xf32> to vector<2x32xf32>
    %406 = arith.negf %405 : vector<2x32xf32>
    %407 = math.exp %406 : vector<2x32xf32>
    %cst_74 = arith.constant 1.000000e+00 : f32
    %408 = vector.broadcast %cst_74 : f32 to vector<2x32xf32>
    %409 = arith.addf %408, %407 : vector<2x32xf32>
    %410 = arith.divf %408, %409 : vector<2x32xf32>
    %411 = arith.mulf %402, %381 : vector<2x32xf32>
    %412 = arith.mulf %396, %404 : vector<2x32xf32>
    %413 = arith.addf %411, %412 : vector<2x32xf32>
    %414 = math.tanh %413 : vector<2x32xf32>
    %415 = arith.mulf %410, %414 : vector<2x32xf32>
    %416 = vector.extract_strided_slice %415 {offsets = [0, 0], sizes = [2, 16], strides = [1, 1]} : vector<2x32xf32> to vector<2x16xf32>
    %417 = vector.extract_strided_slice %415 {offsets = [0, 16], sizes = [2, 16], strides = [1, 1]} : vector<2x32xf32> to vector<2x16xf32>
    %418 = arith.addf %307, %316 : vector<2x128xf32>
    %419 = vector.broadcast %301 : vector<1x128xf32> to vector<2x128xf32>
    %420 = arith.addf %418, %419 : vector<2x128xf32>
    %cst_75 = arith.constant dense<0.000000e+00> : vector<2x128xf32>
    %421 = tpu.matmul %415, %299, %cst_75 {dimension_numbers = #tpu.dot_dimension_numbers<[1], [0], [0], [1], [0, 0, 1, 1], [], []>} : vector<2x32xf32>, vector<32x128xf32>, vector<2x128xf32> -> vector<2x128xf32>
    %422 = arith.addf %420, %421 : vector<2x128xf32>
    %423 = vector.extract_strided_slice %422 {offsets = [0, 0], sizes = [2, 32], strides = [1, 1]} : vector<2x128xf32> to vector<2x32xf32>
    %424 = arith.negf %423 : vector<2x32xf32>
    %425 = math.exp %424 : vector<2x32xf32>
    %cst_76 = arith.constant 1.000000e+00 : f32
    %426 = vector.broadcast %cst_76 : f32 to vector<2x32xf32>
    %427 = arith.addf %426, %425 : vector<2x32xf32>
    %428 = arith.divf %426, %427 : vector<2x32xf32>
    %429 = vector.extract_strided_slice %422 {offsets = [0, 32], sizes = [2, 32], strides = [1, 1]} : vector<2x128xf32> to vector<2x32xf32>
    %430 = arith.negf %429 : vector<2x32xf32>
    %431 = math.exp %430 : vector<2x32xf32>
    %cst_77 = arith.constant 1.000000e+00 : f32
    %432 = vector.broadcast %cst_77 : f32 to vector<2x32xf32>
    %433 = arith.addf %432, %431 : vector<2x32xf32>
    %434 = arith.divf %432, %433 : vector<2x32xf32>
    %435 = vector.extract_strided_slice %422 {offsets = [0, 64], sizes = [2, 32], strides = [1, 1]} : vector<2x128xf32> to vector<2x32xf32>
    %436 = math.tanh %435 : vector<2x32xf32>
    %437 = vector.extract_strided_slice %422 {offsets = [0, 96], sizes = [2, 32], strides = [1, 1]} : vector<2x128xf32> to vector<2x32xf32>
    %438 = arith.negf %437 : vector<2x32xf32>
    %439 = math.exp %438 : vector<2x32xf32>
    %cst_78 = arith.constant 1.000000e+00 : f32
    %440 = vector.broadcast %cst_78 : f32 to vector<2x32xf32>
    %441 = arith.addf %440, %439 : vector<2x32xf32>
    %442 = arith.divf %440, %441 : vector<2x32xf32>
    %443 = arith.mulf %434, %413 : vector<2x32xf32>
    %444 = arith.mulf %428, %436 : vector<2x32xf32>
    %445 = arith.addf %443, %444 : vector<2x32xf32>
    %446 = math.tanh %445 : vector<2x32xf32>
    %447 = arith.mulf %442, %446 : vector<2x32xf32>
    %448 = vector.extract_strided_slice %447 {offsets = [0, 0], sizes = [2, 16], strides = [1, 1]} : vector<2x32xf32> to vector<2x16xf32>
    %449 = vector.extract_strided_slice %447 {offsets = [0, 16], sizes = [2, 16], strides = [1, 1]} : vector<2x32xf32> to vector<2x16xf32>
    %450 = arith.addf %308, %315 : vector<2x128xf32>
    %451 = vector.broadcast %301 : vector<1x128xf32> to vector<2x128xf32>
    %452 = arith.addf %450, %451 : vector<2x128xf32>
    %cst_79 = arith.constant dense<0.000000e+00> : vector<2x128xf32>
    %453 = tpu.matmul %447, %299, %cst_79 {dimension_numbers = #tpu.dot_dimension_numbers<[1], [0], [0], [1], [0, 0, 1, 1], [], []>} : vector<2x32xf32>, vector<32x128xf32>, vector<2x128xf32> -> vector<2x128xf32>
    %454 = arith.addf %452, %453 : vector<2x128xf32>
    %455 = vector.extract_strided_slice %454 {offsets = [0, 0], sizes = [2, 32], strides = [1, 1]} : vector<2x128xf32> to vector<2x32xf32>
    %456 = arith.negf %455 : vector<2x32xf32>
    %457 = math.exp %456 : vector<2x32xf32>
    %cst_80 = arith.constant 1.000000e+00 : f32
    %458 = vector.broadcast %cst_80 : f32 to vector<2x32xf32>
    %459 = arith.addf %458, %457 : vector<2x32xf32>
    %460 = arith.divf %458, %459 : vector<2x32xf32>
    %461 = vector.extract_strided_slice %454 {offsets = [0, 32], sizes = [2, 32], strides = [1, 1]} : vector<2x128xf32> to vector<2x32xf32>
    %462 = arith.negf %461 : vector<2x32xf32>
    %463 = math.exp %462 : vector<2x32xf32>
    %cst_81 = arith.constant 1.000000e+00 : f32
    %464 = vector.broadcast %cst_81 : f32 to vector<2x32xf32>
    %465 = arith.addf %464, %463 : vector<2x32xf32>
    %466 = arith.divf %464, %465 : vector<2x32xf32>
    %467 = vector.extract_strided_slice %454 {offsets = [0, 64], sizes = [2, 32], strides = [1, 1]} : vector<2x128xf32> to vector<2x32xf32>
    %468 = math.tanh %467 : vector<2x32xf32>
    %469 = vector.extract_strided_slice %454 {offsets = [0, 96], sizes = [2, 32], strides = [1, 1]} : vector<2x128xf32> to vector<2x32xf32>
    %470 = arith.negf %469 : vector<2x32xf32>
    %471 = math.exp %470 : vector<2x32xf32>
    %cst_82 = arith.constant 1.000000e+00 : f32
    %472 = vector.broadcast %cst_82 : f32 to vector<2x32xf32>
    %473 = arith.addf %472, %471 : vector<2x32xf32>
    %474 = arith.divf %472, %473 : vector<2x32xf32>
    %475 = arith.mulf %466, %445 : vector<2x32xf32>
    %476 = arith.mulf %460, %468 : vector<2x32xf32>
    %477 = arith.addf %475, %476 : vector<2x32xf32>
    %478 = math.tanh %477 : vector<2x32xf32>
    %479 = arith.mulf %474, %478 : vector<2x32xf32>
    %480 = vector.extract_strided_slice %479 {offsets = [0, 0], sizes = [2, 16], strides = [1, 1]} : vector<2x32xf32> to vector<2x16xf32>
    %481 = vector.extract_strided_slice %479 {offsets = [0, 16], sizes = [2, 16], strides = [1, 1]} : vector<2x32xf32> to vector<2x16xf32>
    %482 = arith.addf %309, %314 : vector<2x128xf32>
    %483 = vector.broadcast %301 : vector<1x128xf32> to vector<2x128xf32>
    %484 = arith.addf %482, %483 : vector<2x128xf32>
    %cst_83 = arith.constant dense<0.000000e+00> : vector<2x128xf32>
    %485 = tpu.matmul %479, %299, %cst_83 {dimension_numbers = #tpu.dot_dimension_numbers<[1], [0], [0], [1], [0, 0, 1, 1], [], []>} : vector<2x32xf32>, vector<32x128xf32>, vector<2x128xf32> -> vector<2x128xf32>
    %486 = arith.addf %484, %485 : vector<2x128xf32>
    %487 = vector.extract_strided_slice %486 {offsets = [0, 0], sizes = [2, 32], strides = [1, 1]} : vector<2x128xf32> to vector<2x32xf32>
    %488 = arith.negf %487 : vector<2x32xf32>
    %489 = math.exp %488 : vector<2x32xf32>
    %cst_84 = arith.constant 1.000000e+00 : f32
    %490 = vector.broadcast %cst_84 : f32 to vector<2x32xf32>
    %491 = arith.addf %490, %489 : vector<2x32xf32>
    %492 = arith.divf %490, %491 : vector<2x32xf32>
    %493 = vector.extract_strided_slice %486 {offsets = [0, 32], sizes = [2, 32], strides = [1, 1]} : vector<2x128xf32> to vector<2x32xf32>
    %494 = arith.negf %493 : vector<2x32xf32>
    %495 = math.exp %494 : vector<2x32xf32>
    %cst_85 = arith.constant 1.000000e+00 : f32
    %496 = vector.broadcast %cst_85 : f32 to vector<2x32xf32>
    %497 = arith.addf %496, %495 : vector<2x32xf32>
    %498 = arith.divf %496, %497 : vector<2x32xf32>
    %499 = vector.extract_strided_slice %486 {offsets = [0, 64], sizes = [2, 32], strides = [1, 1]} : vector<2x128xf32> to vector<2x32xf32>
    %500 = math.tanh %499 : vector<2x32xf32>
    %501 = vector.extract_strided_slice %486 {offsets = [0, 96], sizes = [2, 32], strides = [1, 1]} : vector<2x128xf32> to vector<2x32xf32>
    %502 = arith.negf %501 : vector<2x32xf32>
    %503 = math.exp %502 : vector<2x32xf32>
    %cst_86 = arith.constant 1.000000e+00 : f32
    %504 = vector.broadcast %cst_86 : f32 to vector<2x32xf32>
    %505 = arith.addf %504, %503 : vector<2x32xf32>
    %506 = arith.divf %504, %505 : vector<2x32xf32>
    %507 = arith.mulf %498, %477 : vector<2x32xf32>
    %508 = arith.mulf %492, %500 : vector<2x32xf32>
    %509 = arith.addf %507, %508 : vector<2x32xf32>
    %510 = math.tanh %509 : vector<2x32xf32>
    %511 = arith.mulf %506, %510 : vector<2x32xf32>
    %512 = vector.extract_strided_slice %511 {offsets = [0, 0], sizes = [2, 16], strides = [1, 1]} : vector<2x32xf32> to vector<2x16xf32>
    %513 = vector.extract_strided_slice %511 {offsets = [0, 16], sizes = [2, 16], strides = [1, 1]} : vector<2x32xf32> to vector<2x16xf32>
    %514 = arith.addf %310, %313 : vector<2x128xf32>
    %515 = vector.broadcast %301 : vector<1x128xf32> to vector<2x128xf32>
    %516 = arith.addf %514, %515 : vector<2x128xf32>
    %cst_87 = arith.constant dense<0.000000e+00> : vector<2x128xf32>
    %517 = tpu.matmul %511, %299, %cst_87 {dimension_numbers = #tpu.dot_dimension_numbers<[1], [0], [0], [1], [0, 0, 1, 1], [], []>} : vector<2x32xf32>, vector<32x128xf32>, vector<2x128xf32> -> vector<2x128xf32>
    %518 = arith.addf %516, %517 : vector<2x128xf32>
    %519 = vector.extract_strided_slice %518 {offsets = [0, 0], sizes = [2, 32], strides = [1, 1]} : vector<2x128xf32> to vector<2x32xf32>
    %520 = arith.negf %519 : vector<2x32xf32>
    %521 = math.exp %520 : vector<2x32xf32>
    %cst_88 = arith.constant 1.000000e+00 : f32
    %522 = vector.broadcast %cst_88 : f32 to vector<2x32xf32>
    %523 = arith.addf %522, %521 : vector<2x32xf32>
    %524 = arith.divf %522, %523 : vector<2x32xf32>
    %525 = vector.extract_strided_slice %518 {offsets = [0, 32], sizes = [2, 32], strides = [1, 1]} : vector<2x128xf32> to vector<2x32xf32>
    %526 = arith.negf %525 : vector<2x32xf32>
    %527 = math.exp %526 : vector<2x32xf32>
    %cst_89 = arith.constant 1.000000e+00 : f32
    %528 = vector.broadcast %cst_89 : f32 to vector<2x32xf32>
    %529 = arith.addf %528, %527 : vector<2x32xf32>
    %530 = arith.divf %528, %529 : vector<2x32xf32>
    %531 = vector.extract_strided_slice %518 {offsets = [0, 64], sizes = [2, 32], strides = [1, 1]} : vector<2x128xf32> to vector<2x32xf32>
    %532 = math.tanh %531 : vector<2x32xf32>
    %533 = vector.extract_strided_slice %518 {offsets = [0, 96], sizes = [2, 32], strides = [1, 1]} : vector<2x128xf32> to vector<2x32xf32>
    %534 = arith.negf %533 : vector<2x32xf32>
    %535 = math.exp %534 : vector<2x32xf32>
    %cst_90 = arith.constant 1.000000e+00 : f32
    %536 = vector.broadcast %cst_90 : f32 to vector<2x32xf32>
    %537 = arith.addf %536, %535 : vector<2x32xf32>
    %538 = arith.divf %536, %537 : vector<2x32xf32>
    %539 = arith.mulf %530, %509 : vector<2x32xf32>
    %540 = arith.mulf %524, %532 : vector<2x32xf32>
    %541 = arith.addf %539, %540 : vector<2x32xf32>
    %542 = math.tanh %541 : vector<2x32xf32>
    %543 = arith.mulf %538, %542 : vector<2x32xf32>
    %544 = vector.extract_strided_slice %543 {offsets = [0, 0], sizes = [2, 16], strides = [1, 1]} : vector<2x32xf32> to vector<2x16xf32>
    %545 = vector.extract_strided_slice %543 {offsets = [0, 16], sizes = [2, 16], strides = [1, 1]} : vector<2x32xf32> to vector<2x16xf32>
    %546 = arith.addf %311, %312 : vector<2x128xf32>
    %547 = vector.broadcast %301 : vector<1x128xf32> to vector<2x128xf32>
    %548 = arith.addf %546, %547 : vector<2x128xf32>
    %cst_91 = arith.constant dense<0.000000e+00> : vector<2x128xf32>
    %549 = tpu.matmul %543, %299, %cst_91 {dimension_numbers = #tpu.dot_dimension_numbers<[1], [0], [0], [1], [0, 0, 1, 1], [], []>} : vector<2x32xf32>, vector<32x128xf32>, vector<2x128xf32> -> vector<2x128xf32>
    %550 = arith.addf %548, %549 : vector<2x128xf32>
    %551 = vector.extract_strided_slice %550 {offsets = [0, 0], sizes = [2, 32], strides = [1, 1]} : vector<2x128xf32> to vector<2x32xf32>
    %552 = arith.negf %551 : vector<2x32xf32>
    %553 = math.exp %552 : vector<2x32xf32>
    %cst_92 = arith.constant 1.000000e+00 : f32
    %554 = vector.broadcast %cst_92 : f32 to vector<2x32xf32>
    %555 = arith.addf %554, %553 : vector<2x32xf32>
    %556 = arith.divf %554, %555 : vector<2x32xf32>
    %557 = vector.extract_strided_slice %550 {offsets = [0, 32], sizes = [2, 32], strides = [1, 1]} : vector<2x128xf32> to vector<2x32xf32>
    %558 = arith.negf %557 : vector<2x32xf32>
    %559 = math.exp %558 : vector<2x32xf32>
    %cst_93 = arith.constant 1.000000e+00 : f32
    %560 = vector.broadcast %cst_93 : f32 to vector<2x32xf32>
    %561 = arith.addf %560, %559 : vector<2x32xf32>
    %562 = arith.divf %560, %561 : vector<2x32xf32>
    %563 = vector.extract_strided_slice %550 {offsets = [0, 64], sizes = [2, 32], strides = [1, 1]} : vector<2x128xf32> to vector<2x32xf32>
    %564 = math.tanh %563 : vector<2x32xf32>
    %565 = vector.extract_strided_slice %550 {offsets = [0, 96], sizes = [2, 32], strides = [1, 1]} : vector<2x128xf32> to vector<2x32xf32>
    %566 = arith.negf %565 : vector<2x32xf32>
    %567 = math.exp %566 : vector<2x32xf32>
    %cst_94 = arith.constant 1.000000e+00 : f32
    %568 = vector.broadcast %cst_94 : f32 to vector<2x32xf32>
    %569 = arith.addf %568, %567 : vector<2x32xf32>
    %570 = arith.divf %568, %569 : vector<2x32xf32>
    %571 = arith.mulf %562, %541 : vector<2x32xf32>
    %572 = arith.mulf %556, %564 : vector<2x32xf32>
    %573 = arith.addf %571, %572 : vector<2x32xf32>
    %574 = math.tanh %573 : vector<2x32xf32>
    %575 = arith.mulf %570, %574 : vector<2x32xf32>
    %576 = vector.extract_strided_slice %575 {offsets = [0, 0], sizes = [2, 16], strides = [1, 1]} : vector<2x32xf32> to vector<2x16xf32>
    %577 = vector.extract_strided_slice %575 {offsets = [0, 16], sizes = [2, 16], strides = [1, 1]} : vector<2x32xf32> to vector<2x16xf32>
    %578 = tpu.concatenate %352, %577 in 1 : vector<2x16xf32>, vector<2x16xf32> -> vector<2x32xf32>
    %579 = tpu.concatenate %384, %545 in 1 : vector<2x16xf32>, vector<2x16xf32> -> vector<2x32xf32>
    %580 = tpu.concatenate %416, %513 in 1 : vector<2x16xf32>, vector<2x16xf32> -> vector<2x32xf32>
    %581 = tpu.concatenate %448, %481 in 1 : vector<2x16xf32>, vector<2x16xf32> -> vector<2x32xf32>
    %582 = tpu.concatenate %480, %449 in 1 : vector<2x16xf32>, vector<2x16xf32> -> vector<2x32xf32>
    %583 = tpu.concatenate %512, %417 in 1 : vector<2x16xf32>, vector<2x16xf32> -> vector<2x32xf32>
    %584 = tpu.concatenate %544, %385 in 1 : vector<2x16xf32>, vector<2x16xf32> -> vector<2x32xf32>
    %585 = tpu.concatenate %576, %353 in 1 : vector<2x16xf32>, vector<2x16xf32> -> vector<2x32xf32>
    %586 = tpu.concatenate %578, %579, %580, %581, %582, %583, %584, %585 in 0 : vector<2x32xf32>, vector<2x32xf32>, vector<2x32xf32>, vector<2x32xf32>, vector<2x32xf32>, vector<2x32xf32>, vector<2x32xf32>, vector<2x32xf32> -> vector<16x32xf32>
    %587 = tpu.transpose %586, [1, 0] : vector<16x32xf32> -> vector<32x16xf32>
    %c0_95 = arith.constant 0 : index
    %c0_96 = arith.constant 0 : index
    %588 = vector.load %arg2[%c0_95, %c0_96] : memref<2x16xf32, #tpu.memory_space<vmem>>, vector<2x16xf32>
    %c0_97 = arith.constant 0 : index
    %c0_98 = arith.constant 0 : index
    %589 = vector.load %arg1[%c0_97, %c0_98] : memref<16x16xf32, #tpu.memory_space<vmem>>, vector<16x16xf32>
    %c0_99 = arith.constant 0 : index
    %c0_100 = arith.constant 0 : index
    %590 = vector.load %arg7[%c0_99, %c0_100] : memref<16x128xf32, #tpu.memory_space<vmem>>, vector<16x128xf32>
    %cst_101 = arith.constant dense<0.000000e+00> : vector<16x128xf32>
    %591 = tpu.matmul %589, %590, %cst_101 {dimension_numbers = #tpu.dot_dimension_numbers<[1], [0], [0], [1], [0, 0, 1, 1], [], []>} : vector<16x16xf32>, vector<16x128xf32>, vector<16x128xf32> -> vector<16x128xf32>
    %592 = vector.extract_strided_slice %591 {offsets = [0, 0], sizes = [2, 128], strides = [1, 1]} : vector<16x128xf32> to vector<2x128xf32>
    %593 = vector.extract_strided_slice %591 {offsets = [2, 0], sizes = [2, 128], strides = [1, 1]} : vector<16x128xf32> to vector<2x128xf32>
    %594 = vector.extract_strided_slice %591 {offsets = [4, 0], sizes = [2, 128], strides = [1, 1]} : vector<16x128xf32> to vector<2x128xf32>
    %595 = vector.extract_strided_slice %591 {offsets = [6, 0], sizes = [2, 128], strides = [1, 1]} : vector<16x128xf32> to vector<2x128xf32>
    %596 = vector.extract_strided_slice %591 {offsets = [8, 0], sizes = [2, 128], strides = [1, 1]} : vector<16x128xf32> to vector<2x128xf32>
    %597 = vector.extract_strided_slice %591 {offsets = [10, 0], sizes = [2, 128], strides = [1, 1]} : vector<16x128xf32> to vector<2x128xf32>
    %598 = vector.extract_strided_slice %591 {offsets = [12, 0], sizes = [2, 128], strides = [1, 1]} : vector<16x128xf32> to vector<2x128xf32>
    %599 = vector.extract_strided_slice %591 {offsets = [14, 0], sizes = [2, 128], strides = [1, 1]} : vector<16x128xf32> to vector<2x128xf32>
    %c0_102 = arith.constant 0 : index
    %c0_103 = arith.constant 0 : index
    %600 = vector.load %arg11[%c0_102, %c0_103] : memref<32x32xf32, #tpu.memory_space<vmem>>, vector<32x32xf32>
    %c0_104 = arith.constant 0 : index
    %c0_105 = arith.constant 0 : index
    %601 = vector.load %arg12[%c0_104, %c0_105] : memref<64x32xf32, #tpu.memory_space<vmem>>, vector<64x32xf32>
    %c0_106 = arith.constant 0 : index
    %c0_107 = arith.constant 0 : index
    %602 = vector.load %arg13[%c0_106, %c0_107] : memref<1x32xf32, #tpu.memory_space<vmem>>, vector<1x32xf32>
    %cst_108 = arith.constant 0.000000e+00 : f32
    %603 = vector.broadcast %cst_108 : f32 to vector<2x32xf32>
    %c0_109 = arith.constant 0 : index
    %c0_110 = arith.constant 0 : index
    %c0_111 = arith.constant 0 : index
    %604 = vector.load %arg8[%c0_109, %c0_110, %c0_111] : memref<2x32x128xf32, #tpu.memory_space<vmem>>, vector<1x32x128xf32>
    %605 = vector.shape_cast %604 : vector<1x32x128xf32> to vector<32x128xf32>
    %cst_112 = arith.constant dense<0.000000e+00> : vector<2x128xf32>
    %606 = tpu.matmul %603, %605, %cst_112 {dimension_numbers = #tpu.dot_dimension_numbers<[1], [0], [0], [1], [0, 0, 1, 1], [], []>} : vector<2x32xf32>, vector<32x128xf32>, vector<2x128xf32> -> vector<2x128xf32>
    %c0_113 = arith.constant 0 : index
    %c0_114 = arith.constant 0 : index
    %c0_115 = arith.constant 0 : index
    %607 = vector.load %arg9[%c0_113, %c0_114, %c0_115] : memref<2x32x128xf32, #tpu.memory_space<vmem>>, vector<1x32x128xf32>
    %608 = vector.shape_cast %607 : vector<1x32x128xf32> to vector<32x128xf32>
    %cst_116 = arith.constant dense<0.000000e+00> : vector<2x128xf32>
    %609 = tpu.matmul %282, %608, %cst_116 {dimension_numbers = #tpu.dot_dimension_numbers<[1], [0], [0], [1], [0, 0, 1, 1], [], []>} : vector<2x32xf32>, vector<32x128xf32>, vector<2x128xf32> -> vector<2x128xf32>
    %610 = arith.addf %606, %609 : vector<2x128xf32>
    %c0_117 = arith.constant 0 : index
    %c0_118 = arith.constant 0 : index
    %c0_119 = arith.constant 0 : index
    %611 = vector.load %arg10[%c0_117, %c0_118, %c0_119] : memref<2x1x128xf32, #tpu.memory_space<vmem>>, vector<1x1x128xf32>
    %612 = vector.shape_cast %611 : vector<1x1x128xf32> to vector<1x128xf32>
    %613 = vector.broadcast %612 : vector<1x128xf32> to vector<2x128xf32>
    %614 = arith.addf %610, %613 : vector<2x128xf32>
    %615 = arith.addf %614, %592 : vector<2x128xf32>
    %616 = vector.extract_strided_slice %615 {offsets = [0, 0], sizes = [2, 32], strides = [1, 1]} : vector<2x128xf32> to vector<2x32xf32>
    %617 = arith.negf %616 : vector<2x32xf32>
    %618 = math.exp %617 : vector<2x32xf32>
    %cst_120 = arith.constant 1.000000e+00 : f32
    %619 = vector.broadcast %cst_120 : f32 to vector<2x32xf32>
    %620 = arith.addf %619, %618 : vector<2x32xf32>
    %621 = arith.divf %619, %620 : vector<2x32xf32>
    %622 = vector.extract_strided_slice %615 {offsets = [0, 32], sizes = [2, 32], strides = [1, 1]} : vector<2x128xf32> to vector<2x32xf32>
    %623 = arith.negf %622 : vector<2x32xf32>
    %624 = math.exp %623 : vector<2x32xf32>
    %cst_121 = arith.constant 1.000000e+00 : f32
    %625 = vector.broadcast %cst_121 : f32 to vector<2x32xf32>
    %626 = arith.addf %625, %624 : vector<2x32xf32>
    %627 = arith.divf %625, %626 : vector<2x32xf32>
    %628 = vector.extract_strided_slice %615 {offsets = [0, 64], sizes = [2, 32], strides = [1, 1]} : vector<2x128xf32> to vector<2x32xf32>
    %629 = math.tanh %628 : vector<2x32xf32>
    %630 = vector.extract_strided_slice %615 {offsets = [0, 96], sizes = [2, 32], strides = [1, 1]} : vector<2x128xf32> to vector<2x32xf32>
    %631 = arith.negf %630 : vector<2x32xf32>
    %632 = math.exp %631 : vector<2x32xf32>
    %cst_122 = arith.constant 1.000000e+00 : f32
    %633 = vector.broadcast %cst_122 : f32 to vector<2x32xf32>
    %634 = arith.addf %633, %632 : vector<2x32xf32>
    %635 = arith.divf %633, %634 : vector<2x32xf32>
    %636 = arith.mulf %627, %280 : vector<2x32xf32>
    %637 = arith.mulf %621, %629 : vector<2x32xf32>
    %638 = arith.addf %636, %637 : vector<2x32xf32>
    %639 = math.tanh %638 : vector<2x32xf32>
    %640 = arith.mulf %635, %639 : vector<2x32xf32>
    %c1_123 = arith.constant 1 : index
    %c0_124 = arith.constant 0 : index
    %c0_125 = arith.constant 0 : index
    %641 = vector.load %arg8[%c1_123, %c0_124, %c0_125] : memref<2x32x128xf32, #tpu.memory_space<vmem>>, vector<1x32x128xf32>
    %642 = vector.shape_cast %641 : vector<1x32x128xf32> to vector<32x128xf32>
    %cst_126 = arith.constant dense<0.000000e+00> : vector<2x128xf32>
    %643 = tpu.matmul %640, %642, %cst_126 {dimension_numbers = #tpu.dot_dimension_numbers<[1], [0], [0], [1], [0, 0, 1, 1], [], []>} : vector<2x32xf32>, vector<32x128xf32>, vector<2x128xf32> -> vector<2x128xf32>
    %c1_127 = arith.constant 1 : index
    %c0_128 = arith.constant 0 : index
    %c0_129 = arith.constant 0 : index
    %644 = vector.load %arg9[%c1_127, %c0_128, %c0_129] : memref<2x32x128xf32, #tpu.memory_space<vmem>>, vector<1x32x128xf32>
    %645 = vector.shape_cast %644 : vector<1x32x128xf32> to vector<32x128xf32>
    %cst_130 = arith.constant dense<0.000000e+00> : vector<2x128xf32>
    %646 = tpu.matmul %575, %645, %cst_130 {dimension_numbers = #tpu.dot_dimension_numbers<[1], [0], [0], [1], [0, 0, 1, 1], [], []>} : vector<2x32xf32>, vector<32x128xf32>, vector<2x128xf32> -> vector<2x128xf32>
    %647 = arith.addf %643, %646 : vector<2x128xf32>
    %c1_131 = arith.constant 1 : index
    %c0_132 = arith.constant 0 : index
    %c0_133 = arith.constant 0 : index
    %648 = vector.load %arg10[%c1_131, %c0_132, %c0_133] : memref<2x1x128xf32, #tpu.memory_space<vmem>>, vector<1x1x128xf32>
    %649 = vector.shape_cast %648 : vector<1x1x128xf32> to vector<1x128xf32>
    %650 = vector.broadcast %649 : vector<1x128xf32> to vector<2x128xf32>
    %651 = arith.addf %647, %650 : vector<2x128xf32>
    %652 = vector.extract_strided_slice %651 {offsets = [0, 0], sizes = [2, 32], strides = [1, 1]} : vector<2x128xf32> to vector<2x32xf32>
    %653 = arith.negf %652 : vector<2x32xf32>
    %654 = math.exp %653 : vector<2x32xf32>
    %cst_134 = arith.constant 1.000000e+00 : f32
    %655 = vector.broadcast %cst_134 : f32 to vector<2x32xf32>
    %656 = arith.addf %655, %654 : vector<2x32xf32>
    %657 = arith.divf %655, %656 : vector<2x32xf32>
    %658 = vector.extract_strided_slice %651 {offsets = [0, 32], sizes = [2, 32], strides = [1, 1]} : vector<2x128xf32> to vector<2x32xf32>
    %659 = arith.negf %658 : vector<2x32xf32>
    %660 = math.exp %659 : vector<2x32xf32>
    %cst_135 = arith.constant 1.000000e+00 : f32
    %661 = vector.broadcast %cst_135 : f32 to vector<2x32xf32>
    %662 = arith.addf %661, %660 : vector<2x32xf32>
    %663 = arith.divf %661, %662 : vector<2x32xf32>
    %664 = vector.extract_strided_slice %651 {offsets = [0, 64], sizes = [2, 32], strides = [1, 1]} : vector<2x128xf32> to vector<2x32xf32>
    %665 = math.tanh %664 : vector<2x32xf32>
    %666 = vector.extract_strided_slice %651 {offsets = [0, 96], sizes = [2, 32], strides = [1, 1]} : vector<2x128xf32> to vector<2x32xf32>
    %667 = arith.negf %666 : vector<2x32xf32>
    %668 = math.exp %667 : vector<2x32xf32>
    %cst_136 = arith.constant 1.000000e+00 : f32
    %669 = vector.broadcast %cst_136 : f32 to vector<2x32xf32>
    %670 = arith.addf %669, %668 : vector<2x32xf32>
    %671 = arith.divf %669, %670 : vector<2x32xf32>
    %672 = arith.mulf %663, %573 : vector<2x32xf32>
    %673 = arith.mulf %657, %665 : vector<2x32xf32>
    %674 = arith.addf %672, %673 : vector<2x32xf32>
    %675 = math.tanh %674 : vector<2x32xf32>
    %676 = arith.mulf %671, %675 : vector<2x32xf32>
    %cst_137 = arith.constant dense<0.000000e+00> : vector<2x32xf32>
    %677 = tpu.matmul %676, %600, %cst_137 {dimension_numbers = #tpu.dot_dimension_numbers<[1], [0], [0], [1], [0, 0, 1, 1], [], []>} : vector<2x32xf32>, vector<32x32xf32>, vector<2x32xf32> -> vector<2x32xf32>
    %cst_138 = arith.constant dense<0.000000e+00> : vector<2x16xf32>
    %678 = tpu.matmul %677, %587, %cst_138 {dimension_numbers = #tpu.dot_dimension_numbers<[1], [0], [0], [1], [0, 0, 1, 1], [], []>} : vector<2x32xf32>, vector<32x16xf32>, vector<2x16xf32> -> vector<2x16xf32>
    %679 = arith.addf %678, %588 : vector<2x16xf32>
    %cst_139 = arith.constant dense<0xFF800000> : vector<2xf32>
    %680 = vector.multi_reduction <maximumf>, %679, %cst_139 [1] : vector<2x16xf32> to vector<2xf32>
    %681 = vector.shape_cast %680 : vector<2xf32> to vector<2x1xf32>
    %682 = vector.broadcast %681 : vector<2x1xf32> to vector<2x16xf32>
    %683 = arith.subf %679, %682 : vector<2x16xf32>
    %684 = math.exp %683 : vector<2x16xf32>
    %cst_140 = arith.constant dense<0.000000e+00> : vector<2xf32>
    %685 = vector.multi_reduction <add>, %684, %cst_140 [1] : vector<2x16xf32> to vector<2xf32>
    %686 = vector.shape_cast %685 : vector<2xf32> to vector<2x1xf32>
    %687 = vector.broadcast %686 : vector<2x1xf32> to vector<2x16xf32>
    %688 = arith.divf %684, %687 : vector<2x16xf32>
    %cst_141 = arith.constant dense<0.000000e+00> : vector<2x32xf32>
    %689 = tpu.matmul %688, %586, %cst_141 {dimension_numbers = #tpu.dot_dimension_numbers<[1], [0], [0], [1], [0, 0, 1, 1], [], []>} : vector<2x16xf32>, vector<16x32xf32>, vector<2x32xf32> -> vector<2x32xf32>
    %690 = tpu.concatenate %676, %689 in 1 : vector<2x32xf32>, vector<2x32xf32> -> vector<2x64xf32>
    %cst_142 = arith.constant dense<0.000000e+00> : vector<2x32xf32>
    %691 = tpu.matmul %690, %601, %cst_142 {dimension_numbers = #tpu.dot_dimension_numbers<[1], [0], [0], [1], [0, 0, 1, 1], [], []>} : vector<2x64xf32>, vector<64x32xf32>, vector<2x32xf32> -> vector<2x32xf32>
    %692 = vector.broadcast %602 : vector<1x32xf32> to vector<2x32xf32>
    %693 = arith.addf %691, %692 : vector<2x32xf32>
    %694 = math.tanh %693 : vector<2x32xf32>
    %c0_143 = arith.constant 0 : index
    %c0_144 = arith.constant 0 : index
    %c0_145 = arith.constant 0 : index
    %695 = vector.load %arg8[%c0_143, %c0_144, %c0_145] : memref<2x32x128xf32, #tpu.memory_space<vmem>>, vector<1x32x128xf32>
    %696 = vector.shape_cast %695 : vector<1x32x128xf32> to vector<32x128xf32>
    %cst_146 = arith.constant dense<0.000000e+00> : vector<2x128xf32>
    %697 = tpu.matmul %694, %696, %cst_146 {dimension_numbers = #tpu.dot_dimension_numbers<[1], [0], [0], [1], [0, 0, 1, 1], [], []>} : vector<2x32xf32>, vector<32x128xf32>, vector<2x128xf32> -> vector<2x128xf32>
    %c0_147 = arith.constant 0 : index
    %c0_148 = arith.constant 0 : index
    %c0_149 = arith.constant 0 : index
    %698 = vector.load %arg9[%c0_147, %c0_148, %c0_149] : memref<2x32x128xf32, #tpu.memory_space<vmem>>, vector<1x32x128xf32>
    %699 = vector.shape_cast %698 : vector<1x32x128xf32> to vector<32x128xf32>
    %cst_150 = arith.constant dense<0.000000e+00> : vector<2x128xf32>
    %700 = tpu.matmul %640, %699, %cst_150 {dimension_numbers = #tpu.dot_dimension_numbers<[1], [0], [0], [1], [0, 0, 1, 1], [], []>} : vector<2x32xf32>, vector<32x128xf32>, vector<2x128xf32> -> vector<2x128xf32>
    %701 = arith.addf %697, %700 : vector<2x128xf32>
    %c0_151 = arith.constant 0 : index
    %c0_152 = arith.constant 0 : index
    %c0_153 = arith.constant 0 : index
    %702 = vector.load %arg10[%c0_151, %c0_152, %c0_153] : memref<2x1x128xf32, #tpu.memory_space<vmem>>, vector<1x1x128xf32>
    %703 = vector.shape_cast %702 : vector<1x1x128xf32> to vector<1x128xf32>
    %704 = vector.broadcast %703 : vector<1x128xf32> to vector<2x128xf32>
    %705 = arith.addf %701, %704 : vector<2x128xf32>
    %706 = arith.addf %705, %593 : vector<2x128xf32>
    %707 = vector.extract_strided_slice %706 {offsets = [0, 0], sizes = [2, 32], strides = [1, 1]} : vector<2x128xf32> to vector<2x32xf32>
    %708 = arith.negf %707 : vector<2x32xf32>
    %709 = math.exp %708 : vector<2x32xf32>
    %cst_154 = arith.constant 1.000000e+00 : f32
    %710 = vector.broadcast %cst_154 : f32 to vector<2x32xf32>
    %711 = arith.addf %710, %709 : vector<2x32xf32>
    %712 = arith.divf %710, %711 : vector<2x32xf32>
    %713 = vector.extract_strided_slice %706 {offsets = [0, 32], sizes = [2, 32], strides = [1, 1]} : vector<2x128xf32> to vector<2x32xf32>
    %714 = arith.negf %713 : vector<2x32xf32>
    %715 = math.exp %714 : vector<2x32xf32>
    %cst_155 = arith.constant 1.000000e+00 : f32
    %716 = vector.broadcast %cst_155 : f32 to vector<2x32xf32>
    %717 = arith.addf %716, %715 : vector<2x32xf32>
    %718 = arith.divf %716, %717 : vector<2x32xf32>
    %719 = vector.extract_strided_slice %706 {offsets = [0, 64], sizes = [2, 32], strides = [1, 1]} : vector<2x128xf32> to vector<2x32xf32>
    %720 = math.tanh %719 : vector<2x32xf32>
    %721 = vector.extract_strided_slice %706 {offsets = [0, 96], sizes = [2, 32], strides = [1, 1]} : vector<2x128xf32> to vector<2x32xf32>
    %722 = arith.negf %721 : vector<2x32xf32>
    %723 = math.exp %722 : vector<2x32xf32>
    %cst_156 = arith.constant 1.000000e+00 : f32
    %724 = vector.broadcast %cst_156 : f32 to vector<2x32xf32>
    %725 = arith.addf %724, %723 : vector<2x32xf32>
    %726 = arith.divf %724, %725 : vector<2x32xf32>
    %727 = arith.mulf %718, %638 : vector<2x32xf32>
    %728 = arith.mulf %712, %720 : vector<2x32xf32>
    %729 = arith.addf %727, %728 : vector<2x32xf32>
    %730 = math.tanh %729 : vector<2x32xf32>
    %731 = arith.mulf %726, %730 : vector<2x32xf32>
    %c1_157 = arith.constant 1 : index
    %c0_158 = arith.constant 0 : index
    %c0_159 = arith.constant 0 : index
    %732 = vector.load %arg8[%c1_157, %c0_158, %c0_159] : memref<2x32x128xf32, #tpu.memory_space<vmem>>, vector<1x32x128xf32>
    %733 = vector.shape_cast %732 : vector<1x32x128xf32> to vector<32x128xf32>
    %cst_160 = arith.constant dense<0.000000e+00> : vector<2x128xf32>
    %734 = tpu.matmul %731, %733, %cst_160 {dimension_numbers = #tpu.dot_dimension_numbers<[1], [0], [0], [1], [0, 0, 1, 1], [], []>} : vector<2x32xf32>, vector<32x128xf32>, vector<2x128xf32> -> vector<2x128xf32>
    %c1_161 = arith.constant 1 : index
    %c0_162 = arith.constant 0 : index
    %c0_163 = arith.constant 0 : index
    %735 = vector.load %arg9[%c1_161, %c0_162, %c0_163] : memref<2x32x128xf32, #tpu.memory_space<vmem>>, vector<1x32x128xf32>
    %736 = vector.shape_cast %735 : vector<1x32x128xf32> to vector<32x128xf32>
    %cst_164 = arith.constant dense<0.000000e+00> : vector<2x128xf32>
    %737 = tpu.matmul %676, %736, %cst_164 {dimension_numbers = #tpu.dot_dimension_numbers<[1], [0], [0], [1], [0, 0, 1, 1], [], []>} : vector<2x32xf32>, vector<32x128xf32>, vector<2x128xf32> -> vector<2x128xf32>
    %738 = arith.addf %734, %737 : vector<2x128xf32>
    %c1_165 = arith.constant 1 : index
    %c0_166 = arith.constant 0 : index
    %c0_167 = arith.constant 0 : index
    %739 = vector.load %arg10[%c1_165, %c0_166, %c0_167] : memref<2x1x128xf32, #tpu.memory_space<vmem>>, vector<1x1x128xf32>
    %740 = vector.shape_cast %739 : vector<1x1x128xf32> to vector<1x128xf32>
    %741 = vector.broadcast %740 : vector<1x128xf32> to vector<2x128xf32>
    %742 = arith.addf %738, %741 : vector<2x128xf32>
    %743 = vector.extract_strided_slice %742 {offsets = [0, 0], sizes = [2, 32], strides = [1, 1]} : vector<2x128xf32> to vector<2x32xf32>
    %744 = arith.negf %743 : vector<2x32xf32>
    %745 = math.exp %744 : vector<2x32xf32>
    %cst_168 = arith.constant 1.000000e+00 : f32
    %746 = vector.broadcast %cst_168 : f32 to vector<2x32xf32>
    %747 = arith.addf %746, %745 : vector<2x32xf32>
    %748 = arith.divf %746, %747 : vector<2x32xf32>
    %749 = vector.extract_strided_slice %742 {offsets = [0, 32], sizes = [2, 32], strides = [1, 1]} : vector<2x128xf32> to vector<2x32xf32>
    %750 = arith.negf %749 : vector<2x32xf32>
    %751 = math.exp %750 : vector<2x32xf32>
    %cst_169 = arith.constant 1.000000e+00 : f32
    %752 = vector.broadcast %cst_169 : f32 to vector<2x32xf32>
    %753 = arith.addf %752, %751 : vector<2x32xf32>
    %754 = arith.divf %752, %753 : vector<2x32xf32>
    %755 = vector.extract_strided_slice %742 {offsets = [0, 64], sizes = [2, 32], strides = [1, 1]} : vector<2x128xf32> to vector<2x32xf32>
    %756 = math.tanh %755 : vector<2x32xf32>
    %757 = vector.extract_strided_slice %742 {offsets = [0, 96], sizes = [2, 32], strides = [1, 1]} : vector<2x128xf32> to vector<2x32xf32>
    %758 = arith.negf %757 : vector<2x32xf32>
    %759 = math.exp %758 : vector<2x32xf32>
    %cst_170 = arith.constant 1.000000e+00 : f32
    %760 = vector.broadcast %cst_170 : f32 to vector<2x32xf32>
    %761 = arith.addf %760, %759 : vector<2x32xf32>
    %762 = arith.divf %760, %761 : vector<2x32xf32>
    %763 = arith.mulf %754, %674 : vector<2x32xf32>
    %764 = arith.mulf %748, %756 : vector<2x32xf32>
    %765 = arith.addf %763, %764 : vector<2x32xf32>
    %766 = math.tanh %765 : vector<2x32xf32>
    %767 = arith.mulf %762, %766 : vector<2x32xf32>
    %cst_171 = arith.constant dense<0.000000e+00> : vector<2x32xf32>
    %768 = tpu.matmul %767, %600, %cst_171 {dimension_numbers = #tpu.dot_dimension_numbers<[1], [0], [0], [1], [0, 0, 1, 1], [], []>} : vector<2x32xf32>, vector<32x32xf32>, vector<2x32xf32> -> vector<2x32xf32>
    %cst_172 = arith.constant dense<0.000000e+00> : vector<2x16xf32>
    %769 = tpu.matmul %768, %587, %cst_172 {dimension_numbers = #tpu.dot_dimension_numbers<[1], [0], [0], [1], [0, 0, 1, 1], [], []>} : vector<2x32xf32>, vector<32x16xf32>, vector<2x16xf32> -> vector<2x16xf32>
    %770 = arith.addf %769, %588 : vector<2x16xf32>
    %cst_173 = arith.constant dense<0xFF800000> : vector<2xf32>
    %771 = vector.multi_reduction <maximumf>, %770, %cst_173 [1] : vector<2x16xf32> to vector<2xf32>
    %772 = vector.shape_cast %771 : vector<2xf32> to vector<2x1xf32>
    %773 = vector.broadcast %772 : vector<2x1xf32> to vector<2x16xf32>
    %774 = arith.subf %770, %773 : vector<2x16xf32>
    %775 = math.exp %774 : vector<2x16xf32>
    %cst_174 = arith.constant dense<0.000000e+00> : vector<2xf32>
    %776 = vector.multi_reduction <add>, %775, %cst_174 [1] : vector<2x16xf32> to vector<2xf32>
    %777 = vector.shape_cast %776 : vector<2xf32> to vector<2x1xf32>
    %778 = vector.broadcast %777 : vector<2x1xf32> to vector<2x16xf32>
    %779 = arith.divf %775, %778 : vector<2x16xf32>
    %cst_175 = arith.constant dense<0.000000e+00> : vector<2x32xf32>
    %780 = tpu.matmul %779, %586, %cst_175 {dimension_numbers = #tpu.dot_dimension_numbers<[1], [0], [0], [1], [0, 0, 1, 1], [], []>} : vector<2x16xf32>, vector<16x32xf32>, vector<2x32xf32> -> vector<2x32xf32>
    %781 = tpu.concatenate %767, %780 in 1 : vector<2x32xf32>, vector<2x32xf32> -> vector<2x64xf32>
    %cst_176 = arith.constant dense<0.000000e+00> : vector<2x32xf32>
    %782 = tpu.matmul %781, %601, %cst_176 {dimension_numbers = #tpu.dot_dimension_numbers<[1], [0], [0], [1], [0, 0, 1, 1], [], []>} : vector<2x64xf32>, vector<64x32xf32>, vector<2x32xf32> -> vector<2x32xf32>
    %783 = vector.broadcast %602 : vector<1x32xf32> to vector<2x32xf32>
    %784 = arith.addf %782, %783 : vector<2x32xf32>
    %785 = math.tanh %784 : vector<2x32xf32>
    %c0_177 = arith.constant 0 : index
    %c0_178 = arith.constant 0 : index
    %c0_179 = arith.constant 0 : index
    %786 = vector.load %arg8[%c0_177, %c0_178, %c0_179] : memref<2x32x128xf32, #tpu.memory_space<vmem>>, vector<1x32x128xf32>
    %787 = vector.shape_cast %786 : vector<1x32x128xf32> to vector<32x128xf32>
    %cst_180 = arith.constant dense<0.000000e+00> : vector<2x128xf32>
    %788 = tpu.matmul %785, %787, %cst_180 {dimension_numbers = #tpu.dot_dimension_numbers<[1], [0], [0], [1], [0, 0, 1, 1], [], []>} : vector<2x32xf32>, vector<32x128xf32>, vector<2x128xf32> -> vector<2x128xf32>
    %c0_181 = arith.constant 0 : index
    %c0_182 = arith.constant 0 : index
    %c0_183 = arith.constant 0 : index
    %789 = vector.load %arg9[%c0_181, %c0_182, %c0_183] : memref<2x32x128xf32, #tpu.memory_space<vmem>>, vector<1x32x128xf32>
    %790 = vector.shape_cast %789 : vector<1x32x128xf32> to vector<32x128xf32>
    %cst_184 = arith.constant dense<0.000000e+00> : vector<2x128xf32>
    %791 = tpu.matmul %731, %790, %cst_184 {dimension_numbers = #tpu.dot_dimension_numbers<[1], [0], [0], [1], [0, 0, 1, 1], [], []>} : vector<2x32xf32>, vector<32x128xf32>, vector<2x128xf32> -> vector<2x128xf32>
    %792 = arith.addf %788, %791 : vector<2x128xf32>
    %c0_185 = arith.constant 0 : index
    %c0_186 = arith.constant 0 : index
    %c0_187 = arith.constant 0 : index
    %793 = vector.load %arg10[%c0_185, %c0_186, %c0_187] : memref<2x1x128xf32, #tpu.memory_space<vmem>>, vector<1x1x128xf32>
    %794 = vector.shape_cast %793 : vector<1x1x128xf32> to vector<1x128xf32>
    %795 = vector.broadcast %794 : vector<1x128xf32> to vector<2x128xf32>
    %796 = arith.addf %792, %795 : vector<2x128xf32>
    %797 = arith.addf %796, %594 : vector<2x128xf32>
    %798 = vector.extract_strided_slice %797 {offsets = [0, 0], sizes = [2, 32], strides = [1, 1]} : vector<2x128xf32> to vector<2x32xf32>
    %799 = arith.negf %798 : vector<2x32xf32>
    %800 = math.exp %799 : vector<2x32xf32>
    %cst_188 = arith.constant 1.000000e+00 : f32
    %801 = vector.broadcast %cst_188 : f32 to vector<2x32xf32>
    %802 = arith.addf %801, %800 : vector<2x32xf32>
    %803 = arith.divf %801, %802 : vector<2x32xf32>
    %804 = vector.extract_strided_slice %797 {offsets = [0, 32], sizes = [2, 32], strides = [1, 1]} : vector<2x128xf32> to vector<2x32xf32>
    %805 = arith.negf %804 : vector<2x32xf32>
    %806 = math.exp %805 : vector<2x32xf32>
    %cst_189 = arith.constant 1.000000e+00 : f32
    %807 = vector.broadcast %cst_189 : f32 to vector<2x32xf32>
    %808 = arith.addf %807, %806 : vector<2x32xf32>
    %809 = arith.divf %807, %808 : vector<2x32xf32>
    %810 = vector.extract_strided_slice %797 {offsets = [0, 64], sizes = [2, 32], strides = [1, 1]} : vector<2x128xf32> to vector<2x32xf32>
    %811 = math.tanh %810 : vector<2x32xf32>
    %812 = vector.extract_strided_slice %797 {offsets = [0, 96], sizes = [2, 32], strides = [1, 1]} : vector<2x128xf32> to vector<2x32xf32>
    %813 = arith.negf %812 : vector<2x32xf32>
    %814 = math.exp %813 : vector<2x32xf32>
    %cst_190 = arith.constant 1.000000e+00 : f32
    %815 = vector.broadcast %cst_190 : f32 to vector<2x32xf32>
    %816 = arith.addf %815, %814 : vector<2x32xf32>
    %817 = arith.divf %815, %816 : vector<2x32xf32>
    %818 = arith.mulf %809, %729 : vector<2x32xf32>
    %819 = arith.mulf %803, %811 : vector<2x32xf32>
    %820 = arith.addf %818, %819 : vector<2x32xf32>
    %821 = math.tanh %820 : vector<2x32xf32>
    %822 = arith.mulf %817, %821 : vector<2x32xf32>
    %c1_191 = arith.constant 1 : index
    %c0_192 = arith.constant 0 : index
    %c0_193 = arith.constant 0 : index
    %823 = vector.load %arg8[%c1_191, %c0_192, %c0_193] : memref<2x32x128xf32, #tpu.memory_space<vmem>>, vector<1x32x128xf32>
    %824 = vector.shape_cast %823 : vector<1x32x128xf32> to vector<32x128xf32>
    %cst_194 = arith.constant dense<0.000000e+00> : vector<2x128xf32>
    %825 = tpu.matmul %822, %824, %cst_194 {dimension_numbers = #tpu.dot_dimension_numbers<[1], [0], [0], [1], [0, 0, 1, 1], [], []>} : vector<2x32xf32>, vector<32x128xf32>, vector<2x128xf32> -> vector<2x128xf32>
    %c1_195 = arith.constant 1 : index
    %c0_196 = arith.constant 0 : index
    %c0_197 = arith.constant 0 : index
    %826 = vector.load %arg9[%c1_195, %c0_196, %c0_197] : memref<2x32x128xf32, #tpu.memory_space<vmem>>, vector<1x32x128xf32>
    %827 = vector.shape_cast %826 : vector<1x32x128xf32> to vector<32x128xf32>
    %cst_198 = arith.constant dense<0.000000e+00> : vector<2x128xf32>
    %828 = tpu.matmul %767, %827, %cst_198 {dimension_numbers = #tpu.dot_dimension_numbers<[1], [0], [0], [1], [0, 0, 1, 1], [], []>} : vector<2x32xf32>, vector<32x128xf32>, vector<2x128xf32> -> vector<2x128xf32>
    %829 = arith.addf %825, %828 : vector<2x128xf32>
    %c1_199 = arith.constant 1 : index
    %c0_200 = arith.constant 0 : index
    %c0_201 = arith.constant 0 : index
    %830 = vector.load %arg10[%c1_199, %c0_200, %c0_201] : memref<2x1x128xf32, #tpu.memory_space<vmem>>, vector<1x1x128xf32>
    %831 = vector.shape_cast %830 : vector<1x1x128xf32> to vector<1x128xf32>
    %832 = vector.broadcast %831 : vector<1x128xf32> to vector<2x128xf32>
    %833 = arith.addf %829, %832 : vector<2x128xf32>
    %834 = vector.extract_strided_slice %833 {offsets = [0, 0], sizes = [2, 32], strides = [1, 1]} : vector<2x128xf32> to vector<2x32xf32>
    %835 = arith.negf %834 : vector<2x32xf32>
    %836 = math.exp %835 : vector<2x32xf32>
    %cst_202 = arith.constant 1.000000e+00 : f32
    %837 = vector.broadcast %cst_202 : f32 to vector<2x32xf32>
    %838 = arith.addf %837, %836 : vector<2x32xf32>
    %839 = arith.divf %837, %838 : vector<2x32xf32>
    %840 = vector.extract_strided_slice %833 {offsets = [0, 32], sizes = [2, 32], strides = [1, 1]} : vector<2x128xf32> to vector<2x32xf32>
    %841 = arith.negf %840 : vector<2x32xf32>
    %842 = math.exp %841 : vector<2x32xf32>
    %cst_203 = arith.constant 1.000000e+00 : f32
    %843 = vector.broadcast %cst_203 : f32 to vector<2x32xf32>
    %844 = arith.addf %843, %842 : vector<2x32xf32>
    %845 = arith.divf %843, %844 : vector<2x32xf32>
    %846 = vector.extract_strided_slice %833 {offsets = [0, 64], sizes = [2, 32], strides = [1, 1]} : vector<2x128xf32> to vector<2x32xf32>
    %847 = math.tanh %846 : vector<2x32xf32>
    %848 = vector.extract_strided_slice %833 {offsets = [0, 96], sizes = [2, 32], strides = [1, 1]} : vector<2x128xf32> to vector<2x32xf32>
    %849 = arith.negf %848 : vector<2x32xf32>
    %850 = math.exp %849 : vector<2x32xf32>
    %cst_204 = arith.constant 1.000000e+00 : f32
    %851 = vector.broadcast %cst_204 : f32 to vector<2x32xf32>
    %852 = arith.addf %851, %850 : vector<2x32xf32>
    %853 = arith.divf %851, %852 : vector<2x32xf32>
    %854 = arith.mulf %845, %765 : vector<2x32xf32>
    %855 = arith.mulf %839, %847 : vector<2x32xf32>
    %856 = arith.addf %854, %855 : vector<2x32xf32>
    %857 = math.tanh %856 : vector<2x32xf32>
    %858 = arith.mulf %853, %857 : vector<2x32xf32>
    %cst_205 = arith.constant dense<0.000000e+00> : vector<2x32xf32>
    %859 = tpu.matmul %858, %600, %cst_205 {dimension_numbers = #tpu.dot_dimension_numbers<[1], [0], [0], [1], [0, 0, 1, 1], [], []>} : vector<2x32xf32>, vector<32x32xf32>, vector<2x32xf32> -> vector<2x32xf32>
    %cst_206 = arith.constant dense<0.000000e+00> : vector<2x16xf32>
    %860 = tpu.matmul %859, %587, %cst_206 {dimension_numbers = #tpu.dot_dimension_numbers<[1], [0], [0], [1], [0, 0, 1, 1], [], []>} : vector<2x32xf32>, vector<32x16xf32>, vector<2x16xf32> -> vector<2x16xf32>
    %861 = arith.addf %860, %588 : vector<2x16xf32>
    %cst_207 = arith.constant dense<0xFF800000> : vector<2xf32>
    %862 = vector.multi_reduction <maximumf>, %861, %cst_207 [1] : vector<2x16xf32> to vector<2xf32>
    %863 = vector.shape_cast %862 : vector<2xf32> to vector<2x1xf32>
    %864 = vector.broadcast %863 : vector<2x1xf32> to vector<2x16xf32>
    %865 = arith.subf %861, %864 : vector<2x16xf32>
    %866 = math.exp %865 : vector<2x16xf32>
    %cst_208 = arith.constant dense<0.000000e+00> : vector<2xf32>
    %867 = vector.multi_reduction <add>, %866, %cst_208 [1] : vector<2x16xf32> to vector<2xf32>
    %868 = vector.shape_cast %867 : vector<2xf32> to vector<2x1xf32>
    %869 = vector.broadcast %868 : vector<2x1xf32> to vector<2x16xf32>
    %870 = arith.divf %866, %869 : vector<2x16xf32>
    %cst_209 = arith.constant dense<0.000000e+00> : vector<2x32xf32>
    %871 = tpu.matmul %870, %586, %cst_209 {dimension_numbers = #tpu.dot_dimension_numbers<[1], [0], [0], [1], [0, 0, 1, 1], [], []>} : vector<2x16xf32>, vector<16x32xf32>, vector<2x32xf32> -> vector<2x32xf32>
    %872 = tpu.concatenate %858, %871 in 1 : vector<2x32xf32>, vector<2x32xf32> -> vector<2x64xf32>
    %cst_210 = arith.constant dense<0.000000e+00> : vector<2x32xf32>
    %873 = tpu.matmul %872, %601, %cst_210 {dimension_numbers = #tpu.dot_dimension_numbers<[1], [0], [0], [1], [0, 0, 1, 1], [], []>} : vector<2x64xf32>, vector<64x32xf32>, vector<2x32xf32> -> vector<2x32xf32>
    %874 = vector.broadcast %602 : vector<1x32xf32> to vector<2x32xf32>
    %875 = arith.addf %873, %874 : vector<2x32xf32>
    %876 = math.tanh %875 : vector<2x32xf32>
    %c0_211 = arith.constant 0 : index
    %c0_212 = arith.constant 0 : index
    %c0_213 = arith.constant 0 : index
    %877 = vector.load %arg8[%c0_211, %c0_212, %c0_213] : memref<2x32x128xf32, #tpu.memory_space<vmem>>, vector<1x32x128xf32>
    %878 = vector.shape_cast %877 : vector<1x32x128xf32> to vector<32x128xf32>
    %cst_214 = arith.constant dense<0.000000e+00> : vector<2x128xf32>
    %879 = tpu.matmul %876, %878, %cst_214 {dimension_numbers = #tpu.dot_dimension_numbers<[1], [0], [0], [1], [0, 0, 1, 1], [], []>} : vector<2x32xf32>, vector<32x128xf32>, vector<2x128xf32> -> vector<2x128xf32>
    %c0_215 = arith.constant 0 : index
    %c0_216 = arith.constant 0 : index
    %c0_217 = arith.constant 0 : index
    %880 = vector.load %arg9[%c0_215, %c0_216, %c0_217] : memref<2x32x128xf32, #tpu.memory_space<vmem>>, vector<1x32x128xf32>
    %881 = vector.shape_cast %880 : vector<1x32x128xf32> to vector<32x128xf32>
    %cst_218 = arith.constant dense<0.000000e+00> : vector<2x128xf32>
    %882 = tpu.matmul %822, %881, %cst_218 {dimension_numbers = #tpu.dot_dimension_numbers<[1], [0], [0], [1], [0, 0, 1, 1], [], []>} : vector<2x32xf32>, vector<32x128xf32>, vector<2x128xf32> -> vector<2x128xf32>
    %883 = arith.addf %879, %882 : vector<2x128xf32>
    %c0_219 = arith.constant 0 : index
    %c0_220 = arith.constant 0 : index
    %c0_221 = arith.constant 0 : index
    %884 = vector.load %arg10[%c0_219, %c0_220, %c0_221] : memref<2x1x128xf32, #tpu.memory_space<vmem>>, vector<1x1x128xf32>
    %885 = vector.shape_cast %884 : vector<1x1x128xf32> to vector<1x128xf32>
    %886 = vector.broadcast %885 : vector<1x128xf32> to vector<2x128xf32>
    %887 = arith.addf %883, %886 : vector<2x128xf32>
    %888 = arith.addf %887, %595 : vector<2x128xf32>
    %889 = vector.extract_strided_slice %888 {offsets = [0, 0], sizes = [2, 32], strides = [1, 1]} : vector<2x128xf32> to vector<2x32xf32>
    %890 = arith.negf %889 : vector<2x32xf32>
    %891 = math.exp %890 : vector<2x32xf32>
    %cst_222 = arith.constant 1.000000e+00 : f32
    %892 = vector.broadcast %cst_222 : f32 to vector<2x32xf32>
    %893 = arith.addf %892, %891 : vector<2x32xf32>
    %894 = arith.divf %892, %893 : vector<2x32xf32>
    %895 = vector.extract_strided_slice %888 {offsets = [0, 32], sizes = [2, 32], strides = [1, 1]} : vector<2x128xf32> to vector<2x32xf32>
    %896 = arith.negf %895 : vector<2x32xf32>
    %897 = math.exp %896 : vector<2x32xf32>
    %cst_223 = arith.constant 1.000000e+00 : f32
    %898 = vector.broadcast %cst_223 : f32 to vector<2x32xf32>
    %899 = arith.addf %898, %897 : vector<2x32xf32>
    %900 = arith.divf %898, %899 : vector<2x32xf32>
    %901 = vector.extract_strided_slice %888 {offsets = [0, 64], sizes = [2, 32], strides = [1, 1]} : vector<2x128xf32> to vector<2x32xf32>
    %902 = math.tanh %901 : vector<2x32xf32>
    %903 = vector.extract_strided_slice %888 {offsets = [0, 96], sizes = [2, 32], strides = [1, 1]} : vector<2x128xf32> to vector<2x32xf32>
    %904 = arith.negf %903 : vector<2x32xf32>
    %905 = math.exp %904 : vector<2x32xf32>
    %cst_224 = arith.constant 1.000000e+00 : f32
    %906 = vector.broadcast %cst_224 : f32 to vector<2x32xf32>
    %907 = arith.addf %906, %905 : vector<2x32xf32>
    %908 = arith.divf %906, %907 : vector<2x32xf32>
    %909 = arith.mulf %900, %820 : vector<2x32xf32>
    %910 = arith.mulf %894, %902 : vector<2x32xf32>
    %911 = arith.addf %909, %910 : vector<2x32xf32>
    %912 = math.tanh %911 : vector<2x32xf32>
    %913 = arith.mulf %908, %912 : vector<2x32xf32>
    %c1_225 = arith.constant 1 : index
    %c0_226 = arith.constant 0 : index
    %c0_227 = arith.constant 0 : index
    %914 = vector.load %arg8[%c1_225, %c0_226, %c0_227] : memref<2x32x128xf32, #tpu.memory_space<vmem>>, vector<1x32x128xf32>
    %915 = vector.shape_cast %914 : vector<1x32x128xf32> to vector<32x128xf32>
    %cst_228 = arith.constant dense<0.000000e+00> : vector<2x128xf32>
    %916 = tpu.matmul %913, %915, %cst_228 {dimension_numbers = #tpu.dot_dimension_numbers<[1], [0], [0], [1], [0, 0, 1, 1], [], []>} : vector<2x32xf32>, vector<32x128xf32>, vector<2x128xf32> -> vector<2x128xf32>
    %c1_229 = arith.constant 1 : index
    %c0_230 = arith.constant 0 : index
    %c0_231 = arith.constant 0 : index
    %917 = vector.load %arg9[%c1_229, %c0_230, %c0_231] : memref<2x32x128xf32, #tpu.memory_space<vmem>>, vector<1x32x128xf32>
    %918 = vector.shape_cast %917 : vector<1x32x128xf32> to vector<32x128xf32>
    %cst_232 = arith.constant dense<0.000000e+00> : vector<2x128xf32>
    %919 = tpu.matmul %858, %918, %cst_232 {dimension_numbers = #tpu.dot_dimension_numbers<[1], [0], [0], [1], [0, 0, 1, 1], [], []>} : vector<2x32xf32>, vector<32x128xf32>, vector<2x128xf32> -> vector<2x128xf32>
    %920 = arith.addf %916, %919 : vector<2x128xf32>
    %c1_233 = arith.constant 1 : index
    %c0_234 = arith.constant 0 : index
    %c0_235 = arith.constant 0 : index
    %921 = vector.load %arg10[%c1_233, %c0_234, %c0_235] : memref<2x1x128xf32, #tpu.memory_space<vmem>>, vector<1x1x128xf32>
    %922 = vector.shape_cast %921 : vector<1x1x128xf32> to vector<1x128xf32>
    %923 = vector.broadcast %922 : vector<1x128xf32> to vector<2x128xf32>
    %924 = arith.addf %920, %923 : vector<2x128xf32>
    %925 = vector.extract_strided_slice %924 {offsets = [0, 0], sizes = [2, 32], strides = [1, 1]} : vector<2x128xf32> to vector<2x32xf32>
    %926 = arith.negf %925 : vector<2x32xf32>
    %927 = math.exp %926 : vector<2x32xf32>
    %cst_236 = arith.constant 1.000000e+00 : f32
    %928 = vector.broadcast %cst_236 : f32 to vector<2x32xf32>
    %929 = arith.addf %928, %927 : vector<2x32xf32>
    %930 = arith.divf %928, %929 : vector<2x32xf32>
    %931 = vector.extract_strided_slice %924 {offsets = [0, 32], sizes = [2, 32], strides = [1, 1]} : vector<2x128xf32> to vector<2x32xf32>
    %932 = arith.negf %931 : vector<2x32xf32>
    %933 = math.exp %932 : vector<2x32xf32>
    %cst_237 = arith.constant 1.000000e+00 : f32
    %934 = vector.broadcast %cst_237 : f32 to vector<2x32xf32>
    %935 = arith.addf %934, %933 : vector<2x32xf32>
    %936 = arith.divf %934, %935 : vector<2x32xf32>
    %937 = vector.extract_strided_slice %924 {offsets = [0, 64], sizes = [2, 32], strides = [1, 1]} : vector<2x128xf32> to vector<2x32xf32>
    %938 = math.tanh %937 : vector<2x32xf32>
    %939 = vector.extract_strided_slice %924 {offsets = [0, 96], sizes = [2, 32], strides = [1, 1]} : vector<2x128xf32> to vector<2x32xf32>
    %940 = arith.negf %939 : vector<2x32xf32>
    %941 = math.exp %940 : vector<2x32xf32>
    %cst_238 = arith.constant 1.000000e+00 : f32
    %942 = vector.broadcast %cst_238 : f32 to vector<2x32xf32>
    %943 = arith.addf %942, %941 : vector<2x32xf32>
    %944 = arith.divf %942, %943 : vector<2x32xf32>
    %945 = arith.mulf %936, %856 : vector<2x32xf32>
    %946 = arith.mulf %930, %938 : vector<2x32xf32>
    %947 = arith.addf %945, %946 : vector<2x32xf32>
    %948 = math.tanh %947 : vector<2x32xf32>
    %949 = arith.mulf %944, %948 : vector<2x32xf32>
    %cst_239 = arith.constant dense<0.000000e+00> : vector<2x32xf32>
    %950 = tpu.matmul %949, %600, %cst_239 {dimension_numbers = #tpu.dot_dimension_numbers<[1], [0], [0], [1], [0, 0, 1, 1], [], []>} : vector<2x32xf32>, vector<32x32xf32>, vector<2x32xf32> -> vector<2x32xf32>
    %cst_240 = arith.constant dense<0.000000e+00> : vector<2x16xf32>
    %951 = tpu.matmul %950, %587, %cst_240 {dimension_numbers = #tpu.dot_dimension_numbers<[1], [0], [0], [1], [0, 0, 1, 1], [], []>} : vector<2x32xf32>, vector<32x16xf32>, vector<2x16xf32> -> vector<2x16xf32>
    %952 = arith.addf %951, %588 : vector<2x16xf32>
    %cst_241 = arith.constant dense<0xFF800000> : vector<2xf32>
    %953 = vector.multi_reduction <maximumf>, %952, %cst_241 [1] : vector<2x16xf32> to vector<2xf32>
    %954 = vector.shape_cast %953 : vector<2xf32> to vector<2x1xf32>
    %955 = vector.broadcast %954 : vector<2x1xf32> to vector<2x16xf32>
    %956 = arith.subf %952, %955 : vector<2x16xf32>
    %957 = math.exp %956 : vector<2x16xf32>
    %cst_242 = arith.constant dense<0.000000e+00> : vector<2xf32>
    %958 = vector.multi_reduction <add>, %957, %cst_242 [1] : vector<2x16xf32> to vector<2xf32>
    %959 = vector.shape_cast %958 : vector<2xf32> to vector<2x1xf32>
    %960 = vector.broadcast %959 : vector<2x1xf32> to vector<2x16xf32>
    %961 = arith.divf %957, %960 : vector<2x16xf32>
    %cst_243 = arith.constant dense<0.000000e+00> : vector<2x32xf32>
    %962 = tpu.matmul %961, %586, %cst_243 {dimension_numbers = #tpu.dot_dimension_numbers<[1], [0], [0], [1], [0, 0, 1, 1], [], []>} : vector<2x16xf32>, vector<16x32xf32>, vector<2x32xf32> -> vector<2x32xf32>
    %963 = tpu.concatenate %949, %962 in 1 : vector<2x32xf32>, vector<2x32xf32> -> vector<2x64xf32>
    %cst_244 = arith.constant dense<0.000000e+00> : vector<2x32xf32>
    %964 = tpu.matmul %963, %601, %cst_244 {dimension_numbers = #tpu.dot_dimension_numbers<[1], [0], [0], [1], [0, 0, 1, 1], [], []>} : vector<2x64xf32>, vector<64x32xf32>, vector<2x32xf32> -> vector<2x32xf32>
    %965 = vector.broadcast %602 : vector<1x32xf32> to vector<2x32xf32>
    %966 = arith.addf %964, %965 : vector<2x32xf32>
    %967 = math.tanh %966 : vector<2x32xf32>
    %c0_245 = arith.constant 0 : index
    %c0_246 = arith.constant 0 : index
    %c0_247 = arith.constant 0 : index
    %968 = vector.load %arg8[%c0_245, %c0_246, %c0_247] : memref<2x32x128xf32, #tpu.memory_space<vmem>>, vector<1x32x128xf32>
    %969 = vector.shape_cast %968 : vector<1x32x128xf32> to vector<32x128xf32>
    %cst_248 = arith.constant dense<0.000000e+00> : vector<2x128xf32>
    %970 = tpu.matmul %967, %969, %cst_248 {dimension_numbers = #tpu.dot_dimension_numbers<[1], [0], [0], [1], [0, 0, 1, 1], [], []>} : vector<2x32xf32>, vector<32x128xf32>, vector<2x128xf32> -> vector<2x128xf32>
    %c0_249 = arith.constant 0 : index
    %c0_250 = arith.constant 0 : index
    %c0_251 = arith.constant 0 : index
    %971 = vector.load %arg9[%c0_249, %c0_250, %c0_251] : memref<2x32x128xf32, #tpu.memory_space<vmem>>, vector<1x32x128xf32>
    %972 = vector.shape_cast %971 : vector<1x32x128xf32> to vector<32x128xf32>
    %cst_252 = arith.constant dense<0.000000e+00> : vector<2x128xf32>
    %973 = tpu.matmul %913, %972, %cst_252 {dimension_numbers = #tpu.dot_dimension_numbers<[1], [0], [0], [1], [0, 0, 1, 1], [], []>} : vector<2x32xf32>, vector<32x128xf32>, vector<2x128xf32> -> vector<2x128xf32>
    %974 = arith.addf %970, %973 : vector<2x128xf32>
    %c0_253 = arith.constant 0 : index
    %c0_254 = arith.constant 0 : index
    %c0_255 = arith.constant 0 : index
    %975 = vector.load %arg10[%c0_253, %c0_254, %c0_255] : memref<2x1x128xf32, #tpu.memory_space<vmem>>, vector<1x1x128xf32>
    %976 = vector.shape_cast %975 : vector<1x1x128xf32> to vector<1x128xf32>
    %977 = vector.broadcast %976 : vector<1x128xf32> to vector<2x128xf32>
    %978 = arith.addf %974, %977 : vector<2x128xf32>
    %979 = arith.addf %978, %596 : vector<2x128xf32>
    %980 = vector.extract_strided_slice %979 {offsets = [0, 0], sizes = [2, 32], strides = [1, 1]} : vector<2x128xf32> to vector<2x32xf32>
    %981 = arith.negf %980 : vector<2x32xf32>
    %982 = math.exp %981 : vector<2x32xf32>
    %cst_256 = arith.constant 1.000000e+00 : f32
    %983 = vector.broadcast %cst_256 : f32 to vector<2x32xf32>
    %984 = arith.addf %983, %982 : vector<2x32xf32>
    %985 = arith.divf %983, %984 : vector<2x32xf32>
    %986 = vector.extract_strided_slice %979 {offsets = [0, 32], sizes = [2, 32], strides = [1, 1]} : vector<2x128xf32> to vector<2x32xf32>
    %987 = arith.negf %986 : vector<2x32xf32>
    %988 = math.exp %987 : vector<2x32xf32>
    %cst_257 = arith.constant 1.000000e+00 : f32
    %989 = vector.broadcast %cst_257 : f32 to vector<2x32xf32>
    %990 = arith.addf %989, %988 : vector<2x32xf32>
    %991 = arith.divf %989, %990 : vector<2x32xf32>
    %992 = vector.extract_strided_slice %979 {offsets = [0, 64], sizes = [2, 32], strides = [1, 1]} : vector<2x128xf32> to vector<2x32xf32>
    %993 = math.tanh %992 : vector<2x32xf32>
    %994 = vector.extract_strided_slice %979 {offsets = [0, 96], sizes = [2, 32], strides = [1, 1]} : vector<2x128xf32> to vector<2x32xf32>
    %995 = arith.negf %994 : vector<2x32xf32>
    %996 = math.exp %995 : vector<2x32xf32>
    %cst_258 = arith.constant 1.000000e+00 : f32
    %997 = vector.broadcast %cst_258 : f32 to vector<2x32xf32>
    %998 = arith.addf %997, %996 : vector<2x32xf32>
    %999 = arith.divf %997, %998 : vector<2x32xf32>
    %1000 = arith.mulf %991, %911 : vector<2x32xf32>
    %1001 = arith.mulf %985, %993 : vector<2x32xf32>
    %1002 = arith.addf %1000, %1001 : vector<2x32xf32>
    %1003 = math.tanh %1002 : vector<2x32xf32>
    %1004 = arith.mulf %999, %1003 : vector<2x32xf32>
    %c1_259 = arith.constant 1 : index
    %c0_260 = arith.constant 0 : index
    %c0_261 = arith.constant 0 : index
    %1005 = vector.load %arg8[%c1_259, %c0_260, %c0_261] : memref<2x32x128xf32, #tpu.memory_space<vmem>>, vector<1x32x128xf32>
    %1006 = vector.shape_cast %1005 : vector<1x32x128xf32> to vector<32x128xf32>
    %cst_262 = arith.constant dense<0.000000e+00> : vector<2x128xf32>
    %1007 = tpu.matmul %1004, %1006, %cst_262 {dimension_numbers = #tpu.dot_dimension_numbers<[1], [0], [0], [1], [0, 0, 1, 1], [], []>} : vector<2x32xf32>, vector<32x128xf32>, vector<2x128xf32> -> vector<2x128xf32>
    %c1_263 = arith.constant 1 : index
    %c0_264 = arith.constant 0 : index
    %c0_265 = arith.constant 0 : index
    %1008 = vector.load %arg9[%c1_263, %c0_264, %c0_265] : memref<2x32x128xf32, #tpu.memory_space<vmem>>, vector<1x32x128xf32>
    %1009 = vector.shape_cast %1008 : vector<1x32x128xf32> to vector<32x128xf32>
    %cst_266 = arith.constant dense<0.000000e+00> : vector<2x128xf32>
    %1010 = tpu.matmul %949, %1009, %cst_266 {dimension_numbers = #tpu.dot_dimension_numbers<[1], [0], [0], [1], [0, 0, 1, 1], [], []>} : vector<2x32xf32>, vector<32x128xf32>, vector<2x128xf32> -> vector<2x128xf32>
    %1011 = arith.addf %1007, %1010 : vector<2x128xf32>
    %c1_267 = arith.constant 1 : index
    %c0_268 = arith.constant 0 : index
    %c0_269 = arith.constant 0 : index
    %1012 = vector.load %arg10[%c1_267, %c0_268, %c0_269] : memref<2x1x128xf32, #tpu.memory_space<vmem>>, vector<1x1x128xf32>
    %1013 = vector.shape_cast %1012 : vector<1x1x128xf32> to vector<1x128xf32>
    %1014 = vector.broadcast %1013 : vector<1x128xf32> to vector<2x128xf32>
    %1015 = arith.addf %1011, %1014 : vector<2x128xf32>
    %1016 = vector.extract_strided_slice %1015 {offsets = [0, 0], sizes = [2, 32], strides = [1, 1]} : vector<2x128xf32> to vector<2x32xf32>
    %1017 = arith.negf %1016 : vector<2x32xf32>
    %1018 = math.exp %1017 : vector<2x32xf32>
    %cst_270 = arith.constant 1.000000e+00 : f32
    %1019 = vector.broadcast %cst_270 : f32 to vector<2x32xf32>
    %1020 = arith.addf %1019, %1018 : vector<2x32xf32>
    %1021 = arith.divf %1019, %1020 : vector<2x32xf32>
    %1022 = vector.extract_strided_slice %1015 {offsets = [0, 32], sizes = [2, 32], strides = [1, 1]} : vector<2x128xf32> to vector<2x32xf32>
    %1023 = arith.negf %1022 : vector<2x32xf32>
    %1024 = math.exp %1023 : vector<2x32xf32>
    %cst_271 = arith.constant 1.000000e+00 : f32
    %1025 = vector.broadcast %cst_271 : f32 to vector<2x32xf32>
    %1026 = arith.addf %1025, %1024 : vector<2x32xf32>
    %1027 = arith.divf %1025, %1026 : vector<2x32xf32>
    %1028 = vector.extract_strided_slice %1015 {offsets = [0, 64], sizes = [2, 32], strides = [1, 1]} : vector<2x128xf32> to vector<2x32xf32>
    %1029 = math.tanh %1028 : vector<2x32xf32>
    %1030 = vector.extract_strided_slice %1015 {offsets = [0, 96], sizes = [2, 32], strides = [1, 1]} : vector<2x128xf32> to vector<2x32xf32>
    %1031 = arith.negf %1030 : vector<2x32xf32>
    %1032 = math.exp %1031 : vector<2x32xf32>
    %cst_272 = arith.constant 1.000000e+00 : f32
    %1033 = vector.broadcast %cst_272 : f32 to vector<2x32xf32>
    %1034 = arith.addf %1033, %1032 : vector<2x32xf32>
    %1035 = arith.divf %1033, %1034 : vector<2x32xf32>
    %1036 = arith.mulf %1027, %947 : vector<2x32xf32>
    %1037 = arith.mulf %1021, %1029 : vector<2x32xf32>
    %1038 = arith.addf %1036, %1037 : vector<2x32xf32>
    %1039 = math.tanh %1038 : vector<2x32xf32>
    %1040 = arith.mulf %1035, %1039 : vector<2x32xf32>
    %cst_273 = arith.constant dense<0.000000e+00> : vector<2x32xf32>
    %1041 = tpu.matmul %1040, %600, %cst_273 {dimension_numbers = #tpu.dot_dimension_numbers<[1], [0], [0], [1], [0, 0, 1, 1], [], []>} : vector<2x32xf32>, vector<32x32xf32>, vector<2x32xf32> -> vector<2x32xf32>
    %cst_274 = arith.constant dense<0.000000e+00> : vector<2x16xf32>
    %1042 = tpu.matmul %1041, %587, %cst_274 {dimension_numbers = #tpu.dot_dimension_numbers<[1], [0], [0], [1], [0, 0, 1, 1], [], []>} : vector<2x32xf32>, vector<32x16xf32>, vector<2x16xf32> -> vector<2x16xf32>
    %1043 = arith.addf %1042, %588 : vector<2x16xf32>
    %cst_275 = arith.constant dense<0xFF800000> : vector<2xf32>
    %1044 = vector.multi_reduction <maximumf>, %1043, %cst_275 [1] : vector<2x16xf32> to vector<2xf32>
    %1045 = vector.shape_cast %1044 : vector<2xf32> to vector<2x1xf32>
    %1046 = vector.broadcast %1045 : vector<2x1xf32> to vector<2x16xf32>
    %1047 = arith.subf %1043, %1046 : vector<2x16xf32>
    %1048 = math.exp %1047 : vector<2x16xf32>
    %cst_276 = arith.constant dense<0.000000e+00> : vector<2xf32>
    %1049 = vector.multi_reduction <add>, %1048, %cst_276 [1] : vector<2x16xf32> to vector<2xf32>
    %1050 = vector.shape_cast %1049 : vector<2xf32> to vector<2x1xf32>
    %1051 = vector.broadcast %1050 : vector<2x1xf32> to vector<2x16xf32>
    %1052 = arith.divf %1048, %1051 : vector<2x16xf32>
    %cst_277 = arith.constant dense<0.000000e+00> : vector<2x32xf32>
    %1053 = tpu.matmul %1052, %586, %cst_277 {dimension_numbers = #tpu.dot_dimension_numbers<[1], [0], [0], [1], [0, 0, 1, 1], [], []>} : vector<2x16xf32>, vector<16x32xf32>, vector<2x32xf32> -> vector<2x32xf32>
    %1054 = tpu.concatenate %1040, %1053 in 1 : vector<2x32xf32>, vector<2x32xf32> -> vector<2x64xf32>
    %cst_278 = arith.constant dense<0.000000e+00> : vector<2x32xf32>
    %1055 = tpu.matmul %1054, %601, %cst_278 {dimension_numbers = #tpu.dot_dimension_numbers<[1], [0], [0], [1], [0, 0, 1, 1], [], []>} : vector<2x64xf32>, vector<64x32xf32>, vector<2x32xf32> -> vector<2x32xf32>
    %1056 = vector.broadcast %602 : vector<1x32xf32> to vector<2x32xf32>
    %1057 = arith.addf %1055, %1056 : vector<2x32xf32>
    %1058 = math.tanh %1057 : vector<2x32xf32>
    %c0_279 = arith.constant 0 : index
    %c0_280 = arith.constant 0 : index
    %c0_281 = arith.constant 0 : index
    %1059 = vector.load %arg8[%c0_279, %c0_280, %c0_281] : memref<2x32x128xf32, #tpu.memory_space<vmem>>, vector<1x32x128xf32>
    %1060 = vector.shape_cast %1059 : vector<1x32x128xf32> to vector<32x128xf32>
    %cst_282 = arith.constant dense<0.000000e+00> : vector<2x128xf32>
    %1061 = tpu.matmul %1058, %1060, %cst_282 {dimension_numbers = #tpu.dot_dimension_numbers<[1], [0], [0], [1], [0, 0, 1, 1], [], []>} : vector<2x32xf32>, vector<32x128xf32>, vector<2x128xf32> -> vector<2x128xf32>
    %c0_283 = arith.constant 0 : index
    %c0_284 = arith.constant 0 : index
    %c0_285 = arith.constant 0 : index
    %1062 = vector.load %arg9[%c0_283, %c0_284, %c0_285] : memref<2x32x128xf32, #tpu.memory_space<vmem>>, vector<1x32x128xf32>
    %1063 = vector.shape_cast %1062 : vector<1x32x128xf32> to vector<32x128xf32>
    %cst_286 = arith.constant dense<0.000000e+00> : vector<2x128xf32>
    %1064 = tpu.matmul %1004, %1063, %cst_286 {dimension_numbers = #tpu.dot_dimension_numbers<[1], [0], [0], [1], [0, 0, 1, 1], [], []>} : vector<2x32xf32>, vector<32x128xf32>, vector<2x128xf32> -> vector<2x128xf32>
    %1065 = arith.addf %1061, %1064 : vector<2x128xf32>
    %c0_287 = arith.constant 0 : index
    %c0_288 = arith.constant 0 : index
    %c0_289 = arith.constant 0 : index
    %1066 = vector.load %arg10[%c0_287, %c0_288, %c0_289] : memref<2x1x128xf32, #tpu.memory_space<vmem>>, vector<1x1x128xf32>
    %1067 = vector.shape_cast %1066 : vector<1x1x128xf32> to vector<1x128xf32>
    %1068 = vector.broadcast %1067 : vector<1x128xf32> to vector<2x128xf32>
    %1069 = arith.addf %1065, %1068 : vector<2x128xf32>
    %1070 = arith.addf %1069, %597 : vector<2x128xf32>
    %1071 = vector.extract_strided_slice %1070 {offsets = [0, 0], sizes = [2, 32], strides = [1, 1]} : vector<2x128xf32> to vector<2x32xf32>
    %1072 = arith.negf %1071 : vector<2x32xf32>
    %1073 = math.exp %1072 : vector<2x32xf32>
    %cst_290 = arith.constant 1.000000e+00 : f32
    %1074 = vector.broadcast %cst_290 : f32 to vector<2x32xf32>
    %1075 = arith.addf %1074, %1073 : vector<2x32xf32>
    %1076 = arith.divf %1074, %1075 : vector<2x32xf32>
    %1077 = vector.extract_strided_slice %1070 {offsets = [0, 32], sizes = [2, 32], strides = [1, 1]} : vector<2x128xf32> to vector<2x32xf32>
    %1078 = arith.negf %1077 : vector<2x32xf32>
    %1079 = math.exp %1078 : vector<2x32xf32>
    %cst_291 = arith.constant 1.000000e+00 : f32
    %1080 = vector.broadcast %cst_291 : f32 to vector<2x32xf32>
    %1081 = arith.addf %1080, %1079 : vector<2x32xf32>
    %1082 = arith.divf %1080, %1081 : vector<2x32xf32>
    %1083 = vector.extract_strided_slice %1070 {offsets = [0, 64], sizes = [2, 32], strides = [1, 1]} : vector<2x128xf32> to vector<2x32xf32>
    %1084 = math.tanh %1083 : vector<2x32xf32>
    %1085 = vector.extract_strided_slice %1070 {offsets = [0, 96], sizes = [2, 32], strides = [1, 1]} : vector<2x128xf32> to vector<2x32xf32>
    %1086 = arith.negf %1085 : vector<2x32xf32>
    %1087 = math.exp %1086 : vector<2x32xf32>
    %cst_292 = arith.constant 1.000000e+00 : f32
    %1088 = vector.broadcast %cst_292 : f32 to vector<2x32xf32>
    %1089 = arith.addf %1088, %1087 : vector<2x32xf32>
    %1090 = arith.divf %1088, %1089 : vector<2x32xf32>
    %1091 = arith.mulf %1082, %1002 : vector<2x32xf32>
    %1092 = arith.mulf %1076, %1084 : vector<2x32xf32>
    %1093 = arith.addf %1091, %1092 : vector<2x32xf32>
    %1094 = math.tanh %1093 : vector<2x32xf32>
    %1095 = arith.mulf %1090, %1094 : vector<2x32xf32>
    %c1_293 = arith.constant 1 : index
    %c0_294 = arith.constant 0 : index
    %c0_295 = arith.constant 0 : index
    %1096 = vector.load %arg8[%c1_293, %c0_294, %c0_295] : memref<2x32x128xf32, #tpu.memory_space<vmem>>, vector<1x32x128xf32>
    %1097 = vector.shape_cast %1096 : vector<1x32x128xf32> to vector<32x128xf32>
    %cst_296 = arith.constant dense<0.000000e+00> : vector<2x128xf32>
    %1098 = tpu.matmul %1095, %1097, %cst_296 {dimension_numbers = #tpu.dot_dimension_numbers<[1], [0], [0], [1], [0, 0, 1, 1], [], []>} : vector<2x32xf32>, vector<32x128xf32>, vector<2x128xf32> -> vector<2x128xf32>
    %c1_297 = arith.constant 1 : index
    %c0_298 = arith.constant 0 : index
    %c0_299 = arith.constant 0 : index
    %1099 = vector.load %arg9[%c1_297, %c0_298, %c0_299] : memref<2x32x128xf32, #tpu.memory_space<vmem>>, vector<1x32x128xf32>
    %1100 = vector.shape_cast %1099 : vector<1x32x128xf32> to vector<32x128xf32>
    %cst_300 = arith.constant dense<0.000000e+00> : vector<2x128xf32>
    %1101 = tpu.matmul %1040, %1100, %cst_300 {dimension_numbers = #tpu.dot_dimension_numbers<[1], [0], [0], [1], [0, 0, 1, 1], [], []>} : vector<2x32xf32>, vector<32x128xf32>, vector<2x128xf32> -> vector<2x128xf32>
    %1102 = arith.addf %1098, %1101 : vector<2x128xf32>
    %c1_301 = arith.constant 1 : index
    %c0_302 = arith.constant 0 : index
    %c0_303 = arith.constant 0 : index
    %1103 = vector.load %arg10[%c1_301, %c0_302, %c0_303] : memref<2x1x128xf32, #tpu.memory_space<vmem>>, vector<1x1x128xf32>
    %1104 = vector.shape_cast %1103 : vector<1x1x128xf32> to vector<1x128xf32>
    %1105 = vector.broadcast %1104 : vector<1x128xf32> to vector<2x128xf32>
    %1106 = arith.addf %1102, %1105 : vector<2x128xf32>
    %1107 = vector.extract_strided_slice %1106 {offsets = [0, 0], sizes = [2, 32], strides = [1, 1]} : vector<2x128xf32> to vector<2x32xf32>
    %1108 = arith.negf %1107 : vector<2x32xf32>
    %1109 = math.exp %1108 : vector<2x32xf32>
    %cst_304 = arith.constant 1.000000e+00 : f32
    %1110 = vector.broadcast %cst_304 : f32 to vector<2x32xf32>
    %1111 = arith.addf %1110, %1109 : vector<2x32xf32>
    %1112 = arith.divf %1110, %1111 : vector<2x32xf32>
    %1113 = vector.extract_strided_slice %1106 {offsets = [0, 32], sizes = [2, 32], strides = [1, 1]} : vector<2x128xf32> to vector<2x32xf32>
    %1114 = arith.negf %1113 : vector<2x32xf32>
    %1115 = math.exp %1114 : vector<2x32xf32>
    %cst_305 = arith.constant 1.000000e+00 : f32
    %1116 = vector.broadcast %cst_305 : f32 to vector<2x32xf32>
    %1117 = arith.addf %1116, %1115 : vector<2x32xf32>
    %1118 = arith.divf %1116, %1117 : vector<2x32xf32>
    %1119 = vector.extract_strided_slice %1106 {offsets = [0, 64], sizes = [2, 32], strides = [1, 1]} : vector<2x128xf32> to vector<2x32xf32>
    %1120 = math.tanh %1119 : vector<2x32xf32>
    %1121 = vector.extract_strided_slice %1106 {offsets = [0, 96], sizes = [2, 32], strides = [1, 1]} : vector<2x128xf32> to vector<2x32xf32>
    %1122 = arith.negf %1121 : vector<2x32xf32>
    %1123 = math.exp %1122 : vector<2x32xf32>
    %cst_306 = arith.constant 1.000000e+00 : f32
    %1124 = vector.broadcast %cst_306 : f32 to vector<2x32xf32>
    %1125 = arith.addf %1124, %1123 : vector<2x32xf32>
    %1126 = arith.divf %1124, %1125 : vector<2x32xf32>
    %1127 = arith.mulf %1118, %1038 : vector<2x32xf32>
    %1128 = arith.mulf %1112, %1120 : vector<2x32xf32>
    %1129 = arith.addf %1127, %1128 : vector<2x32xf32>
    %1130 = math.tanh %1129 : vector<2x32xf32>
    %1131 = arith.mulf %1126, %1130 : vector<2x32xf32>
    %cst_307 = arith.constant dense<0.000000e+00> : vector<2x32xf32>
    %1132 = tpu.matmul %1131, %600, %cst_307 {dimension_numbers = #tpu.dot_dimension_numbers<[1], [0], [0], [1], [0, 0, 1, 1], [], []>} : vector<2x32xf32>, vector<32x32xf32>, vector<2x32xf32> -> vector<2x32xf32>
    %cst_308 = arith.constant dense<0.000000e+00> : vector<2x16xf32>
    %1133 = tpu.matmul %1132, %587, %cst_308 {dimension_numbers = #tpu.dot_dimension_numbers<[1], [0], [0], [1], [0, 0, 1, 1], [], []>} : vector<2x32xf32>, vector<32x16xf32>, vector<2x16xf32> -> vector<2x16xf32>
    %1134 = arith.addf %1133, %588 : vector<2x16xf32>
    %cst_309 = arith.constant dense<0xFF800000> : vector<2xf32>
    %1135 = vector.multi_reduction <maximumf>, %1134, %cst_309 [1] : vector<2x16xf32> to vector<2xf32>
    %1136 = vector.shape_cast %1135 : vector<2xf32> to vector<2x1xf32>
    %1137 = vector.broadcast %1136 : vector<2x1xf32> to vector<2x16xf32>
    %1138 = arith.subf %1134, %1137 : vector<2x16xf32>
    %1139 = math.exp %1138 : vector<2x16xf32>
    %cst_310 = arith.constant dense<0.000000e+00> : vector<2xf32>
    %1140 = vector.multi_reduction <add>, %1139, %cst_310 [1] : vector<2x16xf32> to vector<2xf32>
    %1141 = vector.shape_cast %1140 : vector<2xf32> to vector<2x1xf32>
    %1142 = vector.broadcast %1141 : vector<2x1xf32> to vector<2x16xf32>
    %1143 = arith.divf %1139, %1142 : vector<2x16xf32>
    %cst_311 = arith.constant dense<0.000000e+00> : vector<2x32xf32>
    %1144 = tpu.matmul %1143, %586, %cst_311 {dimension_numbers = #tpu.dot_dimension_numbers<[1], [0], [0], [1], [0, 0, 1, 1], [], []>} : vector<2x16xf32>, vector<16x32xf32>, vector<2x32xf32> -> vector<2x32xf32>
    %1145 = tpu.concatenate %1131, %1144 in 1 : vector<2x32xf32>, vector<2x32xf32> -> vector<2x64xf32>
    %cst_312 = arith.constant dense<0.000000e+00> : vector<2x32xf32>
    %1146 = tpu.matmul %1145, %601, %cst_312 {dimension_numbers = #tpu.dot_dimension_numbers<[1], [0], [0], [1], [0, 0, 1, 1], [], []>} : vector<2x64xf32>, vector<64x32xf32>, vector<2x32xf32> -> vector<2x32xf32>
    %1147 = vector.broadcast %602 : vector<1x32xf32> to vector<2x32xf32>
    %1148 = arith.addf %1146, %1147 : vector<2x32xf32>
    %1149 = math.tanh %1148 : vector<2x32xf32>
    %c0_313 = arith.constant 0 : index
    %c0_314 = arith.constant 0 : index
    %c0_315 = arith.constant 0 : index
    %1150 = vector.load %arg8[%c0_313, %c0_314, %c0_315] : memref<2x32x128xf32, #tpu.memory_space<vmem>>, vector<1x32x128xf32>
    %1151 = vector.shape_cast %1150 : vector<1x32x128xf32> to vector<32x128xf32>
    %cst_316 = arith.constant dense<0.000000e+00> : vector<2x128xf32>
    %1152 = tpu.matmul %1149, %1151, %cst_316 {dimension_numbers = #tpu.dot_dimension_numbers<[1], [0], [0], [1], [0, 0, 1, 1], [], []>} : vector<2x32xf32>, vector<32x128xf32>, vector<2x128xf32> -> vector<2x128xf32>
    %c0_317 = arith.constant 0 : index
    %c0_318 = arith.constant 0 : index
    %c0_319 = arith.constant 0 : index
    %1153 = vector.load %arg9[%c0_317, %c0_318, %c0_319] : memref<2x32x128xf32, #tpu.memory_space<vmem>>, vector<1x32x128xf32>
    %1154 = vector.shape_cast %1153 : vector<1x32x128xf32> to vector<32x128xf32>
    %cst_320 = arith.constant dense<0.000000e+00> : vector<2x128xf32>
    %1155 = tpu.matmul %1095, %1154, %cst_320 {dimension_numbers = #tpu.dot_dimension_numbers<[1], [0], [0], [1], [0, 0, 1, 1], [], []>} : vector<2x32xf32>, vector<32x128xf32>, vector<2x128xf32> -> vector<2x128xf32>
    %1156 = arith.addf %1152, %1155 : vector<2x128xf32>
    %c0_321 = arith.constant 0 : index
    %c0_322 = arith.constant 0 : index
    %c0_323 = arith.constant 0 : index
    %1157 = vector.load %arg10[%c0_321, %c0_322, %c0_323] : memref<2x1x128xf32, #tpu.memory_space<vmem>>, vector<1x1x128xf32>
    %1158 = vector.shape_cast %1157 : vector<1x1x128xf32> to vector<1x128xf32>
    %1159 = vector.broadcast %1158 : vector<1x128xf32> to vector<2x128xf32>
    %1160 = arith.addf %1156, %1159 : vector<2x128xf32>
    %1161 = arith.addf %1160, %598 : vector<2x128xf32>
    %1162 = vector.extract_strided_slice %1161 {offsets = [0, 0], sizes = [2, 32], strides = [1, 1]} : vector<2x128xf32> to vector<2x32xf32>
    %1163 = arith.negf %1162 : vector<2x32xf32>
    %1164 = math.exp %1163 : vector<2x32xf32>
    %cst_324 = arith.constant 1.000000e+00 : f32
    %1165 = vector.broadcast %cst_324 : f32 to vector<2x32xf32>
    %1166 = arith.addf %1165, %1164 : vector<2x32xf32>
    %1167 = arith.divf %1165, %1166 : vector<2x32xf32>
    %1168 = vector.extract_strided_slice %1161 {offsets = [0, 32], sizes = [2, 32], strides = [1, 1]} : vector<2x128xf32> to vector<2x32xf32>
    %1169 = arith.negf %1168 : vector<2x32xf32>
    %1170 = math.exp %1169 : vector<2x32xf32>
    %cst_325 = arith.constant 1.000000e+00 : f32
    %1171 = vector.broadcast %cst_325 : f32 to vector<2x32xf32>
    %1172 = arith.addf %1171, %1170 : vector<2x32xf32>
    %1173 = arith.divf %1171, %1172 : vector<2x32xf32>
    %1174 = vector.extract_strided_slice %1161 {offsets = [0, 64], sizes = [2, 32], strides = [1, 1]} : vector<2x128xf32> to vector<2x32xf32>
    %1175 = math.tanh %1174 : vector<2x32xf32>
    %1176 = vector.extract_strided_slice %1161 {offsets = [0, 96], sizes = [2, 32], strides = [1, 1]} : vector<2x128xf32> to vector<2x32xf32>
    %1177 = arith.negf %1176 : vector<2x32xf32>
    %1178 = math.exp %1177 : vector<2x32xf32>
    %cst_326 = arith.constant 1.000000e+00 : f32
    %1179 = vector.broadcast %cst_326 : f32 to vector<2x32xf32>
    %1180 = arith.addf %1179, %1178 : vector<2x32xf32>
    %1181 = arith.divf %1179, %1180 : vector<2x32xf32>
    %1182 = arith.mulf %1173, %1093 : vector<2x32xf32>
    %1183 = arith.mulf %1167, %1175 : vector<2x32xf32>
    %1184 = arith.addf %1182, %1183 : vector<2x32xf32>
    %1185 = math.tanh %1184 : vector<2x32xf32>
    %1186 = arith.mulf %1181, %1185 : vector<2x32xf32>
    %c1_327 = arith.constant 1 : index
    %c0_328 = arith.constant 0 : index
    %c0_329 = arith.constant 0 : index
    %1187 = vector.load %arg8[%c1_327, %c0_328, %c0_329] : memref<2x32x128xf32, #tpu.memory_space<vmem>>, vector<1x32x128xf32>
    %1188 = vector.shape_cast %1187 : vector<1x32x128xf32> to vector<32x128xf32>
    %cst_330 = arith.constant dense<0.000000e+00> : vector<2x128xf32>
    %1189 = tpu.matmul %1186, %1188, %cst_330 {dimension_numbers = #tpu.dot_dimension_numbers<[1], [0], [0], [1], [0, 0, 1, 1], [], []>} : vector<2x32xf32>, vector<32x128xf32>, vector<2x128xf32> -> vector<2x128xf32>
    %c1_331 = arith.constant 1 : index
    %c0_332 = arith.constant 0 : index
    %c0_333 = arith.constant 0 : index
    %1190 = vector.load %arg9[%c1_331, %c0_332, %c0_333] : memref<2x32x128xf32, #tpu.memory_space<vmem>>, vector<1x32x128xf32>
    %1191 = vector.shape_cast %1190 : vector<1x32x128xf32> to vector<32x128xf32>
    %cst_334 = arith.constant dense<0.000000e+00> : vector<2x128xf32>
    %1192 = tpu.matmul %1131, %1191, %cst_334 {dimension_numbers = #tpu.dot_dimension_numbers<[1], [0], [0], [1], [0, 0, 1, 1], [], []>} : vector<2x32xf32>, vector<32x128xf32>, vector<2x128xf32> -> vector<2x128xf32>
    %1193 = arith.addf %1189, %1192 : vector<2x128xf32>
    %c1_335 = arith.constant 1 : index
    %c0_336 = arith.constant 0 : index
    %c0_337 = arith.constant 0 : index
    %1194 = vector.load %arg10[%c1_335, %c0_336, %c0_337] : memref<2x1x128xf32, #tpu.memory_space<vmem>>, vector<1x1x128xf32>
    %1195 = vector.shape_cast %1194 : vector<1x1x128xf32> to vector<1x128xf32>
    %1196 = vector.broadcast %1195 : vector<1x128xf32> to vector<2x128xf32>
    %1197 = arith.addf %1193, %1196 : vector<2x128xf32>
    %1198 = vector.extract_strided_slice %1197 {offsets = [0, 0], sizes = [2, 32], strides = [1, 1]} : vector<2x128xf32> to vector<2x32xf32>
    %1199 = arith.negf %1198 : vector<2x32xf32>
    %1200 = math.exp %1199 : vector<2x32xf32>
    %cst_338 = arith.constant 1.000000e+00 : f32
    %1201 = vector.broadcast %cst_338 : f32 to vector<2x32xf32>
    %1202 = arith.addf %1201, %1200 : vector<2x32xf32>
    %1203 = arith.divf %1201, %1202 : vector<2x32xf32>
    %1204 = vector.extract_strided_slice %1197 {offsets = [0, 32], sizes = [2, 32], strides = [1, 1]} : vector<2x128xf32> to vector<2x32xf32>
    %1205 = arith.negf %1204 : vector<2x32xf32>
    %1206 = math.exp %1205 : vector<2x32xf32>
    %cst_339 = arith.constant 1.000000e+00 : f32
    %1207 = vector.broadcast %cst_339 : f32 to vector<2x32xf32>
    %1208 = arith.addf %1207, %1206 : vector<2x32xf32>
    %1209 = arith.divf %1207, %1208 : vector<2x32xf32>
    %1210 = vector.extract_strided_slice %1197 {offsets = [0, 64], sizes = [2, 32], strides = [1, 1]} : vector<2x128xf32> to vector<2x32xf32>
    %1211 = math.tanh %1210 : vector<2x32xf32>
    %1212 = vector.extract_strided_slice %1197 {offsets = [0, 96], sizes = [2, 32], strides = [1, 1]} : vector<2x128xf32> to vector<2x32xf32>
    %1213 = arith.negf %1212 : vector<2x32xf32>
    %1214 = math.exp %1213 : vector<2x32xf32>
    %cst_340 = arith.constant 1.000000e+00 : f32
    %1215 = vector.broadcast %cst_340 : f32 to vector<2x32xf32>
    %1216 = arith.addf %1215, %1214 : vector<2x32xf32>
    %1217 = arith.divf %1215, %1216 : vector<2x32xf32>
    %1218 = arith.mulf %1209, %1129 : vector<2x32xf32>
    %1219 = arith.mulf %1203, %1211 : vector<2x32xf32>
    %1220 = arith.addf %1218, %1219 : vector<2x32xf32>
    %1221 = math.tanh %1220 : vector<2x32xf32>
    %1222 = arith.mulf %1217, %1221 : vector<2x32xf32>
    %cst_341 = arith.constant dense<0.000000e+00> : vector<2x32xf32>
    %1223 = tpu.matmul %1222, %600, %cst_341 {dimension_numbers = #tpu.dot_dimension_numbers<[1], [0], [0], [1], [0, 0, 1, 1], [], []>} : vector<2x32xf32>, vector<32x32xf32>, vector<2x32xf32> -> vector<2x32xf32>
    %cst_342 = arith.constant dense<0.000000e+00> : vector<2x16xf32>
    %1224 = tpu.matmul %1223, %587, %cst_342 {dimension_numbers = #tpu.dot_dimension_numbers<[1], [0], [0], [1], [0, 0, 1, 1], [], []>} : vector<2x32xf32>, vector<32x16xf32>, vector<2x16xf32> -> vector<2x16xf32>
    %1225 = arith.addf %1224, %588 : vector<2x16xf32>
    %cst_343 = arith.constant dense<0xFF800000> : vector<2xf32>
    %1226 = vector.multi_reduction <maximumf>, %1225, %cst_343 [1] : vector<2x16xf32> to vector<2xf32>
    %1227 = vector.shape_cast %1226 : vector<2xf32> to vector<2x1xf32>
    %1228 = vector.broadcast %1227 : vector<2x1xf32> to vector<2x16xf32>
    %1229 = arith.subf %1225, %1228 : vector<2x16xf32>
    %1230 = math.exp %1229 : vector<2x16xf32>
    %cst_344 = arith.constant dense<0.000000e+00> : vector<2xf32>
    %1231 = vector.multi_reduction <add>, %1230, %cst_344 [1] : vector<2x16xf32> to vector<2xf32>
    %1232 = vector.shape_cast %1231 : vector<2xf32> to vector<2x1xf32>
    %1233 = vector.broadcast %1232 : vector<2x1xf32> to vector<2x16xf32>
    %1234 = arith.divf %1230, %1233 : vector<2x16xf32>
    %cst_345 = arith.constant dense<0.000000e+00> : vector<2x32xf32>
    %1235 = tpu.matmul %1234, %586, %cst_345 {dimension_numbers = #tpu.dot_dimension_numbers<[1], [0], [0], [1], [0, 0, 1, 1], [], []>} : vector<2x16xf32>, vector<16x32xf32>, vector<2x32xf32> -> vector<2x32xf32>
    %1236 = tpu.concatenate %1222, %1235 in 1 : vector<2x32xf32>, vector<2x32xf32> -> vector<2x64xf32>
    %cst_346 = arith.constant dense<0.000000e+00> : vector<2x32xf32>
    %1237 = tpu.matmul %1236, %601, %cst_346 {dimension_numbers = #tpu.dot_dimension_numbers<[1], [0], [0], [1], [0, 0, 1, 1], [], []>} : vector<2x64xf32>, vector<64x32xf32>, vector<2x32xf32> -> vector<2x32xf32>
    %1238 = vector.broadcast %602 : vector<1x32xf32> to vector<2x32xf32>
    %1239 = arith.addf %1237, %1238 : vector<2x32xf32>
    %1240 = math.tanh %1239 : vector<2x32xf32>
    %c0_347 = arith.constant 0 : index
    %c0_348 = arith.constant 0 : index
    %c0_349 = arith.constant 0 : index
    %1241 = vector.load %arg8[%c0_347, %c0_348, %c0_349] : memref<2x32x128xf32, #tpu.memory_space<vmem>>, vector<1x32x128xf32>
    %1242 = vector.shape_cast %1241 : vector<1x32x128xf32> to vector<32x128xf32>
    %cst_350 = arith.constant dense<0.000000e+00> : vector<2x128xf32>
    %1243 = tpu.matmul %1240, %1242, %cst_350 {dimension_numbers = #tpu.dot_dimension_numbers<[1], [0], [0], [1], [0, 0, 1, 1], [], []>} : vector<2x32xf32>, vector<32x128xf32>, vector<2x128xf32> -> vector<2x128xf32>
    %c0_351 = arith.constant 0 : index
    %c0_352 = arith.constant 0 : index
    %c0_353 = arith.constant 0 : index
    %1244 = vector.load %arg9[%c0_351, %c0_352, %c0_353] : memref<2x32x128xf32, #tpu.memory_space<vmem>>, vector<1x32x128xf32>
    %1245 = vector.shape_cast %1244 : vector<1x32x128xf32> to vector<32x128xf32>
    %cst_354 = arith.constant dense<0.000000e+00> : vector<2x128xf32>
    %1246 = tpu.matmul %1186, %1245, %cst_354 {dimension_numbers = #tpu.dot_dimension_numbers<[1], [0], [0], [1], [0, 0, 1, 1], [], []>} : vector<2x32xf32>, vector<32x128xf32>, vector<2x128xf32> -> vector<2x128xf32>
    %1247 = arith.addf %1243, %1246 : vector<2x128xf32>
    %c0_355 = arith.constant 0 : index
    %c0_356 = arith.constant 0 : index
    %c0_357 = arith.constant 0 : index
    %1248 = vector.load %arg10[%c0_355, %c0_356, %c0_357] : memref<2x1x128xf32, #tpu.memory_space<vmem>>, vector<1x1x128xf32>
    %1249 = vector.shape_cast %1248 : vector<1x1x128xf32> to vector<1x128xf32>
    %1250 = vector.broadcast %1249 : vector<1x128xf32> to vector<2x128xf32>
    %1251 = arith.addf %1247, %1250 : vector<2x128xf32>
    %1252 = arith.addf %1251, %599 : vector<2x128xf32>
    %1253 = vector.extract_strided_slice %1252 {offsets = [0, 0], sizes = [2, 32], strides = [1, 1]} : vector<2x128xf32> to vector<2x32xf32>
    %1254 = arith.negf %1253 : vector<2x32xf32>
    %1255 = math.exp %1254 : vector<2x32xf32>
    %cst_358 = arith.constant 1.000000e+00 : f32
    %1256 = vector.broadcast %cst_358 : f32 to vector<2x32xf32>
    %1257 = arith.addf %1256, %1255 : vector<2x32xf32>
    %1258 = arith.divf %1256, %1257 : vector<2x32xf32>
    %1259 = vector.extract_strided_slice %1252 {offsets = [0, 32], sizes = [2, 32], strides = [1, 1]} : vector<2x128xf32> to vector<2x32xf32>
    %1260 = arith.negf %1259 : vector<2x32xf32>
    %1261 = math.exp %1260 : vector<2x32xf32>
    %cst_359 = arith.constant 1.000000e+00 : f32
    %1262 = vector.broadcast %cst_359 : f32 to vector<2x32xf32>
    %1263 = arith.addf %1262, %1261 : vector<2x32xf32>
    %1264 = arith.divf %1262, %1263 : vector<2x32xf32>
    %1265 = vector.extract_strided_slice %1252 {offsets = [0, 64], sizes = [2, 32], strides = [1, 1]} : vector<2x128xf32> to vector<2x32xf32>
    %1266 = math.tanh %1265 : vector<2x32xf32>
    %1267 = vector.extract_strided_slice %1252 {offsets = [0, 96], sizes = [2, 32], strides = [1, 1]} : vector<2x128xf32> to vector<2x32xf32>
    %1268 = arith.negf %1267 : vector<2x32xf32>
    %1269 = math.exp %1268 : vector<2x32xf32>
    %cst_360 = arith.constant 1.000000e+00 : f32
    %1270 = vector.broadcast %cst_360 : f32 to vector<2x32xf32>
    %1271 = arith.addf %1270, %1269 : vector<2x32xf32>
    %1272 = arith.divf %1270, %1271 : vector<2x32xf32>
    %1273 = arith.mulf %1264, %1184 : vector<2x32xf32>
    %1274 = arith.mulf %1258, %1266 : vector<2x32xf32>
    %1275 = arith.addf %1273, %1274 : vector<2x32xf32>
    %1276 = math.tanh %1275 : vector<2x32xf32>
    %1277 = arith.mulf %1272, %1276 : vector<2x32xf32>
    %c1_361 = arith.constant 1 : index
    %c0_362 = arith.constant 0 : index
    %c0_363 = arith.constant 0 : index
    %1278 = vector.load %arg8[%c1_361, %c0_362, %c0_363] : memref<2x32x128xf32, #tpu.memory_space<vmem>>, vector<1x32x128xf32>
    %1279 = vector.shape_cast %1278 : vector<1x32x128xf32> to vector<32x128xf32>
    %cst_364 = arith.constant dense<0.000000e+00> : vector<2x128xf32>
    %1280 = tpu.matmul %1277, %1279, %cst_364 {dimension_numbers = #tpu.dot_dimension_numbers<[1], [0], [0], [1], [0, 0, 1, 1], [], []>} : vector<2x32xf32>, vector<32x128xf32>, vector<2x128xf32> -> vector<2x128xf32>
    %c1_365 = arith.constant 1 : index
    %c0_366 = arith.constant 0 : index
    %c0_367 = arith.constant 0 : index
    %1281 = vector.load %arg9[%c1_365, %c0_366, %c0_367] : memref<2x32x128xf32, #tpu.memory_space<vmem>>, vector<1x32x128xf32>
    %1282 = vector.shape_cast %1281 : vector<1x32x128xf32> to vector<32x128xf32>
    %cst_368 = arith.constant dense<0.000000e+00> : vector<2x128xf32>
    %1283 = tpu.matmul %1222, %1282, %cst_368 {dimension_numbers = #tpu.dot_dimension_numbers<[1], [0], [0], [1], [0, 0, 1, 1], [], []>} : vector<2x32xf32>, vector<32x128xf32>, vector<2x128xf32> -> vector<2x128xf32>
    %1284 = arith.addf %1280, %1283 : vector<2x128xf32>
    %c1_369 = arith.constant 1 : index
    %c0_370 = arith.constant 0 : index
    %c0_371 = arith.constant 0 : index
    %1285 = vector.load %arg10[%c1_369, %c0_370, %c0_371] : memref<2x1x128xf32, #tpu.memory_space<vmem>>, vector<1x1x128xf32>
    %1286 = vector.shape_cast %1285 : vector<1x1x128xf32> to vector<1x128xf32>
    %1287 = vector.broadcast %1286 : vector<1x128xf32> to vector<2x128xf32>
    %1288 = arith.addf %1284, %1287 : vector<2x128xf32>
    %1289 = vector.extract_strided_slice %1288 {offsets = [0, 0], sizes = [2, 32], strides = [1, 1]} : vector<2x128xf32> to vector<2x32xf32>
    %1290 = arith.negf %1289 : vector<2x32xf32>
    %1291 = math.exp %1290 : vector<2x32xf32>
    %cst_372 = arith.constant 1.000000e+00 : f32
    %1292 = vector.broadcast %cst_372 : f32 to vector<2x32xf32>
    %1293 = arith.addf %1292, %1291 : vector<2x32xf32>
    %1294 = arith.divf %1292, %1293 : vector<2x32xf32>
    %1295 = vector.extract_strided_slice %1288 {offsets = [0, 32], sizes = [2, 32], strides = [1, 1]} : vector<2x128xf32> to vector<2x32xf32>
    %1296 = arith.negf %1295 : vector<2x32xf32>
    %1297 = math.exp %1296 : vector<2x32xf32>
    %cst_373 = arith.constant 1.000000e+00 : f32
    %1298 = vector.broadcast %cst_373 : f32 to vector<2x32xf32>
    %1299 = arith.addf %1298, %1297 : vector<2x32xf32>
    %1300 = arith.divf %1298, %1299 : vector<2x32xf32>
    %1301 = vector.extract_strided_slice %1288 {offsets = [0, 64], sizes = [2, 32], strides = [1, 1]} : vector<2x128xf32> to vector<2x32xf32>
    %1302 = math.tanh %1301 : vector<2x32xf32>
    %1303 = vector.extract_strided_slice %1288 {offsets = [0, 96], sizes = [2, 32], strides = [1, 1]} : vector<2x128xf32> to vector<2x32xf32>
    %1304 = arith.negf %1303 : vector<2x32xf32>
    %1305 = math.exp %1304 : vector<2x32xf32>
    %cst_374 = arith.constant 1.000000e+00 : f32
    %1306 = vector.broadcast %cst_374 : f32 to vector<2x32xf32>
    %1307 = arith.addf %1306, %1305 : vector<2x32xf32>
    %1308 = arith.divf %1306, %1307 : vector<2x32xf32>
    %1309 = arith.mulf %1300, %1220 : vector<2x32xf32>
    %1310 = arith.mulf %1294, %1302 : vector<2x32xf32>
    %1311 = arith.addf %1309, %1310 : vector<2x32xf32>
    %1312 = math.tanh %1311 : vector<2x32xf32>
    %1313 = arith.mulf %1308, %1312 : vector<2x32xf32>
    %cst_375 = arith.constant dense<0.000000e+00> : vector<2x32xf32>
    %1314 = tpu.matmul %1313, %600, %cst_375 {dimension_numbers = #tpu.dot_dimension_numbers<[1], [0], [0], [1], [0, 0, 1, 1], [], []>} : vector<2x32xf32>, vector<32x32xf32>, vector<2x32xf32> -> vector<2x32xf32>
    %cst_376 = arith.constant dense<0.000000e+00> : vector<2x16xf32>
    %1315 = tpu.matmul %1314, %587, %cst_376 {dimension_numbers = #tpu.dot_dimension_numbers<[1], [0], [0], [1], [0, 0, 1, 1], [], []>} : vector<2x32xf32>, vector<32x16xf32>, vector<2x16xf32> -> vector<2x16xf32>
    %1316 = arith.addf %1315, %588 : vector<2x16xf32>
    %cst_377 = arith.constant dense<0xFF800000> : vector<2xf32>
    %1317 = vector.multi_reduction <maximumf>, %1316, %cst_377 [1] : vector<2x16xf32> to vector<2xf32>
    %1318 = vector.shape_cast %1317 : vector<2xf32> to vector<2x1xf32>
    %1319 = vector.broadcast %1318 : vector<2x1xf32> to vector<2x16xf32>
    %1320 = arith.subf %1316, %1319 : vector<2x16xf32>
    %1321 = math.exp %1320 : vector<2x16xf32>
    %cst_378 = arith.constant dense<0.000000e+00> : vector<2xf32>
    %1322 = vector.multi_reduction <add>, %1321, %cst_378 [1] : vector<2x16xf32> to vector<2xf32>
    %1323 = vector.shape_cast %1322 : vector<2xf32> to vector<2x1xf32>
    %1324 = vector.broadcast %1323 : vector<2x1xf32> to vector<2x16xf32>
    %1325 = arith.divf %1321, %1324 : vector<2x16xf32>
    %cst_379 = arith.constant dense<0.000000e+00> : vector<2x32xf32>
    %1326 = tpu.matmul %1325, %586, %cst_379 {dimension_numbers = #tpu.dot_dimension_numbers<[1], [0], [0], [1], [0, 0, 1, 1], [], []>} : vector<2x16xf32>, vector<16x32xf32>, vector<2x32xf32> -> vector<2x32xf32>
    %1327 = tpu.concatenate %1313, %1326 in 1 : vector<2x32xf32>, vector<2x32xf32> -> vector<2x64xf32>
    %cst_380 = arith.constant dense<0.000000e+00> : vector<2x32xf32>
    %1328 = tpu.matmul %1327, %601, %cst_380 {dimension_numbers = #tpu.dot_dimension_numbers<[1], [0], [0], [1], [0, 0, 1, 1], [], []>} : vector<2x64xf32>, vector<64x32xf32>, vector<2x32xf32> -> vector<2x32xf32>
    %1329 = vector.broadcast %602 : vector<1x32xf32> to vector<2x32xf32>
    %1330 = arith.addf %1328, %1329 : vector<2x32xf32>
    %1331 = math.tanh %1330 : vector<2x32xf32>
    %1332 = tpu.concatenate %694, %785, %876, %967, %1058, %1149, %1240, %1331 in 0 : vector<2x32xf32>, vector<2x32xf32>, vector<2x32xf32>, vector<2x32xf32>, vector<2x32xf32>, vector<2x32xf32>, vector<2x32xf32>, vector<2x32xf32> -> vector<16x32xf32>
    %c0_381 = arith.constant 0 : index
    %c0_382 = arith.constant 0 : index
    %1333 = vector.load %arg14[%c0_381, %c0_382] : memref<32x48xf32, #tpu.memory_space<vmem>>, vector<32x48xf32>
    %cst_383 = arith.constant dense<0.000000e+00> : vector<16x48xf32>
    %1334 = tpu.matmul %1332, %1333, %cst_383 {dimension_numbers = #tpu.dot_dimension_numbers<[1], [0], [0], [1], [0, 0, 1, 1], [], []>} : vector<16x32xf32>, vector<32x48xf32>, vector<16x48xf32> -> vector<16x48xf32>
    %c0_384 = arith.constant 0 : index
    %c0_385 = arith.constant 0 : index
    %1335 = vector.load %arg15[%c0_384, %c0_385] : memref<1x48xf32, #tpu.memory_space<vmem>>, vector<1x48xf32>
    %1336 = vector.broadcast %1335 : vector<1x48xf32> to vector<16x48xf32>
    %1337 = arith.addf %1334, %1336 : vector<16x48xf32>
    %cst_386 = arith.constant dense<0xFF800000> : vector<16xf32>
    %1338 = vector.multi_reduction <maximumf>, %1337, %cst_386 [1] : vector<16x48xf32> to vector<16xf32>
    %1339 = vector.shape_cast %1338 : vector<16xf32> to vector<16x1xf32>
    %1340 = vector.broadcast %1339 : vector<16x1xf32> to vector<16x48xf32>
    %1341 = arith.subf %1337, %1340 : vector<16x48xf32>
    %1342 = math.exp %1341 : vector<16x48xf32>
    %cst_387 = arith.constant dense<0.000000e+00> : vector<16xf32>
    %1343 = vector.multi_reduction <add>, %1342, %cst_387 [1] : vector<16x48xf32> to vector<16xf32>
    %1344 = vector.shape_cast %1343 : vector<16xf32> to vector<16x1xf32>
    %1345 = math.log %1344 : vector<16x1xf32>
    %1346 = vector.broadcast %1345 : vector<16x1xf32> to vector<16x48xf32>
    %1347 = arith.subf %1341, %1346 : vector<16x48xf32>
    %c0_388 = arith.constant 0 : index
    %c0_389 = arith.constant 0 : index
    %1348 = vector.load %arg16[%c0_388, %c0_389] : memref<16x48xf32, #tpu.memory_space<vmem>>, vector<16x48xf32>
    tpu.vector_store %arg16[%c0_388, %c0_389], %1347 {strides = array<i32>} : memref<16x48xf32, #tpu.memory_space<vmem>>, vector<16x48xf32>,
    return
  }
}

</mosaic_0001>

<llo_original>
// kernel: seq2seq_forward.1
$region0: #{seq2seq_forward.1}
  #allocation0 [shape = 'u32[]', space=smem, size = 0x4, offset = 0x4, fixed_abs, tag = 'smem constant byte address 0x4 - core index']
  #allocation1 [shape = 'u32[144,128]{1,0:T(1,128)}', space=vmem, size = 0x12000, scoped, tag = 'internal scratch']
  %s0 = inlined_call_operand.vmem [shape: f32[16,32], index: 0, kind: input, shape index: {}]
  %s1 = inlined_call_operand.vmem [shape: f32[16,16], index: 1, kind: input, shape index: {}]
  %s2 = inlined_call_operand.vmem [shape: f32[2,16], index: 2, kind: input, shape index: {}]
  %s3 = inlined_call_operand.vmem [shape: f32[2,32,128], index: 3, kind: input, shape index: {}]
  %s4 = inlined_call_operand.vmem [shape: f32[2,32,128], index: 4, kind: input, shape index: {}]
  %s5 = inlined_call_operand.vmem [shape: f32[2,1,128], index: 5, kind: input, shape index: {}]
  %s6 = inlined_call_operand.vmem [shape: f32[2,32,128], index: 6, kind: input, shape index: {}]
  %s7 = inlined_call_operand.vmem [shape: f32[16,128], index: 7, kind: input, shape index: {}]
  %s8 = inlined_call_operand.vmem [shape: f32[2,32,128], index: 8, kind: input, shape index: {}]
  %s9 = inlined_call_operand.vmem [shape: f32[2,32,128], index: 9, kind: input, shape index: {}]
  %s10 = inlined_call_operand.vmem [shape: f32[2,1,128], index: 10, kind: input, shape index: {}]
  %s11 = inlined_call_operand.vmem [shape: f32[32,32], index: 11, kind: input, shape index: {}]
  %s12 = inlined_call_operand.vmem [shape: f32[64,32], index: 12, kind: input, shape index: {}]
  %s13 = inlined_call_operand.vmem [shape: f32[1,32], index: 13, kind: input, shape index: {}]
  %s14 = inlined_call_operand.vmem [shape: f32[32,48], index: 14, kind: input, shape index: {}]
  %s15 = inlined_call_operand.vmem [shape: f32[1,48], index: 15, kind: input, shape index: {}]
  %s16 = inlined_call_operand.vmem [shape: f32[16,48], index: 16, kind: output, shape index: {}]
  %s17 = sld [smem:[#allocation0]]
  $region74: #{seq2seq_forward.1} parent=0
    _
  %s19 = ssub.s32 1, %s17
  %s20 = scalar_select 0, %s19, %s17
  // Predicated region
  $region2: #{seq2seq_forward.1} parent=0 // pred_check
    _
  $region3: #{seq2seq_forward.1} parent=0 // pred_check_branch
    %22 = sbr.rel (0) target = $region5
  $region4: #{seq2seq_forward.1} parent=0 // pred_region
    _
  $region5: #{seq2seq_forward.1} parent=0 // pred_fallthru
    _
  // Predicated region
  $region6: #{seq2seq_forward.1} parent=0 // pred_check
    _
  $region7: #{seq2seq_forward.1} parent=0 // pred_check_branch
    %24 = sbr.rel (0) target = $region9
  $region8: #{seq2seq_forward.1} parent=0 // pred_region
    _
  $region9: #{seq2seq_forward.1} parent=0 // pred_fallthru
    _
  // Predicated region
  $region10: #{seq2seq_forward.1} parent=0 // pred_check
    _
  $region11: #{seq2seq_forward.1} parent=0 // pred_check_branch
    %26 = sbr.rel (0) target = $region13
  $region12: #{seq2seq_forward.1} parent=0 // pred_region
    _
  $region13: #{seq2seq_forward.1} parent=0 // pred_fallthru
    _
  // Predicated region
  $region14: #{seq2seq_forward.1} parent=0 // pred_check
    _
  $region15: #{seq2seq_forward.1} parent=0 // pred_check_branch
    %28 = sbr.rel (0) target = $region17
  $region16: #{seq2seq_forward.1} parent=0 // pred_region
    _
  $region17: #{seq2seq_forward.1} parent=0 // pred_fallthru
    _
  // Predicated region
  $region18: #{seq2seq_forward.1} parent=0 // pred_check
    _
  $region19: #{seq2seq_forward.1} parent=0 // pred_check_branch
    %30 = sbr.rel (0) target = $region21
  $region20: #{seq2seq_forward.1} parent=0 // pred_region
    _
  $region21: #{seq2seq_forward.1} parent=0 // pred_fallthru
    _
  // Predicated region
  $region22: #{seq2seq_forward.1} parent=0 // pred_check
    _
  $region23: #{seq2seq_forward.1} parent=0 // pred_check_branch
    %32 = sbr.rel (0) target = $region25
  $region24: #{seq2seq_forward.1} parent=0 // pred_region
    _
  $region25: #{seq2seq_forward.1} parent=0 // pred_fallthru
    _
  // Predicated region
  $region26: #{seq2seq_forward.1} parent=0 // pred_check
    _
  $region27: #{seq2seq_forward.1} parent=0 // pred_check_branch
    %34 = sbr.rel (0) target = $region29
  $region28: #{seq2seq_forward.1} parent=0 // pred_region
    _
  $region29: #{seq2seq_forward.1} parent=0 // pred_fallthru
    _
  // Predicated region
  $region30: #{seq2seq_forward.1} parent=0 // pred_check
    _
  $region31: #{seq2seq_forward.1} parent=0 // pred_check_branch
    %36 = sbr.rel (0) target = $region33
  $region32: #{seq2seq_forward.1} parent=0 // pred_region
    _
  $region33: #{seq2seq_forward.1} parent=0 // pred_fallthru
    _
  // Predicated region
  $region34: #{seq2seq_forward.1} parent=0 // pred_check
    _
  $region35: #{seq2seq_forward.1} parent=0 // pred_check_branch
    %38 = sbr.rel (0) target = $region37
  $region36: #{seq2seq_forward.1} parent=0 // pred_region
    _
  $region37: #{seq2seq_forward.1} parent=0 // pred_fallthru
    _
  // Predicated region
  $region38: #{seq2seq_forward.1} parent=0 // pred_check
    _
  $region39: #{seq2seq_forward.1} parent=0 // pred_check_branch
    %40 = sbr.rel (0) target = $region41
  $region40: #{seq2seq_forward.1} parent=0 // pred_region
    _
  $region41: #{seq2seq_forward.1} parent=0 // pred_fallthru
    _
  // Predicated region
  $region42: #{seq2seq_forward.1} parent=0 // pred_check
    _
  $region43: #{seq2seq_forward.1} parent=0 // pred_check_branch
    %42 = sbr.rel (0) target = $region45
  $region44: #{seq2seq_forward.1} parent=0 // pred_region
    _
  $region45: #{seq2seq_forward.1} parent=0 // pred_fallthru
    _
  // Predicated region
  $region46: #{seq2seq_forward.1} parent=0 // pred_check
    _
  $region47: #{seq2seq_forward.1} parent=0 // pred_check_branch
    %44 = sbr.rel (0) target = $region49
  $region48: #{seq2seq_forward.1} parent=0 // pred_region
    _
  $region49: #{seq2seq_forward.1} parent=0 // pred_fallthru
    _
  // Predicated region
  $region50: #{seq2seq_forward.1} parent=0 // pred_check
    _
  $region51: #{seq2seq_forward.1} parent=0 // pred_check_branch
    %46 = sbr.rel (0) target = $region53
  $region52: #{seq2seq_forward.1} parent=0 // pred_region
    _
  $region53: #{seq2seq_forward.1} parent=0 // pred_fallthru
    _
  // Predicated region
  $region54: #{seq2seq_forward.1} parent=0 // pred_check
    _
  $region55: #{seq2seq_forward.1} parent=0 // pred_check_branch
    %48 = sbr.rel (0) target = $region57
  $region56: #{seq2seq_forward.1} parent=0 // pred_region
    _
  $region57: #{seq2seq_forward.1} parent=0 // pred_fallthru
    _
  // Predicated region
  $region58: #{seq2seq_forward.1} parent=0 // pred_check
    _
  $region59: #{seq2seq_forward.1} parent=0 // pred_check_branch
    %50 = sbr.rel (0) target = $region61
  $region60: #{seq2seq_forward.1} parent=0 // pred_region
    _
  $region61: #{seq2seq_forward.1} parent=0 // pred_fallthru
    _
  // Predicated region
  $region62: #{seq2seq_forward.1} parent=0 // pred_check
    _
  $region63: #{seq2seq_forward.1} parent=0 // pred_check_branch
    %52 = sbr.rel (0) target = $region65
  $region64: #{seq2seq_forward.1} parent=0 // pred_region
    _
  $region65: #{seq2seq_forward.1} parent=0 // pred_fallthru
    _
  %v53 = vld [vmem:[%s0] sm:$0xff]
  %v54 = vld [vmem:[%s0 + $0x8] sm:$0xff]
  %v55 = vld [vmem:[%s3] sm:$0xff]
  %v56 = vld [vmem:[%s3 + $0x8] sm:$0xff]
  %v57 = vld [vmem:[%s3 + $0x10] sm:$0xff]
  %v58 = vld [vmem:[%s3 + $0x18] sm:$0xff]
  %v59 = vld [vmem:[%s4] sm:$0xff]
  %v60 = vld [vmem:[%s4 + $0x8] sm:$0xff]
  %v61 = vld [vmem:[%s4 + $0x10] sm:$0xff]
  %v62 = vld [vmem:[%s4 + $0x18] sm:$0xff]
  %v63 = vld [vmem:[%s6] sm:$0xff]
  %v64 = vld [vmem:[%s6 + $0x8] sm:$0xff]
  %v65 = vld [vmem:[%s6 + $0x10] sm:$0xff]
  %v66 = vld [vmem:[%s6 + $0x18] sm:$0xff]
  %v67 = vld [vmem:[%s5] sm:$0x1]
  %vm68 = vcmask 261120
  %v70 = vsel %vm68, %v53, 0
  %v73 = vsel %vm68, %v54, 0
  %75 = vmatprep.subr.mxu0 0.0
  %76 = vmatpush1.msra.mxu0 %v55
  %77 = vmatprep.subr.mxu0 0.0
  %78 = vmatpush1.msra.mxu0 %v56
  %79 = vmatprep.subr.mxu0 0.0
  %80 = vmatpush1.msra.mxu0 %v57
  %81 = vmatprep.subr.mxu0 0.0
  %82 = vmatpush1.msra.mxu0 %v58
  %83 = vmatprep.subr.mxu0 0.0
  %84 = vmatpush1.msra.mxu0 0.0
  %85 = vmatprep.subr.mxu0 0.0
  %86 = vmatpush1.msra.mxu0 0.0
  %87 = vmatprep.subr.mxu0 0.0
  %88 = vmatpush1.msra.mxu0 0.0
  %89 = vmatprep.subr.mxu0 0.0
  %90 = vmatpush1.msra.mxu0 0.0
  %91 = vmatprep.subr.mxu0 0.0
  %92 = vmatpush1.msra.mxu0 0.0
  %93 = vmatprep.subr.mxu0 0.0
  %94 = vmatpush1.msra.mxu0 0.0
  %95 = vmatprep.subr.mxu0 0.0
  %96 = vmatpush1.msra.mxu0 0.0
  %97 = vmatprep.subr.mxu0 0.0
  %98 = vmatpush1.msra.mxu0 0.0
  %99 = vmatprep.subr.mxu0 0.0
  %100 = vmatpush1.msra.mxu0 0.0
  %101 = vmatprep.subr.mxu0 0.0
  %102 = vmatpush1.msra.mxu0 0.0
  %103 = vmatprep.subr.mxu0 0.0
  %104 = vmatpush1.msra.mxu0 0.0
  %105 = vmatprep.subr.mxu0 0.0
  %106 = vmatpush1.msra.mxu0 0.0
  %107 = vmatprep.subr.mxu0 0.0
  %108 = vmatpush1.msra.mxu0 0.0
  %109 = vmatprep.subr.mxu0 0.0
  %110 = vmatpush1.msra.mxu0 0.0
  %111 = vmatprep.subr.mxu0 0.0
  %112 = vmatpush1.msra.mxu0 0.0
  %113 = vmatprep.subr.mxu0 0.0
  %114 = vmatpush1.msra.mxu0 0.0
  %115 = vmatprep.subr.mxu0 0.0
  %116 = vmatpush1.msra.mxu0 0.0
  %117 = vmatprep.subr.mxu0 0.0
  %118 = vmatpush1.msra.mxu0 0.0
  %119 = vmatprep.subr.mxu0 0.0
  %120 = vmatpush1.msra.mxu0 0.0
  %121 = vmatprep.subr.mxu0 0.0
  %122 = vmatpush1.msra.mxu0 0.0
  %123 = vmatprep.subr.mxu0 0.0
  %124 = vmatpush1.msra.mxu0 0.0
  %125 = vmatprep.subr.mxu0 0.0
  %126 = vmatpush1.msra.mxu0 0.0
  %127 = vmatprep.subr.mxu0 0.0
  %128 = vmatpush1.msra.mxu0 0.0
  %129 = vmatprep.subr.mxu0 0.0
  %130 = vmatpush1.msra.mxu0 0.0
  %131 = vmatprep.subr.mxu0 0.0
  %132 = vmatpush1.msra.mxu0 0.0
  %133 = vmatprep.subr.mxu0 0.0
  %134 = vmatpush1.msra.mxu0 0.0
  %135 = vmatprep.subr.mxu0 0.0
  %136 = vmatpush1.msra.mxu0 0.0
  %137 = vmatprep.subr.mxu0 0.0
  %138 = vmatpush1.msra.mxu0 0.0
  %139 = vmatprep.mubr.f32.mxu0 0.0
  %140 = vmatmul.mubr.f32.gmra.mrb[0].mxu0 %v70
  %v141 = vpop.f32.mrb[0].mxu0
  %v142 = vadd.f32 0.0, %v141
  %v143 = vpop.f32.mrb[0].mxu0
  %144 = vmatprep.mubr.f32.mxu0 0.0
  %145 = vmatmul.mubr.f32.gmra.mrb[0].mxu0 %v73
  %v146 = vpop.f32.mrb[0].mxu0
  %v147 = vadd.f32 0.0, %v146
  %v148 = vpop.f32.mrb[0].mxu0
  %149 = vdwg.mxu0
  %150 = vmatprep.subr.mxu0 0.0
  %151 = vmatpush1.msra.mxu0 %v59
  %152 = vmatprep.subr.mxu0 0.0
  %153 = vmatpush1.msra.mxu0 %v60
  %154 = vmatprep.subr.mxu0 0.0
  %155 = vmatpush1.msra.mxu0 %v61
  %156 = vmatprep.subr.mxu0 0.0
  %157 = vmatpush1.msra.mxu0 %v62
  %158 = vmatprep.subr.mxu0 0.0
  %159 = vmatpush1.msra.mxu0 0.0
  %160 = vmatprep.subr.mxu0 0.0
  %161 = vmatpush1.msra.mxu0 0.0
  %162 = vmatprep.subr.mxu0 0.0
  %163 = vmatpush1.msra.mxu0 0.0
  %164 = vmatprep.subr.mxu0 0.0
  %165 = vmatpush1.msra.mxu0 0.0
  %166 = vmatprep.subr.mxu0 0.0
  %167 = vmatpush1.msra.mxu0 0.0
  %168 = vmatprep.subr.mxu0 0.0
  %169 = vmatpush1.msra.mxu0 0.0
  %170 = vmatprep.subr.mxu0 0.0
  %171 = vmatpush1.msra.mxu0 0.0
  %172 = vmatprep.subr.mxu0 0.0
  %173 = vmatpush1.msra.mxu0 0.0
  %174 = vmatprep.subr.mxu0 0.0
  %175 = vmatpush1.msra.mxu0 0.0
  %176 = vmatprep.subr.mxu0 0.0
  %177 = vmatpush1.msra.mxu0 0.0
  %178 = vmatprep.subr.mxu0 0.0
  %179 = vmatpush1.msra.mxu0 0.0
  %180 = vmatprep.subr.mxu0 0.0
  %181 = vmatpush1.msra.mxu0 0.0
  %182 = vmatprep.subr.mxu0 0.0
  %183 = vmatpush1.msra.mxu0 0.0
  %184 = vmatprep.subr.mxu0 0.0
  %185 = vmatpush1.msra.mxu0 0.0
  %186 = vmatprep.subr.mxu0 0.0
  %187 = vmatpush1.msra.mxu0 0.0
  %188 = vmatprep.subr.mxu0 0.0
  %189 = vmatpush1.msra.mxu0 0.0
  %190 = vmatprep.subr.mxu0 0.0
  %191 = vmatpush1.msra.mxu0 0.0
  %192 = vmatprep.subr.mxu0 0.0
  %193 = vmatpush1.msra.mxu0 0.0
  %194 = vmatprep.subr.mxu0 0.0
  %195 = vmatpush1.msra.mxu0 0.0
  %196 = vmatprep.subr.mxu0 0.0
  %197 = vmatpush1.msra.mxu0 0.0
  %198 = vmatprep.subr.mxu0 0.0
  %199 = vmatpush1.msra.mxu0 0.0
  %200 = vmatprep.subr.mxu0 0.0
  %201 = vmatpush1.msra.mxu0 0.0
  %202 = vmatprep.subr.mxu0 0.0
  %203 = vmatpush1.msra.mxu0 0.0
  %204 = vmatprep.subr.mxu0 0.0
  %205 = vmatpush1.msra.mxu0 0.0
  %206 = vmatprep.subr.mxu0 0.0
  %207 = vmatpush1.msra.mxu0 0.0
  %208 = vmatprep.subr.mxu0 0.0
  %209 = vmatpush1.msra.mxu0 0.0
  %210 = vmatprep.subr.mxu0 0.0
  %211 = vmatpush1.msra.mxu0 0.0
  %212 = vmatprep.subr.mxu0 0.0
  %213 = vmatpush1.msra.mxu0 0.0
  %214 = vmatprep.mubr.f32.mxu0 0.0
  %215 = vmatmul.mubr.f32.gmra.mrb[0].mxu0 %v70
  %v216 = vpop.f32.mrb[0].mxu0
  %v217 = vadd.f32 0.0, %v216
  %v218 = vpop.f32.mrb[0].mxu0
  %219 = vmatprep.mubr.f32.mxu0 0.0
  %220 = vmatmul.mubr.f32.gmra.mrb[0].mxu0 %v73
  %v221 = vpop.f32.mrb[0].mxu0
  %v222 = vadd.f32 0.0, %v221
  %v223 = vpop.f32.mrb[0].mxu0
  %224 = vdwg.mxu0
  %v226 = vrot.slane %v222, 6
  %v228 = vadd.f32 %v142, %v226
  %v230 = vlaneseq
  %v231 = vshrl.u32 %v230, 7
  %v232 = vsub.s32 0, %v231
  %v233 = vrot.slane %v67, %v232
  %v235 = vadd.f32 %v228, %v233
  %v237 = vsel %vm68, 0.0, 0
  %239 = vmatprep.subr.mxu0 0.0
  %240 = vmatpush1.msra.mxu0 %v63
  %241 = vmatprep.subr.mxu0 0.0
  %242 = vmatpush1.msra.mxu0 %v64
  %243 = vmatprep.subr.mxu0 0.0
  %244 = vmatpush1.msra.mxu0 %v65
  %245 = vmatprep.subr.mxu0 0.0
  %246 = vmatpush1.msra.mxu0 %v66
  %247 = vmatprep.subr.mxu0 0.0
  %248 = vmatpush1.msra.mxu0 0.0
  %249 = vmatprep.subr.mxu0 0.0
  %250 = vmatpush1.msra.mxu0 0.0
  %251 = vmatprep.subr.mxu0 0.0
  %252 = vmatpush1.msra.mxu0 0.0
  %253 = vmatprep.subr.mxu0 0.0
  %254 = vmatpush1.msra.mxu0 0.0
  %255 = vmatprep.subr.mxu0 0.0
  %256 = vmatpush1.msra.mxu0 0.0
  %257 = vmatprep.subr.mxu0 0.0
  %258 = vmatpush1.msra.mxu0 0.0
  %259 = vmatprep.subr.mxu0 0.0
  %260 = vmatpush1.msra.mxu0 0.0
  %261 = vmatprep.subr.mxu0 0.0
  %262 = vmatpush1.msra.mxu0 0.0
  %263 = vmatprep.subr.mxu0 0.0
  %264 = vmatpush1.msra.mxu0 0.0
  %265 = vmatprep.subr.mxu0 0.0
  %266 = vmatpush1.msra.mxu0 0.0
  %267 = vmatprep.subr.mxu0 0.0
  %268 = vmatpush1.msra.mxu0 0.0
  %269 = vmatprep.subr.mxu0 0.0
  %270 = vmatpush1.msra.mxu0 0.0
  %271 = vmatprep.subr.mxu0 0.0
  %272 = vmatpush1.msra.mxu0 0.0
  %273 = vmatprep.subr.mxu0 0.0
  %274 = vmatpush1.msra.mxu0 0.0
  %275 = vmatprep.subr.mxu0 0.0
  %276 = vmatpush1.msra.mxu0 0.0
  %277 = vmatprep.subr.mxu0 0.0
  %278 = vmatpush1.msra.mxu0 0.0
  %279 = vmatprep.subr.mxu0 0.0
  %280 = vmatpush1.msra.mxu0 0.0
  %281 = vmatprep.subr.mxu0 0.0
  %282 = vmatpush1.msra.mxu0 0.0
  %283 = vmatprep.subr.mxu0 0.0
  %284 = vmatpush1.msra.mxu0 0.0
  %285 = vmatprep.subr.mxu0 0.0
  %286 = vmatpush1.msra.mxu0 0.0
  %287 = vmatprep.subr.mxu0 0.0
  %288 = vmatpush1.msra.mxu0 0.0
  %289 = vmatprep.subr.mxu0 0.0
  %290 = vmatpush1.msra.mxu0 0.0
  %291 = vmatprep.subr.mxu0 0.0
  %292 = vmatpush1.msra.mxu0 0.0
  %293 = vmatprep.subr.mxu0 0.0
  %294 = vmatpush1.msra.mxu0 0.0
  %295 = vmatprep.subr.mxu0 0.0
  %296 = vmatpush1.msra.mxu0 0.0
  %297 = vmatprep.subr.mxu0 0.0
  %298 = vmatpush1.msra.mxu0 0.0
  %299 = vmatprep.subr.mxu0 0.0
  %300 = vmatpush1.msra.mxu0 0.0
  %301 = vmatprep.subr.mxu0 0.0
  %302 = vmatpush1.msra.mxu0 0.0
  %303 = vmatprep.mubr.f32.mxu0 0.0
  %304 = vmatmul.mubr.f32.gmra.mrb[0].mxu0 %v237
  %v305 = vpop.f32.mrb[0].mxu0
  %v306 = vadd.f32 0.0, %v305
  %v307 = vpop.f32.mrb[0].mxu0
  %308 = vdwg.mxu0
  %v309 = vadd.f32 %v235, %v306
  %v310 = vxor.u32 %v309, 2147483648
  %v311 = vmul.f32 %v310, 1.442695
  %v312 = vpow.pop %v311
  %v313 = vadd.f32 %v312, 1.0
  %v314 = vrcp.pop %v313
  %v315 = vmul.f32 1.0, %v314
  %v316 = vtanh.pop %v309
  %v317 = vmul.f32 %v315, 0.0
  %319 = vrot.lane.b32.xlu0 %v316, 64
  %v320 = vpop.permute.xlu0 %319
  %v322 = vmul.f32 %v315, %v320
  %324 = vrot.lane.b32.xlu0 %v322, 32
  %v325 = vpop.permute.xlu0 %324
  %v327 = vadd.f32 %v317, %v325
  %v328 = vtanh.pop %v327
  %330 = vrot.lane.b32.xlu0 %v328, 64
  %v331 = vpop.permute.xlu0 %330
  %v333 = vmul.f32 %v315, %v331
  %v334 = vrot.slane %v222, 2
  %v336 = vadd.f32 %v142, %v334
  %v337 = vadd.f32 %v336, %v233
  %339 = vrot.lane.b32.xlu0 %v333, 32
  %v340 = vpop.permute.xlu0 %339
  %v341 = vsel %vm68, %v340, 0
  %343 = vmatprep.subr.mxu0 0.0
  %344 = vmatpush1.msra.mxu0 %v63
  %345 = vmatprep.subr.mxu0 0.0
  %346 = vmatpush1.msra.mxu0 %v64
  %347 = vmatprep.subr.mxu0 0.0
  %348 = vmatpush1.msra.mxu0 %v65
  %349 = vmatprep.subr.mxu0 0.0
  %350 = vmatpush1.msra.mxu0 %v66
  %351 = vmatprep.subr.mxu0 0.0
  %352 = vmatpush1.msra.mxu0 0.0
  %353 = vmatprep.subr.mxu0 0.0
  %354 = vmatpush1.msra.mxu0 0.0
  %355 = vmatprep.subr.mxu0 0.0
  %356 = vmatpush1.msra.mxu0 0.0
  %357 = vmatprep.subr.mxu0 0.0
  %358 = vmatpush1.msra.mxu0 0.0
  %359 = vmatprep.subr.mxu0 0.0
  %360 = vmatpush1.msra.mxu0 0.0
  %361 = vmatprep.subr.mxu0 0.0
  %362 = vmatpush1.msra.mxu0 0.0
  %363 = vmatprep.subr.mxu0 0.0
  %364 = vmatpush1.msra.mxu0 0.0
  %365 = vmatprep.subr.mxu0 0.0
  %366 = vmatpush1.msra.mxu0 0.0
  %367 = vmatprep.subr.mxu0 0.0
  %368 = vmatpush1.msra.mxu0 0.0
  %369 = vmatprep.subr.mxu0 0.0
  %370 = vmatpush1.msra.mxu0 0.0
  %371 = vmatprep.subr.mxu0 0.0
  %372 = vmatpush1.msra.mxu0 0.0
  %373 = vmatprep.subr.mxu0 0.0
  %374 = vmatpush1.msra.mxu0 0.0
  %375 = vmatprep.subr.mxu0 0.0
  %376 = vmatpush1.msra.mxu0 0.0
  %377 = vmatprep.subr.mxu0 0.0
  %378 = vmatpush1.msra.mxu0 0.0
  %379 = vmatprep.subr.mxu0 0.0
  %380 = vmatpush1.msra.mxu0 0.0
  %381 = vmatprep.subr.mxu0 0.0
  %382 = vmatpush1.msra.mxu0 0.0
  %383 = vmatprep.subr.mxu0 0.0
  %384 = vmatpush1.msra.mxu0 0.0
  %385 = vmatprep.subr.mxu0 0.0
  %386 = vmatpush1.msra.mxu0 0.0
  %387 = vmatprep.subr.mxu0 0.0
  %388 = vmatpush1.msra.mxu0 0.0
  %389 = vmatprep.subr.mxu0 0.0
  %390 = vmatpush1.msra.mxu0 0.0
  %391 = vmatprep.subr.mxu0 0.0
  %392 = vmatpush1.msra.mxu0 0.0
  %393 = vmatprep.subr.mxu0 0.0
  %394 = vmatpush1.msra.mxu0 0.0
  %395 = vmatprep.subr.mxu0 0.0
  %396 = vmatpush1.msra.mxu0 0.0
  %397 = vmatprep.subr.mxu0 0.0
  %398 = vmatpush1.msra.mxu0 0.0
  %399 = vmatprep.subr.mxu0 0.0
  %400 = vmatpush1.msra.mxu0 0.0
  %401 = vmatprep.subr.mxu0 0.0
  %402 = vmatpush1.msra.mxu0 0.0
  %403 = vmatprep.subr.mxu0 0.0
  %404 = vmatpush1.msra.mxu0 0.0
  %405 = vmatprep.subr.mxu0 0.0
  %406 = vmatpush1.msra.mxu0 0.0
  %407 = vmatprep.mubr.f32.mxu0 0.0
  %408 = vmatmul.mubr.f32.gmra.mrb[0].mxu0 %v341
  %v409 = vpop.f32.mrb[0].mxu0
  %v410 = vadd.f32 0.0, %v409
  %v411 = vpop.f32.mrb[0].mxu0
  %412 = vdwg.mxu0
  %v414 = vrot.slane %v410, 6
  %v416 = vadd.f32 %v337, %v414
  %v417 = vxor.u32 %v416, 2147483648
  %v418 = vmul.f32 %v417, 1.442695
  %v419 = vpow.pop %v418
  %v420 = vadd.f32 %v419, 1.0
  %v421 = vrcp.pop %v420
  %v422 = vmul.f32 1.0, %v421
  %v423 = vtanh.pop %v416
  %v425 = vrot.slane %v327, 6
  %v427 = vmul.f32 %v422, %v425
  %429 = vrot.lane.b32.xlu0 %v423, 64
  %v430 = vpop.permute.xlu0 %429
  %v432 = vmul.f32 %v422, %v430
  %434 = vrot.lane.b32.xlu0 %v432, 32
  %v435 = vpop.permute.xlu0 %434
  %v437 = vadd.f32 %v427, %v435
  %v438 = vtanh.pop %v437
  %440 = vrot.lane.b32.xlu0 %v438, 64
  %v441 = vpop.permute.xlu0 %440
  %v443 = vmul.f32 %v422, %v441
  %v445 = vrot.slane %v443, 2
  %446 = vrot.lane.b32.xlu0 %v445, 32
  %v447 = vpop.permute.xlu0 %446
  %v448 = vsel %vm68, %v447, 0
  %450 = vmatprep.subr.mxu0 0.0
  %451 = vmatpush1.msra.mxu0 %v63
  %452 = vmatprep.subr.mxu0 0.0
  %453 = vmatpush1.msra.mxu0 %v64
  %454 = vmatprep.subr.mxu0 0.0
  %455 = vmatpush1.msra.mxu0 %v65
  %456 = vmatprep.subr.mxu0 0.0
  %457 = vmatpush1.msra.mxu0 %v66
  %458 = vmatprep.subr.mxu0 0.0
  %459 = vmatpush1.msra.mxu0 0.0
  %460 = vmatprep.subr.mxu0 0.0
  %461 = vmatpush1.msra.mxu0 0.0
  %462 = vmatprep.subr.mxu0 0.0
  %463 = vmatpush1.msra.mxu0 0.0
  %464 = vmatprep.subr.mxu0 0.0
  %465 = vmatpush1.msra.mxu0 0.0
  %466 = vmatprep.subr.mxu0 0.0
  %467 = vmatpush1.msra.mxu0 0.0
  %468 = vmatprep.subr.mxu0 0.0
  %469 = vmatpush1.msra.mxu0 0.0
  %470 = vmatprep.subr.mxu0 0.0
  %471 = vmatpush1.msra.mxu0 0.0
  %472 = vmatprep.subr.mxu0 0.0
  %473 = vmatpush1.msra.mxu0 0.0
  %474 = vmatprep.subr.mxu0 0.0
  %475 = vmatpush1.msra.mxu0 0.0
  %476 = vmatprep.subr.mxu0 0.0
  %477 = vmatpush1.msra.mxu0 0.0
  %478 = vmatprep.subr.mxu0 0.0
  %479 = vmatpush1.msra.mxu0 0.0
  %480 = vmatprep.subr.mxu0 0.0
  %481 = vmatpush1.msra.mxu0 0.0
  %482 = vmatprep.subr.mxu0 0.0
  %483 = vmatpush1.msra.mxu0 0.0
  %484 = vmatprep.subr.mxu0 0.0
  %485 = vmatpush1.msra.mxu0 0.0
  %486 = vmatprep.subr.mxu0 0.0
  %487 = vmatpush1.msra.mxu0 0.0
  %488 = vmatprep.subr.mxu0 0.0
  %489 = vmatpush1.msra.mxu0 0.0
  %490 = vmatprep.subr.mxu0 0.0
  %491 = vmatpush1.msra.mxu0 0.0
  %492 = vmatprep.subr.mxu0 0.0
  %493 = vmatpush1.msra.mxu0 0.0
  %494 = vmatprep.subr.mxu0 0.0
  %495 = vmatpush1.msra.mxu0 0.0
  %496 = vmatprep.subr.mxu0 0.0
  %497 = vmatpush1.msra.mxu0 0.0
  %498 = vmatprep.subr.mxu0 0.0
  %499 = vmatpush1.msra.mxu0 0.0
  %500 = vmatprep.subr.mxu0 0.0
  %501 = vmatpush1.msra.mxu0 0.0
  %502 = vmatprep.subr.mxu0 0.0
  %503 = vmatpush1.msra.mxu0 0.0
  %504 = vmatprep.subr.mxu0 0.0
  %505 = vmatpush1.msra.mxu0 0.0
  %506 = vmatprep.subr.mxu0 0.0
  %507 = vmatpush1.msra.mxu0 0.0
  %508 = vmatprep.subr.mxu0 0.0
  %509 = vmatpush1.msra.mxu0 0.0
  %510 = vmatprep.subr.mxu0 0.0
  %511 = vmatpush1.msra.mxu0 0.0
  %512 = vmatprep.subr.mxu0 0.0
  %513 = vmatpush1.msra.mxu0 0.0
  %514 = vmatprep.mubr.f32.mxu0 0.0
  %515 = vmatmul.mubr.f32.gmra.mrb[0].mxu0 %v448
  %v516 = vpop.f32.mrb[0].mxu0
  %v517 = vadd.f32 0.0, %v516
  %v518 = vpop.f32.mrb[0].mxu0
  %519 = vdwg.mxu0
  %v521 = vrot.slane %v517, 4
  %v523 = vadd.f32 %v235, %v521
  %v524 = vxor.u32 %v523, 2147483648
  %v525 = vmul.f32 %v524, 1.442695
  %v526 = vpow.pop %v525
  %v527 = vadd.f32 %v526, 1.0
  %v528 = vrcp.pop %v527
  %v529 = vmul.f32 1.0, %v528
  %v530 = vtanh.pop %v523
  %v532 = vrot.slane %v437, 6
  %v534 = vmul.f32 %v529, %v532
  %536 = vrot.lane.b32.xlu0 %v530, 64
  %v537 = vpop.permute.xlu0 %536
  %v539 = vmul.f32 %v529, %v537
  %541 = vrot.lane.b32.xlu0 %v539, 32
  %v542 = vpop.permute.xlu0 %541
  %v544 = vadd.f32 %v534, %v542
  %v545 = vtanh.pop %v544
  %547 = vrot.lane.b32.xlu0 %v545, 64
  %v548 = vpop.permute.xlu0 %547
  %v550 = vmul.f32 %v529, %v548
  %v552 = vrot.slane %v550, 4
  %553 = vrot.lane.b32.xlu0 %v552, 32
  %v554 = vpop.permute.xlu0 %553
  %v555 = vsel %vm68, %v554, 0
  %557 = vmatprep.subr.mxu0 0.0
  %558 = vmatpush1.msra.mxu0 %v63
  %559 = vmatprep.subr.mxu0 0.0
  %560 = vmatpush1.msra.mxu0 %v64
  %561 = vmatprep.subr.mxu0 0.0
  %562 = vmatpush1.msra.mxu0 %v65
  %563 = vmatprep.subr.mxu0 0.0
  %564 = vmatpush1.msra.mxu0 %v66
  %565 = vmatprep.subr.mxu0 0.0
  %566 = vmatpush1.msra.mxu0 0.0
  %567 = vmatprep.subr.mxu0 0.0
  %568 = vmatpush1.msra.mxu0 0.0
  %569 = vmatprep.subr.mxu0 0.0
  %570 = vmatpush1.msra.mxu0 0.0
  %571 = vmatprep.subr.mxu0 0.0
  %572 = vmatpush1.msra.mxu0 0.0
  %573 = vmatprep.subr.mxu0 0.0
  %574 = vmatpush1.msra.mxu0 0.0
  %575 = vmatprep.subr.mxu0 0.0
  %576 = vmatpush1.msra.mxu0 0.0
  %577 = vmatprep.subr.mxu0 0.0
  %578 = vmatpush1.msra.mxu0 0.0
  %579 = vmatprep.subr.mxu0 0.0
  %580 = vmatpush1.msra.mxu0 0.0
  %581 = vmatprep.subr.mxu0 0.0
  %582 = vmatpush1.msra.mxu0 0.0
  %583 = vmatprep.subr.mxu0 0.0
  %584 = vmatpush1.msra.mxu0 0.0
  %585 = vmatprep.subr.mxu0 0.0
  %586 = vmatpush1.msra.mxu0 0.0
  %587 = vmatprep.subr.mxu0 0.0
  %588 = vmatpush1.msra.mxu0 0.0
  %589 = vmatprep.subr.mxu0 0.0
  %590 = vmatpush1.msra.mxu0 0.0
  %591 = vmatprep.subr.mxu0 0.0
  %592 = vmatpush1.msra.mxu0 0.0
  %593 = vmatprep.subr.mxu0 0.0
  %594 = vmatpush1.msra.mxu0 0.0
  %595 = vmatprep.subr.mxu0 0.0
  %596 = vmatpush1.msra.mxu0 0.0
  %597 = vmatprep.subr.mxu0 0.0
  %598 = vmatpush1.msra.mxu0 0.0
  %599 = vmatprep.subr.mxu0 0.0
  %600 = vmatpush1.msra.mxu0 0.0
  %601 = vmatprep.subr.mxu0 0.0
  %602 = vmatpush1.msra.mxu0 0.0
  %603 = vmatprep.subr.mxu0 0.0
  %604 = vmatpush1.msra.mxu0 0.0
  %605 = vmatprep.subr.mxu0 0.0
  %606 = vmatpush1.msra.mxu0 0.0
  %607 = vmatprep.subr.mxu0 0.0
  %608 = vmatpush1.msra.mxu0 0.0
  %609 = vmatprep.subr.mxu0 0.0
  %610 = vmatpush1.msra.mxu0 0.0
  %611 = vmatprep.subr.mxu0 0.0
  %612 = vmatpush1.msra.mxu0 0.0
  %613 = vmatprep.subr.mxu0 0.0
  %614 = vmatpush1.msra.mxu0 0.0
  %615 = vmatprep.subr.mxu0 0.0
  %616 = vmatpush1.msra.mxu0 0.0
  %617 = vmatprep.subr.mxu0 0.0
  %618 = vmatpush1.msra.mxu0 0.0
  %619 = vmatprep.subr.mxu0 0.0
  %620 = vmatpush1.msra.mxu0 0.0
  %621 = vmatprep.mubr.f32.mxu0 0.0
  %622 = vmatmul.mubr.f32.gmra.mrb[0].mxu0 %v555
  %v623 = vpop.f32.mrb[0].mxu0
  %v624 = vadd.f32 0.0, %v623
  %v625 = vpop.f32.mrb[0].mxu0
  %626 = vdwg.mxu0
  %v628 = vrot.slane %v624, 2
  %v630 = vadd.f32 %v337, %v628
  %v631 = vxor.u32 %v630, 2147483648
  %v632 = vmul.f32 %v631, 1.442695
  %v633 = vpow.pop %v632
  %v634 = vadd.f32 %v633, 1.0
  %v635 = vrcp.pop %v634
  %v636 = vmul.f32 1.0, %v635
  %v637 = vtanh.pop %v630
  %v639 = vrot.slane %v544, 6
  %v641 = vmul.f32 %v636, %v639
  %643 = vrot.lane.b32.xlu0 %v637, 64
  %v644 = vpop.permute.xlu0 %643
  %v646 = vmul.f32 %v636, %v644
  %648 = vrot.lane.b32.xlu0 %v646, 32
  %v649 = vpop.permute.xlu0 %648
  %v651 = vadd.f32 %v641, %v649
  %v652 = vtanh.pop %v651
  %654 = vrot.lane.b32.xlu0 %v652, 64
  %v655 = vpop.permute.xlu0 %654
  %v657 = vmul.f32 %v636, %v655
  %v659 = vrot.slane %v217, 6
  %v661 = vadd.f32 %v147, %v659
  %v662 = vadd.f32 %v661, %v233
  %v664 = vrot.slane %v657, 6
  %665 = vrot.lane.b32.xlu0 %v664, 32
  %v666 = vpop.permute.xlu0 %665
  %v667 = vsel %vm68, %v666, 0
  %669 = vmatprep.subr.mxu0 0.0
  %670 = vmatpush1.msra.mxu0 %v63
  %671 = vmatprep.subr.mxu0 0.0
  %672 = vmatpush1.msra.mxu0 %v64
  %673 = vmatprep.subr.mxu0 0.0
  %674 = vmatpush1.msra.mxu0 %v65
  %675 = vmatprep.subr.mxu0 0.0
  %676 = vmatpush1.msra.mxu0 %v66
  %677 = vmatprep.subr.mxu0 0.0
  %678 = vmatpush1.msra.mxu0 0.0
  %679 = vmatprep.subr.mxu0 0.0
  %680 = vmatpush1.msra.mxu0 0.0
  %681 = vmatprep.subr.mxu0 0.0
  %682 = vmatpush1.msra.mxu0 0.0
  %683 = vmatprep.subr.mxu0 0.0
  %684 = vmatpush1.msra.mxu0 0.0
  %685 = vmatprep.subr.mxu0 0.0
  %686 = vmatpush1.msra.mxu0 0.0
  %687 = vmatprep.subr.mxu0 0.0
  %688 = vmatpush1.msra.mxu0 0.0
  %689 = vmatprep.subr.mxu0 0.0
  %690 = vmatpush1.msra.mxu0 0.0
  %691 = vmatprep.subr.mxu0 0.0
  %692 = vmatpush1.msra.mxu0 0.0
  %693 = vmatprep.subr.mxu0 0.0
  %694 = vmatpush1.msra.mxu0 0.0
  %695 = vmatprep.subr.mxu0 0.0
  %696 = vmatpush1.msra.mxu0 0.0
  %697 = vmatprep.subr.mxu0 0.0
  %698 = vmatpush1.msra.mxu0 0.0
  %699 = vmatprep.subr.mxu0 0.0
  %700 = vmatpush1.msra.mxu0 0.0
  %701 = vmatprep.subr.mxu0 0.0
  %702 = vmatpush1.msra.mxu0 0.0
  %703 = vmatprep.subr.mxu0 0.0
  %704 = vmatpush1.msra.mxu0 0.0
  %705 = vmatprep.subr.mxu0 0.0
  %706 = vmatpush1.msra.mxu0 0.0
  %707 = vmatprep.subr.mxu0 0.0
  %708 = vmatpush1.msra.mxu0 0.0
  %709 = vmatprep.subr.mxu0 0.0
  %710 = vmatpush1.msra.mxu0 0.0
  %711 = vmatprep.subr.mxu0 0.0
  %712 = vmatpush1.msra.mxu0 0.0
  %713 = vmatprep.subr.mxu0 0.0
  %714 = vmatpush1.msra.mxu0 0.0
  %715 = vmatprep.subr.mxu0 0.0
  %716 = vmatpush1.msra.mxu0 0.0
  %717 = vmatprep.subr.mxu0 0.0
  %718 = vmatpush1.msra.mxu0 0.0
  %719 = vmatprep.subr.mxu0 0.0
  %720 = vmatpush1.msra.mxu0 0.0
  %721 = vmatprep.subr.mxu0 0.0
  %722 = vmatpush1.msra.mxu0 0.0
  %723 = vmatprep.subr.mxu0 0.0
  %724 = vmatpush1.msra.mxu0 0.0
  %725 = vmatprep.subr.mxu0 0.0
  %726 = vmatpush1.msra.mxu0 0.0
  %727 = vmatprep.subr.mxu0 0.0
  %728 = vmatpush1.msra.mxu0 0.0
  %729 = vmatprep.subr.mxu0 0.0
  %730 = vmatpush1.msra.mxu0 0.0
  %731 = vmatprep.subr.mxu0 0.0
  %732 = vmatpush1.msra.mxu0 0.0
  %733 = vmatprep.mubr.f32.mxu0 0.0
  %734 = vmatmul.mubr.f32.gmra.mrb[0].mxu0 %v667
  %v735 = vpop.f32.mrb[0].mxu0
  %v736 = vadd.f32 0.0, %v735
  %v737 = vpop.f32.mrb[0].mxu0
  %738 = vdwg.mxu0
  %v739 = vadd.f32 %v662, %v736
  %v740 = vxor.u32 %v739, 2147483648
  %v741 = vmul.f32 %v740, 1.442695
  %v742 = vpow.pop %v741
  %v743 = vadd.f32 %v742, 1.0
  %v744 = vrcp.pop %v743
  %v745 = vmul.f32 1.0, %v744
  %v746 = vtanh.pop %v739
  %v748 = vrot.slane %v651, 6
  %v750 = vmul.f32 %v745, %v748
  %752 = vrot.lane.b32.xlu0 %v746, 64
  %v753 = vpop.permute.xlu0 %752
  %v755 = vmul.f32 %v745, %v753
  %757 = vrot.lane.b32.xlu0 %v755, 32
  %v758 = vpop.permute.xlu0 %757
  %v760 = vadd.f32 %v750, %v758
  %v761 = vtanh.pop %v760
  %763 = vrot.lane.b32.xlu0 %v761, 64
  %v764 = vpop.permute.xlu0 %763
  %v766 = vmul.f32 %v745, %v764
  %v767 = vrot.slane %v217, 2
  %v769 = vadd.f32 %v147, %v767
  %v770 = vadd.f32 %v769, %v233
  %772 = vrot.lane.b32.xlu0 %v766, 32
  %v773 = vpop.permute.xlu0 %772
  %v774 = vsel %vm68, %v773, 0
  %776 = vmatprep.subr.mxu0 0.0
  %777 = vmatpush1.msra.mxu0 %v63
  %778 = vmatprep.subr.mxu0 0.0
  %779 = vmatpush1.msra.mxu0 %v64
  %780 = vmatprep.subr.mxu0 0.0
  %781 = vmatpush1.msra.mxu0 %v65
  %782 = vmatprep.subr.mxu0 0.0
  %783 = vmatpush1.msra.mxu0 %v66
  %784 = vmatprep.subr.mxu0 0.0
  %785 = vmatpush1.msra.mxu0 0.0
  %786 = vmatprep.subr.mxu0 0.0
  %787 = vmatpush1.msra.mxu0 0.0
  %788 = vmatprep.subr.mxu0 0.0
  %789 = vmatpush1.msra.mxu0 0.0
  %790 = vmatprep.subr.mxu0 0.0
  %791 = vmatpush1.msra.mxu0 0.0
  %792 = vmatprep.subr.mxu0 0.0
  %793 = vmatpush1.msra.mxu0 0.0
  %794 = vmatprep.subr.mxu0 0.0
  %795 = vmatpush1.msra.mxu0 0.0
  %796 = vmatprep.subr.mxu0 0.0
  %797 = vmatpush1.msra.mxu0 0.0
  %798 = vmatprep.subr.mxu0 0.0
  %799 = vmatpush1.msra.mxu0 0.0
  %800 = vmatprep.subr.mxu0 0.0
  %801 = vmatpush1.msra.mxu0 0.0
  %802 = vmatprep.subr.mxu0 0.0
  %803 = vmatpush1.msra.mxu0 0.0
  %804 = vmatprep.subr.mxu0 0.0
  %805 = vmatpush1.msra.mxu0 0.0
  %806 = vmatprep.subr.mxu0 0.0
  %807 = vmatpush1.msra.mxu0 0.0
  %808 = vmatprep.subr.mxu0 0.0
  %809 = vmatpush1.msra.mxu0 0.0
  %810 = vmatprep.subr.mxu0 0.0
  %811 = vmatpush1.msra.mxu0 0.0
  %812 = vmatprep.subr.mxu0 0.0
  %813 = vmatpush1.msra.mxu0 0.0
  %814 = vmatprep.subr.mxu0 0.0
  %815 = vmatpush1.msra.mxu0 0.0
  %816 = vmatprep.subr.mxu0 0.0
  %817 = vmatpush1.msra.mxu0 0.0
  %818 = vmatprep.subr.mxu0 0.0
  %819 = vmatpush1.msra.mxu0 0.0
  %820 = vmatprep.subr.mxu0 0.0
  %821 = vmatpush1.msra.mxu0 0.0
  %822 = vmatprep.subr.mxu0 0.0
  %823 = vmatpush1.msra.mxu0 0.0
  %824 = vmatprep.subr.mxu0 0.0
  %825 = vmatpush1.msra.mxu0 0.0
  %826 = vmatprep.subr.mxu0 0.0
  %827 = vmatpush1.msra.mxu0 0.0
  %828 = vmatprep.subr.mxu0 0.0
  %829 = vmatpush1.msra.mxu0 0.0
  %830 = vmatprep.subr.mxu0 0.0
  %831 = vmatpush1.msra.mxu0 0.0
  %832 = vmatprep.subr.mxu0 0.0
  %833 = vmatpush1.msra.mxu0 0.0
  %834 = vmatprep.subr.mxu0 0.0
  %835 = vmatpush1.msra.mxu0 0.0
  %836 = vmatprep.subr.mxu0 0.0
  %837 = vmatpush1.msra.mxu0 0.0
  %838 = vmatprep.subr.mxu0 0.0
  %839 = vmatpush1.msra.mxu0 0.0
  %840 = vmatprep.mubr.f32.mxu0 0.0
  %841 = vmatmul.mubr.f32.gmra.mrb[0].mxu0 %v774
  %v842 = vpop.f32.mrb[0].mxu0
  %v843 = vadd.f32 0.0, %v842
  %v844 = vpop.f32.mrb[0].mxu0
  %845 = vdwg.mxu0
  %v847 = vrot.slane %v843, 6
  %v849 = vadd.f32 %v770, %v847
  %v850 = vxor.u32 %v849, 2147483648
  %v851 = vmul.f32 %v850, 1.442695
  %v852 = vpow.pop %v851
  %v853 = vadd.f32 %v852, 1.0
  %v854 = vrcp.pop %v853
  %v855 = vmul.f32 1.0, %v854
  %v856 = vtanh.pop %v849
  %v858 = vrot.slane %v760, 6
  %v860 = vmul.f32 %v855, %v858
  %862 = vrot.lane.b32.xlu0 %v856, 64
  %v863 = vpop.permute.xlu0 %862
  %v865 = vmul.f32 %v855, %v863
  %867 = vrot.lane.b32.xlu0 %v865, 32
  %v868 = vpop.permute.xlu0 %867
  %v870 = vadd.f32 %v860, %v868
  %v871 = vtanh.pop %v870
  %873 = vrot.lane.b32.xlu0 %v871, 64
  %v874 = vpop.permute.xlu0 %873
  %v876 = vmul.f32 %v855, %v874
  %v878 = vrot.slane %v876, 2
  %879 = vrot.lane.b32.xlu0 %v878, 32
  %v880 = vpop.permute.xlu0 %879
  %v881 = vsel %vm68, %v880, 0
  %883 = vmatprep.subr.mxu0 0.0
  %884 = vmatpush1.msra.mxu0 %v63
  %885 = vmatprep.subr.mxu0 0.0
  %886 = vmatpush1.msra.mxu0 %v64
  %887 = vmatprep.subr.mxu0 0.0
  %888 = vmatpush1.msra.mxu0 %v65
  %889 = vmatprep.subr.mxu0 0.0
  %890 = vmatpush1.msra.mxu0 %v66
  %891 = vmatprep.subr.mxu0 0.0
  %892 = vmatpush1.msra.mxu0 0.0
  %893 = vmatprep.subr.mxu0 0.0
  %894 = vmatpush1.msra.mxu0 0.0
  %895 = vmatprep.subr.mxu0 0.0
  %896 = vmatpush1.msra.mxu0 0.0
  %897 = vmatprep.subr.mxu0 0.0
  %898 = vmatpush1.msra.mxu0 0.0
  %899 = vmatprep.subr.mxu0 0.0
  %900 = vmatpush1.msra.mxu0 0.0
  %901 = vmatprep.subr.mxu0 0.0
  %902 = vmatpush1.msra.mxu0 0.0
  %903 = vmatprep.subr.mxu0 0.0
  %904 = vmatpush1.msra.mxu0 0.0
  %905 = vmatprep.subr.mxu0 0.0
  %906 = vmatpush1.msra.mxu0 0.0
  %907 = vmatprep.subr.mxu0 0.0
  %908 = vmatpush1.msra.mxu0 0.0
  %909 = vmatprep.subr.mxu0 0.0
  %910 = vmatpush1.msra.mxu0 0.0
  %911 = vmatprep.subr.mxu0 0.0
  %912 = vmatpush1.msra.mxu0 0.0
  %913 = vmatprep.subr.mxu0 0.0
  %914 = vmatpush1.msra.mxu0 0.0
  %915 = vmatprep.subr.mxu0 0.0
  %916 = vmatpush1.msra.mxu0 0.0
  %917 = vmatprep.subr.mxu0 0.0
  %918 = vmatpush1.msra.mxu0 0.0
  %919 = vmatprep.subr.mxu0 0.0
  %920 = vmatpush1.msra.mxu0 0.0
  %921 = vmatprep.subr.mxu0 0.0
  %922 = vmatpush1.msra.mxu0 0.0
  %923 = vmatprep.subr.mxu0 0.0
  %924 = vmatpush1.msra.mxu0 0.0
  %925 = vmatprep.subr.mxu0 0.0
  %926 = vmatpush1.msra.mxu0 0.0
  %927 = vmatprep.subr.mxu0 0.0
  %928 = vmatpush1.msra.mxu0 0.0
  %929 = vmatprep.subr.mxu0 0.0
  %930 = vmatpush1.msra.mxu0 0.0
  %931 = vmatprep.subr.mxu0 0.0
  %932 = vmatpush1.msra.mxu0 0.0
  %933 = vmatprep.subr.mxu0 0.0
  %934 = vmatpush1.msra.mxu0 0.0
  %935 = vmatprep.subr.mxu0 0.0
  %936 = vmatpush1.msra.mxu0 0.0
  %937 = vmatprep.subr.mxu0 0.0
  %938 = vmatpush1.msra.mxu0 0.0
  %939 = vmatprep.subr.mxu0 0.0
  %940 = vmatpush1.msra.mxu0 0.0
  %941 = vmatprep.subr.mxu0 0.0
  %942 = vmatpush1.msra.mxu0 0.0
  %943 = vmatprep.subr.mxu0 0.0
  %944 = vmatpush1.msra.mxu0 0.0
  %945 = vmatprep.subr.mxu0 0.0
  %946 = vmatpush1.msra.mxu0 0.0
  %947 = vmatprep.mubr.f32.mxu0 0.0
  %948 = vmatmul.mubr.f32.gmra.mrb[0].mxu0 %v881
  %v949 = vpop.f32.mrb[0].mxu0
  %v950 = vadd.f32 0.0, %v949
  %v951 = vpop.f32.mrb[0].mxu0
  %952 = vdwg.mxu0
  %v954 = vrot.slane %v950, 4
  %v956 = vadd.f32 %v662, %v954
  %v957 = vxor.u32 %v956, 2147483648
  %v958 = vmul.f32 %v957, 1.442695
  %v959 = vpow.pop %v958
  %v960 = vadd.f32 %v959, 1.0
  %v961 = vrcp.pop %v960
  %v962 = vmul.f32 1.0, %v961
  %v963 = vtanh.pop %v956
  %v965 = vrot.slane %v870, 6
  %v967 = vmul.f32 %v962, %v965
  %969 = vrot.lane.b32.xlu0 %v963, 64
  %v970 = vpop.permute.xlu0 %969
  %v972 = vmul.f32 %v962, %v970
  %974 = vrot.lane.b32.xlu0 %v972, 32
  %v975 = vpop.permute.xlu0 %974
  %v977 = vadd.f32 %v967, %v975
  %v978 = vtanh.pop %v977
  %980 = vrot.lane.b32.xlu0 %v978, 64
  %v981 = vpop.permute.xlu0 %980
  %v983 = vmul.f32 %v962, %v981
  %v985 = vrot.slane %v983, 4
  %986 = vrot.lane.b32.xlu0 %v985, 32
  %v987 = vpop.permute.xlu0 %986
  %v988 = vsel %vm68, %v987, 0
  %990 = vmatprep.subr.mxu0 0.0
  %991 = vmatpush1.msra.mxu0 %v63
  %992 = vmatprep.subr.mxu0 0.0
  %993 = vmatpush1.msra.mxu0 %v64
  %994 = vmatprep.subr.mxu0 0.0
  %995 = vmatpush1.msra.mxu0 %v65
  %996 = vmatprep.subr.mxu0 0.0
  %997 = vmatpush1.msra.mxu0 %v66
  %998 = vmatprep.subr.mxu0 0.0
  %999 = vmatpush1.msra.mxu0 0.0
  %1000 = vmatprep.subr.mxu0 0.0
  %1001 = vmatpush1.msra.mxu0 0.0
  %1002 = vmatprep.subr.mxu0 0.0
  %1003 = vmatpush1.msra.mxu0 0.0
  %1004 = vmatprep.subr.mxu0 0.0
  %1005 = vmatpush1.msra.mxu0 0.0
  %1006 = vmatprep.subr.mxu0 0.0
  %1007 = vmatpush1.msra.mxu0 0.0
  %1008 = vmatprep.subr.mxu0 0.0
  %1009 = vmatpush1.msra.mxu0 0.0
  %1010 = vmatprep.subr.mxu0 0.0
  %1011 = vmatpush1.msra.mxu0 0.0
  %1012 = vmatprep.subr.mxu0 0.0
  %1013 = vmatpush1.msra.mxu0 0.0
  %1014 = vmatprep.subr.mxu0 0.0
  %1015 = vmatpush1.msra.mxu0 0.0
  %1016 = vmatprep.subr.mxu0 0.0
  %1017 = vmatpush1.msra.mxu0 0.0
  %1018 = vmatprep.subr.mxu0 0.0
  %1019 = vmatpush1.msra.mxu0 0.0
  %1020 = vmatprep.subr.mxu0 0.0
  %1021 = vmatpush1.msra.mxu0 0.0
  %1022 = vmatprep.subr.mxu0 0.0
  %1023 = vmatpush1.msra.mxu0 0.0
  %1024 = vmatprep.subr.mxu0 0.0
  %1025 = vmatpush1.msra.mxu0 0.0
  %1026 = vmatprep.subr.mxu0 0.0
  %1027 = vmatpush1.msra.mxu0 0.0
  %1028 = vmatprep.subr.mxu0 0.0
  %1029 = vmatpush1.msra.mxu0 0.0
  %1030 = vmatprep.subr.mxu0 0.0
  %1031 = vmatpush1.msra.mxu0 0.0
  %1032 = vmatprep.subr.mxu0 0.0
  %1033 = vmatpush1.msra.mxu0 0.0
  %1034 = vmatprep.subr.mxu0 0.0
  %1035 = vmatpush1.msra.mxu0 0.0
  %1036 = vmatprep.subr.mxu0 0.0
  %1037 = vmatpush1.msra.mxu0 0.0
  %1038 = vmatprep.subr.mxu0 0.0
  %1039 = vmatpush1.msra.mxu0 0.0
  %1040 = vmatprep.subr.mxu0 0.0
  %1041 = vmatpush1.msra.mxu0 0.0
  %1042 = vmatprep.subr.mxu0 0.0
  %1043 = vmatpush1.msra.mxu0 0.0
  %1044 = vmatprep.subr.mxu0 0.0
  %1045 = vmatpush1.msra.mxu0 0.0
  %1046 = vmatprep.subr.mxu0 0.0
  %1047 = vmatpush1.msra.mxu0 0.0
  %1048 = vmatprep.subr.mxu0 0.0
  %1049 = vmatpush1.msra.mxu0 0.0
  %1050 = vmatprep.subr.mxu0 0.0
  %1051 = vmatpush1.msra.mxu0 0.0
  %1052 = vmatprep.subr.mxu0 0.0
  %1053 = vmatpush1.msra.mxu0 0.0
  %1054 = vmatprep.mubr.f32.mxu0 0.0
  %1055 = vmatmul.mubr.f32.gmra.mrb[0].mxu0 %v988
  %v1056 = vpop.f32.mrb[0].mxu0
  %v1057 = vadd.f32 0.0, %v1056
  %v1058 = vpop.f32.mrb[0].mxu0
  %1059 = vdwg.mxu0
  %v1061 = vrot.slane %v1057, 2
  %v1063 = vadd.f32 %v770, %v1061
  %v1064 = vxor.u32 %v1063, 2147483648
  %v1065 = vmul.f32 %v1064, 1.442695
  %v1066 = vpow.pop %v1065
  %v1067 = vadd.f32 %v1066, 1.0
  %v1068 = vrcp.pop %v1067
  %v1069 = vmul.f32 1.0, %v1068
  %v1070 = vtanh.pop %v1063
  %v1072 = vrot.slane %v977, 6
  %v1074 = vmul.f32 %v1069, %v1072
  %1076 = vrot.lane.b32.xlu0 %v1070, 64
  %v1077 = vpop.permute.xlu0 %1076
  %v1079 = vmul.f32 %v1069, %v1077
  %1081 = vrot.lane.b32.xlu0 %v1079, 32
  %v1082 = vpop.permute.xlu0 %1081
  %v1084 = vadd.f32 %v1074, %v1082
  %v1085 = vtanh.pop %v1084
  %1087 = vrot.lane.b32.xlu0 %v1085, 64
  %v1088 = vpop.permute.xlu0 %1087
  %v1090 = vmul.f32 %v1069, %v1088
  %v1093 = vrot.slane %v1090, 6
  %1094 = vrot.lane.b32.xlu0 %v1093, 32
  %v1095 = vpop.permute.xlu0 %1094
  %vm1097 = vcmask 130048
  %v1098 = vsel %vm1097, %v340, %v1095
  %1099 = vrot.lane.b32.xlu0 %v443, 32
  %v1100 = vpop.permute.xlu0 %1099
  %v1102 = vrot.slane %v983, 2
  %1103 = vrot.lane.b32.xlu0 %v1102, 32
  %v1104 = vpop.permute.xlu0 %1103
  %v1106 = vsel %vm1097, %v1100, %v1104
  %1107 = vrot.lane.b32.xlu0 %v550, 32
  %v1108 = vpop.permute.xlu0 %1107
  %v1110 = vrot.slane %v876, 6
  %1111 = vrot.lane.b32.xlu0 %v1110, 32
  %v1112 = vpop.permute.xlu0 %1111
  %v1114 = vsel %vm1097, %v1108, %v1112
  %1115 = vrot.lane.b32.xlu0 %v657, 32
  %v1116 = vpop.permute.xlu0 %1115
  %v1118 = vrot.slane %v766, 2
  %1119 = vrot.lane.b32.xlu0 %v1118, 32
  %v1120 = vpop.permute.xlu0 %1119
  %v1122 = vsel %vm1097, %v1116, %v1120
  %v1125 = vsel %vm1097, %v773, %v666
  %1126 = vrot.lane.b32.xlu0 %v876, 32
  %v1127 = vpop.permute.xlu0 %1126
  %v1129 = vrot.slane %v550, 2
  %1130 = vrot.lane.b32.xlu0 %v1129, 32
  %v1131 = vpop.permute.xlu0 %1130
  %v1133 = vsel %vm1097, %v1127, %v1131
  %1134 = vrot.lane.b32.xlu0 %v983, 32
  %v1135 = vpop.permute.xlu0 %1134
  %v1137 = vrot.slane %v443, 6
  %1138 = vrot.lane.b32.xlu0 %v1137, 32
  %v1139 = vpop.permute.xlu0 %1138
  %v1141 = vsel %vm1097, %v1135, %v1139
  %1142 = vrot.lane.b32.xlu0 %v1090, 32
  %v1143 = vpop.permute.xlu0 %1142
  %v1145 = vrot.slane %v333, 2
  %1146 = vrot.lane.b32.xlu0 %v1145, 32
  %v1147 = vpop.permute.xlu0 %1146
  %v1149 = vsel %vm1097, %v1143, %v1147
  %vm1150 = vcmask 1041408
  %v1151 = vsel %vm1150, %v1098, %v1106
  %vm1152 = vcmask 1043456
  %v1153 = vsel %vm1152, %v1151, %v1114
  %vm1154 = vcmask 1045504
  %v1155 = vsel %vm1154, %v1153, %v1122
  %v1156 = vsel %vm1150, %v1125, %v1133
  %v1157 = vsel %vm1152, %v1156, %v1141
  %v1158 = vsel %vm1154, %v1157, %v1149
  %s1159 = scalar_lea.vmem %s3, 32
  %v1160 = vld [vmem:[%s1159] sm:$0xff]
  %v1161 = vld [vmem:[%s1159 + $0x8] sm:$0xff]
  %v1162 = vld [vmem:[%s1159 + $0x10] sm:$0xff]
  %v1163 = vld [vmem:[%s1159 + $0x18] sm:$0xff]
  %s1164 = scalar_lea.vmem %s4, 32
  %v1165 = vld [vmem:[%s1164] sm:$0xff]
  %v1166 = vld [vmem:[%s1164 + $0x8] sm:$0xff]
  %v1167 = vld [vmem:[%s1164 + $0x10] sm:$0xff]
  %v1168 = vld [vmem:[%s1164 + $0x18] sm:$0xff]
  %s1169 = scalar_lea.vmem %s6, 32
  %v1170 = vld [vmem:[%s1169] sm:$0xff]
  %v1171 = vld [vmem:[%s1169 + $0x8] sm:$0xff]
  %v1172 = vld [vmem:[%s1169 + $0x10] sm:$0xff]
  %v1173 = vld [vmem:[%s1169 + $0x18] sm:$0xff]
  %s1174 = scalar_lea.vmem %s5, 1
  %v1175 = vld [vmem:[%s1174] sm:$0x1]
  %v1177 = vsel %vm68, %v1155, 0
  %v1180 = vsel %vm68, %v1158, 0
  %1182 = vmatprep.subr.mxu0 0.0
  %1183 = vmatpush1.msra.mxu0 %v1160
  %1184 = vmatprep.subr.mxu0 0.0
  %1185 = vmatpush1.msra.mxu0 %v1161
  %1186 = vmatprep.subr.mxu0 0.0
  %1187 = vmatpush1.msra.mxu0 %v1162
  %1188 = vmatprep.subr.mxu0 0.0
  %1189 = vmatpush1.msra.mxu0 %v1163
  %1190 = vmatprep.subr.mxu0 0.0
  %1191 = vmatpush1.msra.mxu0 0.0
  %1192 = vmatprep.subr.mxu0 0.0
  %1193 = vmatpush1.msra.mxu0 0.0
  %1194 = vmatprep.subr.mxu0 0.0
  %1195 = vmatpush1.msra.mxu0 0.0
  %1196 = vmatprep.subr.mxu0 0.0
  %1197 = vmatpush1.msra.mxu0 0.0
  %1198 = vmatprep.subr.mxu0 0.0
  %1199 = vmatpush1.msra.mxu0 0.0
  %1200 = vmatprep.subr.mxu0 0.0
  %1201 = vmatpush1.msra.mxu0 0.0
  %1202 = vmatprep.subr.mxu0 0.0
  %1203 = vmatpush1.msra.mxu0 0.0
  %1204 = vmatprep.subr.mxu0 0.0
  %1205 = vmatpush1.msra.mxu0 0.0
  %1206 = vmatprep.subr.mxu0 0.0
  %1207 = vmatpush1.msra.mxu0 0.0
  %1208 = vmatprep.subr.mxu0 0.0
  %1209 = vmatpush1.msra.mxu0 0.0
  %1210 = vmatprep.subr.mxu0 0.0
  %1211 = vmatpush1.msra.mxu0 0.0
  %1212 = vmatprep.subr.mxu0 0.0
  %1213 = vmatpush1.msra.mxu0 0.0
  %1214 = vmatprep.subr.mxu0 0.0
  %1215 = vmatpush1.msra.mxu0 0.0
  %1216 = vmatprep.subr.mxu0 0.0
  %1217 = vmatpush1.msra.mxu0 0.0
  %1218 = vmatprep.subr.mxu0 0.0
  %1219 = vmatpush1.msra.mxu0 0.0
  %1220 = vmatprep.subr.mxu0 0.0
  %1221 = vmatpush1.msra.mxu0 0.0
  %1222 = vmatprep.subr.mxu0 0.0
  %1223 = vmatpush1.msra.mxu0 0.0
  %1224 = vmatprep.subr.mxu0 0.0
  %1225 = vmatpush1.msra.mxu0 0.0
  %1226 = vmatprep.subr.mxu0 0.0
  %1227 = vmatpush1.msra.mxu0 0.0
  %1228 = vmatprep.subr.mxu0 0.0
  %1229 = vmatpush1.msra.mxu0 0.0
  %1230 = vmatprep.subr.mxu0 0.0
  %1231 = vmatpush1.msra.mxu0 0.0
  %1232 = vmatprep.subr.mxu0 0.0
  %1233 = vmatpush1.msra.mxu0 0.0
  %1234 = vmatprep.subr.mxu0 0.0
  %1235 = vmatpush1.msra.mxu0 0.0
  %1236 = vmatprep.subr.mxu0 0.0
  %1237 = vmatpush1.msra.mxu0 0.0
  %1238 = vmatprep.subr.mxu0 0.0
  %1239 = vmatpush1.msra.mxu0 0.0
  %1240 = vmatprep.subr.mxu0 0.0
  %1241 = vmatpush1.msra.mxu0 0.0
  %1242 = vmatprep.subr.mxu0 0.0
  %1243 = vmatpush1.msra.mxu0 0.0
  %1244 = vmatprep.subr.mxu0 0.0
  %1245 = vmatpush1.msra.mxu0 0.0
  %1246 = vmatprep.mubr.f32.mxu0 0.0
  %1247 = vmatmul.mubr.f32.gmra.mrb[0].mxu0 %v1177
  %v1248 = vpop.f32.mrb[0].mxu0
  %v1249 = vadd.f32 0.0, %v1248
  %v1250 = vpop.f32.mrb[0].mxu0
  %1251 = vmatprep.mubr.f32.mxu0 0.0
  %1252 = vmatmul.mubr.f32.gmra.mrb[0].mxu0 %v1180
  %v1253 = vpop.f32.mrb[0].mxu0
  %v1254 = vadd.f32 0.0, %v1253
  %v1255 = vpop.f32.mrb[0].mxu0
  %1256 = vdwg.mxu0
  %1257 = vmatprep.subr.mxu0 0.0
  %1258 = vmatpush1.msra.mxu0 %v1165
  %1259 = vmatprep.subr.mxu0 0.0
  %1260 = vmatpush1.msra.mxu0 %v1166
  %1261 = vmatprep.subr.mxu0 0.0
  %1262 = vmatpush1.msra.mxu0 %v1167
  %1263 = vmatprep.subr.mxu0 0.0
  %1264 = vmatpush1.msra.mxu0 %v1168
  %1265 = vmatprep.subr.mxu0 0.0
  %1266 = vmatpush1.msra.mxu0 0.0
  %1267 = vmatprep.subr.mxu0 0.0
  %1268 = vmatpush1.msra.mxu0 0.0
  %1269 = vmatprep.subr.mxu0 0.0
  %1270 = vmatpush1.msra.mxu0 0.0
  %1271 = vmatprep.subr.mxu0 0.0
  %1272 = vmatpush1.msra.mxu0 0.0
  %1273 = vmatprep.subr.mxu0 0.0
  %1274 = vmatpush1.msra.mxu0 0.0
  %1275 = vmatprep.subr.mxu0 0.0
  %1276 = vmatpush1.msra.mxu0 0.0
  %1277 = vmatprep.subr.mxu0 0.0
  %1278 = vmatpush1.msra.mxu0 0.0
  %1279 = vmatprep.subr.mxu0 0.0
  %1280 = vmatpush1.msra.mxu0 0.0
  %1281 = vmatprep.subr.mxu0 0.0
  %1282 = vmatpush1.msra.mxu0 0.0
  %1283 = vmatprep.subr.mxu0 0.0
  %1284 = vmatpush1.msra.mxu0 0.0
  %1285 = vmatprep.subr.mxu0 0.0
  %1286 = vmatpush1.msra.mxu0 0.0
  %1287 = vmatprep.subr.mxu0 0.0
  %1288 = vmatpush1.msra.mxu0 0.0
  %1289 = vmatprep.subr.mxu0 0.0
  %1290 = vmatpush1.msra.mxu0 0.0
  %1291 = vmatprep.subr.mxu0 0.0
  %1292 = vmatpush1.msra.mxu0 0.0
  %1293 = vmatprep.subr.mxu0 0.0
  %1294 = vmatpush1.msra.mxu0 0.0
  %1295 = vmatprep.subr.mxu0 0.0
  %1296 = vmatpush1.msra.mxu0 0.0
  %1297 = vmatprep.subr.mxu0 0.0
  %1298 = vmatpush1.msra.mxu0 0.0
  %1299 = vmatprep.subr.mxu0 0.0
  %1300 = vmatpush1.msra.mxu0 0.0
  %1301 = vmatprep.subr.mxu0 0.0
  %1302 = vmatpush1.msra.mxu0 0.0
  %1303 = vmatprep.subr.mxu0 0.0
  %1304 = vmatpush1.msra.mxu0 0.0
  %1305 = vmatprep.subr.mxu0 0.0
  %1306 = vmatpush1.msra.mxu0 0.0
  %1307 = vmatprep.subr.mxu0 0.0
  %1308 = vmatpush1.msra.mxu0 0.0
  %1309 = vmatprep.subr.mxu0 0.0
  %1310 = vmatpush1.msra.mxu0 0.0
  %1311 = vmatprep.subr.mxu0 0.0
  %1312 = vmatpush1.msra.mxu0 0.0
  %1313 = vmatprep.subr.mxu0 0.0
  %1314 = vmatpush1.msra.mxu0 0.0
  %1315 = vmatprep.subr.mxu0 0.0
  %1316 = vmatpush1.msra.mxu0 0.0
  %1317 = vmatprep.subr.mxu0 0.0
  %1318 = vmatpush1.msra.mxu0 0.0
  %1319 = vmatprep.subr.mxu0 0.0
  %1320 = vmatpush1.msra.mxu0 0.0
  %1321 = vmatprep.mubr.f32.mxu0 0.0
  %1322 = vmatmul.mubr.f32.gmra.mrb[0].mxu0 %v1177
  %v1323 = vpop.f32.mrb[0].mxu0
  %v1324 = vadd.f32 0.0, %v1323
  %v1325 = vpop.f32.mrb[0].mxu0
  %1326 = vmatprep.mubr.f32.mxu0 0.0
  %1327 = vmatmul.mubr.f32.gmra.mrb[0].mxu0 %v1180
  %v1328 = vpop.f32.mrb[0].mxu0
  %v1329 = vadd.f32 0.0, %v1328
  %v1330 = vpop.f32.mrb[0].mxu0
  %1331 = vdwg.mxu0
  %v1333 = vrot.slane %v1329, 6
  %v1335 = vadd.f32 %v1249, %v1333
  %v1337 = vlaneseq
  %v1338 = vshrl.u32 %v1337, 7
  %v1339 = vsub.s32 0, %v1338
  %v1340 = vrot.slane %v1175, %v1339
  %v1342 = vadd.f32 %v1335, %v1340
  %1343 = vmatprep.subr.mxu0 0.0
  %1344 = vmatpush1.msra.mxu0 %v1170
  %1345 = vmatprep.subr.mxu0 0.0
  %1346 = vmatpush1.msra.mxu0 %v1171
  %1347 = vmatprep.subr.mxu0 0.0
  %1348 = vmatpush1.msra.mxu0 %v1172
  %1349 = vmatprep.subr.mxu0 0.0
  %1350 = vmatpush1.msra.mxu0 %v1173
  %1351 = vmatprep.subr.mxu0 0.0
  %1352 = vmatpush1.msra.mxu0 0.0
  %1353 = vmatprep.subr.mxu0 0.0
  %1354 = vmatpush1.msra.mxu0 0.0
  %1355 = vmatprep.subr.mxu0 0.0
  %1356 = vmatpush1.msra.mxu0 0.0
  %1357 = vmatprep.subr.mxu0 0.0
  %1358 = vmatpush1.msra.mxu0 0.0
  %1359 = vmatprep.subr.mxu0 0.0
  %1360 = vmatpush1.msra.mxu0 0.0
  %1361 = vmatprep.subr.mxu0 0.0
  %1362 = vmatpush1.msra.mxu0 0.0
  %1363 = vmatprep.subr.mxu0 0.0
  %1364 = vmatpush1.msra.mxu0 0.0
  %1365 = vmatprep.subr.mxu0 0.0
  %1366 = vmatpush1.msra.mxu0 0.0
  %1367 = vmatprep.subr.mxu0 0.0
  %1368 = vmatpush1.msra.mxu0 0.0
  %1369 = vmatprep.subr.mxu0 0.0
  %1370 = vmatpush1.msra.mxu0 0.0
  %1371 = vmatprep.subr.mxu0 0.0
  %1372 = vmatpush1.msra.mxu0 0.0
  %1373 = vmatprep.subr.mxu0 0.0
  %1374 = vmatpush1.msra.mxu0 0.0
  %1375 = vmatprep.subr.mxu0 0.0
  %1376 = vmatpush1.msra.mxu0 0.0
  %1377 = vmatprep.subr.mxu0 0.0
  %1378 = vmatpush1.msra.mxu0 0.0
  %1379 = vmatprep.subr.mxu0 0.0
  %1380 = vmatpush1.msra.mxu0 0.0
  %1381 = vmatprep.subr.mxu0 0.0
  %1382 = vmatpush1.msra.mxu0 0.0
  %1383 = vmatprep.subr.mxu0 0.0
  %1384 = vmatpush1.msra.mxu0 0.0
  %1385 = vmatprep.subr.mxu0 0.0
  %1386 = vmatpush1.msra.mxu0 0.0
  %1387 = vmatprep.subr.mxu0 0.0
  %1388 = vmatpush1.msra.mxu0 0.0
  %1389 = vmatprep.subr.mxu0 0.0
  %1390 = vmatpush1.msra.mxu0 0.0
  %1391 = vmatprep.subr.mxu0 0.0
  %1392 = vmatpush1.msra.mxu0 0.0
  %1393 = vmatprep.subr.mxu0 0.0
  %1394 = vmatpush1.msra.mxu0 0.0
  %1395 = vmatprep.subr.mxu0 0.0
  %1396 = vmatpush1.msra.mxu0 0.0
  %1397 = vmatprep.subr.mxu0 0.0
  %1398 = vmatpush1.msra.mxu0 0.0
  %1399 = vmatprep.subr.mxu0 0.0
  %1400 = vmatpush1.msra.mxu0 0.0
  %1401 = vmatprep.subr.mxu0 0.0
  %1402 = vmatpush1.msra.mxu0 0.0
  %1403 = vmatprep.subr.mxu0 0.0
  %1404 = vmatpush1.msra.mxu0 0.0
  %1405 = vmatprep.subr.mxu0 0.0
  %1406 = vmatpush1.msra.mxu0 0.0
  %1407 = vmatprep.mubr.f32.mxu0 0.0
  %1408 = vmatmul.mubr.f32.gmra.mrb[0].mxu0 %v237
  %v1409 = vpop.f32.mrb[0].mxu0
  %v1410 = vadd.f32 0.0, %v1409
  %v1411 = vpop.f32.mrb[0].mxu0
  %1412 = vdwg.mxu0
  %v1413 = vadd.f32 %v1342, %v1410
  %v1414 = vxor.u32 %v1413, 2147483648
  %v1415 = vmul.f32 %v1414, 1.442695
  %v1416 = vpow.pop %v1415
  %v1417 = vadd.f32 %v1416, 1.0
  %v1418 = vrcp.pop %v1417
  %v1419 = vmul.f32 1.0, %v1418
  %v1420 = vtanh.pop %v1413
  %v1421 = vmul.f32 %v1419, 0.0
  %1423 = vrot.lane.b32.xlu0 %v1420, 64
  %v1424 = vpop.permute.xlu0 %1423
  %v1426 = vmul.f32 %v1419, %v1424
  %1428 = vrot.lane.b32.xlu0 %v1426, 32
  %v1429 = vpop.permute.xlu0 %1428
  %v1431 = vadd.f32 %v1421, %v1429
  %v1432 = vtanh.pop %v1431
  %1434 = vrot.lane.b32.xlu0 %v1432, 64
  %v1435 = vpop.permute.xlu0 %1434
  %v1437 = vmul.f32 %v1419, %v1435
  %v1438 = vrot.slane %v1329, 2
  %v1440 = vadd.f32 %v1249, %v1438
  %v1441 = vadd.f32 %v1440, %v1340
  %1443 = vrot.lane.b32.xlu0 %v1437, 32
  %v1444 = vpop.permute.xlu0 %1443
  %v1445 = vsel %vm68, %v1444, 0
  %1447 = vmatprep.subr.mxu0 0.0
  %1448 = vmatpush1.msra.mxu0 %v1170
  %1449 = vmatprep.subr.mxu0 0.0
  %1450 = vmatpush1.msra.mxu0 %v1171
  %1451 = vmatprep.subr.mxu0 0.0
  %1452 = vmatpush1.msra.mxu0 %v1172
  %1453 = vmatprep.subr.mxu0 0.0
  %1454 = vmatpush1.msra.mxu0 %v1173
  %1455 = vmatprep.subr.mxu0 0.0
  %1456 = vmatpush1.msra.mxu0 0.0
  %1457 = vmatprep.subr.mxu0 0.0
  %1458 = vmatpush1.msra.mxu0 0.0
  %1459 = vmatprep.subr.mxu0 0.0
  %1460 = vmatpush1.msra.mxu0 0.0
  %1461 = vmatprep.subr.mxu0 0.0
  %1462 = vmatpush1.msra.mxu0 0.0
  %1463 = vmatprep.subr.mxu0 0.0
  %1464 = vmatpush1.msra.mxu0 0.0
  %1465 = vmatprep.subr.mxu0 0.0
  %1466 = vmatpush1.msra.mxu0 0.0
  %1467 = vmatprep.subr.mxu0 0.0
  %1468 = vmatpush1.msra.mxu0 0.0
  %1469 = vmatprep.subr.mxu0 0.0
  %1470 = vmatpush1.msra.mxu0 0.0
  %1471 = vmatprep.subr.mxu0 0.0
  %1472 = vmatpush1.msra.mxu0 0.0
  %1473 = vmatprep.subr.mxu0 0.0
  %1474 = vmatpush1.msra.mxu0 0.0
  %1475 = vmatprep.subr.mxu0 0.0
  %1476 = vmatpush1.msra.mxu0 0.0
  %1477 = vmatprep.subr.mxu0 0.0
  %1478 = vmatpush1.msra.mxu0 0.0
  %1479 = vmatprep.subr.mxu0 0.0
  %1480 = vmatpush1.msra.mxu0 0.0
  %1481 = vmatprep.subr.mxu0 0.0
  %1482 = vmatpush1.msra.mxu0 0.0
  %1483 = vmatprep.subr.mxu0 0.0
  %1484 = vmatpush1.msra.mxu0 0.0
  %1485 = vmatprep.subr.mxu0 0.0
  %1486 = vmatpush1.msra.mxu0 0.0
  %1487 = vmatprep.subr.mxu0 0.0
  %1488 = vmatpush1.msra.mxu0 0.0
  %1489 = vmatprep.subr.mxu0 0.0
  %1490 = vmatpush1.msra.mxu0 0.0
  %1491 = vmatprep.subr.mxu0 0.0
  %1492 = vmatpush1.msra.mxu0 0.0
  %1493 = vmatprep.subr.mxu0 0.0
  %1494 = vmatpush1.msra.mxu0 0.0
  %1495 = vmatprep.subr.mxu0 0.0
  %1496 = vmatpush1.msra.mxu0 0.0
  %1497 = vmatprep.subr.mxu0 0.0
  %1498 = vmatpush1.msra.mxu0 0.0
  %1499 = vmatprep.subr.mxu0 0.0
  %1500 = vmatpush1.msra.mxu0 0.0
  %1501 = vmatprep.subr.mxu0 0.0
  %1502 = vmatpush1.msra.mxu0 0.0
  %1503 = vmatprep.subr.mxu0 0.0
  %1504 = vmatpush1.msra.mxu0 0.0
  %1505 = vmatprep.subr.mxu0 0.0
  %1506 = vmatpush1.msra.mxu0 0.0
  %1507 = vmatprep.subr.mxu0 0.0
  %1508 = vmatpush1.msra.mxu0 0.0
  %1509 = vmatprep.subr.mxu0 0.0
  %1510 = vmatpush1.msra.mxu0 0.0
  %1511 = vmatprep.mubr.f32.mxu0 0.0
  %1512 = vmatmul.mubr.f32.gmra.mrb[0].mxu0 %v1445
  %v1513 = vpop.f32.mrb[0].mxu0
  %v1514 = vadd.f32 0.0, %v1513
  %v1515 = vpop.f32.mrb[0].mxu0
  %1516 = vdwg.mxu0
  %v1518 = vrot.slane %v1514, 6
  %v1520 = vadd.f32 %v1441, %v1518
  %v1521 = vxor.u32 %v1520, 2147483648
  %v1522 = vmul.f32 %v1521, 1.442695
  %v1523 = vpow.pop %v1522
  %v1524 = vadd.f32 %v1523, 1.0
  %v1525 = vrcp.pop %v1524
  %v1526 = vmul.f32 1.0, %v1525
  %v1527 = vtanh.pop %v1520
  %v1529 = vrot.slane %v1431, 6
  %v1531 = vmul.f32 %v1526, %v1529
  %1533 = vrot.lane.b32.xlu0 %v1527, 64
  %v1534 = vpop.permute.xlu0 %1533
  %v1536 = vmul.f32 %v1526, %v1534
  %1538 = vrot.lane.b32.xlu0 %v1536, 32
  %v1539 = vpop.permute.xlu0 %1538
  %v1541 = vadd.f32 %v1531, %v1539
  %v1542 = vtanh.pop %v1541
  %1544 = vrot.lane.b32.xlu0 %v1542, 64
  %v1545 = vpop.permute.xlu0 %1544
  %v1547 = vmul.f32 %v1526, %v1545
  %v1549 = vrot.slane %v1547, 2
  %1550 = vrot.lane.b32.xlu0 %v1549, 32
  %v1551 = vpop.permute.xlu0 %1550
  %v1552 = vsel %vm68, %v1551, 0
  %1554 = vmatprep.subr.mxu0 0.0
  %1555 = vmatpush1.msra.mxu0 %v1170
  %1556 = vmatprep.subr.mxu0 0.0
  %1557 = vmatpush1.msra.mxu0 %v1171
  %1558 = vmatprep.subr.mxu0 0.0
  %1559 = vmatpush1.msra.mxu0 %v1172
  %1560 = vmatprep.subr.mxu0 0.0
  %1561 = vmatpush1.msra.mxu0 %v1173
  %1562 = vmatprep.subr.mxu0 0.0
  %1563 = vmatpush1.msra.mxu0 0.0
  %1564 = vmatprep.subr.mxu0 0.0
  %1565 = vmatpush1.msra.mxu0 0.0
  %1566 = vmatprep.subr.mxu0 0.0
  %1567 = vmatpush1.msra.mxu0 0.0
  %1568 = vmatprep.subr.mxu0 0.0
  %1569 = vmatpush1.msra.mxu0 0.0
  %1570 = vmatprep.subr.mxu0 0.0
  %1571 = vmatpush1.msra.mxu0 0.0
  %1572 = vmatprep.subr.mxu0 0.0
  %1573 = vmatpush1.msra.mxu0 0.0
  %1574 = vmatprep.subr.mxu0 0.0
  %1575 = vmatpush1.msra.mxu0 0.0
  %1576 = vmatprep.subr.mxu0 0.0
  %1577 = vmatpush1.msra.mxu0 0.0
  %1578 = vmatprep.subr.mxu0 0.0
  %1579 = vmatpush1.msra.mxu0 0.0
  %1580 = vmatprep.subr.mxu0 0.0
  %1581 = vmatpush1.msra.mxu0 0.0
  %1582 = vmatprep.subr.mxu0 0.0
  %1583 = vmatpush1.msra.mxu0 0.0
  %1584 = vmatprep.subr.mxu0 0.0
  %1585 = vmatpush1.msra.mxu0 0.0
  %1586 = vmatprep.subr.mxu0 0.0
  %1587 = vmatpush1.msra.mxu0 0.0
  %1588 = vmatprep.subr.mxu0 0.0
  %1589 = vmatpush1.msra.mxu0 0.0
  %1590 = vmatprep.subr.mxu0 0.0
  %1591 = vmatpush1.msra.mxu0 0.0
  %1592 = vmatprep.subr.mxu0 0.0
  %1593 = vmatpush1.msra.mxu0 0.0
  %1594 = vmatprep.subr.mxu0 0.0
  %1595 = vmatpush1.msra.mxu0 0.0
  %1596 = vmatprep.subr.mxu0 0.0
  %1597 = vmatpush1.msra.mxu0 0.0
  %1598 = vmatprep.subr.mxu0 0.0
  %1599 = vmatpush1.msra.mxu0 0.0
  %1600 = vmatprep.subr.mxu0 0.0
  %1601 = vmatpush1.msra.mxu0 0.0
  %1602 = vmatprep.subr.mxu0 0.0
  %1603 = vmatpush1.msra.mxu0 0.0
  %1604 = vmatprep.subr.mxu0 0.0
  %1605 = vmatpush1.msra.mxu0 0.0
  %1606 = vmatprep.subr.mxu0 0.0
  %1607 = vmatpush1.msra.mxu0 0.0
  %1608 = vmatprep.subr.mxu0 0.0
  %1609 = vmatpush1.msra.mxu0 0.0
  %1610 = vmatprep.subr.mxu0 0.0
  %1611 = vmatpush1.msra.mxu0 0.0
  %1612 = vmatprep.subr.mxu0 0.0
  %1613 = vmatpush1.msra.mxu0 0.0
  %1614 = vmatprep.subr.mxu0 0.0
  %1615 = vmatpush1.msra.mxu0 0.0
  %1616 = vmatprep.subr.mxu0 0.0
  %1617 = vmatpush1.msra.mxu0 0.0
  %1618 = vmatprep.mubr.f32.mxu0 0.0
  %1619 = vmatmul.mubr.f32.gmra.mrb[0].mxu0 %v1552
  %v1620 = vpop.f32.mrb[0].mxu0
  %v1621 = vadd.f32 0.0, %v1620
  %v1622 = vpop.f32.mrb[0].mxu0
  %1623 = vdwg.mxu0
  %v1625 = vrot.slane %v1621, 4
  %v1627 = vadd.f32 %v1342, %v1625
  %v1628 = vxor.u32 %v1627, 2147483648
  %v1629 = vmul.f32 %v1628, 1.442695
  %v1630 = vpow.pop %v1629
  %v1631 = vadd.f32 %v1630, 1.0
  %v1632 = vrcp.pop %v1631
  %v1633 = vmul.f32 1.0, %v1632
  %v1634 = vtanh.pop %v1627
  %v1636 = vrot.slane %v1541, 6
  %v1638 = vmul.f32 %v1633, %v1636
  %1640 = vrot.lane.b32.xlu0 %v1634, 64
  %v1641 = vpop.permute.xlu0 %1640
  %v1643 = vmul.f32 %v1633, %v1641
  %1645 = vrot.lane.b32.xlu0 %v1643, 32
  %v1646 = vpop.permute.xlu0 %1645
  %v1648 = vadd.f32 %v1638, %v1646
  %v1649 = vtanh.pop %v1648
  %1651 = vrot.lane.b32.xlu0 %v1649, 64
  %v1652 = vpop.permute.xlu0 %1651
  %v1654 = vmul.f32 %v1633, %v1652
  %v1656 = vrot.slane %v1654, 4
  %1657 = vrot.lane.b32.xlu0 %v1656, 32
  %v1658 = vpop.permute.xlu0 %1657
  %v1659 = vsel %vm68, %v1658, 0
  %1661 = vmatprep.subr.mxu0 0.0
  %1662 = vmatpush1.msra.mxu0 %v1170
  %1663 = vmatprep.subr.mxu0 0.0
  %1664 = vmatpush1.msra.mxu0 %v1171
  %1665 = vmatprep.subr.mxu0 0.0
  %1666 = vmatpush1.msra.mxu0 %v1172
  %1667 = vmatprep.subr.mxu0 0.0
  %1668 = vmatpush1.msra.mxu0 %v1173
  %1669 = vmatprep.subr.mxu0 0.0
  %1670 = vmatpush1.msra.mxu0 0.0
  %1671 = vmatprep.subr.mxu0 0.0
  %1672 = vmatpush1.msra.mxu0 0.0
  %1673 = vmatprep.subr.mxu0 0.0
  %1674 = vmatpush1.msra.mxu0 0.0
  %1675 = vmatprep.subr.mxu0 0.0
  %1676 = vmatpush1.msra.mxu0 0.0
  %1677 = vmatprep.subr.mxu0 0.0
  %1678 = vmatpush1.msra.mxu0 0.0
  %1679 = vmatprep.subr.mxu0 0.0
  %1680 = vmatpush1.msra.mxu0 0.0
  %1681 = vmatprep.subr.mxu0 0.0
  %1682 = vmatpush1.msra.mxu0 0.0
  %1683 = vmatprep.subr.mxu0 0.0
  %1684 = vmatpush1.msra.mxu0 0.0
  %1685 = vmatprep.subr.mxu0 0.0
  %1686 = vmatpush1.msra.mxu0 0.0
  %1687 = vmatprep.subr.mxu0 0.0
  %1688 = vmatpush1.msra.mxu0 0.0
  %1689 = vmatprep.subr.mxu0 0.0
  %1690 = vmatpush1.msra.mxu0 0.0
  %1691 = vmatprep.subr.mxu0 0.0
  %1692 = vmatpush1.msra.mxu0 0.0
  %1693 = vmatprep.subr.mxu0 0.0
  %1694 = vmatpush1.msra.mxu0 0.0
  %1695 = vmatprep.subr.mxu0 0.0
  %1696 = vmatpush1.msra.mxu0 0.0
  %1697 = vmatprep.subr.mxu0 0.0
  %1698 = vmatpush1.msra.mxu0 0.0
  %1699 = vmatprep.subr.mxu0 0.0
  %1700 = vmatpush1.msra.mxu0 0.0
  %1701 = vmatprep.subr.mxu0 0.0
  %1702 = vmatpush1.msra.mxu0 0.0
  %1703 = vmatprep.subr.mxu0 0.0
  %1704 = vmatpush1.msra.mxu0 0.0
  %1705 = vmatprep.subr.mxu0 0.0
  %1706 = vmatpush1.msra.mxu0 0.0
  %1707 = vmatprep.subr.mxu0 0.0
  %1708 = vmatpush1.msra.mxu0 0.0
  %1709 = vmatprep.subr.mxu0 0.0
  %1710 = vmatpush1.msra.mxu0 0.0
  %1711 = vmatprep.subr.mxu0 0.0
  %1712 = vmatpush1.msra.mxu0 0.0
  %1713 = vmatprep.subr.mxu0 0.0
  %1714 = vmatpush1.msra.mxu0 0.0
  %1715 = vmatprep.subr.mxu0 0.0
  %1716 = vmatpush1.msra.mxu0 0.0
  %1717 = vmatprep.subr.mxu0 0.0
  %1718 = vmatpush1.msra.mxu0 0.0
  %1719 = vmatprep.subr.mxu0 0.0
  %1720 = vmatpush1.msra.mxu0 0.0
  %1721 = vmatprep.subr.mxu0 0.0
  %1722 = vmatpush1.msra.mxu0 0.0
  %1723 = vmatprep.subr.mxu0 0.0
  %1724 = vmatpush1.msra.mxu0 0.0
  %1725 = vmatprep.mubr.f32.mxu0 0.0
  %1726 = vmatmul.mubr.f32.gmra.mrb[0].mxu0 %v1659
  %v1727 = vpop.f32.mrb[0].mxu0
  %v1728 = vadd.f32 0.0, %v1727
  %v1729 = vpop.f32.mrb[0].mxu0
  %1730 = vdwg.mxu0
  %v1732 = vrot.slane %v1728, 2
  %v1734 = vadd.f32 %v1441, %v1732
  %v1735 = vxor.u32 %v1734, 2147483648
  %v1736 = vmul.f32 %v1735, 1.442695
  %v1737 = vpow.pop %v1736
  %v1738 = vadd.f32 %v1737, 1.0
  %v1739 = vrcp.pop %v1738
  %v1740 = vmul.f32 1.0, %v1739
  %v1741 = vtanh.pop %v1734
  %v1743 = vrot.slane %v1648, 6
  %v1745 = vmul.f32 %v1740, %v1743
  %1747 = vrot.lane.b32.xlu0 %v1741, 64
  %v1748 = vpop.permute.xlu0 %1747
  %v1750 = vmul.f32 %v1740, %v1748
  %1752 = vrot.lane.b32.xlu0 %v1750, 32
  %v1753 = vpop.permute.xlu0 %1752
  %v1755 = vadd.f32 %v1745, %v1753
  %v1756 = vtanh.pop %v1755
  %1758 = vrot.lane.b32.xlu0 %v1756, 64
  %v1759 = vpop.permute.xlu0 %1758
  %v1761 = vmul.f32 %v1740, %v1759
  %v1763 = vrot.slane %v1324, 6
  %v1765 = vadd.f32 %v1254, %v1763
  %v1766 = vadd.f32 %v1765, %v1340
  %v1768 = vrot.slane %v1761, 6
  %1769 = vrot.lane.b32.xlu0 %v1768, 32
  %v1770 = vpop.permute.xlu0 %1769
  %v1771 = vsel %vm68, %v1770, 0
  %1773 = vmatprep.subr.mxu0 0.0
  %1774 = vmatpush1.msra.mxu0 %v1170
  %1775 = vmatprep.subr.mxu0 0.0
  %1776 = vmatpush1.msra.mxu0 %v1171
  %1777 = vmatprep.subr.mxu0 0.0
  %1778 = vmatpush1.msra.mxu0 %v1172
  %1779 = vmatprep.subr.mxu0 0.0
  %1780 = vmatpush1.msra.mxu0 %v1173
  %1781 = vmatprep.subr.mxu0 0.0
  %1782 = vmatpush1.msra.mxu0 0.0
  %1783 = vmatprep.subr.mxu0 0.0
  %1784 = vmatpush1.msra.mxu0 0.0
  %1785 = vmatprep.subr.mxu0 0.0
  %1786 = vmatpush1.msra.mxu0 0.0
  %1787 = vmatprep.subr.mxu0 0.0
  %1788 = vmatpush1.msra.mxu0 0.0
  %1789 = vmatprep.subr.mxu0 0.0
  %1790 = vmatpush1.msra.mxu0 0.0
  %1791 = vmatprep.subr.mxu0 0.0
  %1792 = vmatpush1.msra.mxu0 0.0
  %1793 = vmatprep.subr.mxu0 0.0
  %1794 = vmatpush1.msra.mxu0 0.0
  %1795 = vmatprep.subr.mxu0 0.0
  %1796 = vmatpush1.msra.mxu0 0.0
  %1797 = vmatprep.subr.mxu0 0.0
  %1798 = vmatpush1.msra.mxu0 0.0
  %1799 = vmatprep.subr.mxu0 0.0
  %1800 = vmatpush1.msra.mxu0 0.0
  %1801 = vmatprep.subr.mxu0 0.0
  %1802 = vmatpush1.msra.mxu0 0.0
  %1803 = vmatprep.subr.mxu0 0.0
  %1804 = vmatpush1.msra.mxu0 0.0
  %1805 = vmatprep.subr.mxu0 0.0
  %1806 = vmatpush1.msra.mxu0 0.0
  %1807 = vmatprep.subr.mxu0 0.0
  %1808 = vmatpush1.msra.mxu0 0.0
  %1809 = vmatprep.subr.mxu0 0.0
  %1810 = vmatpush1.msra.mxu0 0.0
  %1811 = vmatprep.subr.mxu0 0.0
  %1812 = vmatpush1.msra.mxu0 0.0
  %1813 = vmatprep.subr.mxu0 0.0
  %1814 = vmatpush1.msra.mxu0 0.0
  %1815 = vmatprep.subr.mxu0 0.0
  %1816 = vmatpush1.msra.mxu0 0.0
  %1817 = vmatprep.subr.mxu0 0.0
  %1818 = vmatpush1.msra.mxu0 0.0
  %1819 = vmatprep.subr.mxu0 0.0
  %1820 = vmatpush1.msra.mxu0 0.0
  %1821 = vmatprep.subr.mxu0 0.0
  %1822 = vmatpush1.msra.mxu0 0.0
  %1823 = vmatprep.subr.mxu0 0.0
  %1824 = vmatpush1.msra.mxu0 0.0
  %1825 = vmatprep.subr.mxu0 0.0
  %1826 = vmatpush1.msra.mxu0 0.0
  %1827 = vmatprep.subr.mxu0 0.0
  %1828 = vmatpush1.msra.mxu0 0.0
  %1829 = vmatprep.subr.mxu0 0.0
  %1830 = vmatpush1.msra.mxu0 0.0
  %1831 = vmatprep.subr.mxu0 0.0
  %1832 = vmatpush1.msra.mxu0 0.0
  %1833 = vmatprep.subr.mxu0 0.0
  %1834 = vmatpush1.msra.mxu0 0.0
  %1835 = vmatprep.subr.mxu0 0.0
  %1836 = vmatpush1.msra.mxu0 0.0
  %1837 = vmatprep.mubr.f32.mxu0 0.0
  %1838 = vmatmul.mubr.f32.gmra.mrb[0].mxu0 %v1771
  %v1839 = vpop.f32.mrb[0].mxu0
  %v1840 = vadd.f32 0.0, %v1839
  %v1841 = vpop.f32.mrb[0].mxu0
  %1842 = vdwg.mxu0
  %v1843 = vadd.f32 %v1766, %v1840
  %v1844 = vxor.u32 %v1843, 2147483648
  %v1845 = vmul.f32 %v1844, 1.442695
  %v1846 = vpow.pop %v1845
  %v1847 = vadd.f32 %v1846, 1.0
  %v1848 = vrcp.pop %v1847
  %v1849 = vmul.f32 1.0, %v1848
  %v1850 = vtanh.pop %v1843
  %v1852 = vrot.slane %v1755, 6
  %v1854 = vmul.f32 %v1849, %v1852
  %1856 = vrot.lane.b32.xlu0 %v1850, 64
  %v1857 = vpop.permute.xlu0 %1856
  %v1859 = vmul.f32 %v1849, %v1857
  %1861 = vrot.lane.b32.xlu0 %v1859, 32
  %v1862 = vpop.permute.xlu0 %1861
  %v1864 = vadd.f32 %v1854, %v1862
  %v1865 = vtanh.pop %v1864
  %1867 = vrot.lane.b32.xlu0 %v1865, 64
  %v1868 = vpop.permute.xlu0 %1867
  %v1870 = vmul.f32 %v1849, %v1868
  %v1871 = vrot.slane %v1324, 2
  %v1873 = vadd.f32 %v1254, %v1871
  %v1874 = vadd.f32 %v1873, %v1340
  %1876 = vrot.lane.b32.xlu0 %v1870, 32
  %v1877 = vpop.permute.xlu0 %1876
  %v1878 = vsel %vm68, %v1877, 0
  %1880 = vmatprep.subr.mxu0 0.0
  %1881 = vmatpush1.msra.mxu0 %v1170
  %1882 = vmatprep.subr.mxu0 0.0
  %1883 = vmatpush1.msra.mxu0 %v1171
  %1884 = vmatprep.subr.mxu0 0.0
  %1885 = vmatpush1.msra.mxu0 %v1172
  %1886 = vmatprep.subr.mxu0 0.0
  %1887 = vmatpush1.msra.mxu0 %v1173
  %1888 = vmatprep.subr.mxu0 0.0
  %1889 = vmatpush1.msra.mxu0 0.0
  %1890 = vmatprep.subr.mxu0 0.0
  %1891 = vmatpush1.msra.mxu0 0.0
  %1892 = vmatprep.subr.mxu0 0.0
  %1893 = vmatpush1.msra.mxu0 0.0
  %1894 = vmatprep.subr.mxu0 0.0
  %1895 = vmatpush1.msra.mxu0 0.0
  %1896 = vmatprep.subr.mxu0 0.0
  %1897 = vmatpush1.msra.mxu0 0.0
  %1898 = vmatprep.subr.mxu0 0.0
  %1899 = vmatpush1.msra.mxu0 0.0
  %1900 = vmatprep.subr.mxu0 0.0
  %1901 = vmatpush1.msra.mxu0 0.0
  %1902 = vmatprep.subr.mxu0 0.0
  %1903 = vmatpush1.msra.mxu0 0.0
  %1904 = vmatprep.subr.mxu0 0.0
  %1905 = vmatpush1.msra.mxu0 0.0
  %1906 = vmatprep.subr.mxu0 0.0
  %1907 = vmatpush1.msra.mxu0 0.0
  %1908 = vmatprep.subr.mxu0 0.0
  %1909 = vmatpush1.msra.mxu0 0.0
  %1910 = vmatprep.subr.mxu0 0.0
  %1911 = vmatpush1.msra.mxu0 0.0
  %1912 = vmatprep.subr.mxu0 0.0
  %1913 = vmatpush1.msra.mxu0 0.0
  %1914 = vmatprep.subr.mxu0 0.0
  %1915 = vmatpush1.msra.mxu0 0.0
  %1916 = vmatprep.subr.mxu0 0.0
  %1917 = vmatpush1.msra.mxu0 0.0
  %1918 = vmatprep.subr.mxu0 0.0
  %1919 = vmatpush1.msra.mxu0 0.0
  %1920 = vmatprep.subr.mxu0 0.0
  %1921 = vmatpush1.msra.mxu0 0.0
  %1922 = vmatprep.subr.mxu0 0.0
  %1923 = vmatpush1.msra.mxu0 0.0
  %1924 = vmatprep.subr.mxu0 0.0
  %1925 = vmatpush1.msra.mxu0 0.0
  %1926 = vmatprep.subr.mxu0 0.0
  %1927 = vmatpush1.msra.mxu0 0.0
  %1928 = vmatprep.subr.mxu0 0.0
  %1929 = vmatpush1.msra.mxu0 0.0
  %1930 = vmatprep.subr.mxu0 0.0
  %1931 = vmatpush1.msra.mxu0 0.0
  %1932 = vmatprep.subr.mxu0 0.0
  %1933 = vmatpush1.msra.mxu0 0.0
  %1934 = vmatprep.subr.mxu0 0.0
  %1935 = vmatpush1.msra.mxu0 0.0
  %1936 = vmatprep.subr.mxu0 0.0
  %1937 = vmatpush1.msra.mxu0 0.0
  %1938 = vmatprep.subr.mxu0 0.0
  %1939 = vmatpush1.msra.mxu0 0.0
  %1940 = vmatprep.subr.mxu0 0.0
  %1941 = vmatpush1.msra.mxu0 0.0
  %1942 = vmatprep.subr.mxu0 0.0
  %1943 = vmatpush1.msra.mxu0 0.0
  %1944 = vmatprep.mubr.f32.mxu0 0.0
  %1945 = vmatmul.mubr.f32.gmra.mrb[0].mxu0 %v1878
  %v1946 = vpop.f32.mrb[0].mxu0
  %v1947 = vadd.f32 0.0, %v1946
  %v1948 = vpop.f32.mrb[0].mxu0
  %1949 = vdwg.mxu0
  %v1951 = vrot.slane %v1947, 6
  %v1953 = vadd.f32 %v1874, %v1951
  %v1954 = vxor.u32 %v1953, 2147483648
  %v1955 = vmul.f32 %v1954, 1.442695
  %v1956 = vpow.pop %v1955
  %v1957 = vadd.f32 %v1956, 1.0
  %v1958 = vrcp.pop %v1957
  %v1959 = vmul.f32 1.0, %v1958
  %v1960 = vtanh.pop %v1953
  %v1962 = vrot.slane %v1864, 6
  %v1964 = vmul.f32 %v1959, %v1962
  %1966 = vrot.lane.b32.xlu0 %v1960, 64
  %v1967 = vpop.permute.xlu0 %1966
  %v1969 = vmul.f32 %v1959, %v1967
  %1971 = vrot.lane.b32.xlu0 %v1969, 32
  %v1972 = vpop.permute.xlu0 %1971
  %v1974 = vadd.f32 %v1964, %v1972
  %v1975 = vtanh.pop %v1974
  %1977 = vrot.lane.b32.xlu0 %v1975, 64
  %v1978 = vpop.permute.xlu0 %1977
  %v1980 = vmul.f32 %v1959, %v1978
  %v1982 = vrot.slane %v1980, 2
  %1983 = vrot.lane.b32.xlu0 %v1982, 32
  %v1984 = vpop.permute.xlu0 %1983
  %v1985 = vsel %vm68, %v1984, 0
  %1987 = vmatprep.subr.mxu0 0.0
  %1988 = vmatpush1.msra.mxu0 %v1170
  %1989 = vmatprep.subr.mxu0 0.0
  %1990 = vmatpush1.msra.mxu0 %v1171
  %1991 = vmatprep.subr.mxu0 0.0
  %1992 = vmatpush1.msra.mxu0 %v1172
  %1993 = vmatprep.subr.mxu0 0.0
  %1994 = vmatpush1.msra.mxu0 %v1173
  %1995 = vmatprep.subr.mxu0 0.0
  %1996 = vmatpush1.msra.mxu0 0.0
  %1997 = vmatprep.subr.mxu0 0.0
  %1998 = vmatpush1.msra.mxu0 0.0
  %1999 = vmatprep.subr.mxu0 0.0
  %2000 = vmatpush1.msra.mxu0 0.0
  %2001 = vmatprep.subr.mxu0 0.0
  %2002 = vmatpush1.msra.mxu0 0.0
  %2003 = vmatprep.subr.mxu0 0.0
  %2004 = vmatpush1.msra.mxu0 0.0
  %2005 = vmatprep.subr.mxu0 0.0
  %2006 = vmatpush1.msra.mxu0 0.0
  %2007 = vmatprep.subr.mxu0 0.0
  %2008 = vmatpush1.msra.mxu0 0.0
  %2009 = vmatprep.subr.mxu0 0.0
  %2010 = vmatpush1.msra.mxu0 0.0
  %2011 = vmatprep.subr.mxu0 0.0
  %2012 = vmatpush1.msra.mxu0 0.0
  %2013 = vmatprep.subr.mxu0 0.0
  %2014 = vmatpush1.msra.mxu0 0.0
  %2015 = vmatprep.subr.mxu0 0.0
  %2016 = vmatpush1.msra.mxu0 0.0
  %2017 = vmatprep.subr.mxu0 0.0
  %2018 = vmatpush1.msra.mxu0 0.0
  %2019 = vmatprep.subr.mxu0 0.0
  %2020 = vmatpush1.msra.mxu0 0.0
  %2021 = vmatprep.subr.mxu0 0.0
  %2022 = vmatpush1.msra.mxu0 0.0
  %2023 = vmatprep.subr.mxu0 0.0
  %2024 = vmatpush1.msra.mxu0 0.0
  %2025 = vmatprep.subr.mxu0 0.0
  %2026 = vmatpush1.msra.mxu0 0.0
  %2027 = vmatprep.subr.mxu0 0.0
  %2028 = vmatpush1.msra.mxu0 0.0
  %2029 = vmatprep.subr.mxu0 0.0
  %2030 = vmatpush1.msra.mxu0 0.0
  %2031 = vmatprep.subr.mxu0 0.0
  %2032 = vmatpush1.msra.mxu0 0.0
  %2033 = vmatprep.subr.mxu0 0.0
  %2034 = vmatpush1.msra.mxu0 0.0
  %2035 = vmatprep.subr.mxu0 0.0
  %2036 = vmatpush1.msra.mxu0 0.0
  %2037 = vmatprep.subr.mxu0 0.0
  %2038 = vmatpush1.msra.mxu0 0.0
  %2039 = vmatprep.subr.mxu0 0.0
  %2040 = vmatpush1.msra.mxu0 0.0
  %2041 = vmatprep.subr.mxu0 0.0
  %2042 = vmatpush1.msra.mxu0 0.0
  %2043 = vmatprep.subr.mxu0 0.0
  %2044 = vmatpush1.msra.mxu0 0.0
  %2045 = vmatprep.subr.mxu0 0.0
  %2046 = vmatpush1.msra.mxu0 0.0
  %2047 = vmatprep.subr.mxu0 0.0
  %2048 = vmatpush1.msra.mxu0 0.0
  %2049 = vmatprep.subr.mxu0 0.0
  %2050 = vmatpush1.msra.mxu0 0.0
  %2051 = vmatprep.mubr.f32.mxu0 0.0
  %2052 = vmatmul.mubr.f32.gmra.mrb[0].mxu0 %v1985
  %v2053 = vpop.f32.mrb[0].mxu0
  %v2054 = vadd.f32 0.0, %v2053
  %v2055 = vpop.f32.mrb[0].mxu0
  %2056 = vdwg.mxu0
  %v2058 = vrot.slane %v2054, 4
  %v2060 = vadd.f32 %v1766, %v2058
  %v2061 = vxor.u32 %v2060, 2147483648
  %v2062 = vmul.f32 %v2061, 1.442695
  %v2063 = vpow.pop %v2062
  %v2064 = vadd.f32 %v2063, 1.0
  %v2065 = vrcp.pop %v2064
  %v2066 = vmul.f32 1.0, %v2065
  %v2067 = vtanh.pop %v2060
  %v2069 = vrot.slane %v1974, 6
  %v2071 = vmul.f32 %v2066, %v2069
  %2073 = vrot.lane.b32.xlu0 %v2067, 64
  %v2074 = vpop.permute.xlu0 %2073
  %v2076 = vmul.f32 %v2066, %v2074
  %2078 = vrot.lane.b32.xlu0 %v2076, 32
  %v2079 = vpop.permute.xlu0 %2078
  %v2081 = vadd.f32 %v2071, %v2079
  %v2082 = vtanh.pop %v2081
  %2084 = vrot.lane.b32.xlu0 %v2082, 64
  %v2085 = vpop.permute.xlu0 %2084
  %v2087 = vmul.f32 %v2066, %v2085
  %v2089 = vrot.slane %v2087, 4
  %2090 = vrot.lane.b32.xlu0 %v2089, 32
  %v2091 = vpop.permute.xlu0 %2090
  %v2092 = vsel %vm68, %v2091, 0
  %2094 = vmatprep.subr.mxu0 0.0
  %2095 = vmatpush1.msra.mxu0 %v1170
  %2096 = vmatprep.subr.mxu0 0.0
  %2097 = vmatpush1.msra.mxu0 %v1171
  %2098 = vmatprep.subr.mxu0 0.0
  %2099 = vmatpush1.msra.mxu0 %v1172
  %2100 = vmatprep.subr.mxu0 0.0
  %2101 = vmatpush1.msra.mxu0 %v1173
  %2102 = vmatprep.subr.mxu0 0.0
  %2103 = vmatpush1.msra.mxu0 0.0
  %2104 = vmatprep.subr.mxu0 0.0
  %2105 = vmatpush1.msra.mxu0 0.0
  %2106 = vmatprep.subr.mxu0 0.0
  %2107 = vmatpush1.msra.mxu0 0.0
  %2108 = vmatprep.subr.mxu0 0.0
  %2109 = vmatpush1.msra.mxu0 0.0
  %2110 = vmatprep.subr.mxu0 0.0
  %2111 = vmatpush1.msra.mxu0 0.0
  %2112 = vmatprep.subr.mxu0 0.0
  %2113 = vmatpush1.msra.mxu0 0.0
  %2114 = vmatprep.subr.mxu0 0.0
  %2115 = vmatpush1.msra.mxu0 0.0
  %2116 = vmatprep.subr.mxu0 0.0
  %2117 = vmatpush1.msra.mxu0 0.0
  %2118 = vmatprep.subr.mxu0 0.0
  %2119 = vmatpush1.msra.mxu0 0.0
  %2120 = vmatprep.subr.mxu0 0.0
  %2121 = vmatpush1.msra.mxu0 0.0
  %2122 = vmatprep.subr.mxu0 0.0
  %2123 = vmatpush1.msra.mxu0 0.0
  %2124 = vmatprep.subr.mxu0 0.0
  %2125 = vmatpush1.msra.mxu0 0.0
  %2126 = vmatprep.subr.mxu0 0.0
  %2127 = vmatpush1.msra.mxu0 0.0
  %2128 = vmatprep.subr.mxu0 0.0
  %2129 = vmatpush1.msra.mxu0 0.0
  %2130 = vmatprep.subr.mxu0 0.0
  %2131 = vmatpush1.msra.mxu0 0.0
  %2132 = vmatprep.subr.mxu0 0.0
  %2133 = vmatpush1.msra.mxu0 0.0
  %2134 = vmatprep.subr.mxu0 0.0
  %2135 = vmatpush1.msra.mxu0 0.0
  %2136 = vmatprep.subr.mxu0 0.0
  %2137 = vmatpush1.msra.mxu0 0.0
  %2138 = vmatprep.subr.mxu0 0.0
  %2139 = vmatpush1.msra.mxu0 0.0
  %2140 = vmatprep.subr.mxu0 0.0
  %2141 = vmatpush1.msra.mxu0 0.0
  %2142 = vmatprep.subr.mxu0 0.0
  %2143 = vmatpush1.msra.mxu0 0.0
  %2144 = vmatprep.subr.mxu0 0.0
  %2145 = vmatpush1.msra.mxu0 0.0
  %2146 = vmatprep.subr.mxu0 0.0
  %2147 = vmatpush1.msra.mxu0 0.0
  %2148 = vmatprep.subr.mxu0 0.0
  %2149 = vmatpush1.msra.mxu0 0.0
  %2150 = vmatprep.subr.mxu0 0.0
  %2151 = vmatpush1.msra.mxu0 0.0
  %2152 = vmatprep.subr.mxu0 0.0
  %2153 = vmatpush1.msra.mxu0 0.0
  %2154 = vmatprep.subr.mxu0 0.0
  %2155 = vmatpush1.msra.mxu0 0.0
  %2156 = vmatprep.subr.mxu0 0.0
  %2157 = vmatpush1.msra.mxu0 0.0
  %2158 = vmatprep.mubr.f32.mxu0 0.0
  %2159 = vmatmul.mubr.f32.gmra.mrb[0].mxu0 %v2092
  %v2160 = vpop.f32.mrb[0].mxu0
  %v2161 = vadd.f32 0.0, %v2160
  %v2162 = vpop.f32.mrb[0].mxu0
  %2163 = vdwg.mxu0
  %v2165 = vrot.slane %v2161, 2
  %v2167 = vadd.f32 %v1874, %v2165
  %v2168 = vxor.u32 %v2167, 2147483648
  %v2169 = vmul.f32 %v2168, 1.442695
  %v2170 = vpow.pop %v2169
  %v2171 = vadd.f32 %v2170, 1.0
  %v2172 = vrcp.pop %v2171
  %v2173 = vmul.f32 1.0, %v2172
  %v2174 = vtanh.pop %v2167
  %v2176 = vrot.slane %v2081, 6
  %v2178 = vmul.f32 %v2173, %v2176
  %2180 = vrot.lane.b32.xlu0 %v2174, 64
  %v2181 = vpop.permute.xlu0 %2180
  %v2183 = vmul.f32 %v2173, %v2181
  %2185 = vrot.lane.b32.xlu0 %v2183, 32
  %v2186 = vpop.permute.xlu0 %2185
  %v2188 = vadd.f32 %v2178, %v2186
  %v2189 = vtanh.pop %v2188
  %2191 = vrot.lane.b32.xlu0 %v2189, 64
  %v2192 = vpop.permute.xlu0 %2191
  %v2194 = vmul.f32 %v2173, %v2192
  %v2197 = vrot.slane %v2194, 6
  %2198 = vrot.lane.b32.xlu0 %v2197, 32
  %v2199 = vpop.permute.xlu0 %2198
  %v2201 = vsel %vm1097, %v1444, %v2199
  %2202 = vrot.lane.b32.xlu0 %v1547, 32
  %v2203 = vpop.permute.xlu0 %2202
  %v2205 = vrot.slane %v2087, 2
  %2206 = vrot.lane.b32.xlu0 %v2205, 32
  %v2207 = vpop.permute.xlu0 %2206
  %v2209 = vsel %vm1097, %v2203, %v2207
  %2210 = vrot.lane.b32.xlu0 %v1654, 32
  %v2211 = vpop.permute.xlu0 %2210
  %v2213 = vrot.slane %v1980, 6
  %2214 = vrot.lane.b32.xlu0 %v2213, 32
  %v2215 = vpop.permute.xlu0 %2214
  %v2217 = vsel %vm1097, %v2211, %v2215
  %2218 = vrot.lane.b32.xlu0 %v1761, 32
  %v2219 = vpop.permute.xlu0 %2218
  %v2221 = vrot.slane %v1870, 2
  %2222 = vrot.lane.b32.xlu0 %v2221, 32
  %v2223 = vpop.permute.xlu0 %2222
  %v2225 = vsel %vm1097, %v2219, %v2223
  %v2228 = vsel %vm1097, %v1877, %v1770
  %2229 = vrot.lane.b32.xlu0 %v1980, 32
  %v2230 = vpop.permute.xlu0 %2229
  %v2232 = vrot.slane %v1654, 2
  %2233 = vrot.lane.b32.xlu0 %v2232, 32
  %v2234 = vpop.permute.xlu0 %2233
  %v2236 = vsel %vm1097, %v2230, %v2234
  %2237 = vrot.lane.b32.xlu0 %v2087, 32
  %v2238 = vpop.permute.xlu0 %2237
  %v2240 = vrot.slane %v1547, 6
  %2241 = vrot.lane.b32.xlu0 %v2240, 32
  %v2242 = vpop.permute.xlu0 %2241
  %v2244 = vsel %vm1097, %v2238, %v2242
  %2245 = vrot.lane.b32.xlu0 %v2194, 32
  %v2246 = vpop.permute.xlu0 %2245
  %v2248 = vrot.slane %v1437, 2
  %2249 = vrot.lane.b32.xlu0 %v2248, 32
  %v2250 = vpop.permute.xlu0 %2249
  %v2252 = vsel %vm1097, %v2246, %v2250
  %v2253 = vsel %vm1150, %v2201, %v2209
  %v2254 = vsel %vm1152, %v2253, %v2217
  %v2255 = vsel %vm1154, %v2254, %v2225
  %v2256 = vsel %vm1150, %v2228, %v2236
  %v2257 = vsel %vm1152, %v2256, %v2244
  %v2258 = vsel %vm1154, %v2257, %v2252
  %v2259 = vld [vmem:[%s2] sm:$0x3]
  %v2260 = vld [vmem:[%s1] sm:$0xff]
  %v2261 = vld [vmem:[%s1 + $0x8] sm:$0xff]
  %v2262 = vld [vmem:[%s7] sm:$0xff]
  %v2263 = vld [vmem:[%s7 + $0x8] sm:$0xff]
  %v2265 = vsel %vm1097, %v2260, 0
  %v2268 = vsel %vm1097, %v2261, 0
  %2270 = vmatprep.subr.mxu0 0.0
  %2271 = vmatpush1.msra.mxu0 %v2262
  %2272 = vmatprep.subr.mxu0 0.0
  %2273 = vmatpush1.msra.mxu0 %v2263
  %2274 = vmatprep.subr.mxu0 0.0
  %2275 = vmatpush1.msra.mxu0 0.0
  %2276 = vmatprep.subr.mxu0 0.0
  %2277 = vmatpush1.msra.mxu0 0.0
  %2278 = vmatprep.subr.mxu0 0.0
  %2279 = vmatpush1.msra.mxu0 0.0
  %2280 = vmatprep.subr.mxu0 0.0
  %2281 = vmatpush1.msra.mxu0 0.0
  %2282 = vmatprep.subr.mxu0 0.0
  %2283 = vmatpush1.msra.mxu0 0.0
  %2284 = vmatprep.subr.mxu0 0.0
  %2285 = vmatpush1.msra.mxu0 0.0
  %2286 = vmatprep.subr.mxu0 0.0
  %2287 = vmatpush1.msra.mxu0 0.0
  %2288 = vmatprep.subr.mxu0 0.0
  %2289 = vmatpush1.msra.mxu0 0.0
  %2290 = vmatprep.subr.mxu0 0.0
  %2291 = vmatpush1.msra.mxu0 0.0
  %2292 = vmatprep.subr.mxu0 0.0
  %2293 = vmatpush1.msra.mxu0 0.0
  %2294 = vmatprep.subr.mxu0 0.0
  %2295 = vmatpush1.msra.mxu0 0.0
  %2296 = vmatprep.subr.mxu0 0.0
  %2297 = vmatpush1.msra.mxu0 0.0
  %2298 = vmatprep.subr.mxu0 0.0
  %2299 = vmatpush1.msra.mxu0 0.0
  %2300 = vmatprep.subr.mxu0 0.0
  %2301 = vmatpush1.msra.mxu0 0.0
  %2302 = vmatprep.subr.mxu0 0.0
  %2303 = vmatpush1.msra.mxu0 0.0
  %2304 = vmatprep.subr.mxu0 0.0
  %2305 = vmatpush1.msra.mxu0 0.0
  %2306 = vmatprep.subr.mxu0 0.0
  %2307 = vmatpush1.msra.mxu0 0.0
  %2308 = vmatprep.subr.mxu0 0.0
  %2309 = vmatpush1.msra.mxu0 0.0
  %2310 = vmatprep.subr.mxu0 0.0
  %2311 = vmatpush1.msra.mxu0 0.0
  %2312 = vmatprep.subr.mxu0 0.0
  %2313 = vmatpush1.msra.mxu0 0.0
  %2314 = vmatprep.subr.mxu0 0.0
  %2315 = vmatpush1.msra.mxu0 0.0
  %2316 = vmatprep.subr.mxu0 0.0
  %2317 = vmatpush1.msra.mxu0 0.0
  %2318 = vmatprep.subr.mxu0 0.0
  %2319 = vmatpush1.msra.mxu0 0.0
  %2320 = vmatprep.subr.mxu0 0.0
  %2321 = vmatpush1.msra.mxu0 0.0
  %2322 = vmatprep.subr.mxu0 0.0
  %2323 = vmatpush1.msra.mxu0 0.0
  %2324 = vmatprep.subr.mxu0 0.0
  %2325 = vmatpush1.msra.mxu0 0.0
  %2326 = vmatprep.subr.mxu0 0.0
  %2327 = vmatpush1.msra.mxu0 0.0
  %2328 = vmatprep.subr.mxu0 0.0
  %2329 = vmatpush1.msra.mxu0 0.0
  %2330 = vmatprep.subr.mxu0 0.0
  %2331 = vmatpush1.msra.mxu0 0.0
  %2332 = vmatprep.subr.mxu0 0.0
  %2333 = vmatpush1.msra.mxu0 0.0
  %2334 = vmatprep.mubr.f32.mxu0 0.0
  %2335 = vmatmul.mubr.f32.gmra.mrb[0].mxu0 %v2265
  %v2336 = vpop.f32.mrb[0].mxu0
  %v2337 = vadd.f32 0.0, %v2336
  %v2338 = vpop.f32.mrb[0].mxu0
  %2339 = vmatprep.mubr.f32.mxu0 0.0
  %2340 = vmatmul.mubr.f32.gmra.mrb[0].mxu0 %v2268
  %v2341 = vpop.f32.mrb[0].mxu0
  %v2342 = vadd.f32 0.0, %v2341
  %v2343 = vpop.f32.mrb[0].mxu0
  %2344 = vdwg.mxu0
  %v2345 = vld [vmem:[%s11] sm:$0xff]
  %v2346 = vld [vmem:[%s11 + $0x8] sm:$0xff]
  %v2347 = vld [vmem:[%s11 + $0x10] sm:$0xff]
  %v2348 = vld [vmem:[%s11 + $0x18] sm:$0xff]
  %v2349 = vld [vmem:[%s12] sm:$0xff]
  %v2350 = vld [vmem:[%s12 + $0x8] sm:$0xff]
  %v2351 = vld [vmem:[%s12 + $0x10] sm:$0xff]
  %v2352 = vld [vmem:[%s12 + $0x18] sm:$0xff]
  %v2353 = vld [vmem:[%s12 + $0x20] sm:$0xff]
  %v2354 = vld [vmem:[%s12 + $0x28] sm:$0xff]
  %v2355 = vld [vmem:[%s12 + $0x30] sm:$0xff]
  %v2356 = vld [vmem:[%s12 + $0x38] sm:$0xff]
  %v2357 = vld [vmem:[%s13] sm:$0x1]
  %v2358 = vld [vmem:[%s8] sm:$0xff]
  %v2359 = vld [vmem:[%s8 + $0x8] sm:$0xff]
  %v2360 = vld [vmem:[%s8 + $0x10] sm:$0xff]
  %v2361 = vld [vmem:[%s8 + $0x18] sm:$0xff]
  %v2362 = vld [vmem:[%s9] sm:$0xff]
  %v2363 = vld [vmem:[%s9 + $0x8] sm:$0xff]
  %v2364 = vld [vmem:[%s9 + $0x10] sm:$0xff]
  %v2365 = vld [vmem:[%s9 + $0x18] sm:$0xff]
  %v2366 = vsel %vm68, %v1095, 0
  %2368 = vmatprep.subr.mxu0 0.0
  %2369 = vmatpush1.msra.mxu0 %v2362
  %2370 = vmatprep.subr.mxu0 0.0
  %2371 = vmatpush1.msra.mxu0 %v2363
  %2372 = vmatprep.subr.mxu0 0.0
  %2373 = vmatpush1.msra.mxu0 %v2364
  %2374 = vmatprep.subr.mxu0 0.0
  %2375 = vmatpush1.msra.mxu0 %v2365
  %2376 = vmatprep.subr.mxu0 0.0
  %2377 = vmatpush1.msra.mxu0 0.0
  %2378 = vmatprep.subr.mxu0 0.0
  %2379 = vmatpush1.msra.mxu0 0.0
  %2380 = vmatprep.subr.mxu0 0.0
  %2381 = vmatpush1.msra.mxu0 0.0
  %2382 = vmatprep.subr.mxu0 0.0
  %2383 = vmatpush1.msra.mxu0 0.0
  %2384 = vmatprep.subr.mxu0 0.0
  %2385 = vmatpush1.msra.mxu0 0.0
  %2386 = vmatprep.subr.mxu0 0.0
  %2387 = vmatpush1.msra.mxu0 0.0
  %2388 = vmatprep.subr.mxu0 0.0
  %2389 = vmatpush1.msra.mxu0 0.0
  %2390 = vmatprep.subr.mxu0 0.0
  %2391 = vmatpush1.msra.mxu0 0.0
  %2392 = vmatprep.subr.mxu0 0.0
  %2393 = vmatpush1.msra.mxu0 0.0
  %2394 = vmatprep.subr.mxu0 0.0
  %2395 = vmatpush1.msra.mxu0 0.0
  %2396 = vmatprep.subr.mxu0 0.0
  %2397 = vmatpush1.msra.mxu0 0.0
  %2398 = vmatprep.subr.mxu0 0.0
  %2399 = vmatpush1.msra.mxu0 0.0
  %2400 = vmatprep.subr.mxu0 0.0
  %2401 = vmatpush1.msra.mxu0 0.0
  %2402 = vmatprep.subr.mxu0 0.0
  %2403 = vmatpush1.msra.mxu0 0.0
  %2404 = vmatprep.subr.mxu0 0.0
  %2405 = vmatpush1.msra.mxu0 0.0
  %2406 = vmatprep.subr.mxu0 0.0
  %2407 = vmatpush1.msra.mxu0 0.0
  %2408 = vmatprep.subr.mxu0 0.0
  %2409 = vmatpush1.msra.mxu0 0.0
  %2410 = vmatprep.subr.mxu0 0.0
  %2411 = vmatpush1.msra.mxu0 0.0
  %2412 = vmatprep.subr.mxu0 0.0
  %2413 = vmatpush1.msra.mxu0 0.0
  %2414 = vmatprep.subr.mxu0 0.0
  %2415 = vmatpush1.msra.mxu0 0.0
  %2416 = vmatprep.subr.mxu0 0.0
  %2417 = vmatpush1.msra.mxu0 0.0
  %2418 = vmatprep.subr.mxu0 0.0
  %2419 = vmatpush1.msra.mxu0 0.0
  %2420 = vmatprep.subr.mxu0 0.0
  %2421 = vmatpush1.msra.mxu0 0.0
  %2422 = vmatprep.subr.mxu0 0.0
  %2423 = vmatpush1.msra.mxu0 0.0
  %2424 = vmatprep.subr.mxu0 0.0
  %2425 = vmatpush1.msra.mxu0 0.0
  %2426 = vmatprep.subr.mxu0 0.0
  %2427 = vmatpush1.msra.mxu0 0.0
  %2428 = vmatprep.subr.mxu0 0.0
  %2429 = vmatpush1.msra.mxu0 0.0
  %2430 = vmatprep.subr.mxu0 0.0
  %2431 = vmatpush1.msra.mxu0 0.0
  %2432 = vmatprep.mubr.f32.mxu0 0.0
  %2433 = vmatmul.mubr.f32.gmra.mrb[0].mxu0 %v2366
  %v2434 = vpop.f32.mrb[0].mxu0
  %v2435 = vadd.f32 0.0, %v2434
  %v2436 = vpop.f32.mrb[0].mxu0
  %2437 = vdwg.mxu0
  %2438 = vmatprep.subr.mxu0 0.0
  %2439 = vmatpush1.msra.mxu0 %v2358
  %2440 = vmatprep.subr.mxu0 0.0
  %2441 = vmatpush1.msra.mxu0 %v2359
  %2442 = vmatprep.subr.mxu0 0.0
  %2443 = vmatpush1.msra.mxu0 %v2360
  %2444 = vmatprep.subr.mxu0 0.0
  %2445 = vmatpush1.msra.mxu0 %v2361
  %2446 = vmatprep.subr.mxu0 0.0
  %2447 = vmatpush1.msra.mxu0 0.0
  %2448 = vmatprep.subr.mxu0 0.0
  %2449 = vmatpush1.msra.mxu0 0.0
  %2450 = vmatprep.subr.mxu0 0.0
  %2451 = vmatpush1.msra.mxu0 0.0
  %2452 = vmatprep.subr.mxu0 0.0
  %2453 = vmatpush1.msra.mxu0 0.0
  %2454 = vmatprep.subr.mxu0 0.0
  %2455 = vmatpush1.msra.mxu0 0.0
  %2456 = vmatprep.subr.mxu0 0.0
  %2457 = vmatpush1.msra.mxu0 0.0
  %2458 = vmatprep.subr.mxu0 0.0
  %2459 = vmatpush1.msra.mxu0 0.0
  %2460 = vmatprep.subr.mxu0 0.0
  %2461 = vmatpush1.msra.mxu0 0.0
  %2462 = vmatprep.subr.mxu0 0.0
  %2463 = vmatpush1.msra.mxu0 0.0
  %2464 = vmatprep.subr.mxu0 0.0
  %2465 = vmatpush1.msra.mxu0 0.0
  %2466 = vmatprep.subr.mxu0 0.0
  %2467 = vmatpush1.msra.mxu0 0.0
  %2468 = vmatprep.subr.mxu0 0.0
  %2469 = vmatpush1.msra.mxu0 0.0
  %2470 = vmatprep.subr.mxu0 0.0
  %2471 = vmatpush1.msra.mxu0 0.0
  %2472 = vmatprep.subr.mxu0 0.0
  %2473 = vmatpush1.msra.mxu0 0.0
  %2474 = vmatprep.subr.mxu0 0.0
  %2475 = vmatpush1.msra.mxu0 0.0
  %2476 = vmatprep.subr.mxu0 0.0
  %2477 = vmatpush1.msra.mxu0 0.0
  %2478 = vmatprep.subr.mxu0 0.0
  %2479 = vmatpush1.msra.mxu0 0.0
  %2480 = vmatprep.subr.mxu0 0.0
  %2481 = vmatpush1.msra.mxu0 0.0
  %2482 = vmatprep.subr.mxu0 0.0
  %2483 = vmatpush1.msra.mxu0 0.0
  %2484 = vmatprep.subr.mxu0 0.0
  %2485 = vmatpush1.msra.mxu0 0.0
  %2486 = vmatprep.subr.mxu0 0.0
  %2487 = vmatpush1.msra.mxu0 0.0
  %2488 = vmatprep.subr.mxu0 0.0
  %2489 = vmatpush1.msra.mxu0 0.0
  %2490 = vmatprep.subr.mxu0 0.0
  %2491 = vmatpush1.msra.mxu0 0.0
  %2492 = vmatprep.subr.mxu0 0.0
  %2493 = vmatpush1.msra.mxu0 0.0
  %2494 = vmatprep.subr.mxu0 0.0
  %2495 = vmatpush1.msra.mxu0 0.0
  %2496 = vmatprep.subr.mxu0 0.0
  %2497 = vmatpush1.msra.mxu0 0.0
  %2498 = vmatprep.subr.mxu0 0.0
  %2499 = vmatpush1.msra.mxu0 0.0
  %2500 = vmatprep.subr.mxu0 0.0
  %2501 = vmatpush1.msra.mxu0 0.0
  %2502 = vmatprep.mubr.f32.mxu0 0.0
  %2503 = vmatmul.mubr.f32.gmra.mrb[0].mxu0 %v237
  %v2504 = vpop.f32.mrb[0].mxu0
  %v2505 = vadd.f32 %v2435, %v2504
  %v2506 = vpop.f32.mrb[0].mxu0
  %2507 = vdwg.mxu0
  %v2508 = vld [vmem:[%s10] sm:$0x1]
  %v2510 = vlaneseq
  %v2511 = vshrl.u32 %v2510, 7
  %v2512 = vsub.s32 0, %v2511
  %v2513 = vrot.slane %v2508, %v2512
  %v2515 = vadd.f32 %v2505, %v2513
  %v2516 = vadd.f32 %v2515, %v2337
  %v2517 = vxor.u32 %v2516, 2147483648
  %v2518 = vmul.f32 %v2517, 1.442695
  %v2519 = vpow.pop %v2518
  %v2520 = vadd.f32 %v2519, 1.0
  %v2521 = vrcp.pop %v2520
  %v2522 = vmul.f32 1.0, %v2521
  %v2523 = vtanh.pop %v2516
  %v2525 = vrot.slane %v1084, 6
  %v2527 = vmul.f32 %v2522, %v2525
  %2529 = vrot.lane.b32.xlu0 %v2523, 64
  %v2530 = vpop.permute.xlu0 %2529
  %v2532 = vmul.f32 %v2522, %v2530
  %2534 = vrot.lane.b32.xlu0 %v2532, 32
  %v2535 = vpop.permute.xlu0 %2534
  %v2537 = vadd.f32 %v2527, %v2535
  %v2538 = vtanh.pop %v2537
  %2540 = vrot.lane.b32.xlu0 %v2538, 64
  %v2541 = vpop.permute.xlu0 %2540
  %v2543 = vmul.f32 %v2522, %v2541
  %s2544 = scalar_lea.vmem %s8, 32
  %v2545 = vld [vmem:[%s2544] sm:$0xff]
  %v2546 = vld [vmem:[%s2544 + $0x8] sm:$0xff]
  %v2547 = vld [vmem:[%s2544 + $0x10] sm:$0xff]
  %v2548 = vld [vmem:[%s2544 + $0x18] sm:$0xff]
  %s2549 = scalar_lea.vmem %s9, 32
  %v2550 = vld [vmem:[%s2549] sm:$0xff]
  %v2551 = vld [vmem:[%s2549 + $0x8] sm:$0xff]
  %v2552 = vld [vmem:[%s2549 + $0x10] sm:$0xff]
  %v2553 = vld [vmem:[%s2549 + $0x18] sm:$0xff]
  %v2554 = vsel %vm68, %v2199, 0
  %2556 = vmatprep.subr.mxu0 0.0
  %2557 = vmatpush1.msra.mxu0 %v2550
  %2558 = vmatprep.subr.mxu0 0.0
  %2559 = vmatpush1.msra.mxu0 %v2551
  %2560 = vmatprep.subr.mxu0 0.0
  %2561 = vmatpush1.msra.mxu0 %v2552
  %2562 = vmatprep.subr.mxu0 0.0
  %2563 = vmatpush1.msra.mxu0 %v2553
  %2564 = vmatprep.subr.mxu0 0.0
  %2565 = vmatpush1.msra.mxu0 0.0
  %2566 = vmatprep.subr.mxu0 0.0
  %2567 = vmatpush1.msra.mxu0 0.0
  %2568 = vmatprep.subr.mxu0 0.0
  %2569 = vmatpush1.msra.mxu0 0.0
  %2570 = vmatprep.subr.mxu0 0.0
  %2571 = vmatpush1.msra.mxu0 0.0
  %2572 = vmatprep.subr.mxu0 0.0
  %2573 = vmatpush1.msra.mxu0 0.0
  %2574 = vmatprep.subr.mxu0 0.0
  %2575 = vmatpush1.msra.mxu0 0.0
  %2576 = vmatprep.subr.mxu0 0.0
  %2577 = vmatpush1.msra.mxu0 0.0
  %2578 = vmatprep.subr.mxu0 0.0
  %2579 = vmatpush1.msra.mxu0 0.0
  %2580 = vmatprep.subr.mxu0 0.0
  %2581 = vmatpush1.msra.mxu0 0.0
  %2582 = vmatprep.subr.mxu0 0.0
  %2583 = vmatpush1.msra.mxu0 0.0
  %2584 = vmatprep.subr.mxu0 0.0
  %2585 = vmatpush1.msra.mxu0 0.0
  %2586 = vmatprep.subr.mxu0 0.0
  %2587 = vmatpush1.msra.mxu0 0.0
  %2588 = vmatprep.subr.mxu0 0.0
  %2589 = vmatpush1.msra.mxu0 0.0
  %2590 = vmatprep.subr.mxu0 0.0
  %2591 = vmatpush1.msra.mxu0 0.0
  %2592 = vmatprep.subr.mxu0 0.0
  %2593 = vmatpush1.msra.mxu0 0.0
  %2594 = vmatprep.subr.mxu0 0.0
  %2595 = vmatpush1.msra.mxu0 0.0
  %2596 = vmatprep.subr.mxu0 0.0
  %2597 = vmatpush1.msra.mxu0 0.0
  %2598 = vmatprep.subr.mxu0 0.0
  %2599 = vmatpush1.msra.mxu0 0.0
  %2600 = vmatprep.subr.mxu0 0.0
  %2601 = vmatpush1.msra.mxu0 0.0
  %2602 = vmatprep.subr.mxu0 0.0
  %2603 = vmatpush1.msra.mxu0 0.0
  %2604 = vmatprep.subr.mxu0 0.0
  %2605 = vmatpush1.msra.mxu0 0.0
  %2606 = vmatprep.subr.mxu0 0.0
  %2607 = vmatpush1.msra.mxu0 0.0
  %2608 = vmatprep.subr.mxu0 0.0
  %2609 = vmatpush1.msra.mxu0 0.0
  %2610 = vmatprep.subr.mxu0 0.0
  %2611 = vmatpush1.msra.mxu0 0.0
  %2612 = vmatprep.subr.mxu0 0.0
  %2613 = vmatpush1.msra.mxu0 0.0
  %2614 = vmatprep.subr.mxu0 0.0
  %2615 = vmatpush1.msra.mxu0 0.0
  %2616 = vmatprep.subr.mxu0 0.0
  %2617 = vmatpush1.msra.mxu0 0.0
  %2618 = vmatprep.subr.mxu0 0.0
  %2619 = vmatpush1.msra.mxu0 0.0
  %2620 = vmatprep.mubr.f32.mxu0 0.0
  %2621 = vmatmul.mubr.f32.gmra.mrb[0].mxu0 %v2554
  %v2622 = vpop.f32.mrb[0].mxu0
  %v2623 = vadd.f32 0.0, %v2622
  %v2624 = vpop.f32.mrb[0].mxu0
  %2625 = vdwg.mxu0
  %2627 = vrot.lane.b32.xlu0 %v2543, 32
  %v2628 = vpop.permute.xlu0 %2627
  %v2629 = vsel %vm68, %v2628, 0
  %2631 = vmatprep.subr.mxu0 0.0
  %2632 = vmatpush1.msra.mxu0 %v2545
  %2633 = vmatprep.subr.mxu0 0.0
  %2634 = vmatpush1.msra.mxu0 %v2546
  %2635 = vmatprep.subr.mxu0 0.0
  %2636 = vmatpush1.msra.mxu0 %v2547
  %2637 = vmatprep.subr.mxu0 0.0
  %2638 = vmatpush1.msra.mxu0 %v2548
  %2639 = vmatprep.subr.mxu0 0.0
  %2640 = vmatpush1.msra.mxu0 0.0
  %2641 = vmatprep.subr.mxu0 0.0
  %2642 = vmatpush1.msra.mxu0 0.0
  %2643 = vmatprep.subr.mxu0 0.0
  %2644 = vmatpush1.msra.mxu0 0.0
  %2645 = vmatprep.subr.mxu0 0.0
  %2646 = vmatpush1.msra.mxu0 0.0
  %2647 = vmatprep.subr.mxu0 0.0
  %2648 = vmatpush1.msra.mxu0 0.0
  %2649 = vmatprep.subr.mxu0 0.0
  %2650 = vmatpush1.msra.mxu0 0.0
  %2651 = vmatprep.subr.mxu0 0.0
  %2652 = vmatpush1.msra.mxu0 0.0
  %2653 = vmatprep.subr.mxu0 0.0
  %2654 = vmatpush1.msra.mxu0 0.0
  %2655 = vmatprep.subr.mxu0 0.0
  %2656 = vmatpush1.msra.mxu0 0.0
  %2657 = vmatprep.subr.mxu0 0.0
  %2658 = vmatpush1.msra.mxu0 0.0
  %2659 = vmatprep.subr.mxu0 0.0
  %2660 = vmatpush1.msra.mxu0 0.0
  %2661 = vmatprep.subr.mxu0 0.0
  %2662 = vmatpush1.msra.mxu0 0.0
  %2663 = vmatprep.subr.mxu0 0.0
  %2664 = vmatpush1.msra.mxu0 0.0
  %2665 = vmatprep.subr.mxu0 0.0
  %2666 = vmatpush1.msra.mxu0 0.0
  %2667 = vmatprep.subr.mxu0 0.0
  %2668 = vmatpush1.msra.mxu0 0.0
  %2669 = vmatprep.subr.mxu0 0.0
  %2670 = vmatpush1.msra.mxu0 0.0
  %2671 = vmatprep.subr.mxu0 0.0
  %2672 = vmatpush1.msra.mxu0 0.0
  %2673 = vmatprep.subr.mxu0 0.0
  %2674 = vmatpush1.msra.mxu0 0.0
  %2675 = vmatprep.subr.mxu0 0.0
  %2676 = vmatpush1.msra.mxu0 0.0
  %2677 = vmatprep.subr.mxu0 0.0
  %2678 = vmatpush1.msra.mxu0 0.0
  %2679 = vmatprep.subr.mxu0 0.0
  %2680 = vmatpush1.msra.mxu0 0.0
  %2681 = vmatprep.subr.mxu0 0.0
  %2682 = vmatpush1.msra.mxu0 0.0
  %2683 = vmatprep.subr.mxu0 0.0
  %2684 = vmatpush1.msra.mxu0 0.0
  %2685 = vmatprep.subr.mxu0 0.0
  %2686 = vmatpush1.msra.mxu0 0.0
  %2687 = vmatprep.subr.mxu0 0.0
  %2688 = vmatpush1.msra.mxu0 0.0
  %2689 = vmatprep.subr.mxu0 0.0
  %2690 = vmatpush1.msra.mxu0 0.0
  %2691 = vmatprep.subr.mxu0 0.0
  %2692 = vmatpush1.msra.mxu0 0.0
  %2693 = vmatprep.subr.mxu0 0.0
  %2694 = vmatpush1.msra.mxu0 0.0
  %2695 = vmatprep.mubr.f32.mxu0 0.0
  %2696 = vmatmul.mubr.f32.gmra.mrb[0].mxu0 %v2629
  %v2697 = vpop.f32.mrb[0].mxu0
  %v2698 = vadd.f32 %v2623, %v2697
  %v2699 = vpop.f32.mrb[0].mxu0
  %2700 = vdwg.mxu0
  %s2701 = scalar_lea.vmem %s10, 1
  %v2702 = vld [vmem:[%s2701] sm:$0x1]
  %v2704 = vlaneseq
  %v2705 = vshrl.u32 %v2704, 7
  %v2706 = vsub.s32 0, %v2705
  %v2707 = vrot.slane %v2702, %v2706
  %v2709 = vadd.f32 %v2698, %v2707
  %v2710 = vxor.u32 %v2709, 2147483648
  %v2711 = vmul.f32 %v2710, 1.442695
  %v2712 = vpow.pop %v2711
  %v2713 = vadd.f32 %v2712, 1.0
  %v2714 = vrcp.pop %v2713
  %v2715 = vmul.f32 1.0, %v2714
  %v2716 = vtanh.pop %v2709
  %v2718 = vrot.slane %v2188, 6
  %v2720 = vmul.f32 %v2715, %v2718
  %2722 = vrot.lane.b32.xlu0 %v2716, 64
  %v2723 = vpop.permute.xlu0 %2722
  %v2725 = vmul.f32 %v2715, %v2723
  %2727 = vrot.lane.b32.xlu0 %v2725, 32
  %v2728 = vpop.permute.xlu0 %2727
  %v2730 = vadd.f32 %v2720, %v2728
  %v2731 = vtanh.pop %v2730
  %2733 = vrot.lane.b32.xlu0 %v2731, 64
  %v2734 = vpop.permute.xlu0 %2733
  %v2736 = vmul.f32 %v2715, %v2734
  %2738 = vrot.lane.b32.xlu0 %v2736, 32
  %v2739 = vpop.permute.xlu0 %2738
  %v2740 = vsel %vm68, %v2739, 0
  %2742 = vmatprep.subr.mxu0 0.0
  %2743 = vmatpush1.msra.mxu0 %v2345
  %2744 = vmatprep.subr.mxu0 0.0
  %2745 = vmatpush1.msra.mxu0 %v2346
  %2746 = vmatprep.subr.mxu0 0.0
  %2747 = vmatpush1.msra.mxu0 %v2347
  %2748 = vmatprep.subr.mxu0 0.0
  %2749 = vmatpush1.msra.mxu0 %v2348
  %2750 = vmatprep.subr.mxu0 0.0
  %2751 = vmatpush1.msra.mxu0 0.0
  %2752 = vmatprep.subr.mxu0 0.0
  %2753 = vmatpush1.msra.mxu0 0.0
  %2754 = vmatprep.subr.mxu0 0.0
  %2755 = vmatpush1.msra.mxu0 0.0
  %2756 = vmatprep.subr.mxu0 0.0
  %2757 = vmatpush1.msra.mxu0 0.0
  %2758 = vmatprep.subr.mxu0 0.0
  %2759 = vmatpush1.msra.mxu0 0.0
  %2760 = vmatprep.subr.mxu0 0.0
  %2761 = vmatpush1.msra.mxu0 0.0
  %2762 = vmatprep.subr.mxu0 0.0
  %2763 = vmatpush1.msra.mxu0 0.0
  %2764 = vmatprep.subr.mxu0 0.0
  %2765 = vmatpush1.msra.mxu0 0.0
  %2766 = vmatprep.subr.mxu0 0.0
  %2767 = vmatpush1.msra.mxu0 0.0
  %2768 = vmatprep.subr.mxu0 0.0
  %2769 = vmatpush1.msra.mxu0 0.0
  %2770 = vmatprep.subr.mxu0 0.0
  %2771 = vmatpush1.msra.mxu0 0.0
  %2772 = vmatprep.subr.mxu0 0.0
  %2773 = vmatpush1.msra.mxu0 0.0
  %2774 = vmatprep.subr.mxu0 0.0
  %2775 = vmatpush1.msra.mxu0 0.0
  %2776 = vmatprep.subr.mxu0 0.0
  %2777 = vmatpush1.msra.mxu0 0.0
  %2778 = vmatprep.subr.mxu0 0.0
  %2779 = vmatpush1.msra.mxu0 0.0
  %2780 = vmatprep.subr.mxu0 0.0
  %2781 = vmatpush1.msra.mxu0 0.0
  %2782 = vmatprep.subr.mxu0 0.0
  %2783 = vmatpush1.msra.mxu0 0.0
  %2784 = vmatprep.subr.mxu0 0.0
  %2785 = vmatpush1.msra.mxu0 0.0
  %2786 = vmatprep.subr.mxu0 0.0
  %2787 = vmatpush1.msra.mxu0 0.0
  %2788 = vmatprep.subr.mxu0 0.0
  %2789 = vmatpush1.msra.mxu0 0.0
  %2790 = vmatprep.subr.mxu0 0.0
  %2791 = vmatpush1.msra.mxu0 0.0
  %2792 = vmatprep.subr.mxu0 0.0
  %2793 = vmatpush1.msra.mxu0 0.0
  %2794 = vmatprep.subr.mxu0 0.0
  %2795 = vmatpush1.msra.mxu0 0.0
  %2796 = vmatprep.subr.mxu0 0.0
  %2797 = vmatpush1.msra.mxu0 0.0
  %2798 = vmatprep.subr.mxu0 0.0
  %2799 = vmatpush1.msra.mxu0 0.0
  %2800 = vmatprep.subr.mxu0 0.0
  %2801 = vmatpush1.msra.mxu0 0.0
  %2802 = vmatprep.subr.mxu0 0.0
  %2803 = vmatpush1.msra.mxu0 0.0
  %2804 = vmatprep.subr.mxu0 0.0
  %2805 = vmatpush1.msra.mxu0 0.0
  %2806 = vmatprep.mubr.f32.mxu0 0.0
  %2807 = vmatmul.mubr.f32.gmra.mrb[0].mxu0 %v2740
  %v2808 = vpop.f32.mrb[0].mxu0
  %v2809 = vadd.f32 0.0, %v2808
  %v2810 = vpop.f32.mrb[0].mxu0
  %2811 = vdwg.mxu0
  %v2813 = vsel %vm68, %v2809, 0
  %v2816 = vsel %vm68, %v2255, 0
  %v2819 = vsel %vm68, %v2258, 0
  %2821 = vmatprep.subr.mxu0 0.0
  %2822 = vmatpush1.xpose.msra.mxu0 %v2816
  %2823 = vmatprep.subr.mxu0 0.0
  %2824 = vmatpush1.xpose.msra.mxu0 %v2819
  %2825 = vmatprep.subr.mxu0 0.0
  %2826 = vmatpush1.xpose.msra.mxu0 0.0
  %2827 = vmatprep.subr.mxu0 0.0
  %2828 = vmatpush1.xpose.msra.mxu0 0.0
  %2829 = vmatprep.subr.mxu0 0.0
  %2830 = vmatpush1.xpose.msra.mxu0 0.0
  %2831 = vmatprep.subr.mxu0 0.0
  %2832 = vmatpush1.xpose.msra.mxu0 0.0
  %2833 = vmatprep.subr.mxu0 0.0
  %2834 = vmatpush1.xpose.msra.mxu0 0.0
  %2835 = vmatprep.subr.mxu0 0.0
  %2836 = vmatpush1.xpose.msra.mxu0 0.0
  %2837 = vmatprep.subr.mxu0 0.0
  %2838 = vmatpush1.xpose.msra.mxu0 0.0
  %2839 = vmatprep.subr.mxu0 0.0
  %2840 = vmatpush1.xpose.msra.mxu0 0.0
  %2841 = vmatprep.subr.mxu0 0.0
  %2842 = vmatpush1.xpose.msra.mxu0 0.0
  %2843 = vmatprep.subr.mxu0 0.0
  %2844 = vmatpush1.xpose.msra.mxu0 0.0
  %2845 = vmatprep.subr.mxu0 0.0
  %2846 = vmatpush1.xpose.msra.mxu0 0.0
  %2847 = vmatprep.subr.mxu0 0.0
  %2848 = vmatpush1.xpose.msra.mxu0 0.0
  %2849 = vmatprep.subr.mxu0 0.0
  %2850 = vmatpush1.xpose.msra.mxu0 0.0
  %2851 = vmatprep.subr.mxu0 0.0
  %2852 = vmatpush1.xpose.msra.mxu0 0.0
  %2853 = vmatprep.subr.mxu0 0.0
  %2854 = vmatpush1.xpose.msra.mxu0 0.0
  %2855 = vmatprep.subr.mxu0 0.0
  %2856 = vmatpush1.xpose.msra.mxu0 0.0
  %2857 = vmatprep.subr.mxu0 0.0
  %2858 = vmatpush1.xpose.msra.mxu0 0.0
  %2859 = vmatprep.subr.mxu0 0.0
  %2860 = vmatpush1.xpose.msra.mxu0 0.0
  %2861 = vmatprep.subr.mxu0 0.0
  %2862 = vmatpush1.xpose.msra.mxu0 0.0
  %2863 = vmatprep.subr.mxu0 0.0
  %2864 = vmatpush1.xpose.msra.mxu0 0.0
  %2865 = vmatprep.subr.mxu0 0.0
  %2866 = vmatpush1.xpose.msra.mxu0 0.0
  %2867 = vmatprep.subr.mxu0 0.0
  %2868 = vmatpush1.xpose.msra.mxu0 0.0
  %2869 = vmatprep.subr.mxu0 0.0
  %2870 = vmatpush1.xpose.msra.mxu0 0.0
  %2871 = vmatprep.subr.mxu0 0.0
  %2872 = vmatpush1.xpose.msra.mxu0 0.0
  %2873 = vmatprep.subr.mxu0 0.0
  %2874 = vmatpush1.xpose.msra.mxu0 0.0
  %2875 = vmatprep.subr.mxu0 0.0
  %2876 = vmatpush1.xpose.msra.mxu0 0.0
  %2877 = vmatprep.subr.mxu0 0.0
  %2878 = vmatpush1.xpose.msra.mxu0 0.0
  %2879 = vmatprep.subr.mxu0 0.0
  %2880 = vmatpush1.xpose.msra.mxu0 0.0
  %2881 = vmatprep.subr.mxu0 0.0
  %2882 = vmatpush1.xpose.msra.mxu0 0.0
  %2883 = vmatprep.subr.mxu0 0.0
  %2884 = vmatpush1.xpose.msra.mxu0 0.0
  %2885 = vmatprep.mubr.f32.mxu0 0.0
  %2886 = vmatmul.mubr.f32.gmra.mrb[0].mxu0 %v2813
  %v2887 = vpop.f32.mrb[0].mxu0
  %v2888 = vadd.f32 %v2259, %v2887
  %v2889 = vpop.f32.mrb[0].mxu0
  %2890 = vdwg.mxu0
  %vm2891 = vcmask 123904
  %v2892 = vsel %vm2891, %v2888, -inf
  %2893 = vmax.xlane.f32.xlu0 %v2892
  %v2894 = vpop.xlane.xlu0 %2893
  %v2895 = vsub.f32 %v2888, %v2894
  %v2896 = vmul.f32 %v2895, 1.442695
  %v2897 = vpow.pop %v2896
  %v2898 = vsel %vm2891, %v2897, 0.0
  %2899 = vadd.xlane.f32.xlu0 %v2898
  %v2900 = vpop.xlane.xlu0 %2899
  %v2901 = vrcp.pop %v2900
  %v2902 = vmul.f32 %v2897, %v2901
  %v2904 = vsel %vm1097, %v2902, 0
  %2906 = vmatprep.subr.mxu0 0.0
  %2907 = vmatpush1.msra.mxu0 %v2255
  %2908 = vmatprep.subr.mxu0 0.0
  %2909 = vmatpush1.msra.mxu0 %v2258
  %2910 = vmatprep.subr.mxu0 0.0
  %2911 = vmatpush1.msra.mxu0 0.0
  %2912 = vmatprep.subr.mxu0 0.0
  %2913 = vmatpush1.msra.mxu0 0.0
  %2914 = vmatprep.subr.mxu0 0.0
  %2915 = vmatpush1.msra.mxu0 0.0
  %2916 = vmatprep.subr.mxu0 0.0
  %2917 = vmatpush1.msra.mxu0 0.0
  %2918 = vmatprep.subr.mxu0 0.0
  %2919 = vmatpush1.msra.mxu0 0.0
  %2920 = vmatprep.subr.mxu0 0.0
  %2921 = vmatpush1.msra.mxu0 0.0
  %2922 = vmatprep.subr.mxu0 0.0
  %2923 = vmatpush1.msra.mxu0 0.0
  %2924 = vmatprep.subr.mxu0 0.0
  %2925 = vmatpush1.msra.mxu0 0.0
  %2926 = vmatprep.subr.mxu0 0.0
  %2927 = vmatpush1.msra.mxu0 0.0
  %2928 = vmatprep.subr.mxu0 0.0
  %2929 = vmatpush1.msra.mxu0 0.0
  %2930 = vmatprep.subr.mxu0 0.0
  %2931 = vmatpush1.msra.mxu0 0.0
  %2932 = vmatprep.subr.mxu0 0.0
  %2933 = vmatpush1.msra.mxu0 0.0
  %2934 = vmatprep.subr.mxu0 0.0
  %2935 = vmatpush1.msra.mxu0 0.0
  %2936 = vmatprep.subr.mxu0 0.0
  %2937 = vmatpush1.msra.mxu0 0.0
  %2938 = vmatprep.subr.mxu0 0.0
  %2939 = vmatpush1.msra.mxu0 0.0
  %2940 = vmatprep.subr.mxu0 0.0
  %2941 = vmatpush1.msra.mxu0 0.0
  %2942 = vmatprep.subr.mxu0 0.0
  %2943 = vmatpush1.msra.mxu0 0.0
  %2944 = vmatprep.subr.mxu0 0.0
  %2945 = vmatpush1.msra.mxu0 0.0
  %2946 = vmatprep.subr.mxu0 0.0
  %2947 = vmatpush1.msra.mxu0 0.0
  %2948 = vmatprep.subr.mxu0 0.0
  %2949 = vmatpush1.msra.mxu0 0.0
  %2950 = vmatprep.subr.mxu0 0.0
  %2951 = vmatpush1.msra.mxu0 0.0
  %2952 = vmatprep.subr.mxu0 0.0
  %2953 = vmatpush1.msra.mxu0 0.0
  %2954 = vmatprep.subr.mxu0 0.0
  %2955 = vmatpush1.msra.mxu0 0.0
  %2956 = vmatprep.subr.mxu0 0.0
  %2957 = vmatpush1.msra.mxu0 0.0
  %2958 = vmatprep.subr.mxu0 0.0
  %2959 = vmatpush1.msra.mxu0 0.0
  %2960 = vmatprep.subr.mxu0 0.0
  %2961 = vmatpush1.msra.mxu0 0.0
  %2962 = vmatprep.subr.mxu0 0.0
  %2963 = vmatpush1.msra.mxu0 0.0
  %2964 = vmatprep.subr.mxu0 0.0
  %2965 = vmatpush1.msra.mxu0 0.0
  %2966 = vmatprep.subr.mxu0 0.0
  %2967 = vmatpush1.msra.mxu0 0.0
  %2968 = vmatprep.subr.mxu0 0.0
  %2969 = vmatpush1.msra.mxu0 0.0
  %2970 = vmatprep.mubr.f32.mxu0 0.0
  %2971 = vmatmul.mubr.f32.gmra.mrb[0].mxu0 %v2904
  %v2972 = vpop.f32.mrb[0].mxu0
  %v2973 = vadd.f32 0.0, %v2972
  %v2974 = vpop.f32.mrb[0].mxu0
  %2975 = vdwg.mxu0
  %2978 = vrot.lane.b32.xlu0 %v2973, 32
  %v2979 = vpop.permute.xlu0 %2978
  %v2981 = vsel %vm68, %v2739, %v2979
  %v2983 = vlaneseq
  %v2984 = vshrl.u32 %v2983, 7
  %v2985 = vsub.s32 0, %v2984
  %v2986 = vrot.slane %v2357, %v2985
  %vm2988 = vcmask 523264
  %v2990 = vsel %vm2988, %v2981, 0
  %2992 = vmatprep.subr.mxu0 0.0
  %2993 = vmatpush1.msra.mxu0 %v2349
  %2994 = vmatprep.subr.mxu0 0.0
  %2995 = vmatpush1.msra.mxu0 %v2350
  %2996 = vmatprep.subr.mxu0 0.0
  %2997 = vmatpush1.msra.mxu0 %v2351
  %2998 = vmatprep.subr.mxu0 0.0
  %2999 = vmatpush1.msra.mxu0 %v2352
  %3000 = vmatprep.subr.mxu0 0.0
  %3001 = vmatpush1.msra.mxu0 %v2353
  %3002 = vmatprep.subr.mxu0 0.0
  %3003 = vmatpush1.msra.mxu0 %v2354
  %3004 = vmatprep.subr.mxu0 0.0
  %3005 = vmatpush1.msra.mxu0 %v2355
  %3006 = vmatprep.subr.mxu0 0.0
  %3007 = vmatpush1.msra.mxu0 %v2356
  %3008 = vmatprep.subr.mxu0 0.0
  %3009 = vmatpush1.msra.mxu0 0.0
  %3010 = vmatprep.subr.mxu0 0.0
  %3011 = vmatpush1.msra.mxu0 0.0
  %3012 = vmatprep.subr.mxu0 0.0
  %3013 = vmatpush1.msra.mxu0 0.0
  %3014 = vmatprep.subr.mxu0 0.0
  %3015 = vmatpush1.msra.mxu0 0.0
  %3016 = vmatprep.subr.mxu0 0.0
  %3017 = vmatpush1.msra.mxu0 0.0
  %3018 = vmatprep.subr.mxu0 0.0
  %3019 = vmatpush1.msra.mxu0 0.0
  %3020 = vmatprep.subr.mxu0 0.0
  %3021 = vmatpush1.msra.mxu0 0.0
  %3022 = vmatprep.subr.mxu0 0.0
  %3023 = vmatpush1.msra.mxu0 0.0
  %3024 = vmatprep.subr.mxu0 0.0
  %3025 = vmatpush1.msra.mxu0 0.0
  %3026 = vmatprep.subr.mxu0 0.0
  %3027 = vmatpush1.msra.mxu0 0.0
  %3028 = vmatprep.subr.mxu0 0.0
  %3029 = vmatpush1.msra.mxu0 0.0
  %3030 = vmatprep.subr.mxu0 0.0
  %3031 = vmatpush1.msra.mxu0 0.0
  %3032 = vmatprep.subr.mxu0 0.0
  %3033 = vmatpush1.msra.mxu0 0.0
  %3034 = vmatprep.subr.mxu0 0.0
  %3035 = vmatpush1.msra.mxu0 0.0
  %3036 = vmatprep.subr.mxu0 0.0
  %3037 = vmatpush1.msra.mxu0 0.0
  %3038 = vmatprep.subr.mxu0 0.0
  %3039 = vmatpush1.msra.mxu0 0.0
  %3040 = vmatprep.subr.mxu0 0.0
  %3041 = vmatpush1.msra.mxu0 0.0
  %3042 = vmatprep.subr.mxu0 0.0
  %3043 = vmatpush1.msra.mxu0 0.0
  %3044 = vmatprep.subr.mxu0 0.0
  %3045 = vmatpush1.msra.mxu0 0.0
  %3046 = vmatprep.subr.mxu0 0.0
  %3047 = vmatpush1.msra.mxu0 0.0
  %3048 = vmatprep.subr.mxu0 0.0
  %3049 = vmatpush1.msra.mxu0 0.0
  %3050 = vmatprep.subr.mxu0 0.0
  %3051 = vmatpush1.msra.mxu0 0.0
  %3052 = vmatprep.subr.mxu0 0.0
  %3053 = vmatpush1.msra.mxu0 0.0
  %3054 = vmatprep.subr.mxu0 0.0
  %3055 = vmatpush1.msra.mxu0 0.0
  %3056 = vmatprep.mubr.f32.mxu0 0.0
  %3057 = vmatmul.mubr.f32.gmra.mrb[0].mxu0 %v2990
  %v3058 = vpop.f32.mrb[0].mxu0
  %v3059 = vadd.f32 %v2986, %v3058
  %v3060 = vpop.f32.mrb[0].mxu0
  %3061 = vdwg.mxu0
  %v3062 = vtanh.pop %v3059
  %3063 = vmatprep.subr.mxu0 0.0
  %3064 = vmatpush1.msra.mxu0 %v2362
  %3065 = vmatprep.subr.mxu0 0.0
  %3066 = vmatpush1.msra.mxu0 %v2363
  %3067 = vmatprep.subr.mxu0 0.0
  %3068 = vmatpush1.msra.mxu0 %v2364
  %3069 = vmatprep.subr.mxu0 0.0
  %3070 = vmatpush1.msra.mxu0 %v2365
  %3071 = vmatprep.subr.mxu0 0.0
  %3072 = vmatpush1.msra.mxu0 0.0
  %3073 = vmatprep.subr.mxu0 0.0
  %3074 = vmatpush1.msra.mxu0 0.0
  %3075 = vmatprep.subr.mxu0 0.0
  %3076 = vmatpush1.msra.mxu0 0.0
  %3077 = vmatprep.subr.mxu0 0.0
  %3078 = vmatpush1.msra.mxu0 0.0
  %3079 = vmatprep.subr.mxu0 0.0
  %3080 = vmatpush1.msra.mxu0 0.0
  %3081 = vmatprep.subr.mxu0 0.0
  %3082 = vmatpush1.msra.mxu0 0.0
  %3083 = vmatprep.subr.mxu0 0.0
  %3084 = vmatpush1.msra.mxu0 0.0
  %3085 = vmatprep.subr.mxu0 0.0
  %3086 = vmatpush1.msra.mxu0 0.0
  %3087 = vmatprep.subr.mxu0 0.0
  %3088 = vmatpush1.msra.mxu0 0.0
  %3089 = vmatprep.subr.mxu0 0.0
  %3090 = vmatpush1.msra.mxu0 0.0
  %3091 = vmatprep.subr.mxu0 0.0
  %3092 = vmatpush1.msra.mxu0 0.0
  %3093 = vmatprep.subr.mxu0 0.0
  %3094 = vmatpush1.msra.mxu0 0.0
  %3095 = vmatprep.subr.mxu0 0.0
  %3096 = vmatpush1.msra.mxu0 0.0
  %3097 = vmatprep.subr.mxu0 0.0
  %3098 = vmatpush1.msra.mxu0 0.0
  %3099 = vmatprep.subr.mxu0 0.0
  %3100 = vmatpush1.msra.mxu0 0.0
  %3101 = vmatprep.subr.mxu0 0.0
  %3102 = vmatpush1.msra.mxu0 0.0
  %3103 = vmatprep.subr.mxu0 0.0
  %3104 = vmatpush1.msra.mxu0 0.0
  %3105 = vmatprep.subr.mxu0 0.0
  %3106 = vmatpush1.msra.mxu0 0.0
  %3107 = vmatprep.subr.mxu0 0.0
  %3108 = vmatpush1.msra.mxu0 0.0
  %3109 = vmatprep.subr.mxu0 0.0
  %3110 = vmatpush1.msra.mxu0 0.0
  %3111 = vmatprep.subr.mxu0 0.0
  %3112 = vmatpush1.msra.mxu0 0.0
  %3113 = vmatprep.subr.mxu0 0.0
  %3114 = vmatpush1.msra.mxu0 0.0
  %3115 = vmatprep.subr.mxu0 0.0
  %3116 = vmatpush1.msra.mxu0 0.0
  %3117 = vmatprep.subr.mxu0 0.0
  %3118 = vmatpush1.msra.mxu0 0.0
  %3119 = vmatprep.subr.mxu0 0.0
  %3120 = vmatpush1.msra.mxu0 0.0
  %3121 = vmatprep.subr.mxu0 0.0
  %3122 = vmatpush1.msra.mxu0 0.0
  %3123 = vmatprep.subr.mxu0 0.0
  %3124 = vmatpush1.msra.mxu0 0.0
  %3125 = vmatprep.subr.mxu0 0.0
  %3126 = vmatpush1.msra.mxu0 0.0
  %3127 = vmatprep.mubr.f32.mxu0 0.0
  %3128 = vmatmul.mubr.f32.gmra.mrb[0].mxu0 %v2629
  %v3129 = vpop.f32.mrb[0].mxu0
  %v3130 = vadd.f32 0.0, %v3129
  %v3131 = vpop.f32.mrb[0].mxu0
  %3132 = vdwg.mxu0
  %v3134 = vsel %vm68, %v3062, 0
  %3136 = vmatprep.subr.mxu0 0.0
  %3137 = vmatpush1.msra.mxu0 %v2358
  %3138 = vmatprep.subr.mxu0 0.0
  %3139 = vmatpush1.msra.mxu0 %v2359
  %3140 = vmatprep.subr.mxu0 0.0
  %3141 = vmatpush1.msra.mxu0 %v2360
  %3142 = vmatprep.subr.mxu0 0.0
  %3143 = vmatpush1.msra.mxu0 %v2361
  %3144 = vmatprep.subr.mxu0 0.0
  %3145 = vmatpush1.msra.mxu0 0.0
  %3146 = vmatprep.subr.mxu0 0.0
  %3147 = vmatpush1.msra.mxu0 0.0
  %3148 = vmatprep.subr.mxu0 0.0
  %3149 = vmatpush1.msra.mxu0 0.0
  %3150 = vmatprep.subr.mxu0 0.0
  %3151 = vmatpush1.msra.mxu0 0.0
  %3152 = vmatprep.subr.mxu0 0.0
  %3153 = vmatpush1.msra.mxu0 0.0
  %3154 = vmatprep.subr.mxu0 0.0
  %3155 = vmatpush1.msra.mxu0 0.0
  %3156 = vmatprep.subr.mxu0 0.0
  %3157 = vmatpush1.msra.mxu0 0.0
  %3158 = vmatprep.subr.mxu0 0.0
  %3159 = vmatpush1.msra.mxu0 0.0
  %3160 = vmatprep.subr.mxu0 0.0
  %3161 = vmatpush1.msra.mxu0 0.0
  %3162 = vmatprep.subr.mxu0 0.0
  %3163 = vmatpush1.msra.mxu0 0.0
  %3164 = vmatprep.subr.mxu0 0.0
  %3165 = vmatpush1.msra.mxu0 0.0
  %3166 = vmatprep.subr.mxu0 0.0
  %3167 = vmatpush1.msra.mxu0 0.0
  %3168 = vmatprep.subr.mxu0 0.0
  %3169 = vmatpush1.msra.mxu0 0.0
  %3170 = vmatprep.subr.mxu0 0.0
  %3171 = vmatpush1.msra.mxu0 0.0
  %3172 = vmatprep.subr.mxu0 0.0
  %3173 = vmatpush1.msra.mxu0 0.0
  %3174 = vmatprep.subr.mxu0 0.0
  %3175 = vmatpush1.msra.mxu0 0.0
  %3176 = vmatprep.subr.mxu0 0.0
  %3177 = vmatpush1.msra.mxu0 0.0
  %3178 = vmatprep.subr.mxu0 0.0
  %3179 = vmatpush1.msra.mxu0 0.0
  %3180 = vmatprep.subr.mxu0 0.0
  %3181 = vmatpush1.msra.mxu0 0.0
  %3182 = vmatprep.subr.mxu0 0.0
  %3183 = vmatpush1.msra.mxu0 0.0
  %3184 = vmatprep.subr.mxu0 0.0
  %3185 = vmatpush1.msra.mxu0 0.0
  %3186 = vmatprep.subr.mxu0 0.0
  %3187 = vmatpush1.msra.mxu0 0.0
  %3188 = vmatprep.subr.mxu0 0.0
  %3189 = vmatpush1.msra.mxu0 0.0
  %3190 = vmatprep.subr.mxu0 0.0
  %3191 = vmatpush1.msra.mxu0 0.0
  %3192 = vmatprep.subr.mxu0 0.0
  %3193 = vmatpush1.msra.mxu0 0.0
  %3194 = vmatprep.subr.mxu0 0.0
  %3195 = vmatpush1.msra.mxu0 0.0
  %3196 = vmatprep.subr.mxu0 0.0
  %3197 = vmatpush1.msra.mxu0 0.0
  %3198 = vmatprep.subr.mxu0 0.0
  %3199 = vmatpush1.msra.mxu0 0.0
  %3200 = vmatprep.mubr.f32.mxu0 0.0
  %3201 = vmatmul.mubr.f32.gmra.mrb[0].mxu0 %v3134
  %v3202 = vpop.f32.mrb[0].mxu0
  %v3203 = vadd.f32 %v3130, %v3202
  %v3204 = vpop.f32.mrb[0].mxu0
  %3205 = vdwg.mxu0
  %v3206 = vadd.f32 %v3203, %v2513
  %v3208 = vrot.slane %v2337, 2
  %v3210 = vadd.f32 %v3206, %v3208
  %v3211 = vxor.u32 %v3210, 2147483648
  %v3212 = vmul.f32 %v3211, 1.442695
  %v3213 = vpow.pop %v3212
  %v3214 = vadd.f32 %v3213, 1.0
  %v3215 = vrcp.pop %v3214
  %v3216 = vmul.f32 1.0, %v3215
  %v3217 = vtanh.pop %v3210
  %v3218 = vmul.f32 %v3216, %v2537
  %3220 = vrot.lane.b32.xlu0 %v3217, 64
  %v3221 = vpop.permute.xlu0 %3220
  %v3223 = vmul.f32 %v3216, %v3221
  %3225 = vrot.lane.b32.xlu0 %v3223, 32
  %v3226 = vpop.permute.xlu0 %3225
  %v3228 = vadd.f32 %v3218, %v3226
  %v3229 = vtanh.pop %v3228
  %3231 = vrot.lane.b32.xlu0 %v3229, 64
  %v3232 = vpop.permute.xlu0 %3231
  %v3234 = vmul.f32 %v3216, %v3232
  %3235 = vmatprep.subr.mxu0 0.0
  %3236 = vmatpush1.msra.mxu0 %v2550
  %3237 = vmatprep.subr.mxu0 0.0
  %3238 = vmatpush1.msra.mxu0 %v2551
  %3239 = vmatprep.subr.mxu0 0.0
  %3240 = vmatpush1.msra.mxu0 %v2552
  %3241 = vmatprep.subr.mxu0 0.0
  %3242 = vmatpush1.msra.mxu0 %v2553
  %3243 = vmatprep.subr.mxu0 0.0
  %3244 = vmatpush1.msra.mxu0 0.0
  %3245 = vmatprep.subr.mxu0 0.0
  %3246 = vmatpush1.msra.mxu0 0.0
  %3247 = vmatprep.subr.mxu0 0.0
  %3248 = vmatpush1.msra.mxu0 0.0
  %3249 = vmatprep.subr.mxu0 0.0
  %3250 = vmatpush1.msra.mxu0 0.0
  %3251 = vmatprep.subr.mxu0 0.0
  %3252 = vmatpush1.msra.mxu0 0.0
  %3253 = vmatprep.subr.mxu0 0.0
  %3254 = vmatpush1.msra.mxu0 0.0
  %3255 = vmatprep.subr.mxu0 0.0
  %3256 = vmatpush1.msra.mxu0 0.0
  %3257 = vmatprep.subr.mxu0 0.0
  %3258 = vmatpush1.msra.mxu0 0.0
  %3259 = vmatprep.subr.mxu0 0.0
  %3260 = vmatpush1.msra.mxu0 0.0
  %3261 = vmatprep.subr.mxu0 0.0
  %3262 = vmatpush1.msra.mxu0 0.0
  %3263 = vmatprep.subr.mxu0 0.0
  %3264 = vmatpush1.msra.mxu0 0.0
  %3265 = vmatprep.subr.mxu0 0.0
  %3266 = vmatpush1.msra.mxu0 0.0
  %3267 = vmatprep.subr.mxu0 0.0
  %3268 = vmatpush1.msra.mxu0 0.0
  %3269 = vmatprep.subr.mxu0 0.0
  %3270 = vmatpush1.msra.mxu0 0.0
  %3271 = vmatprep.subr.mxu0 0.0
  %3272 = vmatpush1.msra.mxu0 0.0
  %3273 = vmatprep.subr.mxu0 0.0
  %3274 = vmatpush1.msra.mxu0 0.0
  %3275 = vmatprep.subr.mxu0 0.0
  %3276 = vmatpush1.msra.mxu0 0.0
  %3277 = vmatprep.subr.mxu0 0.0
  %3278 = vmatpush1.msra.mxu0 0.0
  %3279 = vmatprep.subr.mxu0 0.0
  %3280 = vmatpush1.msra.mxu0 0.0
  %3281 = vmatprep.subr.mxu0 0.0
  %3282 = vmatpush1.msra.mxu0 0.0
  %3283 = vmatprep.subr.mxu0 0.0
  %3284 = vmatpush1.msra.mxu0 0.0
  %3285 = vmatprep.subr.mxu0 0.0
  %3286 = vmatpush1.msra.mxu0 0.0
  %3287 = vmatprep.subr.mxu0 0.0
  %3288 = vmatpush1.msra.mxu0 0.0
  %3289 = vmatprep.subr.mxu0 0.0
  %3290 = vmatpush1.msra.mxu0 0.0
  %3291 = vmatprep.subr.mxu0 0.0
  %3292 = vmatpush1.msra.mxu0 0.0
  %3293 = vmatprep.subr.mxu0 0.0
  %3294 = vmatpush1.msra.mxu0 0.0
  %3295 = vmatprep.subr.mxu0 0.0
  %3296 = vmatpush1.msra.mxu0 0.0
  %3297 = vmatprep.subr.mxu0 0.0
  %3298 = vmatpush1.msra.mxu0 0.0
  %3299 = vmatprep.mubr.f32.mxu0 0.0
  %3300 = vmatmul.mubr.f32.gmra.mrb[0].mxu0 %v2740
  %v3301 = vpop.f32.mrb[0].mxu0
  %v3302 = vadd.f32 0.0, %v3301
  %v3303 = vpop.f32.mrb[0].mxu0
  %3304 = vdwg.mxu0
  %3306 = vrot.lane.b32.xlu0 %v3234, 32
  %v3307 = vpop.permute.xlu0 %3306
  %v3308 = vsel %vm68, %v3307, 0
  %3310 = vmatprep.subr.mxu0 0.0
  %3311 = vmatpush1.msra.mxu0 %v2545
  %3312 = vmatprep.subr.mxu0 0.0
  %3313 = vmatpush1.msra.mxu0 %v2546
  %3314 = vmatprep.subr.mxu0 0.0
  %3315 = vmatpush1.msra.mxu0 %v2547
  %3316 = vmatprep.subr.mxu0 0.0
  %3317 = vmatpush1.msra.mxu0 %v2548
  %3318 = vmatprep.subr.mxu0 0.0
  %3319 = vmatpush1.msra.mxu0 0.0
  %3320 = vmatprep.subr.mxu0 0.0
  %3321 = vmatpush1.msra.mxu0 0.0
  %3322 = vmatprep.subr.mxu0 0.0
  %3323 = vmatpush1.msra.mxu0 0.0
  %3324 = vmatprep.subr.mxu0 0.0
  %3325 = vmatpush1.msra.mxu0 0.0
  %3326 = vmatprep.subr.mxu0 0.0
  %3327 = vmatpush1.msra.mxu0 0.0
  %3328 = vmatprep.subr.mxu0 0.0
  %3329 = vmatpush1.msra.mxu0 0.0
  %3330 = vmatprep.subr.mxu0 0.0
  %3331 = vmatpush1.msra.mxu0 0.0
  %3332 = vmatprep.subr.mxu0 0.0
  %3333 = vmatpush1.msra.mxu0 0.0
  %3334 = vmatprep.subr.mxu0 0.0
  %3335 = vmatpush1.msra.mxu0 0.0
  %3336 = vmatprep.subr.mxu0 0.0
  %3337 = vmatpush1.msra.mxu0 0.0
  %3338 = vmatprep.subr.mxu0 0.0
  %3339 = vmatpush1.msra.mxu0 0.0
  %3340 = vmatprep.subr.mxu0 0.0
  %3341 = vmatpush1.msra.mxu0 0.0
  %3342 = vmatprep.subr.mxu0 0.0
  %3343 = vmatpush1.msra.mxu0 0.0
  %3344 = vmatprep.subr.mxu0 0.0
  %3345 = vmatpush1.msra.mxu0 0.0
  %3346 = vmatprep.subr.mxu0 0.0
  %3347 = vmatpush1.msra.mxu0 0.0
  %3348 = vmatprep.subr.mxu0 0.0
  %3349 = vmatpush1.msra.mxu0 0.0
  %3350 = vmatprep.subr.mxu0 0.0
  %3351 = vmatpush1.msra.mxu0 0.0
  %3352 = vmatprep.subr.mxu0 0.0
  %3353 = vmatpush1.msra.mxu0 0.0
  %3354 = vmatprep.subr.mxu0 0.0
  %3355 = vmatpush1.msra.mxu0 0.0
  %3356 = vmatprep.subr.mxu0 0.0
  %3357 = vmatpush1.msra.mxu0 0.0
  %3358 = vmatprep.subr.mxu0 0.0
  %3359 = vmatpush1.msra.mxu0 0.0
  %3360 = vmatprep.subr.mxu0 0.0
  %3361 = vmatpush1.msra.mxu0 0.0
  %3362 = vmatprep.subr.mxu0 0.0
  %3363 = vmatpush1.msra.mxu0 0.0
  %3364 = vmatprep.subr.mxu0 0.0
  %3365 = vmatpush1.msra.mxu0 0.0
  %3366 = vmatprep.subr.mxu0 0.0
  %3367 = vmatpush1.msra.mxu0 0.0
  %3368 = vmatprep.subr.mxu0 0.0
  %3369 = vmatpush1.msra.mxu0 0.0
  %3370 = vmatprep.subr.mxu0 0.0
  %3371 = vmatpush1.msra.mxu0 0.0
  %3372 = vmatprep.subr.mxu0 0.0
  %3373 = vmatpush1.msra.mxu0 0.0
  %3374 = vmatprep.mubr.f32.mxu0 0.0
  %3375 = vmatmul.mubr.f32.gmra.mrb[0].mxu0 %v3308
  %v3376 = vpop.f32.mrb[0].mxu0
  %v3377 = vadd.f32 %v3302, %v3376
  %v3378 = vpop.f32.mrb[0].mxu0
  %3379 = vdwg.mxu0
  %v3380 = vadd.f32 %v3377, %v2707
  %v3381 = vxor.u32 %v3380, 2147483648
  %v3382 = vmul.f32 %v3381, 1.442695
  %v3383 = vpow.pop %v3382
  %v3384 = vadd.f32 %v3383, 1.0
  %v3385 = vrcp.pop %v3384
  %v3386 = vmul.f32 1.0, %v3385
  %v3387 = vtanh.pop %v3380
  %v3388 = vmul.f32 %v3386, %v2730
  %3390 = vrot.lane.b32.xlu0 %v3387, 64
  %v3391 = vpop.permute.xlu0 %3390
  %v3393 = vmul.f32 %v3386, %v3391
  %3395 = vrot.lane.b32.xlu0 %v3393, 32
  %v3396 = vpop.permute.xlu0 %3395
  %v3398 = vadd.f32 %v3388, %v3396
  %v3399 = vtanh.pop %v3398
  %3401 = vrot.lane.b32.xlu0 %v3399, 64
  %v3402 = vpop.permute.xlu0 %3401
  %v3404 = vmul.f32 %v3386, %v3402
  %3406 = vrot.lane.b32.xlu0 %v3404, 32
  %v3407 = vpop.permute.xlu0 %3406
  %v3408 = vsel %vm68, %v3407, 0
  %3410 = vmatprep.subr.mxu0 0.0
  %3411 = vmatpush1.msra.mxu0 %v2345
  %3412 = vmatprep.subr.mxu0 0.0
  %3413 = vmatpush1.msra.mxu0 %v2346
  %3414 = vmatprep.subr.mxu0 0.0
  %3415 = vmatpush1.msra.mxu0 %v2347
  %3416 = vmatprep.subr.mxu0 0.0
  %3417 = vmatpush1.msra.mxu0 %v2348
  %3418 = vmatprep.subr.mxu0 0.0
  %3419 = vmatpush1.msra.mxu0 0.0
  %3420 = vmatprep.subr.mxu0 0.0
  %3421 = vmatpush1.msra.mxu0 0.0
  %3422 = vmatprep.subr.mxu0 0.0
  %3423 = vmatpush1.msra.mxu0 0.0
  %3424 = vmatprep.subr.mxu0 0.0
  %3425 = vmatpush1.msra.mxu0 0.0
  %3426 = vmatprep.subr.mxu0 0.0
  %3427 = vmatpush1.msra.mxu0 0.0
  %3428 = vmatprep.subr.mxu0 0.0
  %3429 = vmatpush1.msra.mxu0 0.0
  %3430 = vmatprep.subr.mxu0 0.0
  %3431 = vmatpush1.msra.mxu0 0.0
  %3432 = vmatprep.subr.mxu0 0.0
  %3433 = vmatpush1.msra.mxu0 0.0
  %3434 = vmatprep.subr.mxu0 0.0
  %3435 = vmatpush1.msra.mxu0 0.0
  %3436 = vmatprep.subr.mxu0 0.0
  %3437 = vmatpush1.msra.mxu0 0.0
  %3438 = vmatprep.subr.mxu0 0.0
  %3439 = vmatpush1.msra.mxu0 0.0
  %3440 = vmatprep.subr.mxu0 0.0
  %3441 = vmatpush1.msra.mxu0 0.0
  %3442 = vmatprep.subr.mxu0 0.0
  %3443 = vmatpush1.msra.mxu0 0.0
  %3444 = vmatprep.subr.mxu0 0.0
  %3445 = vmatpush1.msra.mxu0 0.0
  %3446 = vmatprep.subr.mxu0 0.0
  %3447 = vmatpush1.msra.mxu0 0.0
  %3448 = vmatprep.subr.mxu0 0.0
  %3449 = vmatpush1.msra.mxu0 0.0
  %3450 = vmatprep.subr.mxu0 0.0
  %3451 = vmatpush1.msra.mxu0 0.0
  %3452 = vmatprep.subr.mxu0 0.0
  %3453 = vmatpush1.msra.mxu0 0.0
  %3454 = vmatprep.subr.mxu0 0.0
  %3455 = vmatpush1.msra.mxu0 0.0
  %3456 = vmatprep.subr.mxu0 0.0
  %3457 = vmatpush1.msra.mxu0 0.0
  %3458 = vmatprep.subr.mxu0 0.0
  %3459 = vmatpush1.msra.mxu0 0.0
  %3460 = vmatprep.subr.mxu0 0.0
  %3461 = vmatpush1.msra.mxu0 0.0
  %3462 = vmatprep.subr.mxu0 0.0
  %3463 = vmatpush1.msra.mxu0 0.0
  %3464 = vmatprep.subr.mxu0 0.0
  %3465 = vmatpush1.msra.mxu0 0.0
  %3466 = vmatprep.subr.mxu0 0.0
  %3467 = vmatpush1.msra.mxu0 0.0
  %3468 = vmatprep.subr.mxu0 0.0
  %3469 = vmatpush1.msra.mxu0 0.0
  %3470 = vmatprep.subr.mxu0 0.0
  %3471 = vmatpush1.msra.mxu0 0.0
  %3472 = vmatprep.subr.mxu0 0.0
  %3473 = vmatpush1.msra.mxu0 0.0
  %3474 = vmatprep.mubr.f32.mxu0 0.0
  %3475 = vmatmul.mubr.f32.gmra.mrb[0].mxu0 %v3408
  %v3476 = vpop.f32.mrb[0].mxu0
  %v3477 = vadd.f32 0.0, %v3476
  %v3478 = vpop.f32.mrb[0].mxu0
  %3479 = vdwg.mxu0
  %v3481 = vsel %vm68, %v3477, 0
  %3483 = vmatprep.subr.mxu0 0.0
  %3484 = vmatpush1.xpose.msra.mxu0 %v2816
  %3485 = vmatprep.subr.mxu0 0.0
  %3486 = vmatpush1.xpose.msra.mxu0 %v2819
  %3487 = vmatprep.subr.mxu0 0.0
  %3488 = vmatpush1.xpose.msra.mxu0 0.0
  %3489 = vmatprep.subr.mxu0 0.0
  %3490 = vmatpush1.xpose.msra.mxu0 0.0
  %3491 = vmatprep.subr.mxu0 0.0
  %3492 = vmatpush1.xpose.msra.mxu0 0.0
  %3493 = vmatprep.subr.mxu0 0.0
  %3494 = vmatpush1.xpose.msra.mxu0 0.0
  %3495 = vmatprep.subr.mxu0 0.0
  %3496 = vmatpush1.xpose.msra.mxu0 0.0
  %3497 = vmatprep.subr.mxu0 0.0
  %3498 = vmatpush1.xpose.msra.mxu0 0.0
  %3499 = vmatprep.subr.mxu0 0.0
  %3500 = vmatpush1.xpose.msra.mxu0 0.0
  %3501 = vmatprep.subr.mxu0 0.0
  %3502 = vmatpush1.xpose.msra.mxu0 0.0
  %3503 = vmatprep.subr.mxu0 0.0
  %3504 = vmatpush1.xpose.msra.mxu0 0.0
  %3505 = vmatprep.subr.mxu0 0.0
  %3506 = vmatpush1.xpose.msra.mxu0 0.0
  %3507 = vmatprep.subr.mxu0 0.0
  %3508 = vmatpush1.xpose.msra.mxu0 0.0
  %3509 = vmatprep.subr.mxu0 0.0
  %3510 = vmatpush1.xpose.msra.mxu0 0.0
  %3511 = vmatprep.subr.mxu0 0.0
  %3512 = vmatpush1.xpose.msra.mxu0 0.0
  %3513 = vmatprep.subr.mxu0 0.0
  %3514 = vmatpush1.xpose.msra.mxu0 0.0
  %3515 = vmatprep.subr.mxu0 0.0
  %3516 = vmatpush1.xpose.msra.mxu0 0.0
  %3517 = vmatprep.subr.mxu0 0.0
  %3518 = vmatpush1.xpose.msra.mxu0 0.0
  %3519 = vmatprep.subr.mxu0 0.0
  %3520 = vmatpush1.xpose.msra.mxu0 0.0
  %3521 = vmatprep.subr.mxu0 0.0
  %3522 = vmatpush1.xpose.msra.mxu0 0.0
  %3523 = vmatprep.subr.mxu0 0.0
  %3524 = vmatpush1.xpose.msra.mxu0 0.0
  %3525 = vmatprep.subr.mxu0 0.0
  %3526 = vmatpush1.xpose.msra.mxu0 0.0
  %3527 = vmatprep.subr.mxu0 0.0
  %3528 = vmatpush1.xpose.msra.mxu0 0.0
  %3529 = vmatprep.subr.mxu0 0.0
  %3530 = vmatpush1.xpose.msra.mxu0 0.0
  %3531 = vmatprep.subr.mxu0 0.0
  %3532 = vmatpush1.xpose.msra.mxu0 0.0
  %3533 = vmatprep.subr.mxu0 0.0
  %3534 = vmatpush1.xpose.msra.mxu0 0.0
  %3535 = vmatprep.subr.mxu0 0.0
  %3536 = vmatpush1.xpose.msra.mxu0 0.0
  %3537 = vmatprep.subr.mxu0 0.0
  %3538 = vmatpush1.xpose.msra.mxu0 0.0
  %3539 = vmatprep.subr.mxu0 0.0
  %3540 = vmatpush1.xpose.msra.mxu0 0.0
  %3541 = vmatprep.subr.mxu0 0.0
  %3542 = vmatpush1.xpose.msra.mxu0 0.0
  %3543 = vmatprep.subr.mxu0 0.0
  %3544 = vmatpush1.xpose.msra.mxu0 0.0
  %3545 = vmatprep.subr.mxu0 0.0
  %3546 = vmatpush1.xpose.msra.mxu0 0.0
  %3547 = vmatprep.mubr.f32.mxu0 0.0
  %3548 = vmatmul.mubr.f32.gmra.mrb[0].mxu0 %v3481
  %v3549 = vpop.f32.mrb[0].mxu0
  %v3550 = vadd.f32 %v2259, %v3549
  %v3551 = vpop.f32.mrb[0].mxu0
  %3552 = vdwg.mxu0
  %v3553 = vsel %vm2891, %v3550, -inf
  %3554 = vmax.xlane.f32.xlu0 %v3553
  %v3555 = vpop.xlane.xlu0 %3554
  %v3556 = vsub.f32 %v3550, %v3555
  %v3557 = vmul.f32 %v3556, 1.442695
  %v3558 = vpow.pop %v3557
  %v3559 = vsel %vm2891, %v3558, 0.0
  %3560 = vadd.xlane.f32.xlu0 %v3559
  %v3561 = vpop.xlane.xlu0 %3560
  %v3562 = vrcp.pop %v3561
  %v3563 = vmul.f32 %v3558, %v3562
  %v3565 = vsel %vm1097, %v3563, 0
  %3567 = vmatprep.subr.mxu0 0.0
  %3568 = vmatpush1.msra.mxu0 %v2255
  %3569 = vmatprep.subr.mxu0 0.0
  %3570 = vmatpush1.msra.mxu0 %v2258
  %3571 = vmatprep.subr.mxu0 0.0
  %3572 = vmatpush1.msra.mxu0 0.0
  %3573 = vmatprep.subr.mxu0 0.0
  %3574 = vmatpush1.msra.mxu0 0.0
  %3575 = vmatprep.subr.mxu0 0.0
  %3576 = vmatpush1.msra.mxu0 0.0
  %3577 = vmatprep.subr.mxu0 0.0
  %3578 = vmatpush1.msra.mxu0 0.0
  %3579 = vmatprep.subr.mxu0 0.0
  %3580 = vmatpush1.msra.mxu0 0.0
  %3581 = vmatprep.subr.mxu0 0.0
  %3582 = vmatpush1.msra.mxu0 0.0
  %3583 = vmatprep.subr.mxu0 0.0
  %3584 = vmatpush1.msra.mxu0 0.0
  %3585 = vmatprep.subr.mxu0 0.0
  %3586 = vmatpush1.msra.mxu0 0.0
  %3587 = vmatprep.subr.mxu0 0.0
  %3588 = vmatpush1.msra.mxu0 0.0
  %3589 = vmatprep.subr.mxu0 0.0
  %3590 = vmatpush1.msra.mxu0 0.0
  %3591 = vmatprep.subr.mxu0 0.0
  %3592 = vmatpush1.msra.mxu0 0.0
  %3593 = vmatprep.subr.mxu0 0.0
  %3594 = vmatpush1.msra.mxu0 0.0
  %3595 = vmatprep.subr.mxu0 0.0
  %3596 = vmatpush1.msra.mxu0 0.0
  %3597 = vmatprep.subr.mxu0 0.0
  %3598 = vmatpush1.msra.mxu0 0.0
  %3599 = vmatprep.subr.mxu0 0.0
  %3600 = vmatpush1.msra.mxu0 0.0
  %3601 = vmatprep.subr.mxu0 0.0
  %3602 = vmatpush1.msra.mxu0 0.0
  %3603 = vmatprep.subr.mxu0 0.0
  %3604 = vmatpush1.msra.mxu0 0.0
  %3605 = vmatprep.subr.mxu0 0.0
  %3606 = vmatpush1.msra.mxu0 0.0
  %3607 = vmatprep.subr.mxu0 0.0
  %3608 = vmatpush1.msra.mxu0 0.0
  %3609 = vmatprep.subr.mxu0 0.0
  %3610 = vmatpush1.msra.mxu0 0.0
  %3611 = vmatprep.subr.mxu0 0.0
  %3612 = vmatpush1.msra.mxu0 0.0
  %3613 = vmatprep.subr.mxu0 0.0
  %3614 = vmatpush1.msra.mxu0 0.0
  %3615 = vmatprep.subr.mxu0 0.0
  %3616 = vmatpush1.msra.mxu0 0.0
  %3617 = vmatprep.subr.mxu0 0.0
  %3618 = vmatpush1.msra.mxu0 0.0
  %3619 = vmatprep.subr.mxu0 0.0
  %3620 = vmatpush1.msra.mxu0 0.0
  %3621 = vmatprep.subr.mxu0 0.0
  %3622 = vmatpush1.msra.mxu0 0.0
  %3623 = vmatprep.subr.mxu0 0.0
  %3624 = vmatpush1.msra.mxu0 0.0
  %3625 = vmatprep.subr.mxu0 0.0
  %3626 = vmatpush1.msra.mxu0 0.0
  %3627 = vmatprep.subr.mxu0 0.0
  %3628 = vmatpush1.msra.mxu0 0.0
  %3629 = vmatprep.subr.mxu0 0.0
  %3630 = vmatpush1.msra.mxu0 0.0
  %3631 = vmatprep.mubr.f32.mxu0 0.0
  %3632 = vmatmul.mubr.f32.gmra.mrb[0].mxu0 %v3565
  %v3633 = vpop.f32.mrb[0].mxu0
  %v3634 = vadd.f32 0.0, %v3633
  %v3635 = vpop.f32.mrb[0].mxu0
  %3636 = vdwg.mxu0
  %3639 = vrot.lane.b32.xlu0 %v3634, 32
  %v3640 = vpop.permute.xlu0 %3639
  %v3642 = vsel %vm68, %v3407, %v3640
  %v3644 = vsel %vm2988, %v3642, 0
  %3646 = vmatprep.subr.mxu0 0.0
  %3647 = vmatpush1.msra.mxu0 %v2349
  %3648 = vmatprep.subr.mxu0 0.0
  %3649 = vmatpush1.msra.mxu0 %v2350
  %3650 = vmatprep.subr.mxu0 0.0
  %3651 = vmatpush1.msra.mxu0 %v2351
  %3652 = vmatprep.subr.mxu0 0.0
  %3653 = vmatpush1.msra.mxu0 %v2352
  %3654 = vmatprep.subr.mxu0 0.0
  %3655 = vmatpush1.msra.mxu0 %v2353
  %3656 = vmatprep.subr.mxu0 0.0
  %3657 = vmatpush1.msra.mxu0 %v2354
  %3658 = vmatprep.subr.mxu0 0.0
  %3659 = vmatpush1.msra.mxu0 %v2355
  %3660 = vmatprep.subr.mxu0 0.0
  %3661 = vmatpush1.msra.mxu0 %v2356
  %3662 = vmatprep.subr.mxu0 0.0
  %3663 = vmatpush1.msra.mxu0 0.0
  %3664 = vmatprep.subr.mxu0 0.0
  %3665 = vmatpush1.msra.mxu0 0.0
  %3666 = vmatprep.subr.mxu0 0.0
  %3667 = vmatpush1.msra.mxu0 0.0
  %3668 = vmatprep.subr.mxu0 0.0
  %3669 = vmatpush1.msra.mxu0 0.0
  %3670 = vmatprep.subr.mxu0 0.0
  %3671 = vmatpush1.msra.mxu0 0.0
  %3672 = vmatprep.subr.mxu0 0.0
  %3673 = vmatpush1.msra.mxu0 0.0
  %3674 = vmatprep.subr.mxu0 0.0
  %3675 = vmatpush1.msra.mxu0 0.0
  %3676 = vmatprep.subr.mxu0 0.0
  %3677 = vmatpush1.msra.mxu0 0.0
  %3678 = vmatprep.subr.mxu0 0.0
  %3679 = vmatpush1.msra.mxu0 0.0
  %3680 = vmatprep.subr.mxu0 0.0
  %3681 = vmatpush1.msra.mxu0 0.0
  %3682 = vmatprep.subr.mxu0 0.0
  %3683 = vmatpush1.msra.mxu0 0.0
  %3684 = vmatprep.subr.mxu0 0.0
  %3685 = vmatpush1.msra.mxu0 0.0
  %3686 = vmatprep.subr.mxu0 0.0
  %3687 = vmatpush1.msra.mxu0 0.0
  %3688 = vmatprep.subr.mxu0 0.0
  %3689 = vmatpush1.msra.mxu0 0.0
  %3690 = vmatprep.subr.mxu0 0.0
  %3691 = vmatpush1.msra.mxu0 0.0
  %3692 = vmatprep.subr.mxu0 0.0
  %3693 = vmatpush1.msra.mxu0 0.0
  %3694 = vmatprep.subr.mxu0 0.0
  %3695 = vmatpush1.msra.mxu0 0.0
  %3696 = vmatprep.subr.mxu0 0.0
  %3697 = vmatpush1.msra.mxu0 0.0
  %3698 = vmatprep.subr.mxu0 0.0
  %3699 = vmatpush1.msra.mxu0 0.0
  %3700 = vmatprep.subr.mxu0 0.0
  %3701 = vmatpush1.msra.mxu0 0.0
  %3702 = vmatprep.subr.mxu0 0.0
  %3703 = vmatpush1.msra.mxu0 0.0
  %3704 = vmatprep.subr.mxu0 0.0
  %3705 = vmatpush1.msra.mxu0 0.0
  %3706 = vmatprep.subr.mxu0 0.0
  %3707 = vmatpush1.msra.mxu0 0.0
  %3708 = vmatprep.subr.mxu0 0.0
  %3709 = vmatpush1.msra.mxu0 0.0
  %3710 = vmatprep.mubr.f32.mxu0 0.0
  %3711 = vmatmul.mubr.f32.gmra.mrb[0].mxu0 %v3644
  %v3712 = vpop.f32.mrb[0].mxu0
  %v3713 = vadd.f32 %v2986, %v3712
  %v3714 = vpop.f32.mrb[0].mxu0
  %3715 = vdwg.mxu0
  %v3716 = vtanh.pop %v3713
  %3717 = vmatprep.subr.mxu0 0.0
  %3718 = vmatpush1.msra.mxu0 %v2362
  %3719 = vmatprep.subr.mxu0 0.0
  %3720 = vmatpush1.msra.mxu0 %v2363
  %3721 = vmatprep.subr.mxu0 0.0
  %3722 = vmatpush1.msra.mxu0 %v2364
  %3723 = vmatprep.subr.mxu0 0.0
  %3724 = vmatpush1.msra.mxu0 %v2365
  %3725 = vmatprep.subr.mxu0 0.0
  %3726 = vmatpush1.msra.mxu0 0.0
  %3727 = vmatprep.subr.mxu0 0.0
  %3728 = vmatpush1.msra.mxu0 0.0
  %3729 = vmatprep.subr.mxu0 0.0
  %3730 = vmatpush1.msra.mxu0 0.0
  %3731 = vmatprep.subr.mxu0 0.0
  %3732 = vmatpush1.msra.mxu0 0.0
  %3733 = vmatprep.subr.mxu0 0.0
  %3734 = vmatpush1.msra.mxu0 0.0
  %3735 = vmatprep.subr.mxu0 0.0
  %3736 = vmatpush1.msra.mxu0 0.0
  %3737 = vmatprep.subr.mxu0 0.0
  %3738 = vmatpush1.msra.mxu0 0.0
  %3739 = vmatprep.subr.mxu0 0.0
  %3740 = vmatpush1.msra.mxu0 0.0
  %3741 = vmatprep.subr.mxu0 0.0
  %3742 = vmatpush1.msra.mxu0 0.0
  %3743 = vmatprep.subr.mxu0 0.0
  %3744 = vmatpush1.msra.mxu0 0.0
  %3745 = vmatprep.subr.mxu0 0.0
  %3746 = vmatpush1.msra.mxu0 0.0
  %3747 = vmatprep.subr.mxu0 0.0
  %3748 = vmatpush1.msra.mxu0 0.0
  %3749 = vmatprep.subr.mxu0 0.0
  %3750 = vmatpush1.msra.mxu0 0.0
  %3751 = vmatprep.subr.mxu0 0.0
  %3752 = vmatpush1.msra.mxu0 0.0
  %3753 = vmatprep.subr.mxu0 0.0
  %3754 = vmatpush1.msra.mxu0 0.0
  %3755 = vmatprep.subr.mxu0 0.0
  %3756 = vmatpush1.msra.mxu0 0.0
  %3757 = vmatprep.subr.mxu0 0.0
  %3758 = vmatpush1.msra.mxu0 0.0
  %3759 = vmatprep.subr.mxu0 0.0
  %3760 = vmatpush1.msra.mxu0 0.0
  %3761 = vmatprep.subr.mxu0 0.0
  %3762 = vmatpush1.msra.mxu0 0.0
  %3763 = vmatprep.subr.mxu0 0.0
  %3764 = vmatpush1.msra.mxu0 0.0
  %3765 = vmatprep.subr.mxu0 0.0
  %3766 = vmatpush1.msra.mxu0 0.0
  %3767 = vmatprep.subr.mxu0 0.0
  %3768 = vmatpush1.msra.mxu0 0.0
  %3769 = vmatprep.subr.mxu0 0.0
  %3770 = vmatpush1.msra.mxu0 0.0
  %3771 = vmatprep.subr.mxu0 0.0
  %3772 = vmatpush1.msra.mxu0 0.0
  %3773 = vmatprep.subr.mxu0 0.0
  %3774 = vmatpush1.msra.mxu0 0.0
  %3775 = vmatprep.subr.mxu0 0.0
  %3776 = vmatpush1.msra.mxu0 0.0
  %3777 = vmatprep.subr.mxu0 0.0
  %3778 = vmatpush1.msra.mxu0 0.0
  %3779 = vmatprep.subr.mxu0 0.0
  %3780 = vmatpush1.msra.mxu0 0.0
  %3781 = vmatprep.mubr.f32.mxu0 0.0
  %3782 = vmatmul.mubr.f32.gmra.mrb[0].mxu0 %v3308
  %v3783 = vpop.f32.mrb[0].mxu0
  %v3784 = vadd.f32 0.0, %v3783
  %v3785 = vpop.f32.mrb[0].mxu0
  %3786 = vdwg.mxu0
  %v3788 = vsel %vm68, %v3716, 0
  %3790 = vmatprep.subr.mxu0 0.0
  %3791 = vmatpush1.msra.mxu0 %v2358
  %3792 = vmatprep.subr.mxu0 0.0
  %3793 = vmatpush1.msra.mxu0 %v2359
  %3794 = vmatprep.subr.mxu0 0.0
  %3795 = vmatpush1.msra.mxu0 %v2360
  %3796 = vmatprep.subr.mxu0 0.0
  %3797 = vmatpush1.msra.mxu0 %v2361
  %3798 = vmatprep.subr.mxu0 0.0
  %3799 = vmatpush1.msra.mxu0 0.0
  %3800 = vmatprep.subr.mxu0 0.0
  %3801 = vmatpush1.msra.mxu0 0.0
  %3802 = vmatprep.subr.mxu0 0.0
  %3803 = vmatpush1.msra.mxu0 0.0
  %3804 = vmatprep.subr.mxu0 0.0
  %3805 = vmatpush1.msra.mxu0 0.0
  %3806 = vmatprep.subr.mxu0 0.0
  %3807 = vmatpush1.msra.mxu0 0.0
  %3808 = vmatprep.subr.mxu0 0.0
  %3809 = vmatpush1.msra.mxu0 0.0
  %3810 = vmatprep.subr.mxu0 0.0
  %3811 = vmatpush1.msra.mxu0 0.0
  %3812 = vmatprep.subr.mxu0 0.0
  %3813 = vmatpush1.msra.mxu0 0.0
  %3814 = vmatprep.subr.mxu0 0.0
  %3815 = vmatpush1.msra.mxu0 0.0
  %3816 = vmatprep.subr.mxu0 0.0
  %3817 = vmatpush1.msra.mxu0 0.0
  %3818 = vmatprep.subr.mxu0 0.0
  %3819 = vmatpush1.msra.mxu0 0.0
  %3820 = vmatprep.subr.mxu0 0.0
  %3821 = vmatpush1.msra.mxu0 0.0
  %3822 = vmatprep.subr.mxu0 0.0
  %3823 = vmatpush1.msra.mxu0 0.0
  %3824 = vmatprep.subr.mxu0 0.0
  %3825 = vmatpush1.msra.mxu0 0.0
  %3826 = vmatprep.subr.mxu0 0.0
  %3827 = vmatpush1.msra.mxu0 0.0
  %3828 = vmatprep.subr.mxu0 0.0
  %3829 = vmatpush1.msra.mxu0 0.0
  %3830 = vmatprep.subr.mxu0 0.0
  %3831 = vmatpush1.msra.mxu0 0.0
  %3832 = vmatprep.subr.mxu0 0.0
  %3833 = vmatpush1.msra.mxu0 0.0
  %3834 = vmatprep.subr.mxu0 0.0
  %3835 = vmatpush1.msra.mxu0 0.0
  %3836 = vmatprep.subr.mxu0 0.0
  %3837 = vmatpush1.msra.mxu0 0.0
  %3838 = vmatprep.subr.mxu0 0.0
  %3839 = vmatpush1.msra.mxu0 0.0
  %3840 = vmatprep.subr.mxu0 0.0
  %3841 = vmatpush1.msra.mxu0 0.0
  %3842 = vmatprep.subr.mxu0 0.0
  %3843 = vmatpush1.msra.mxu0 0.0
  %3844 = vmatprep.subr.mxu0 0.0
  %3845 = vmatpush1.msra.mxu0 0.0
  %3846 = vmatprep.subr.mxu0 0.0
  %3847 = vmatpush1.msra.mxu0 0.0
  %3848 = vmatprep.subr.mxu0 0.0
  %3849 = vmatpush1.msra.mxu0 0.0
  %3850 = vmatprep.subr.mxu0 0.0
  %3851 = vmatpush1.msra.mxu0 0.0
  %3852 = vmatprep.subr.mxu0 0.0
  %3853 = vmatpush1.msra.mxu0 0.0
  %3854 = vmatprep.mubr.f32.mxu0 0.0
  %3855 = vmatmul.mubr.f32.gmra.mrb[0].mxu0 %v3788
  %v3856 = vpop.f32.mrb[0].mxu0
  %v3857 = vadd.f32 %v3784, %v3856
  %v3858 = vpop.f32.mrb[0].mxu0
  %3859 = vdwg.mxu0
  %v3860 = vadd.f32 %v3857, %v2513
  %v3861 = vrot.slane %v2337, 4
  %v3863 = vadd.f32 %v3860, %v3861
  %v3864 = vxor.u32 %v3863, 2147483648
  %v3865 = vmul.f32 %v3864, 1.442695
  %v3866 = vpow.pop %v3865
  %v3867 = vadd.f32 %v3866, 1.0
  %v3868 = vrcp.pop %v3867
  %v3869 = vmul.f32 1.0, %v3868
  %v3870 = vtanh.pop %v3863
  %v3871 = vmul.f32 %v3869, %v3228
  %3873 = vrot.lane.b32.xlu0 %v3870, 64
  %v3874 = vpop.permute.xlu0 %3873
  %v3876 = vmul.f32 %v3869, %v3874
  %3878 = vrot.lane.b32.xlu0 %v3876, 32
  %v3879 = vpop.permute.xlu0 %3878
  %v3881 = vadd.f32 %v3871, %v3879
  %v3882 = vtanh.pop %v3881
  %3884 = vrot.lane.b32.xlu0 %v3882, 64
  %v3885 = vpop.permute.xlu0 %3884
  %v3887 = vmul.f32 %v3869, %v3885
  %3888 = vmatprep.subr.mxu0 0.0
  %3889 = vmatpush1.msra.mxu0 %v2550
  %3890 = vmatprep.subr.mxu0 0.0
  %3891 = vmatpush1.msra.mxu0 %v2551
  %3892 = vmatprep.subr.mxu0 0.0
  %3893 = vmatpush1.msra.mxu0 %v2552
  %3894 = vmatprep.subr.mxu0 0.0
  %3895 = vmatpush1.msra.mxu0 %v2553
  %3896 = vmatprep.subr.mxu0 0.0
  %3897 = vmatpush1.msra.mxu0 0.0
  %3898 = vmatprep.subr.mxu0 0.0
  %3899 = vmatpush1.msra.mxu0 0.0
  %3900 = vmatprep.subr.mxu0 0.0
  %3901 = vmatpush1.msra.mxu0 0.0
  %3902 = vmatprep.subr.mxu0 0.0
  %3903 = vmatpush1.msra.mxu0 0.0
  %3904 = vmatprep.subr.mxu0 0.0
  %3905 = vmatpush1.msra.mxu0 0.0
  %3906 = vmatprep.subr.mxu0 0.0
  %3907 = vmatpush1.msra.mxu0 0.0
  %3908 = vmatprep.subr.mxu0 0.0
  %3909 = vmatpush1.msra.mxu0 0.0
  %3910 = vmatprep.subr.mxu0 0.0
  %3911 = vmatpush1.msra.mxu0 0.0
  %3912 = vmatprep.subr.mxu0 0.0
  %3913 = vmatpush1.msra.mxu0 0.0
  %3914 = vmatprep.subr.mxu0 0.0
  %3915 = vmatpush1.msra.mxu0 0.0
  %3916 = vmatprep.subr.mxu0 0.0
  %3917 = vmatpush1.msra.mxu0 0.0
  %3918 = vmatprep.subr.mxu0 0.0
  %3919 = vmatpush1.msra.mxu0 0.0
  %3920 = vmatprep.subr.mxu0 0.0
  %3921 = vmatpush1.msra.mxu0 0.0
  %3922 = vmatprep.subr.mxu0 0.0
  %3923 = vmatpush1.msra.mxu0 0.0
  %3924 = vmatprep.subr.mxu0 0.0
  %3925 = vmatpush1.msra.mxu0 0.0
  %3926 = vmatprep.subr.mxu0 0.0
  %3927 = vmatpush1.msra.mxu0 0.0
  %3928 = vmatprep.subr.mxu0 0.0
  %3929 = vmatpush1.msra.mxu0 0.0
  %3930 = vmatprep.subr.mxu0 0.0
  %3931 = vmatpush1.msra.mxu0 0.0
  %3932 = vmatprep.subr.mxu0 0.0
  %3933 = vmatpush1.msra.mxu0 0.0
  %3934 = vmatprep.subr.mxu0 0.0
  %3935 = vmatpush1.msra.mxu0 0.0
  %3936 = vmatprep.subr.mxu0 0.0
  %3937 = vmatpush1.msra.mxu0 0.0
  %3938 = vmatprep.subr.mxu0 0.0
  %3939 = vmatpush1.msra.mxu0 0.0
  %3940 = vmatprep.subr.mxu0 0.0
  %3941 = vmatpush1.msra.mxu0 0.0
  %3942 = vmatprep.subr.mxu0 0.0
  %3943 = vmatpush1.msra.mxu0 0.0
  %3944 = vmatprep.subr.mxu0 0.0
  %3945 = vmatpush1.msra.mxu0 0.0
  %3946 = vmatprep.subr.mxu0 0.0
  %3947 = vmatpush1.msra.mxu0 0.0
  %3948 = vmatprep.subr.mxu0 0.0
  %3949 = vmatpush1.msra.mxu0 0.0
  %3950 = vmatprep.subr.mxu0 0.0
  %3951 = vmatpush1.msra.mxu0 0.0
  %3952 = vmatprep.mubr.f32.mxu0 0.0
  %3953 = vmatmul.mubr.f32.gmra.mrb[0].mxu0 %v3408
  %v3954 = vpop.f32.mrb[0].mxu0
  %v3955 = vadd.f32 0.0, %v3954
  %v3956 = vpop.f32.mrb[0].mxu0
  %3957 = vdwg.mxu0
  %3959 = vrot.lane.b32.xlu0 %v3887, 32
  %v3960 = vpop.permute.xlu0 %3959
  %v3961 = vsel %vm68, %v3960, 0
  %3963 = vmatprep.subr.mxu0 0.0
  %3964 = vmatpush1.msra.mxu0 %v2545
  %3965 = vmatprep.subr.mxu0 0.0
  %3966 = vmatpush1.msra.mxu0 %v2546
  %3967 = vmatprep.subr.mxu0 0.0
  %3968 = vmatpush1.msra.mxu0 %v2547
  %3969 = vmatprep.subr.mxu0 0.0
  %3970 = vmatpush1.msra.mxu0 %v2548
  %3971 = vmatprep.subr.mxu0 0.0
  %3972 = vmatpush1.msra.mxu0 0.0
  %3973 = vmatprep.subr.mxu0 0.0
  %3974 = vmatpush1.msra.mxu0 0.0
  %3975 = vmatprep.subr.mxu0 0.0
  %3976 = vmatpush1.msra.mxu0 0.0
  %3977 = vmatprep.subr.mxu0 0.0
  %3978 = vmatpush1.msra.mxu0 0.0
  %3979 = vmatprep.subr.mxu0 0.0
  %3980 = vmatpush1.msra.mxu0 0.0
  %3981 = vmatprep.subr.mxu0 0.0
  %3982 = vmatpush1.msra.mxu0 0.0
  %3983 = vmatprep.subr.mxu0 0.0
  %3984 = vmatpush1.msra.mxu0 0.0
  %3985 = vmatprep.subr.mxu0 0.0
  %3986 = vmatpush1.msra.mxu0 0.0
  %3987 = vmatprep.subr.mxu0 0.0
  %3988 = vmatpush1.msra.mxu0 0.0
  %3989 = vmatprep.subr.mxu0 0.0
  %3990 = vmatpush1.msra.mxu0 0.0
  %3991 = vmatprep.subr.mxu0 0.0
  %3992 = vmatpush1.msra.mxu0 0.0
  %3993 = vmatprep.subr.mxu0 0.0
  %3994 = vmatpush1.msra.mxu0 0.0
  %3995 = vmatprep.subr.mxu0 0.0
  %3996 = vmatpush1.msra.mxu0 0.0
  %3997 = vmatprep.subr.mxu0 0.0
  %3998 = vmatpush1.msra.mxu0 0.0
  %3999 = vmatprep.subr.mxu0 0.0
  %4000 = vmatpush1.msra.mxu0 0.0
  %4001 = vmatprep.subr.mxu0 0.0
  %4002 = vmatpush1.msra.mxu0 0.0
  %4003 = vmatprep.subr.mxu0 0.0
  %4004 = vmatpush1.msra.mxu0 0.0
  %4005 = vmatprep.subr.mxu0 0.0
  %4006 = vmatpush1.msra.mxu0 0.0
  %4007 = vmatprep.subr.mxu0 0.0
  %4008 = vmatpush1.msra.mxu0 0.0
  %4009 = vmatprep.subr.mxu0 0.0
  %4010 = vmatpush1.msra.mxu0 0.0
  %4011 = vmatprep.subr.mxu0 0.0
  %4012 = vmatpush1.msra.mxu0 0.0
  %4013 = vmatprep.subr.mxu0 0.0
  %4014 = vmatpush1.msra.mxu0 0.0
  %4015 = vmatprep.subr.mxu0 0.0
  %4016 = vmatpush1.msra.mxu0 0.0
  %4017 = vmatprep.subr.mxu0 0.0
  %4018 = vmatpush1.msra.mxu0 0.0
  %4019 = vmatprep.subr.mxu0 0.0
  %4020 = vmatpush1.msra.mxu0 0.0
  %4021 = vmatprep.subr.mxu0 0.0
  %4022 = vmatpush1.msra.mxu0 0.0
  %4023 = vmatprep.subr.mxu0 0.0
  %4024 = vmatpush1.msra.mxu0 0.0
  %4025 = vmatprep.subr.mxu0 0.0
  %4026 = vmatpush1.msra.mxu0 0.0
  %4027 = vmatprep.mubr.f32.mxu0 0.0
  %4028 = vmatmul.mubr.f32.gmra.mrb[0].mxu0 %v3961
  %v4029 = vpop.f32.mrb[0].mxu0
  %v4030 = vadd.f32 %v3955, %v4029
  %v4031 = vpop.f32.mrb[0].mxu0
  %4032 = vdwg.mxu0
  %v4033 = vadd.f32 %v4030, %v2707
  %v4034 = vxor.u32 %v4033, 2147483648
  %v4035 = vmul.f32 %v4034, 1.442695
  %v4036 = vpow.pop %v4035
  %v4037 = vadd.f32 %v4036, 1.0
  %v4038 = vrcp.pop %v4037
  %v4039 = vmul.f32 1.0, %v4038
  %v4040 = vtanh.pop %v4033
  %v4041 = vmul.f32 %v4039, %v3398
  %4043 = vrot.lane.b32.xlu0 %v4040, 64
  %v4044 = vpop.permute.xlu0 %4043
  %v4046 = vmul.f32 %v4039, %v4044
  %4048 = vrot.lane.b32.xlu0 %v4046, 32
  %v4049 = vpop.permute.xlu0 %4048
  %v4051 = vadd.f32 %v4041, %v4049
  %v4052 = vtanh.pop %v4051
  %4054 = vrot.lane.b32.xlu0 %v4052, 64
  %v4055 = vpop.permute.xlu0 %4054
  %v4057 = vmul.f32 %v4039, %v4055
  %4059 = vrot.lane.b32.xlu0 %v4057, 32
  %v4060 = vpop.permute.xlu0 %4059
  %v4061 = vsel %vm68, %v4060, 0
  %4063 = vmatprep.subr.mxu0 0.0
  %4064 = vmatpush1.msra.mxu0 %v2345
  %4065 = vmatprep.subr.mxu0 0.0
  %4066 = vmatpush1.msra.mxu0 %v2346
  %4067 = vmatprep.subr.mxu0 0.0
  %4068 = vmatpush1.msra.mxu0 %v2347
  %4069 = vmatprep.subr.mxu0 0.0
  %4070 = vmatpush1.msra.mxu0 %v2348
  %4071 = vmatprep.subr.mxu0 0.0
  %4072 = vmatpush1.msra.mxu0 0.0
  %4073 = vmatprep.subr.mxu0 0.0
  %4074 = vmatpush1.msra.mxu0 0.0
  %4075 = vmatprep.subr.mxu0 0.0
  %4076 = vmatpush1.msra.mxu0 0.0
  %4077 = vmatprep.subr.mxu0 0.0
  %4078 = vmatpush1.msra.mxu0 0.0
  %4079 = vmatprep.subr.mxu0 0.0
  %4080 = vmatpush1.msra.mxu0 0.0
  %4081 = vmatprep.subr.mxu0 0.0
  %4082 = vmatpush1.msra.mxu0 0.0
  %4083 = vmatprep.subr.mxu0 0.0
  %4084 = vmatpush1.msra.mxu0 0.0
  %4085 = vmatprep.subr.mxu0 0.0
  %4086 = vmatpush1.msra.mxu0 0.0
  %4087 = vmatprep.subr.mxu0 0.0
  %4088 = vmatpush1.msra.mxu0 0.0
  %4089 = vmatprep.subr.mxu0 0.0
  %4090 = vmatpush1.msra.mxu0 0.0
  %4091 = vmatprep.subr.mxu0 0.0
  %4092 = vmatpush1.msra.mxu0 0.0
  %4093 = vmatprep.subr.mxu0 0.0
  %4094 = vmatpush1.msra.mxu0 0.0
  %4095 = vmatprep.subr.mxu0 0.0
  %4096 = vmatpush1.msra.mxu0 0.0
  %4097 = vmatprep.subr.mxu0 0.0
  %4098 = vmatpush1.msra.mxu0 0.0
  %4099 = vmatprep.subr.mxu0 0.0
  %4100 = vmatpush1.msra.mxu0 0.0
  %4101 = vmatprep.subr.mxu0 0.0
  %4102 = vmatpush1.msra.mxu0 0.0
  %4103 = vmatprep.subr.mxu0 0.0
  %4104 = vmatpush1.msra.mxu0 0.0
  %4105 = vmatprep.subr.mxu0 0.0
  %4106 = vmatpush1.msra.mxu0 0.0
  %4107 = vmatprep.subr.mxu0 0.0
  %4108 = vmatpush1.msra.mxu0 0.0
  %4109 = vmatprep.subr.mxu0 0.0
  %4110 = vmatpush1.msra.mxu0 0.0
  %4111 = vmatprep.subr.mxu0 0.0
  %4112 = vmatpush1.msra.mxu0 0.0
  %4113 = vmatprep.subr.mxu0 0.0
  %4114 = vmatpush1.msra.mxu0 0.0
  %4115 = vmatprep.subr.mxu0 0.0
  %4116 = vmatpush1.msra.mxu0 0.0
  %4117 = vmatprep.subr.mxu0 0.0
  %4118 = vmatpush1.msra.mxu0 0.0
  %4119 = vmatprep.subr.mxu0 0.0
  %4120 = vmatpush1.msra.mxu0 0.0
  %4121 = vmatprep.subr.mxu0 0.0
  %4122 = vmatpush1.msra.mxu0 0.0
  %4123 = vmatprep.subr.mxu0 0.0
  %4124 = vmatpush1.msra.mxu0 0.0
  %4125 = vmatprep.subr.mxu0 0.0
  %4126 = vmatpush1.msra.mxu0 0.0
  %4127 = vmatprep.mubr.f32.mxu0 0.0
  %4128 = vmatmul.mubr.f32.gmra.mrb[0].mxu0 %v4061
  %v4129 = vpop.f32.mrb[0].mxu0
  %v4130 = vadd.f32 0.0, %v4129
  %v4131 = vpop.f32.mrb[0].mxu0
  %4132 = vdwg.mxu0
  %v4134 = vsel %vm68, %v4130, 0
  %4136 = vmatprep.subr.mxu0 0.0
  %4137 = vmatpush1.xpose.msra.mxu0 %v2816
  %4138 = vmatprep.subr.mxu0 0.0
  %4139 = vmatpush1.xpose.msra.mxu0 %v2819
  %4140 = vmatprep.subr.mxu0 0.0
  %4141 = vmatpush1.xpose.msra.mxu0 0.0
  %4142 = vmatprep.subr.mxu0 0.0
  %4143 = vmatpush1.xpose.msra.mxu0 0.0
  %4144 = vmatprep.subr.mxu0 0.0
  %4145 = vmatpush1.xpose.msra.mxu0 0.0
  %4146 = vmatprep.subr.mxu0 0.0
  %4147 = vmatpush1.xpose.msra.mxu0 0.0
  %4148 = vmatprep.subr.mxu0 0.0
  %4149 = vmatpush1.xpose.msra.mxu0 0.0
  %4150 = vmatprep.subr.mxu0 0.0
  %4151 = vmatpush1.xpose.msra.mxu0 0.0
  %4152 = vmatprep.subr.mxu0 0.0
  %4153 = vmatpush1.xpose.msra.mxu0 0.0
  %4154 = vmatprep.subr.mxu0 0.0
  %4155 = vmatpush1.xpose.msra.mxu0 0.0
  %4156 = vmatprep.subr.mxu0 0.0
  %4157 = vmatpush1.xpose.msra.mxu0 0.0
  %4158 = vmatprep.subr.mxu0 0.0
  %4159 = vmatpush1.xpose.msra.mxu0 0.0
  %4160 = vmatprep.subr.mxu0 0.0
  %4161 = vmatpush1.xpose.msra.mxu0 0.0
  %4162 = vmatprep.subr.mxu0 0.0
  %4163 = vmatpush1.xpose.msra.mxu0 0.0
  %4164 = vmatprep.subr.mxu0 0.0
  %4165 = vmatpush1.xpose.msra.mxu0 0.0
  %4166 = vmatprep.subr.mxu0 0.0
  %4167 = vmatpush1.xpose.msra.mxu0 0.0
  %4168 = vmatprep.subr.mxu0 0.0
  %4169 = vmatpush1.xpose.msra.mxu0 0.0
  %4170 = vmatprep.subr.mxu0 0.0
  %4171 = vmatpush1.xpose.msra.mxu0 0.0
  %4172 = vmatprep.subr.mxu0 0.0
  %4173 = vmatpush1.xpose.msra.mxu0 0.0
  %4174 = vmatprep.subr.mxu0 0.0
  %4175 = vmatpush1.xpose.msra.mxu0 0.0
  %4176 = vmatprep.subr.mxu0 0.0
  %4177 = vmatpush1.xpose.msra.mxu0 0.0
  %4178 = vmatprep.subr.mxu0 0.0
  %4179 = vmatpush1.xpose.msra.mxu0 0.0
  %4180 = vmatprep.subr.mxu0 0.0
  %4181 = vmatpush1.xpose.msra.mxu0 0.0
  %4182 = vmatprep.subr.mxu0 0.0
  %4183 = vmatpush1.xpose.msra.mxu0 0.0
  %4184 = vmatprep.subr.mxu0 0.0
  %4185 = vmatpush1.xpose.msra.mxu0 0.0
  %4186 = vmatprep.subr.mxu0 0.0
  %4187 = vmatpush1.xpose.msra.mxu0 0.0
  %4188 = vmatprep.subr.mxu0 0.0
  %4189 = vmatpush1.xpose.msra.mxu0 0.0
  %4190 = vmatprep.subr.mxu0 0.0
  %4191 = vmatpush1.xpose.msra.mxu0 0.0
  %4192 = vmatprep.subr.mxu0 0.0
  %4193 = vmatpush1.xpose.msra.mxu0 0.0
  %4194 = vmatprep.subr.mxu0 0.0
  %4195 = vmatpush1.xpose.msra.mxu0 0.0
  %4196 = vmatprep.subr.mxu0 0.0
  %4197 = vmatpush1.xpose.msra.mxu0 0.0
  %4198 = vmatprep.subr.mxu0 0.0
  %4199 = vmatpush1.xpose.msra.mxu0 0.0
  %4200 = vmatprep.mubr.f32.mxu0 0.0
  %4201 = vmatmul.mubr.f32.gmra.mrb[0].mxu0 %v4134
  %v4202 = vpop.f32.mrb[0].mxu0
  %v4203 = vadd.f32 %v2259, %v4202
  %v4204 = vpop.f32.mrb[0].mxu0
  %4205 = vdwg.mxu0
  %v4206 = vsel %vm2891, %v4203, -inf
  %4207 = vmax.xlane.f32.xlu0 %v4206
  %v4208 = vpop.xlane.xlu0 %4207
  %v4209 = vsub.f32 %v4203, %v4208
  %v4210 = vmul.f32 %v4209, 1.442695
  %v4211 = vpow.pop %v4210
  %v4212 = vsel %vm2891, %v4211, 0.0
  %4213 = vadd.xlane.f32.xlu0 %v4212
  %v4214 = vpop.xlane.xlu0 %4213
  %v4215 = vrcp.pop %v4214
  %v4216 = vmul.f32 %v4211, %v4215
  %v4218 = vsel %vm1097, %v4216, 0
  %4220 = vmatprep.subr.mxu0 0.0
  %4221 = vmatpush1.msra.mxu0 %v2255
  %4222 = vmatprep.subr.mxu0 0.0
  %4223 = vmatpush1.msra.mxu0 %v2258
  %4224 = vmatprep.subr.mxu0 0.0
  %4225 = vmatpush1.msra.mxu0 0.0
  %4226 = vmatprep.subr.mxu0 0.0
  %4227 = vmatpush1.msra.mxu0 0.0
  %4228 = vmatprep.subr.mxu0 0.0
  %4229 = vmatpush1.msra.mxu0 0.0
  %4230 = vmatprep.subr.mxu0 0.0
  %4231 = vmatpush1.msra.mxu0 0.0
  %4232 = vmatprep.subr.mxu0 0.0
  %4233 = vmatpush1.msra.mxu0 0.0
  %4234 = vmatprep.subr.mxu0 0.0
  %4235 = vmatpush1.msra.mxu0 0.0
  %4236 = vmatprep.subr.mxu0 0.0
  %4237 = vmatpush1.msra.mxu0 0.0
  %4238 = vmatprep.subr.mxu0 0.0
  %4239 = vmatpush1.msra.mxu0 0.0
  %4240 = vmatprep.subr.mxu0 0.0
  %4241 = vmatpush1.msra.mxu0 0.0
  %4242 = vmatprep.subr.mxu0 0.0
  %4243 = vmatpush1.msra.mxu0 0.0
  %4244 = vmatprep.subr.mxu0 0.0
  %4245 = vmatpush1.msra.mxu0 0.0
  %4246 = vmatprep.subr.mxu0 0.0
  %4247 = vmatpush1.msra.mxu0 0.0
  %4248 = vmatprep.subr.mxu0 0.0
  %4249 = vmatpush1.msra.mxu0 0.0
  %4250 = vmatprep.subr.mxu0 0.0
  %4251 = vmatpush1.msra.mxu0 0.0
  %4252 = vmatprep.subr.mxu0 0.0
  %4253 = vmatpush1.msra.mxu0 0.0
  %4254 = vmatprep.subr.mxu0 0.0
  %4255 = vmatpush1.msra.mxu0 0.0
  %4256 = vmatprep.subr.mxu0 0.0
  %4257 = vmatpush1.msra.mxu0 0.0
  %4258 = vmatprep.subr.mxu0 0.0
  %4259 = vmatpush1.msra.mxu0 0.0
  %4260 = vmatprep.subr.mxu0 0.0
  %4261 = vmatpush1.msra.mxu0 0.0
  %4262 = vmatprep.subr.mxu0 0.0
  %4263 = vmatpush1.msra.mxu0 0.0
  %4264 = vmatprep.subr.mxu0 0.0
  %4265 = vmatpush1.msra.mxu0 0.0
  %4266 = vmatprep.subr.mxu0 0.0
  %4267 = vmatpush1.msra.mxu0 0.0
  %4268 = vmatprep.subr.mxu0 0.0
  %4269 = vmatpush1.msra.mxu0 0.0
  %4270 = vmatprep.subr.mxu0 0.0
  %4271 = vmatpush1.msra.mxu0 0.0
  %4272 = vmatprep.subr.mxu0 0.0
  %4273 = vmatpush1.msra.mxu0 0.0
  %4274 = vmatprep.subr.mxu0 0.0
  %4275 = vmatpush1.msra.mxu0 0.0
  %4276 = vmatprep.subr.mxu0 0.0
  %4277 = vmatpush1.msra.mxu0 0.0
  %4278 = vmatprep.subr.mxu0 0.0
  %4279 = vmatpush1.msra.mxu0 0.0
  %4280 = vmatprep.subr.mxu0 0.0
  %4281 = vmatpush1.msra.mxu0 0.0
  %4282 = vmatprep.subr.mxu0 0.0
  %4283 = vmatpush1.msra.mxu0 0.0
  %4284 = vmatprep.mubr.f32.mxu0 0.0
  %4285 = vmatmul.mubr.f32.gmra.mrb[0].mxu0 %v4218
  %v4286 = vpop.f32.mrb[0].mxu0
  %v4287 = vadd.f32 0.0, %v4286
  %v4288 = vpop.f32.mrb[0].mxu0
  %4289 = vdwg.mxu0
  %4292 = vrot.lane.b32.xlu0 %v4287, 32
  %v4293 = vpop.permute.xlu0 %4292
  %v4295 = vsel %vm68, %v4060, %v4293
  %v4297 = vsel %vm2988, %v4295, 0
  %4299 = vmatprep.subr.mxu0 0.0
  %4300 = vmatpush1.msra.mxu0 %v2349
  %4301 = vmatprep.subr.mxu0 0.0
  %4302 = vmatpush1.msra.mxu0 %v2350
  %4303 = vmatprep.subr.mxu0 0.0
  %4304 = vmatpush1.msra.mxu0 %v2351
  %4305 = vmatprep.subr.mxu0 0.0
  %4306 = vmatpush1.msra.mxu0 %v2352
  %4307 = vmatprep.subr.mxu0 0.0
  %4308 = vmatpush1.msra.mxu0 %v2353
  %4309 = vmatprep.subr.mxu0 0.0
  %4310 = vmatpush1.msra.mxu0 %v2354
  %4311 = vmatprep.subr.mxu0 0.0
  %4312 = vmatpush1.msra.mxu0 %v2355
  %4313 = vmatprep.subr.mxu0 0.0
  %4314 = vmatpush1.msra.mxu0 %v2356
  %4315 = vmatprep.subr.mxu0 0.0
  %4316 = vmatpush1.msra.mxu0 0.0
  %4317 = vmatprep.subr.mxu0 0.0
  %4318 = vmatpush1.msra.mxu0 0.0
  %4319 = vmatprep.subr.mxu0 0.0
  %4320 = vmatpush1.msra.mxu0 0.0
  %4321 = vmatprep.subr.mxu0 0.0
  %4322 = vmatpush1.msra.mxu0 0.0
  %4323 = vmatprep.subr.mxu0 0.0
  %4324 = vmatpush1.msra.mxu0 0.0
  %4325 = vmatprep.subr.mxu0 0.0
  %4326 = vmatpush1.msra.mxu0 0.0
  %4327 = vmatprep.subr.mxu0 0.0
  %4328 = vmatpush1.msra.mxu0 0.0
  %4329 = vmatprep.subr.mxu0 0.0
  %4330 = vmatpush1.msra.mxu0 0.0
  %4331 = vmatprep.subr.mxu0 0.0
  %4332 = vmatpush1.msra.mxu0 0.0
  %4333 = vmatprep.subr.mxu0 0.0
  %4334 = vmatpush1.msra.mxu0 0.0
  %4335 = vmatprep.subr.mxu0 0.0
  %4336 = vmatpush1.msra.mxu0 0.0
  %4337 = vmatprep.subr.mxu0 0.0
  %4338 = vmatpush1.msra.mxu0 0.0
  %4339 = vmatprep.subr.mxu0 0.0
  %4340 = vmatpush1.msra.mxu0 0.0
  %4341 = vmatprep.subr.mxu0 0.0
  %4342 = vmatpush1.msra.mxu0 0.0
  %4343 = vmatprep.subr.mxu0 0.0
  %4344 = vmatpush1.msra.mxu0 0.0
  %4345 = vmatprep.subr.mxu0 0.0
  %4346 = vmatpush1.msra.mxu0 0.0
  %4347 = vmatprep.subr.mxu0 0.0
  %4348 = vmatpush1.msra.mxu0 0.0
  %4349 = vmatprep.subr.mxu0 0.0
  %4350 = vmatpush1.msra.mxu0 0.0
  %4351 = vmatprep.subr.mxu0 0.0
  %4352 = vmatpush1.msra.mxu0 0.0
  %4353 = vmatprep.subr.mxu0 0.0
  %4354 = vmatpush1.msra.mxu0 0.0
  %4355 = vmatprep.subr.mxu0 0.0
  %4356 = vmatpush1.msra.mxu0 0.0
  %4357 = vmatprep.subr.mxu0 0.0
  %4358 = vmatpush1.msra.mxu0 0.0
  %4359 = vmatprep.subr.mxu0 0.0
  %4360 = vmatpush1.msra.mxu0 0.0
  %4361 = vmatprep.subr.mxu0 0.0
  %4362 = vmatpush1.msra.mxu0 0.0
  %4363 = vmatprep.mubr.f32.mxu0 0.0
  %4364 = vmatmul.mubr.f32.gmra.mrb[0].mxu0 %v4297
  %v4365 = vpop.f32.mrb[0].mxu0
  %v4366 = vadd.f32 %v2986, %v4365
  %v4367 = vpop.f32.mrb[0].mxu0
  %4368 = vdwg.mxu0
  %v4369 = vtanh.pop %v4366
  %4370 = vmatprep.subr.mxu0 0.0
  %4371 = vmatpush1.msra.mxu0 %v2362
  %4372 = vmatprep.subr.mxu0 0.0
  %4373 = vmatpush1.msra.mxu0 %v2363
  %4374 = vmatprep.subr.mxu0 0.0
  %4375 = vmatpush1.msra.mxu0 %v2364
  %4376 = vmatprep.subr.mxu0 0.0
  %4377 = vmatpush1.msra.mxu0 %v2365
  %4378 = vmatprep.subr.mxu0 0.0
  %4379 = vmatpush1.msra.mxu0 0.0
  %4380 = vmatprep.subr.mxu0 0.0
  %4381 = vmatpush1.msra.mxu0 0.0
  %4382 = vmatprep.subr.mxu0 0.0
  %4383 = vmatpush1.msra.mxu0 0.0
  %4384 = vmatprep.subr.mxu0 0.0
  %4385 = vmatpush1.msra.mxu0 0.0
  %4386 = vmatprep.subr.mxu0 0.0
  %4387 = vmatpush1.msra.mxu0 0.0
  %4388 = vmatprep.subr.mxu0 0.0
  %4389 = vmatpush1.msra.mxu0 0.0
  %4390 = vmatprep.subr.mxu0 0.0
  %4391 = vmatpush1.msra.mxu0 0.0
  %4392 = vmatprep.subr.mxu0 0.0
  %4393 = vmatpush1.msra.mxu0 0.0
  %4394 = vmatprep.subr.mxu0 0.0
  %4395 = vmatpush1.msra.mxu0 0.0
  %4396 = vmatprep.subr.mxu0 0.0
  %4397 = vmatpush1.msra.mxu0 0.0
  %4398 = vmatprep.subr.mxu0 0.0
  %4399 = vmatpush1.msra.mxu0 0.0
  %4400 = vmatprep.subr.mxu0 0.0
  %4401 = vmatpush1.msra.mxu0 0.0
  %4402 = vmatprep.subr.mxu0 0.0
  %4403 = vmatpush1.msra.mxu0 0.0
  %4404 = vmatprep.subr.mxu0 0.0
  %4405 = vmatpush1.msra.mxu0 0.0
  %4406 = vmatprep.subr.mxu0 0.0
  %4407 = vmatpush1.msra.mxu0 0.0
  %4408 = vmatprep.subr.mxu0 0.0
  %4409 = vmatpush1.msra.mxu0 0.0
  %4410 = vmatprep.subr.mxu0 0.0
  %4411 = vmatpush1.msra.mxu0 0.0
  %4412 = vmatprep.subr.mxu0 0.0
  %4413 = vmatpush1.msra.mxu0 0.0
  %4414 = vmatprep.subr.mxu0 0.0
  %4415 = vmatpush1.msra.mxu0 0.0
  %4416 = vmatprep.subr.mxu0 0.0
  %4417 = vmatpush1.msra.mxu0 0.0
  %4418 = vmatprep.subr.mxu0 0.0
  %4419 = vmatpush1.msra.mxu0 0.0
  %4420 = vmatprep.subr.mxu0 0.0
  %4421 = vmatpush1.msra.mxu0 0.0
  %4422 = vmatprep.subr.mxu0 0.0
  %4423 = vmatpush1.msra.mxu0 0.0
  %4424 = vmatprep.subr.mxu0 0.0
  %4425 = vmatpush1.msra.mxu0 0.0
  %4426 = vmatprep.subr.mxu0 0.0
  %4427 = vmatpush1.msra.mxu0 0.0
  %4428 = vmatprep.subr.mxu0 0.0
  %4429 = vmatpush1.msra.mxu0 0.0
  %4430 = vmatprep.subr.mxu0 0.0
  %4431 = vmatpush1.msra.mxu0 0.0
  %4432 = vmatprep.subr.mxu0 0.0
  %4433 = vmatpush1.msra.mxu0 0.0
  %4434 = vmatprep.mubr.f32.mxu0 0.0
  %4435 = vmatmul.mubr.f32.gmra.mrb[0].mxu0 %v3961
  %v4436 = vpop.f32.mrb[0].mxu0
  %v4437 = vadd.f32 0.0, %v4436
  %v4438 = vpop.f32.mrb[0].mxu0
  %4439 = vdwg.mxu0
  %v4441 = vsel %vm68, %v4369, 0
  %4443 = vmatprep.subr.mxu0 0.0
  %4444 = vmatpush1.msra.mxu0 %v2358
  %4445 = vmatprep.subr.mxu0 0.0
  %4446 = vmatpush1.msra.mxu0 %v2359
  %4447 = vmatprep.subr.mxu0 0.0
  %4448 = vmatpush1.msra.mxu0 %v2360
  %4449 = vmatprep.subr.mxu0 0.0
  %4450 = vmatpush1.msra.mxu0 %v2361
  %4451 = vmatprep.subr.mxu0 0.0
  %4452 = vmatpush1.msra.mxu0 0.0
  %4453 = vmatprep.subr.mxu0 0.0
  %4454 = vmatpush1.msra.mxu0 0.0
  %4455 = vmatprep.subr.mxu0 0.0
  %4456 = vmatpush1.msra.mxu0 0.0
  %4457 = vmatprep.subr.mxu0 0.0
  %4458 = vmatpush1.msra.mxu0 0.0
  %4459 = vmatprep.subr.mxu0 0.0
  %4460 = vmatpush1.msra.mxu0 0.0
  %4461 = vmatprep.subr.mxu0 0.0
  %4462 = vmatpush1.msra.mxu0 0.0
  %4463 = vmatprep.subr.mxu0 0.0
  %4464 = vmatpush1.msra.mxu0 0.0
  %4465 = vmatprep.subr.mxu0 0.0
  %4466 = vmatpush1.msra.mxu0 0.0
  %4467 = vmatprep.subr.mxu0 0.0
  %4468 = vmatpush1.msra.mxu0 0.0
  %4469 = vmatprep.subr.mxu0 0.0
  %4470 = vmatpush1.msra.mxu0 0.0
  %4471 = vmatprep.subr.mxu0 0.0
  %4472 = vmatpush1.msra.mxu0 0.0
  %4473 = vmatprep.subr.mxu0 0.0
  %4474 = vmatpush1.msra.mxu0 0.0
  %4475 = vmatprep.subr.mxu0 0.0
  %4476 = vmatpush1.msra.mxu0 0.0
  %4477 = vmatprep.subr.mxu0 0.0
  %4478 = vmatpush1.msra.mxu0 0.0
  %4479 = vmatprep.subr.mxu0 0.0
  %4480 = vmatpush1.msra.mxu0 0.0
  %4481 = vmatprep.subr.mxu0 0.0
  %4482 = vmatpush1.msra.mxu0 0.0
  %4483 = vmatprep.subr.mxu0 0.0
  %4484 = vmatpush1.msra.mxu0 0.0
  %4485 = vmatprep.subr.mxu0 0.0
  %4486 = vmatpush1.msra.mxu0 0.0
  %4487 = vmatprep.subr.mxu0 0.0
  %4488 = vmatpush1.msra.mxu0 0.0
  %4489 = vmatprep.subr.mxu0 0.0
  %4490 = vmatpush1.msra.mxu0 0.0
  %4491 = vmatprep.subr.mxu0 0.0
  %4492 = vmatpush1.msra.mxu0 0.0
  %4493 = vmatprep.subr.mxu0 0.0
  %4494 = vmatpush1.msra.mxu0 0.0
  %4495 = vmatprep.subr.mxu0 0.0
  %4496 = vmatpush1.msra.mxu0 0.0
  %4497 = vmatprep.subr.mxu0 0.0
  %4498 = vmatpush1.msra.mxu0 0.0
  %4499 = vmatprep.subr.mxu0 0.0
  %4500 = vmatpush1.msra.mxu0 0.0
  %4501 = vmatprep.subr.mxu0 0.0
  %4502 = vmatpush1.msra.mxu0 0.0
  %4503 = vmatprep.subr.mxu0 0.0
  %4504 = vmatpush1.msra.mxu0 0.0
  %4505 = vmatprep.subr.mxu0 0.0
  %4506 = vmatpush1.msra.mxu0 0.0
  %4507 = vmatprep.mubr.f32.mxu0 0.0
  %4508 = vmatmul.mubr.f32.gmra.mrb[0].mxu0 %v4441
  %v4509 = vpop.f32.mrb[0].mxu0
  %v4510 = vadd.f32 %v4437, %v4509
  %v4511 = vpop.f32.mrb[0].mxu0
  %4512 = vdwg.mxu0
  %v4513 = vadd.f32 %v4510, %v2513
  %v4514 = vrot.slane %v2337, 6
  %v4516 = vadd.f32 %v4513, %v4514
  %v4517 = vxor.u32 %v4516, 2147483648
  %v4518 = vmul.f32 %v4517, 1.442695
  %v4519 = vpow.pop %v4518
  %v4520 = vadd.f32 %v4519, 1.0
  %v4521 = vrcp.pop %v4520
  %v4522 = vmul.f32 1.0, %v4521
  %v4523 = vtanh.pop %v4516
  %v4524 = vmul.f32 %v4522, %v3881
  %4526 = vrot.lane.b32.xlu0 %v4523, 64
  %v4527 = vpop.permute.xlu0 %4526
  %v4529 = vmul.f32 %v4522, %v4527
  %4531 = vrot.lane.b32.xlu0 %v4529, 32
  %v4532 = vpop.permute.xlu0 %4531
  %v4534 = vadd.f32 %v4524, %v4532
  %v4535 = vtanh.pop %v4534
  %4537 = vrot.lane.b32.xlu0 %v4535, 64
  %v4538 = vpop.permute.xlu0 %4537
  %v4540 = vmul.f32 %v4522, %v4538
  %4541 = vmatprep.subr.mxu0 0.0
  %4542 = vmatpush1.msra.mxu0 %v2550
  %4543 = vmatprep.subr.mxu0 0.0
  %4544 = vmatpush1.msra.mxu0 %v2551
  %4545 = vmatprep.subr.mxu0 0.0
  %4546 = vmatpush1.msra.mxu0 %v2552
  %4547 = vmatprep.subr.mxu0 0.0
  %4548 = vmatpush1.msra.mxu0 %v2553
  %4549 = vmatprep.subr.mxu0 0.0
  %4550 = vmatpush1.msra.mxu0 0.0
  %4551 = vmatprep.subr.mxu0 0.0
  %4552 = vmatpush1.msra.mxu0 0.0
  %4553 = vmatprep.subr.mxu0 0.0
  %4554 = vmatpush1.msra.mxu0 0.0
  %4555 = vmatprep.subr.mxu0 0.0
  %4556 = vmatpush1.msra.mxu0 0.0
  %4557 = vmatprep.subr.mxu0 0.0
  %4558 = vmatpush1.msra.mxu0 0.0
  %4559 = vmatprep.subr.mxu0 0.0
  %4560 = vmatpush1.msra.mxu0 0.0
  %4561 = vmatprep.subr.mxu0 0.0
  %4562 = vmatpush1.msra.mxu0 0.0
  %4563 = vmatprep.subr.mxu0 0.0
  %4564 = vmatpush1.msra.mxu0 0.0
  %4565 = vmatprep.subr.mxu0 0.0
  %4566 = vmatpush1.msra.mxu0 0.0
  %4567 = vmatprep.subr.mxu0 0.0
  %4568 = vmatpush1.msra.mxu0 0.0
  %4569 = vmatprep.subr.mxu0 0.0
  %4570 = vmatpush1.msra.mxu0 0.0
  %4571 = vmatprep.subr.mxu0 0.0
  %4572 = vmatpush1.msra.mxu0 0.0
  %4573 = vmatprep.subr.mxu0 0.0
  %4574 = vmatpush1.msra.mxu0 0.0
  %4575 = vmatprep.subr.mxu0 0.0
  %4576 = vmatpush1.msra.mxu0 0.0
  %4577 = vmatprep.subr.mxu0 0.0
  %4578 = vmatpush1.msra.mxu0 0.0
  %4579 = vmatprep.subr.mxu0 0.0
  %4580 = vmatpush1.msra.mxu0 0.0
  %4581 = vmatprep.subr.mxu0 0.0
  %4582 = vmatpush1.msra.mxu0 0.0
  %4583 = vmatprep.subr.mxu0 0.0
  %4584 = vmatpush1.msra.mxu0 0.0
  %4585 = vmatprep.subr.mxu0 0.0
  %4586 = vmatpush1.msra.mxu0 0.0
  %4587 = vmatprep.subr.mxu0 0.0
  %4588 = vmatpush1.msra.mxu0 0.0
  %4589 = vmatprep.subr.mxu0 0.0
  %4590 = vmatpush1.msra.mxu0 0.0
  %4591 = vmatprep.subr.mxu0 0.0
  %4592 = vmatpush1.msra.mxu0 0.0
  %4593 = vmatprep.subr.mxu0 0.0
  %4594 = vmatpush1.msra.mxu0 0.0
  %4595 = vmatprep.subr.mxu0 0.0
  %4596 = vmatpush1.msra.mxu0 0.0
  %4597 = vmatprep.subr.mxu0 0.0
  %4598 = vmatpush1.msra.mxu0 0.0
  %4599 = vmatprep.subr.mxu0 0.0
  %4600 = vmatpush1.msra.mxu0 0.0
  %4601 = vmatprep.subr.mxu0 0.0
  %4602 = vmatpush1.msra.mxu0 0.0
  %4603 = vmatprep.subr.mxu0 0.0
  %4604 = vmatpush1.msra.mxu0 0.0
  %4605 = vmatprep.mubr.f32.mxu0 0.0
  %4606 = vmatmul.mubr.f32.gmra.mrb[0].mxu0 %v4061
  %v4607 = vpop.f32.mrb[0].mxu0
  %v4608 = vadd.f32 0.0, %v4607
  %v4609 = vpop.f32.mrb[0].mxu0
  %4610 = vdwg.mxu0
  %4612 = vrot.lane.b32.xlu0 %v4540, 32
  %v4613 = vpop.permute.xlu0 %4612
  %v4614 = vsel %vm68, %v4613, 0
  %4616 = vmatprep.subr.mxu0 0.0
  %4617 = vmatpush1.msra.mxu0 %v2545
  %4618 = vmatprep.subr.mxu0 0.0
  %4619 = vmatpush1.msra.mxu0 %v2546
  %4620 = vmatprep.subr.mxu0 0.0
  %4621 = vmatpush1.msra.mxu0 %v2547
  %4622 = vmatprep.subr.mxu0 0.0
  %4623 = vmatpush1.msra.mxu0 %v2548
  %4624 = vmatprep.subr.mxu0 0.0
  %4625 = vmatpush1.msra.mxu0 0.0
  %4626 = vmatprep.subr.mxu0 0.0
  %4627 = vmatpush1.msra.mxu0 0.0
  %4628 = vmatprep.subr.mxu0 0.0
  %4629 = vmatpush1.msra.mxu0 0.0
  %4630 = vmatprep.subr.mxu0 0.0
  %4631 = vmatpush1.msra.mxu0 0.0
  %4632 = vmatprep.subr.mxu0 0.0
  %4633 = vmatpush1.msra.mxu0 0.0
  %4634 = vmatprep.subr.mxu0 0.0
  %4635 = vmatpush1.msra.mxu0 0.0
  %4636 = vmatprep.subr.mxu0 0.0
  %4637 = vmatpush1.msra.mxu0 0.0
  %4638 = vmatprep.subr.mxu0 0.0
  %4639 = vmatpush1.msra.mxu0 0.0
  %4640 = vmatprep.subr.mxu0 0.0
  %4641 = vmatpush1.msra.mxu0 0.0
  %4642 = vmatprep.subr.mxu0 0.0
  %4643 = vmatpush1.msra.mxu0 0.0
  %4644 = vmatprep.subr.mxu0 0.0
  %4645 = vmatpush1.msra.mxu0 0.0
  %4646 = vmatprep.subr.mxu0 0.0
  %4647 = vmatpush1.msra.mxu0 0.0
  %4648 = vmatprep.subr.mxu0 0.0
  %4649 = vmatpush1.msra.mxu0 0.0
  %4650 = vmatprep.subr.mxu0 0.0
  %4651 = vmatpush1.msra.mxu0 0.0
  %4652 = vmatprep.subr.mxu0 0.0
  %4653 = vmatpush1.msra.mxu0 0.0
  %4654 = vmatprep.subr.mxu0 0.0
  %4655 = vmatpush1.msra.mxu0 0.0
  %4656 = vmatprep.subr.mxu0 0.0
  %4657 = vmatpush1.msra.mxu0 0.0
  %4658 = vmatprep.subr.mxu0 0.0
  %4659 = vmatpush1.msra.mxu0 0.0
  %4660 = vmatprep.subr.mxu0 0.0
  %4661 = vmatpush1.msra.mxu0 0.0
  %4662 = vmatprep.subr.mxu0 0.0
  %4663 = vmatpush1.msra.mxu0 0.0
  %4664 = vmatprep.subr.mxu0 0.0
  %4665 = vmatpush1.msra.mxu0 0.0
  %4666 = vmatprep.subr.mxu0 0.0
  %4667 = vmatpush1.msra.mxu0 0.0
  %4668 = vmatprep.subr.mxu0 0.0
  %4669 = vmatpush1.msra.mxu0 0.0
  %4670 = vmatprep.subr.mxu0 0.0
  %4671 = vmatpush1.msra.mxu0 0.0
  %4672 = vmatprep.subr.mxu0 0.0
  %4673 = vmatpush1.msra.mxu0 0.0
  %4674 = vmatprep.subr.mxu0 0.0
  %4675 = vmatpush1.msra.mxu0 0.0
  %4676 = vmatprep.subr.mxu0 0.0
  %4677 = vmatpush1.msra.mxu0 0.0
  %4678 = vmatprep.subr.mxu0 0.0
  %4679 = vmatpush1.msra.mxu0 0.0
  %4680 = vmatprep.mubr.f32.mxu0 0.0
  %4681 = vmatmul.mubr.f32.gmra.mrb[0].mxu0 %v4614
  %v4682 = vpop.f32.mrb[0].mxu0
  %v4683 = vadd.f32 %v4608, %v4682
  %v4684 = vpop.f32.mrb[0].mxu0
  %4685 = vdwg.mxu0
  %v4686 = vadd.f32 %v4683, %v2707
  %v4687 = vxor.u32 %v4686, 2147483648
  %v4688 = vmul.f32 %v4687, 1.442695
  %v4689 = vpow.pop %v4688
  %v4690 = vadd.f32 %v4689, 1.0
  %v4691 = vrcp.pop %v4690
  %v4692 = vmul.f32 1.0, %v4691
  %v4693 = vtanh.pop %v4686
  %v4694 = vmul.f32 %v4692, %v4051
  %4696 = vrot.lane.b32.xlu0 %v4693, 64
  %v4697 = vpop.permute.xlu0 %4696
  %v4699 = vmul.f32 %v4692, %v4697
  %4701 = vrot.lane.b32.xlu0 %v4699, 32
  %v4702 = vpop.permute.xlu0 %4701
  %v4704 = vadd.f32 %v4694, %v4702
  %v4705 = vtanh.pop %v4704
  %4707 = vrot.lane.b32.xlu0 %v4705, 64
  %v4708 = vpop.permute.xlu0 %4707
  %v4710 = vmul.f32 %v4692, %v4708
  %4712 = vrot.lane.b32.xlu0 %v4710, 32
  %v4713 = vpop.permute.xlu0 %4712
  %v4714 = vsel %vm68, %v4713, 0
  %4716 = vmatprep.subr.mxu0 0.0
  %4717 = vmatpush1.msra.mxu0 %v2345
  %4718 = vmatprep.subr.mxu0 0.0
  %4719 = vmatpush1.msra.mxu0 %v2346
  %4720 = vmatprep.subr.mxu0 0.0
  %4721 = vmatpush1.msra.mxu0 %v2347
  %4722 = vmatprep.subr.mxu0 0.0
  %4723 = vmatpush1.msra.mxu0 %v2348
  %4724 = vmatprep.subr.mxu0 0.0
  %4725 = vmatpush1.msra.mxu0 0.0
  %4726 = vmatprep.subr.mxu0 0.0
  %4727 = vmatpush1.msra.mxu0 0.0
  %4728 = vmatprep.subr.mxu0 0.0
  %4729 = vmatpush1.msra.mxu0 0.0
  %4730 = vmatprep.subr.mxu0 0.0
  %4731 = vmatpush1.msra.mxu0 0.0
  %4732 = vmatprep.subr.mxu0 0.0
  %4733 = vmatpush1.msra.mxu0 0.0
  %4734 = vmatprep.subr.mxu0 0.0
  %4735 = vmatpush1.msra.mxu0 0.0
  %4736 = vmatprep.subr.mxu0 0.0
  %4737 = vmatpush1.msra.mxu0 0.0
  %4738 = vmatprep.subr.mxu0 0.0
  %4739 = vmatpush1.msra.mxu0 0.0
  %4740 = vmatprep.subr.mxu0 0.0
  %4741 = vmatpush1.msra.mxu0 0.0
  %4742 = vmatprep.subr.mxu0 0.0
  %4743 = vmatpush1.msra.mxu0 0.0
  %4744 = vmatprep.subr.mxu0 0.0
  %4745 = vmatpush1.msra.mxu0 0.0
  %4746 = vmatprep.subr.mxu0 0.0
  %4747 = vmatpush1.msra.mxu0 0.0
  %4748 = vmatprep.subr.mxu0 0.0
  %4749 = vmatpush1.msra.mxu0 0.0
  %4750 = vmatprep.subr.mxu0 0.0
  %4751 = vmatpush1.msra.mxu0 0.0
  %4752 = vmatprep.subr.mxu0 0.0
  %4753 = vmatpush1.msra.mxu0 0.0
  %4754 = vmatprep.subr.mxu0 0.0
  %4755 = vmatpush1.msra.mxu0 0.0
  %4756 = vmatprep.subr.mxu0 0.0
  %4757 = vmatpush1.msra.mxu0 0.0
  %4758 = vmatprep.subr.mxu0 0.0
  %4759 = vmatpush1.msra.mxu0 0.0
  %4760 = vmatprep.subr.mxu0 0.0
  %4761 = vmatpush1.msra.mxu0 0.0
  %4762 = vmatprep.subr.mxu0 0.0
  %4763 = vmatpush1.msra.mxu0 0.0
  %4764 = vmatprep.subr.mxu0 0.0
  %4765 = vmatpush1.msra.mxu0 0.0
  %4766 = vmatprep.subr.mxu0 0.0
  %4767 = vmatpush1.msra.mxu0 0.0
  %4768 = vmatprep.subr.mxu0 0.0
  %4769 = vmatpush1.msra.mxu0 0.0
  %4770 = vmatprep.subr.mxu0 0.0
  %4771 = vmatpush1.msra.mxu0 0.0
  %4772 = vmatprep.subr.mxu0 0.0
  %4773 = vmatpush1.msra.mxu0 0.0
  %4774 = vmatprep.subr.mxu0 0.0
  %4775 = vmatpush1.msra.mxu0 0.0
  %4776 = vmatprep.subr.mxu0 0.0
  %4777 = vmatpush1.msra.mxu0 0.0
  %4778 = vmatprep.subr.mxu0 0.0
  %4779 = vmatpush1.msra.mxu0 0.0
  %4780 = vmatprep.mubr.f32.mxu0 0.0
  %4781 = vmatmul.mubr.f32.gmra.mrb[0].mxu0 %v4714
  %v4782 = vpop.f32.mrb[0].mxu0
  %v4783 = vadd.f32 0.0, %v4782
  %v4784 = vpop.f32.mrb[0].mxu0
  %4785 = vdwg.mxu0
  %v4787 = vsel %vm68, %v4783, 0
  %4789 = vmatprep.subr.mxu0 0.0
  %4790 = vmatpush1.xpose.msra.mxu0 %v2816
  %4791 = vmatprep.subr.mxu0 0.0
  %4792 = vmatpush1.xpose.msra.mxu0 %v2819
  %4793 = vmatprep.subr.mxu0 0.0
  %4794 = vmatpush1.xpose.msra.mxu0 0.0
  %4795 = vmatprep.subr.mxu0 0.0
  %4796 = vmatpush1.xpose.msra.mxu0 0.0
  %4797 = vmatprep.subr.mxu0 0.0
  %4798 = vmatpush1.xpose.msra.mxu0 0.0
  %4799 = vmatprep.subr.mxu0 0.0
  %4800 = vmatpush1.xpose.msra.mxu0 0.0
  %4801 = vmatprep.subr.mxu0 0.0
  %4802 = vmatpush1.xpose.msra.mxu0 0.0
  %4803 = vmatprep.subr.mxu0 0.0
  %4804 = vmatpush1.xpose.msra.mxu0 0.0
  %4805 = vmatprep.subr.mxu0 0.0
  %4806 = vmatpush1.xpose.msra.mxu0 0.0
  %4807 = vmatprep.subr.mxu0 0.0
  %4808 = vmatpush1.xpose.msra.mxu0 0.0
  %4809 = vmatprep.subr.mxu0 0.0
  %4810 = vmatpush1.xpose.msra.mxu0 0.0
  %4811 = vmatprep.subr.mxu0 0.0
  %4812 = vmatpush1.xpose.msra.mxu0 0.0
  %4813 = vmatprep.subr.mxu0 0.0
  %4814 = vmatpush1.xpose.msra.mxu0 0.0
  %4815 = vmatprep.subr.mxu0 0.0
  %4816 = vmatpush1.xpose.msra.mxu0 0.0
  %4817 = vmatprep.subr.mxu0 0.0
  %4818 = vmatpush1.xpose.msra.mxu0 0.0
  %4819 = vmatprep.subr.mxu0 0.0
  %4820 = vmatpush1.xpose.msra.mxu0 0.0
  %4821 = vmatprep.subr.mxu0 0.0
  %4822 = vmatpush1.xpose.msra.mxu0 0.0
  %4823 = vmatprep.subr.mxu0 0.0
  %4824 = vmatpush1.xpose.msra.mxu0 0.0
  %4825 = vmatprep.subr.mxu0 0.0
  %4826 = vmatpush1.xpose.msra.mxu0 0.0
  %4827 = vmatprep.subr.mxu0 0.0
  %4828 = vmatpush1.xpose.msra.mxu0 0.0
  %4829 = vmatprep.subr.mxu0 0.0
  %4830 = vmatpush1.xpose.msra.mxu0 0.0
  %4831 = vmatprep.subr.mxu0 0.0
  %4832 = vmatpush1.xpose.msra.mxu0 0.0
  %4833 = vmatprep.subr.mxu0 0.0
  %4834 = vmatpush1.xpose.msra.mxu0 0.0
  %4835 = vmatprep.subr.mxu0 0.0
  %4836 = vmatpush1.xpose.msra.mxu0 0.0
  %4837 = vmatprep.subr.mxu0 0.0
  %4838 = vmatpush1.xpose.msra.mxu0 0.0
  %4839 = vmatprep.subr.mxu0 0.0
  %4840 = vmatpush1.xpose.msra.mxu0 0.0
  %4841 = vmatprep.subr.mxu0 0.0
  %4842 = vmatpush1.xpose.msra.mxu0 0.0
  %4843 = vmatprep.subr.mxu0 0.0
  %4844 = vmatpush1.xpose.msra.mxu0 0.0
  %4845 = vmatprep.subr.mxu0 0.0
  %4846 = vmatpush1.xpose.msra.mxu0 0.0
  %4847 = vmatprep.subr.mxu0 0.0
  %4848 = vmatpush1.xpose.msra.mxu0 0.0
  %4849 = vmatprep.subr.mxu0 0.0
  %4850 = vmatpush1.xpose.msra.mxu0 0.0
  %4851 = vmatprep.subr.mxu0 0.0
  %4852 = vmatpush1.xpose.msra.mxu0 0.0
  %4853 = vmatprep.mubr.f32.mxu0 0.0
  %4854 = vmatmul.mubr.f32.gmra.mrb[0].mxu0 %v4787
  %v4855 = vpop.f32.mrb[0].mxu0
  %v4856 = vadd.f32 %v2259, %v4855
  %v4857 = vpop.f32.mrb[0].mxu0
  %4858 = vdwg.mxu0
  %v4859 = vsel %vm2891, %v4856, -inf
  %4860 = vmax.xlane.f32.xlu0 %v4859
  %v4861 = vpop.xlane.xlu0 %4860
  %v4862 = vsub.f32 %v4856, %v4861
  %v4863 = vmul.f32 %v4862, 1.442695
  %v4864 = vpow.pop %v4863
  %v4865 = vsel %vm2891, %v4864, 0.0
  %4866 = vadd.xlane.f32.xlu0 %v4865
  %v4867 = vpop.xlane.xlu0 %4866
  %v4868 = vrcp.pop %v4867
  %v4869 = vmul.f32 %v4864, %v4868
  %v4871 = vsel %vm1097, %v4869, 0
  %4873 = vmatprep.subr.mxu0 0.0
  %4874 = vmatpush1.msra.mxu0 %v2255
  %4875 = vmatprep.subr.mxu0 0.0
  %4876 = vmatpush1.msra.mxu0 %v2258
  %4877 = vmatprep.subr.mxu0 0.0
  %4878 = vmatpush1.msra.mxu0 0.0
  %4879 = vmatprep.subr.mxu0 0.0
  %4880 = vmatpush1.msra.mxu0 0.0
  %4881 = vmatprep.subr.mxu0 0.0
  %4882 = vmatpush1.msra.mxu0 0.0
  %4883 = vmatprep.subr.mxu0 0.0
  %4884 = vmatpush1.msra.mxu0 0.0
  %4885 = vmatprep.subr.mxu0 0.0
  %4886 = vmatpush1.msra.mxu0 0.0
  %4887 = vmatprep.subr.mxu0 0.0
  %4888 = vmatpush1.msra.mxu0 0.0
  %4889 = vmatprep.subr.mxu0 0.0
  %4890 = vmatpush1.msra.mxu0 0.0
  %4891 = vmatprep.subr.mxu0 0.0
  %4892 = vmatpush1.msra.mxu0 0.0
  %4893 = vmatprep.subr.mxu0 0.0
  %4894 = vmatpush1.msra.mxu0 0.0
  %4895 = vmatprep.subr.mxu0 0.0
  %4896 = vmatpush1.msra.mxu0 0.0
  %4897 = vmatprep.subr.mxu0 0.0
  %4898 = vmatpush1.msra.mxu0 0.0
  %4899 = vmatprep.subr.mxu0 0.0
  %4900 = vmatpush1.msra.mxu0 0.0
  %4901 = vmatprep.subr.mxu0 0.0
  %4902 = vmatpush1.msra.mxu0 0.0
  %4903 = vmatprep.subr.mxu0 0.0
  %4904 = vmatpush1.msra.mxu0 0.0
  %4905 = vmatprep.subr.mxu0 0.0
  %4906 = vmatpush1.msra.mxu0 0.0
  %4907 = vmatprep.subr.mxu0 0.0
  %4908 = vmatpush1.msra.mxu0 0.0
  %4909 = vmatprep.subr.mxu0 0.0
  %4910 = vmatpush1.msra.mxu0 0.0
  %4911 = vmatprep.subr.mxu0 0.0
  %4912 = vmatpush1.msra.mxu0 0.0
  %4913 = vmatprep.subr.mxu0 0.0
  %4914 = vmatpush1.msra.mxu0 0.0
  %4915 = vmatprep.subr.mxu0 0.0
  %4916 = vmatpush1.msra.mxu0 0.0
  %4917 = vmatprep.subr.mxu0 0.0
  %4918 = vmatpush1.msra.mxu0 0.0
  %4919 = vmatprep.subr.mxu0 0.0
  %4920 = vmatpush1.msra.mxu0 0.0
  %4921 = vmatprep.subr.mxu0 0.0
  %4922 = vmatpush1.msra.mxu0 0.0
  %4923 = vmatprep.subr.mxu0 0.0
  %4924 = vmatpush1.msra.mxu0 0.0
  %4925 = vmatprep.subr.mxu0 0.0
  %4926 = vmatpush1.msra.mxu0 0.0
  %4927 = vmatprep.subr.mxu0 0.0
  %4928 = vmatpush1.msra.mxu0 0.0
  %4929 = vmatprep.subr.mxu0 0.0
  %4930 = vmatpush1.msra.mxu0 0.0
  %4931 = vmatprep.subr.mxu0 0.0
  %4932 = vmatpush1.msra.mxu0 0.0
  %4933 = vmatprep.subr.mxu0 0.0
  %4934 = vmatpush1.msra.mxu0 0.0
  %4935 = vmatprep.subr.mxu0 0.0
  %4936 = vmatpush1.msra.mxu0 0.0
  %4937 = vmatprep.mubr.f32.mxu0 0.0
  %4938 = vmatmul.mubr.f32.gmra.mrb[0].mxu0 %v4871
  %v4939 = vpop.f32.mrb[0].mxu0
  %v4940 = vadd.f32 0.0, %v4939
  %v4941 = vpop.f32.mrb[0].mxu0
  %4942 = vdwg.mxu0
  %4945 = vrot.lane.b32.xlu0 %v4940, 32
  %v4946 = vpop.permute.xlu0 %4945
  %v4948 = vsel %vm68, %v4713, %v4946
  %v4950 = vsel %vm2988, %v4948, 0
  %4952 = vmatprep.subr.mxu0 0.0
  %4953 = vmatpush1.msra.mxu0 %v2349
  %4954 = vmatprep.subr.mxu0 0.0
  %4955 = vmatpush1.msra.mxu0 %v2350
  %4956 = vmatprep.subr.mxu0 0.0
  %4957 = vmatpush1.msra.mxu0 %v2351
  %4958 = vmatprep.subr.mxu0 0.0
  %4959 = vmatpush1.msra.mxu0 %v2352
  %4960 = vmatprep.subr.mxu0 0.0
  %4961 = vmatpush1.msra.mxu0 %v2353
  %4962 = vmatprep.subr.mxu0 0.0
  %4963 = vmatpush1.msra.mxu0 %v2354
  %4964 = vmatprep.subr.mxu0 0.0
  %4965 = vmatpush1.msra.mxu0 %v2355
  %4966 = vmatprep.subr.mxu0 0.0
  %4967 = vmatpush1.msra.mxu0 %v2356
  %4968 = vmatprep.subr.mxu0 0.0
  %4969 = vmatpush1.msra.mxu0 0.0
  %4970 = vmatprep.subr.mxu0 0.0
  %4971 = vmatpush1.msra.mxu0 0.0
  %4972 = vmatprep.subr.mxu0 0.0
  %4973 = vmatpush1.msra.mxu0 0.0
  %4974 = vmatprep.subr.mxu0 0.0
  %4975 = vmatpush1.msra.mxu0 0.0
  %4976 = vmatprep.subr.mxu0 0.0
  %4977 = vmatpush1.msra.mxu0 0.0
  %4978 = vmatprep.subr.mxu0 0.0
  %4979 = vmatpush1.msra.mxu0 0.0
  %4980 = vmatprep.subr.mxu0 0.0
  %4981 = vmatpush1.msra.mxu0 0.0
  %4982 = vmatprep.subr.mxu0 0.0
  %4983 = vmatpush1.msra.mxu0 0.0
  %4984 = vmatprep.subr.mxu0 0.0
  %4985 = vmatpush1.msra.mxu0 0.0
  %4986 = vmatprep.subr.mxu0 0.0
  %4987 = vmatpush1.msra.mxu0 0.0
  %4988 = vmatprep.subr.mxu0 0.0
  %4989 = vmatpush1.msra.mxu0 0.0
  %4990 = vmatprep.subr.mxu0 0.0
  %4991 = vmatpush1.msra.mxu0 0.0
  %4992 = vmatprep.subr.mxu0 0.0
  %4993 = vmatpush1.msra.mxu0 0.0
  %4994 = vmatprep.subr.mxu0 0.0
  %4995 = vmatpush1.msra.mxu0 0.0
  %4996 = vmatprep.subr.mxu0 0.0
  %4997 = vmatpush1.msra.mxu0 0.0
  %4998 = vmatprep.subr.mxu0 0.0
  %4999 = vmatpush1.msra.mxu0 0.0
  %5000 = vmatprep.subr.mxu0 0.0
  %5001 = vmatpush1.msra.mxu0 0.0
  %5002 = vmatprep.subr.mxu0 0.0
  %5003 = vmatpush1.msra.mxu0 0.0
  %5004 = vmatprep.subr.mxu0 0.0
  %5005 = vmatpush1.msra.mxu0 0.0
  %5006 = vmatprep.subr.mxu0 0.0
  %5007 = vmatpush1.msra.mxu0 0.0
  %5008 = vmatprep.subr.mxu0 0.0
  %5009 = vmatpush1.msra.mxu0 0.0
  %5010 = vmatprep.subr.mxu0 0.0
  %5011 = vmatpush1.msra.mxu0 0.0
  %5012 = vmatprep.subr.mxu0 0.0
  %5013 = vmatpush1.msra.mxu0 0.0
  %5014 = vmatprep.subr.mxu0 0.0
  %5015 = vmatpush1.msra.mxu0 0.0
  %5016 = vmatprep.mubr.f32.mxu0 0.0
  %5017 = vmatmul.mubr.f32.gmra.mrb[0].mxu0 %v4950
  %v5018 = vpop.f32.mrb[0].mxu0
  %v5019 = vadd.f32 %v2986, %v5018
  %v5020 = vpop.f32.mrb[0].mxu0
  %5021 = vdwg.mxu0
  %v5022 = vtanh.pop %v5019
  %5023 = vmatprep.subr.mxu0 0.0
  %5024 = vmatpush1.msra.mxu0 %v2362
  %5025 = vmatprep.subr.mxu0 0.0
  %5026 = vmatpush1.msra.mxu0 %v2363
  %5027 = vmatprep.subr.mxu0 0.0
  %5028 = vmatpush1.msra.mxu0 %v2364
  %5029 = vmatprep.subr.mxu0 0.0
  %5030 = vmatpush1.msra.mxu0 %v2365
  %5031 = vmatprep.subr.mxu0 0.0
  %5032 = vmatpush1.msra.mxu0 0.0
  %5033 = vmatprep.subr.mxu0 0.0
  %5034 = vmatpush1.msra.mxu0 0.0
  %5035 = vmatprep.subr.mxu0 0.0
  %5036 = vmatpush1.msra.mxu0 0.0
  %5037 = vmatprep.subr.mxu0 0.0
  %5038 = vmatpush1.msra.mxu0 0.0
  %5039 = vmatprep.subr.mxu0 0.0
  %5040 = vmatpush1.msra.mxu0 0.0
  %5041 = vmatprep.subr.mxu0 0.0
  %5042 = vmatpush1.msra.mxu0 0.0
  %5043 = vmatprep.subr.mxu0 0.0
  %5044 = vmatpush1.msra.mxu0 0.0
  %5045 = vmatprep.subr.mxu0 0.0
  %5046 = vmatpush1.msra.mxu0 0.0
  %5047 = vmatprep.subr.mxu0 0.0
  %5048 = vmatpush1.msra.mxu0 0.0
  %5049 = vmatprep.subr.mxu0 0.0
  %5050 = vmatpush1.msra.mxu0 0.0
  %5051 = vmatprep.subr.mxu0 0.0
  %5052 = vmatpush1.msra.mxu0 0.0
  %5053 = vmatprep.subr.mxu0 0.0
  %5054 = vmatpush1.msra.mxu0 0.0
  %5055 = vmatprep.subr.mxu0 0.0
  %5056 = vmatpush1.msra.mxu0 0.0
  %5057 = vmatprep.subr.mxu0 0.0
  %5058 = vmatpush1.msra.mxu0 0.0
  %5059 = vmatprep.subr.mxu0 0.0
  %5060 = vmatpush1.msra.mxu0 0.0
  %5061 = vmatprep.subr.mxu0 0.0
  %5062 = vmatpush1.msra.mxu0 0.0
  %5063 = vmatprep.subr.mxu0 0.0
  %5064 = vmatpush1.msra.mxu0 0.0
  %5065 = vmatprep.subr.mxu0 0.0
  %5066 = vmatpush1.msra.mxu0 0.0
  %5067 = vmatprep.subr.mxu0 0.0
  %5068 = vmatpush1.msra.mxu0 0.0
  %5069 = vmatprep.subr.mxu0 0.0
  %5070 = vmatpush1.msra.mxu0 0.0
  %5071 = vmatprep.subr.mxu0 0.0
  %5072 = vmatpush1.msra.mxu0 0.0
  %5073 = vmatprep.subr.mxu0 0.0
  %5074 = vmatpush1.msra.mxu0 0.0
  %5075 = vmatprep.subr.mxu0 0.0
  %5076 = vmatpush1.msra.mxu0 0.0
  %5077 = vmatprep.subr.mxu0 0.0
  %5078 = vmatpush1.msra.mxu0 0.0
  %5079 = vmatprep.subr.mxu0 0.0
  %5080 = vmatpush1.msra.mxu0 0.0
  %5081 = vmatprep.subr.mxu0 0.0
  %5082 = vmatpush1.msra.mxu0 0.0
  %5083 = vmatprep.subr.mxu0 0.0
  %5084 = vmatpush1.msra.mxu0 0.0
  %5085 = vmatprep.subr.mxu0 0.0
  %5086 = vmatpush1.msra.mxu0 0.0
  %5087 = vmatprep.mubr.f32.mxu0 0.0
  %5088 = vmatmul.mubr.f32.gmra.mrb[0].mxu0 %v4614
  %v5089 = vpop.f32.mrb[0].mxu0
  %v5090 = vadd.f32 0.0, %v5089
  %v5091 = vpop.f32.mrb[0].mxu0
  %5092 = vdwg.mxu0
  %v5094 = vsel %vm68, %v5022, 0
  %5096 = vmatprep.subr.mxu0 0.0
  %5097 = vmatpush1.msra.mxu0 %v2358
  %5098 = vmatprep.subr.mxu0 0.0
  %5099 = vmatpush1.msra.mxu0 %v2359
  %5100 = vmatprep.subr.mxu0 0.0
  %5101 = vmatpush1.msra.mxu0 %v2360
  %5102 = vmatprep.subr.mxu0 0.0
  %5103 = vmatpush1.msra.mxu0 %v2361
  %5104 = vmatprep.subr.mxu0 0.0
  %5105 = vmatpush1.msra.mxu0 0.0
  %5106 = vmatprep.subr.mxu0 0.0
  %5107 = vmatpush1.msra.mxu0 0.0
  %5108 = vmatprep.subr.mxu0 0.0
  %5109 = vmatpush1.msra.mxu0 0.0
  %5110 = vmatprep.subr.mxu0 0.0
  %5111 = vmatpush1.msra.mxu0 0.0
  %5112 = vmatprep.subr.mxu0 0.0
  %5113 = vmatpush1.msra.mxu0 0.0
  %5114 = vmatprep.subr.mxu0 0.0
  %5115 = vmatpush1.msra.mxu0 0.0
  %5116 = vmatprep.subr.mxu0 0.0
  %5117 = vmatpush1.msra.mxu0 0.0
  %5118 = vmatprep.subr.mxu0 0.0
  %5119 = vmatpush1.msra.mxu0 0.0
  %5120 = vmatprep.subr.mxu0 0.0
  %5121 = vmatpush1.msra.mxu0 0.0
  %5122 = vmatprep.subr.mxu0 0.0
  %5123 = vmatpush1.msra.mxu0 0.0
  %5124 = vmatprep.subr.mxu0 0.0
  %5125 = vmatpush1.msra.mxu0 0.0
  %5126 = vmatprep.subr.mxu0 0.0
  %5127 = vmatpush1.msra.mxu0 0.0
  %5128 = vmatprep.subr.mxu0 0.0
  %5129 = vmatpush1.msra.mxu0 0.0
  %5130 = vmatprep.subr.mxu0 0.0
  %5131 = vmatpush1.msra.mxu0 0.0
  %5132 = vmatprep.subr.mxu0 0.0
  %5133 = vmatpush1.msra.mxu0 0.0
  %5134 = vmatprep.subr.mxu0 0.0
  %5135 = vmatpush1.msra.mxu0 0.0
  %5136 = vmatprep.subr.mxu0 0.0
  %5137 = vmatpush1.msra.mxu0 0.0
  %5138 = vmatprep.subr.mxu0 0.0
  %5139 = vmatpush1.msra.mxu0 0.0
  %5140 = vmatprep.subr.mxu0 0.0
  %5141 = vmatpush1.msra.mxu0 0.0
  %5142 = vmatprep.subr.mxu0 0.0
  %5143 = vmatpush1.msra.mxu0 0.0
  %5144 = vmatprep.subr.mxu0 0.0
  %5145 = vmatpush1.msra.mxu0 0.0
  %5146 = vmatprep.subr.mxu0 0.0
  %5147 = vmatpush1.msra.mxu0 0.0
  %5148 = vmatprep.subr.mxu0 0.0
  %5149 = vmatpush1.msra.mxu0 0.0
  %5150 = vmatprep.subr.mxu0 0.0
  %5151 = vmatpush1.msra.mxu0 0.0
  %5152 = vmatprep.subr.mxu0 0.0
  %5153 = vmatpush1.msra.mxu0 0.0
  %5154 = vmatprep.subr.mxu0 0.0
  %5155 = vmatpush1.msra.mxu0 0.0
  %5156 = vmatprep.subr.mxu0 0.0
  %5157 = vmatpush1.msra.mxu0 0.0
  %5158 = vmatprep.subr.mxu0 0.0
  %5159 = vmatpush1.msra.mxu0 0.0
  %5160 = vmatprep.mubr.f32.mxu0 0.0
  %5161 = vmatmul.mubr.f32.gmra.mrb[0].mxu0 %v5094
  %v5162 = vpop.f32.mrb[0].mxu0
  %v5163 = vadd.f32 %v5090, %v5162
  %v5164 = vpop.f32.mrb[0].mxu0
  %5165 = vdwg.mxu0
  %v5166 = vadd.f32 %v5163, %v2513
  %v5167 = vadd.f32 %v5166, %v2342
  %v5168 = vxor.u32 %v5167, 2147483648
  %v5169 = vmul.f32 %v5168, 1.442695
  %v5170 = vpow.pop %v5169
  %v5171 = vadd.f32 %v5170, 1.0
  %v5172 = vrcp.pop %v5171
  %v5173 = vmul.f32 1.0, %v5172
  %v5174 = vtanh.pop %v5167
  %v5175 = vmul.f32 %v5173, %v4534
  %5177 = vrot.lane.b32.xlu0 %v5174, 64
  %v5178 = vpop.permute.xlu0 %5177
  %v5180 = vmul.f32 %v5173, %v5178
  %5182 = vrot.lane.b32.xlu0 %v5180, 32
  %v5183 = vpop.permute.xlu0 %5182
  %v5185 = vadd.f32 %v5175, %v5183
  %v5186 = vtanh.pop %v5185
  %5188 = vrot.lane.b32.xlu0 %v5186, 64
  %v5189 = vpop.permute.xlu0 %5188
  %v5191 = vmul.f32 %v5173, %v5189
  %5192 = vmatprep.subr.mxu0 0.0
  %5193 = vmatpush1.msra.mxu0 %v2550
  %5194 = vmatprep.subr.mxu0 0.0
  %5195 = vmatpush1.msra.mxu0 %v2551
  %5196 = vmatprep.subr.mxu0 0.0
  %5197 = vmatpush1.msra.mxu0 %v2552
  %5198 = vmatprep.subr.mxu0 0.0
  %5199 = vmatpush1.msra.mxu0 %v2553
  %5200 = vmatprep.subr.mxu0 0.0
  %5201 = vmatpush1.msra.mxu0 0.0
  %5202 = vmatprep.subr.mxu0 0.0
  %5203 = vmatpush1.msra.mxu0 0.0
  %5204 = vmatprep.subr.mxu0 0.0
  %5205 = vmatpush1.msra.mxu0 0.0
  %5206 = vmatprep.subr.mxu0 0.0
  %5207 = vmatpush1.msra.mxu0 0.0
  %5208 = vmatprep.subr.mxu0 0.0
  %5209 = vmatpush1.msra.mxu0 0.0
  %5210 = vmatprep.subr.mxu0 0.0
  %5211 = vmatpush1.msra.mxu0 0.0
  %5212 = vmatprep.subr.mxu0 0.0
  %5213 = vmatpush1.msra.mxu0 0.0
  %5214 = vmatprep.subr.mxu0 0.0
  %5215 = vmatpush1.msra.mxu0 0.0
  %5216 = vmatprep.subr.mxu0 0.0
  %5217 = vmatpush1.msra.mxu0 0.0
  %5218 = vmatprep.subr.mxu0 0.0
  %5219 = vmatpush1.msra.mxu0 0.0
  %5220 = vmatprep.subr.mxu0 0.0
  %5221 = vmatpush1.msra.mxu0 0.0
  %5222 = vmatprep.subr.mxu0 0.0
  %5223 = vmatpush1.msra.mxu0 0.0
  %5224 = vmatprep.subr.mxu0 0.0
  %5225 = vmatpush1.msra.mxu0 0.0
  %5226 = vmatprep.subr.mxu0 0.0
  %5227 = vmatpush1.msra.mxu0 0.0
  %5228 = vmatprep.subr.mxu0 0.0
  %5229 = vmatpush1.msra.mxu0 0.0
  %5230 = vmatprep.subr.mxu0 0.0
  %5231 = vmatpush1.msra.mxu0 0.0
  %5232 = vmatprep.subr.mxu0 0.0
  %5233 = vmatpush1.msra.mxu0 0.0
  %5234 = vmatprep.subr.mxu0 0.0
  %5235 = vmatpush1.msra.mxu0 0.0
  %5236 = vmatprep.subr.mxu0 0.0
  %5237 = vmatpush1.msra.mxu0 0.0
  %5238 = vmatprep.subr.mxu0 0.0
  %5239 = vmatpush1.msra.mxu0 0.0
  %5240 = vmatprep.subr.mxu0 0.0
  %5241 = vmatpush1.msra.mxu0 0.0
  %5242 = vmatprep.subr.mxu0 0.0
  %5243 = vmatpush1.msra.mxu0 0.0
  %5244 = vmatprep.subr.mxu0 0.0
  %5245 = vmatpush1.msra.mxu0 0.0
  %5246 = vmatprep.subr.mxu0 0.0
  %5247 = vmatpush1.msra.mxu0 0.0
  %5248 = vmatprep.subr.mxu0 0.0
  %5249 = vmatpush1.msra.mxu0 0.0
  %5250 = vmatprep.subr.mxu0 0.0
  %5251 = vmatpush1.msra.mxu0 0.0
  %5252 = vmatprep.subr.mxu0 0.0
  %5253 = vmatpush1.msra.mxu0 0.0
  %5254 = vmatprep.subr.mxu0 0.0
  %5255 = vmatpush1.msra.mxu0 0.0
  %5256 = vmatprep.mubr.f32.mxu0 0.0
  %5257 = vmatmul.mubr.f32.gmra.mrb[0].mxu0 %v4714
  %v5258 = vpop.f32.mrb[0].mxu0
  %v5259 = vadd.f32 0.0, %v5258
  %v5260 = vpop.f32.mrb[0].mxu0
  %5261 = vdwg.mxu0
  %5263 = vrot.lane.b32.xlu0 %v5191, 32
  %v5264 = vpop.permute.xlu0 %5263
  %v5265 = vsel %vm68, %v5264, 0
  %5267 = vmatprep.subr.mxu0 0.0
  %5268 = vmatpush1.msra.mxu0 %v2545
  %5269 = vmatprep.subr.mxu0 0.0
  %5270 = vmatpush1.msra.mxu0 %v2546
  %5271 = vmatprep.subr.mxu0 0.0
  %5272 = vmatpush1.msra.mxu0 %v2547
  %5273 = vmatprep.subr.mxu0 0.0
  %5274 = vmatpush1.msra.mxu0 %v2548
  %5275 = vmatprep.subr.mxu0 0.0
  %5276 = vmatpush1.msra.mxu0 0.0
  %5277 = vmatprep.subr.mxu0 0.0
  %5278 = vmatpush1.msra.mxu0 0.0
  %5279 = vmatprep.subr.mxu0 0.0
  %5280 = vmatpush1.msra.mxu0 0.0
  %5281 = vmatprep.subr.mxu0 0.0
  %5282 = vmatpush1.msra.mxu0 0.0
  %5283 = vmatprep.subr.mxu0 0.0
  %5284 = vmatpush1.msra.mxu0 0.0
  %5285 = vmatprep.subr.mxu0 0.0
  %5286 = vmatpush1.msra.mxu0 0.0
  %5287 = vmatprep.subr.mxu0 0.0
  %5288 = vmatpush1.msra.mxu0 0.0
  %5289 = vmatprep.subr.mxu0 0.0
  %5290 = vmatpush1.msra.mxu0 0.0
  %5291 = vmatprep.subr.mxu0 0.0
  %5292 = vmatpush1.msra.mxu0 0.0
  %5293 = vmatprep.subr.mxu0 0.0
  %5294 = vmatpush1.msra.mxu0 0.0
  %5295 = vmatprep.subr.mxu0 0.0
  %5296 = vmatpush1.msra.mxu0 0.0
  %5297 = vmatprep.subr.mxu0 0.0
  %5298 = vmatpush1.msra.mxu0 0.0
  %5299 = vmatprep.subr.mxu0 0.0
  %5300 = vmatpush1.msra.mxu0 0.0
  %5301 = vmatprep.subr.mxu0 0.0
  %5302 = vmatpush1.msra.mxu0 0.0
  %5303 = vmatprep.subr.mxu0 0.0
  %5304 = vmatpush1.msra.mxu0 0.0
  %5305 = vmatprep.subr.mxu0 0.0
  %5306 = vmatpush1.msra.mxu0 0.0
  %5307 = vmatprep.subr.mxu0 0.0
  %5308 = vmatpush1.msra.mxu0 0.0
  %5309 = vmatprep.subr.mxu0 0.0
  %5310 = vmatpush1.msra.mxu0 0.0
  %5311 = vmatprep.subr.mxu0 0.0
  %5312 = vmatpush1.msra.mxu0 0.0
  %5313 = vmatprep.subr.mxu0 0.0
  %5314 = vmatpush1.msra.mxu0 0.0
  %5315 = vmatprep.subr.mxu0 0.0
  %5316 = vmatpush1.msra.mxu0 0.0
  %5317 = vmatprep.subr.mxu0 0.0
  %5318 = vmatpush1.msra.mxu0 0.0
  %5319 = vmatprep.subr.mxu0 0.0
  %5320 = vmatpush1.msra.mxu0 0.0
  %5321 = vmatprep.subr.mxu0 0.0
  %5322 = vmatpush1.msra.mxu0 0.0
  %5323 = vmatprep.subr.mxu0 0.0
  %5324 = vmatpush1.msra.mxu0 0.0
  %5325 = vmatprep.subr.mxu0 0.0
  %5326 = vmatpush1.msra.mxu0 0.0
  %5327 = vmatprep.subr.mxu0 0.0
  %5328 = vmatpush1.msra.mxu0 0.0
  %5329 = vmatprep.subr.mxu0 0.0
  %5330 = vmatpush1.msra.mxu0 0.0
  %5331 = vmatprep.mubr.f32.mxu0 0.0
  %5332 = vmatmul.mubr.f32.gmra.mrb[0].mxu0 %v5265
  %v5333 = vpop.f32.mrb[0].mxu0
  %v5334 = vadd.f32 %v5259, %v5333
  %v5335 = vpop.f32.mrb[0].mxu0
  %5336 = vdwg.mxu0
  %v5337 = vadd.f32 %v5334, %v2707
  %v5338 = vxor.u32 %v5337, 2147483648
  %v5339 = vmul.f32 %v5338, 1.442695
  %v5340 = vpow.pop %v5339
  %v5341 = vadd.f32 %v5340, 1.0
  %v5342 = vrcp.pop %v5341
  %v5343 = vmul.f32 1.0, %v5342
  %v5344 = vtanh.pop %v5337
  %v5345 = vmul.f32 %v5343, %v4704
  %5347 = vrot.lane.b32.xlu0 %v5344, 64
  %v5348 = vpop.permute.xlu0 %5347
  %v5350 = vmul.f32 %v5343, %v5348
  %5352 = vrot.lane.b32.xlu0 %v5350, 32
  %v5353 = vpop.permute.xlu0 %5352
  %v5355 = vadd.f32 %v5345, %v5353
  %v5356 = vtanh.pop %v5355
  %5358 = vrot.lane.b32.xlu0 %v5356, 64
  %v5359 = vpop.permute.xlu0 %5358
  %v5361 = vmul.f32 %v5343, %v5359
  %5363 = vrot.lane.b32.xlu0 %v5361, 32
  %v5364 = vpop.permute.xlu0 %5363
  %v5365 = vsel %vm68, %v5364, 0
  %5367 = vmatprep.subr.mxu0 0.0
  %5368 = vmatpush1.msra.mxu0 %v2345
  %5369 = vmatprep.subr.mxu0 0.0
  %5370 = vmatpush1.msra.mxu0 %v2346
  %5371 = vmatprep.subr.mxu0 0.0
  %5372 = vmatpush1.msra.mxu0 %v2347
  %5373 = vmatprep.subr.mxu0 0.0
  %5374 = vmatpush1.msra.mxu0 %v2348
  %5375 = vmatprep.subr.mxu0 0.0
  %5376 = vmatpush1.msra.mxu0 0.0
  %5377 = vmatprep.subr.mxu0 0.0
  %5378 = vmatpush1.msra.mxu0 0.0
  %5379 = vmatprep.subr.mxu0 0.0
  %5380 = vmatpush1.msra.mxu0 0.0
  %5381 = vmatprep.subr.mxu0 0.0
  %5382 = vmatpush1.msra.mxu0 0.0
  %5383 = vmatprep.subr.mxu0 0.0
  %5384 = vmatpush1.msra.mxu0 0.0
  %5385 = vmatprep.subr.mxu0 0.0
  %5386 = vmatpush1.msra.mxu0 0.0
  %5387 = vmatprep.subr.mxu0 0.0
  %5388 = vmatpush1.msra.mxu0 0.0
  %5389 = vmatprep.subr.mxu0 0.0
  %5390 = vmatpush1.msra.mxu0 0.0
  %5391 = vmatprep.subr.mxu0 0.0
  %5392 = vmatpush1.msra.mxu0 0.0
  %5393 = vmatprep.subr.mxu0 0.0
  %5394 = vmatpush1.msra.mxu0 0.0
  %5395 = vmatprep.subr.mxu0 0.0
  %5396 = vmatpush1.msra.mxu0 0.0
  %5397 = vmatprep.subr.mxu0 0.0
  %5398 = vmatpush1.msra.mxu0 0.0
  %5399 = vmatprep.subr.mxu0 0.0
  %5400 = vmatpush1.msra.mxu0 0.0
  %5401 = vmatprep.subr.mxu0 0.0
  %5402 = vmatpush1.msra.mxu0 0.0
  %5403 = vmatprep.subr.mxu0 0.0
  %5404 = vmatpush1.msra.mxu0 0.0
  %5405 = vmatprep.subr.mxu0 0.0
  %5406 = vmatpush1.msra.mxu0 0.0
  %5407 = vmatprep.subr.mxu0 0.0
  %5408 = vmatpush1.msra.mxu0 0.0
  %5409 = vmatprep.subr.mxu0 0.0
  %5410 = vmatpush1.msra.mxu0 0.0
  %5411 = vmatprep.subr.mxu0 0.0
  %5412 = vmatpush1.msra.mxu0 0.0
  %5413 = vmatprep.subr.mxu0 0.0
  %5414 = vmatpush1.msra.mxu0 0.0
  %5415 = vmatprep.subr.mxu0 0.0
  %5416 = vmatpush1.msra.mxu0 0.0
  %5417 = vmatprep.subr.mxu0 0.0
  %5418 = vmatpush1.msra.mxu0 0.0
  %5419 = vmatprep.subr.mxu0 0.0
  %5420 = vmatpush1.msra.mxu0 0.0
  %5421 = vmatprep.subr.mxu0 0.0
  %5422 = vmatpush1.msra.mxu0 0.0
  %5423 = vmatprep.subr.mxu0 0.0
  %5424 = vmatpush1.msra.mxu0 0.0
  %5425 = vmatprep.subr.mxu0 0.0
  %5426 = vmatpush1.msra.mxu0 0.0
  %5427 = vmatprep.subr.mxu0 0.0
  %5428 = vmatpush1.msra.mxu0 0.0
  %5429 = vmatprep.subr.mxu0 0.0
  %5430 = vmatpush1.msra.mxu0 0.0
  %5431 = vmatprep.mubr.f32.mxu0 0.0
  %5432 = vmatmul.mubr.f32.gmra.mrb[0].mxu0 %v5365
  %v5433 = vpop.f32.mrb[0].mxu0
  %v5434 = vadd.f32 0.0, %v5433
  %v5435 = vpop.f32.mrb[0].mxu0
  %5436 = vdwg.mxu0
  %v5438 = vsel %vm68, %v5434, 0
  %5440 = vmatprep.subr.mxu0 0.0
  %5441 = vmatpush1.xpose.msra.mxu0 %v2816
  %5442 = vmatprep.subr.mxu0 0.0
  %5443 = vmatpush1.xpose.msra.mxu0 %v2819
  %5444 = vmatprep.subr.mxu0 0.0
  %5445 = vmatpush1.xpose.msra.mxu0 0.0
  %5446 = vmatprep.subr.mxu0 0.0
  %5447 = vmatpush1.xpose.msra.mxu0 0.0
  %5448 = vmatprep.subr.mxu0 0.0
  %5449 = vmatpush1.xpose.msra.mxu0 0.0
  %5450 = vmatprep.subr.mxu0 0.0
  %5451 = vmatpush1.xpose.msra.mxu0 0.0
  %5452 = vmatprep.subr.mxu0 0.0
  %5453 = vmatpush1.xpose.msra.mxu0 0.0
  %5454 = vmatprep.subr.mxu0 0.0
  %5455 = vmatpush1.xpose.msra.mxu0 0.0
  %5456 = vmatprep.subr.mxu0 0.0
  %5457 = vmatpush1.xpose.msra.mxu0 0.0
  %5458 = vmatprep.subr.mxu0 0.0
  %5459 = vmatpush1.xpose.msra.mxu0 0.0
  %5460 = vmatprep.subr.mxu0 0.0
  %5461 = vmatpush1.xpose.msra.mxu0 0.0
  %5462 = vmatprep.subr.mxu0 0.0
  %5463 = vmatpush1.xpose.msra.mxu0 0.0
  %5464 = vmatprep.subr.mxu0 0.0
  %5465 = vmatpush1.xpose.msra.mxu0 0.0
  %5466 = vmatprep.subr.mxu0 0.0
  %5467 = vmatpush1.xpose.msra.mxu0 0.0
  %5468 = vmatprep.subr.mxu0 0.0
  %5469 = vmatpush1.xpose.msra.mxu0 0.0
  %5470 = vmatprep.subr.mxu0 0.0
  %5471 = vmatpush1.xpose.msra.mxu0 0.0
  %5472 = vmatprep.subr.mxu0 0.0
  %5473 = vmatpush1.xpose.msra.mxu0 0.0
  %5474 = vmatprep.subr.mxu0 0.0
  %5475 = vmatpush1.xpose.msra.mxu0 0.0
  %5476 = vmatprep.subr.mxu0 0.0
  %5477 = vmatpush1.xpose.msra.mxu0 0.0
  %5478 = vmatprep.subr.mxu0 0.0
  %5479 = vmatpush1.xpose.msra.mxu0 0.0
  %5480 = vmatprep.subr.mxu0 0.0
  %5481 = vmatpush1.xpose.msra.mxu0 0.0
  %5482 = vmatprep.subr.mxu0 0.0
  %5483 = vmatpush1.xpose.msra.mxu0 0.0
  %5484 = vmatprep.subr.mxu0 0.0
  %5485 = vmatpush1.xpose.msra.mxu0 0.0
  %5486 = vmatprep.subr.mxu0 0.0
  %5487 = vmatpush1.xpose.msra.mxu0 0.0
  %5488 = vmatprep.subr.mxu0 0.0
  %5489 = vmatpush1.xpose.msra.mxu0 0.0
  %5490 = vmatprep.subr.mxu0 0.0
  %5491 = vmatpush1.xpose.msra.mxu0 0.0
  %5492 = vmatprep.subr.mxu0 0.0
  %5493 = vmatpush1.xpose.msra.mxu0 0.0
  %5494 = vmatprep.subr.mxu0 0.0
  %5495 = vmatpush1.xpose.msra.mxu0 0.0
  %5496 = vmatprep.subr.mxu0 0.0
  %5497 = vmatpush1.xpose.msra.mxu0 0.0
  %5498 = vmatprep.subr.mxu0 0.0
  %5499 = vmatpush1.xpose.msra.mxu0 0.0
  %5500 = vmatprep.subr.mxu0 0.0
  %5501 = vmatpush1.xpose.msra.mxu0 0.0
  %5502 = vmatprep.subr.mxu0 0.0
  %5503 = vmatpush1.xpose.msra.mxu0 0.0
  %5504 = vmatprep.mubr.f32.mxu0 0.0
  %5505 = vmatmul.mubr.f32.gmra.mrb[0].mxu0 %v5438
  %v5506 = vpop.f32.mrb[0].mxu0
  %v5507 = vadd.f32 %v2259, %v5506
  %v5508 = vpop.f32.mrb[0].mxu0
  %5509 = vdwg.mxu0
  %v5510 = vsel %vm2891, %v5507, -inf
  %5511 = vmax.xlane.f32.xlu0 %v5510
  %v5512 = vpop.xlane.xlu0 %5511
  %v5513 = vsub.f32 %v5507, %v5512
  %v5514 = vmul.f32 %v5513, 1.442695
  %v5515 = vpow.pop %v5514
  %v5516 = vsel %vm2891, %v5515, 0.0
  %5517 = vadd.xlane.f32.xlu0 %v5516
  %v5518 = vpop.xlane.xlu0 %5517
  %v5519 = vrcp.pop %v5518
  %v5520 = vmul.f32 %v5515, %v5519
  %v5522 = vsel %vm1097, %v5520, 0
  %5524 = vmatprep.subr.mxu0 0.0
  %5525 = vmatpush1.msra.mxu0 %v2255
  %5526 = vmatprep.subr.mxu0 0.0
  %5527 = vmatpush1.msra.mxu0 %v2258
  %5528 = vmatprep.subr.mxu0 0.0
  %5529 = vmatpush1.msra.mxu0 0.0
  %5530 = vmatprep.subr.mxu0 0.0
  %5531 = vmatpush1.msra.mxu0 0.0
  %5532 = vmatprep.subr.mxu0 0.0
  %5533 = vmatpush1.msra.mxu0 0.0
  %5534 = vmatprep.subr.mxu0 0.0
  %5535 = vmatpush1.msra.mxu0 0.0
  %5536 = vmatprep.subr.mxu0 0.0
  %5537 = vmatpush1.msra.mxu0 0.0
  %5538 = vmatprep.subr.mxu0 0.0
  %5539 = vmatpush1.msra.mxu0 0.0
  %5540 = vmatprep.subr.mxu0 0.0
  %5541 = vmatpush1.msra.mxu0 0.0
  %5542 = vmatprep.subr.mxu0 0.0
  %5543 = vmatpush1.msra.mxu0 0.0
  %5544 = vmatprep.subr.mxu0 0.0
  %5545 = vmatpush1.msra.mxu0 0.0
  %5546 = vmatprep.subr.mxu0 0.0
  %5547 = vmatpush1.msra.mxu0 0.0
  %5548 = vmatprep.subr.mxu0 0.0
  %5549 = vmatpush1.msra.mxu0 0.0
  %5550 = vmatprep.subr.mxu0 0.0
  %5551 = vmatpush1.msra.mxu0 0.0
  %5552 = vmatprep.subr.mxu0 0.0
  %5553 = vmatpush1.msra.mxu0 0.0
  %5554 = vmatprep.subr.mxu0 0.0
  %5555 = vmatpush1.msra.mxu0 0.0
  %5556 = vmatprep.subr.mxu0 0.0
  %5557 = vmatpush1.msra.mxu0 0.0
  %5558 = vmatprep.subr.mxu0 0.0
  %5559 = vmatpush1.msra.mxu0 0.0
  %5560 = vmatprep.subr.mxu0 0.0
  %5561 = vmatpush1.msra.mxu0 0.0
  %5562 = vmatprep.subr.mxu0 0.0
  %5563 = vmatpush1.msra.mxu0 0.0
  %5564 = vmatprep.subr.mxu0 0.0
  %5565 = vmatpush1.msra.mxu0 0.0
  %5566 = vmatprep.subr.mxu0 0.0
  %5567 = vmatpush1.msra.mxu0 0.0
  %5568 = vmatprep.subr.mxu0 0.0
  %5569 = vmatpush1.msra.mxu0 0.0
  %5570 = vmatprep.subr.mxu0 0.0
  %5571 = vmatpush1.msra.mxu0 0.0
  %5572 = vmatprep.subr.mxu0 0.0
  %5573 = vmatpush1.msra.mxu0 0.0
  %5574 = vmatprep.subr.mxu0 0.0
  %5575 = vmatpush1.msra.mxu0 0.0
  %5576 = vmatprep.subr.mxu0 0.0
  %5577 = vmatpush1.msra.mxu0 0.0
  %5578 = vmatprep.subr.mxu0 0.0
  %5579 = vmatpush1.msra.mxu0 0.0
  %5580 = vmatprep.subr.mxu0 0.0
  %5581 = vmatpush1.msra.mxu0 0.0
  %5582 = vmatprep.subr.mxu0 0.0
  %5583 = vmatpush1.msra.mxu0 0.0
  %5584 = vmatprep.subr.mxu0 0.0
  %5585 = vmatpush1.msra.mxu0 0.0
  %5586 = vmatprep.subr.mxu0 0.0
  %5587 = vmatpush1.msra.mxu0 0.0
  %5588 = vmatprep.mubr.f32.mxu0 0.0
  %5589 = vmatmul.mubr.f32.gmra.mrb[0].mxu0 %v5522
  %v5590 = vpop.f32.mrb[0].mxu0
  %v5591 = vadd.f32 0.0, %v5590
  %v5592 = vpop.f32.mrb[0].mxu0
  %5593 = vdwg.mxu0
  %5596 = vrot.lane.b32.xlu0 %v5591, 32
  %v5597 = vpop.permute.xlu0 %5596
  %v5599 = vsel %vm68, %v5364, %v5597
  %v5601 = vsel %vm2988, %v5599, 0
  %5603 = vmatprep.subr.mxu0 0.0
  %5604 = vmatpush1.msra.mxu0 %v2349
  %5605 = vmatprep.subr.mxu0 0.0
  %5606 = vmatpush1.msra.mxu0 %v2350
  %5607 = vmatprep.subr.mxu0 0.0
  %5608 = vmatpush1.msra.mxu0 %v2351
  %5609 = vmatprep.subr.mxu0 0.0
  %5610 = vmatpush1.msra.mxu0 %v2352
  %5611 = vmatprep.subr.mxu0 0.0
  %5612 = vmatpush1.msra.mxu0 %v2353
  %5613 = vmatprep.subr.mxu0 0.0
  %5614 = vmatpush1.msra.mxu0 %v2354
  %5615 = vmatprep.subr.mxu0 0.0
  %5616 = vmatpush1.msra.mxu0 %v2355
  %5617 = vmatprep.subr.mxu0 0.0
  %5618 = vmatpush1.msra.mxu0 %v2356
  %5619 = vmatprep.subr.mxu0 0.0
  %5620 = vmatpush1.msra.mxu0 0.0
  %5621 = vmatprep.subr.mxu0 0.0
  %5622 = vmatpush1.msra.mxu0 0.0
  %5623 = vmatprep.subr.mxu0 0.0
  %5624 = vmatpush1.msra.mxu0 0.0
  %5625 = vmatprep.subr.mxu0 0.0
  %5626 = vmatpush1.msra.mxu0 0.0
  %5627 = vmatprep.subr.mxu0 0.0
  %5628 = vmatpush1.msra.mxu0 0.0
  %5629 = vmatprep.subr.mxu0 0.0
  %5630 = vmatpush1.msra.mxu0 0.0
  %5631 = vmatprep.subr.mxu0 0.0
  %5632 = vmatpush1.msra.mxu0 0.0
  %5633 = vmatprep.subr.mxu0 0.0
  %5634 = vmatpush1.msra.mxu0 0.0
  %5635 = vmatprep.subr.mxu0 0.0
  %5636 = vmatpush1.msra.mxu0 0.0
  %5637 = vmatprep.subr.mxu0 0.0
  %5638 = vmatpush1.msra.mxu0 0.0
  %5639 = vmatprep.subr.mxu0 0.0
  %5640 = vmatpush1.msra.mxu0 0.0
  %5641 = vmatprep.subr.mxu0 0.0
  %5642 = vmatpush1.msra.mxu0 0.0
  %5643 = vmatprep.subr.mxu0 0.0
  %5644 = vmatpush1.msra.mxu0 0.0
  %5645 = vmatprep.subr.mxu0 0.0
  %5646 = vmatpush1.msra.mxu0 0.0
  %5647 = vmatprep.subr.mxu0 0.0
  %5648 = vmatpush1.msra.mxu0 0.0
  %5649 = vmatprep.subr.mxu0 0.0
  %5650 = vmatpush1.msra.mxu0 0.0
  %5651 = vmatprep.subr.mxu0 0.0
  %5652 = vmatpush1.msra.mxu0 0.0
  %5653 = vmatprep.subr.mxu0 0.0
  %5654 = vmatpush1.msra.mxu0 0.0
  %5655 = vmatprep.subr.mxu0 0.0
  %5656 = vmatpush1.msra.mxu0 0.0
  %5657 = vmatprep.subr.mxu0 0.0
  %5658 = vmatpush1.msra.mxu0 0.0
  %5659 = vmatprep.subr.mxu0 0.0
  %5660 = vmatpush1.msra.mxu0 0.0
  %5661 = vmatprep.subr.mxu0 0.0
  %5662 = vmatpush1.msra.mxu0 0.0
  %5663 = vmatprep.subr.mxu0 0.0
  %5664 = vmatpush1.msra.mxu0 0.0
  %5665 = vmatprep.subr.mxu0 0.0
  %5666 = vmatpush1.msra.mxu0 0.0
  %5667 = vmatprep.mubr.f32.mxu0 0.0
  %5668 = vmatmul.mubr.f32.gmra.mrb[0].mxu0 %v5601
  %v5669 = vpop.f32.mrb[0].mxu0
  %v5670 = vadd.f32 %v2986, %v5669
  %v5671 = vpop.f32.mrb[0].mxu0
  %5672 = vdwg.mxu0
  %v5673 = vtanh.pop %v5670
  %5674 = vmatprep.subr.mxu0 0.0
  %5675 = vmatpush1.msra.mxu0 %v2362
  %5676 = vmatprep.subr.mxu0 0.0
  %5677 = vmatpush1.msra.mxu0 %v2363
  %5678 = vmatprep.subr.mxu0 0.0
  %5679 = vmatpush1.msra.mxu0 %v2364
  %5680 = vmatprep.subr.mxu0 0.0
  %5681 = vmatpush1.msra.mxu0 %v2365
  %5682 = vmatprep.subr.mxu0 0.0
  %5683 = vmatpush1.msra.mxu0 0.0
  %5684 = vmatprep.subr.mxu0 0.0
  %5685 = vmatpush1.msra.mxu0 0.0
  %5686 = vmatprep.subr.mxu0 0.0
  %5687 = vmatpush1.msra.mxu0 0.0
  %5688 = vmatprep.subr.mxu0 0.0
  %5689 = vmatpush1.msra.mxu0 0.0
  %5690 = vmatprep.subr.mxu0 0.0
  %5691 = vmatpush1.msra.mxu0 0.0
  %5692 = vmatprep.subr.mxu0 0.0
  %5693 = vmatpush1.msra.mxu0 0.0
  %5694 = vmatprep.subr.mxu0 0.0
  %5695 = vmatpush1.msra.mxu0 0.0
  %5696 = vmatprep.subr.mxu0 0.0
  %5697 = vmatpush1.msra.mxu0 0.0
  %5698 = vmatprep.subr.mxu0 0.0
  %5699 = vmatpush1.msra.mxu0 0.0
  %5700 = vmatprep.subr.mxu0 0.0
  %5701 = vmatpush1.msra.mxu0 0.0
  %5702 = vmatprep.subr.mxu0 0.0
  %5703 = vmatpush1.msra.mxu0 0.0
  %5704 = vmatprep.subr.mxu0 0.0
  %5705 = vmatpush1.msra.mxu0 0.0
  %5706 = vmatprep.subr.mxu0 0.0
  %5707 = vmatpush1.msra.mxu0 0.0
  %5708 = vmatprep.subr.mxu0 0.0
  %5709 = vmatpush1.msra.mxu0 0.0
  %5710 = vmatprep.subr.mxu0 0.0
  %5711 = vmatpush1.msra.mxu0 0.0
  %5712 = vmatprep.subr.mxu0 0.0
  %5713 = vmatpush1.msra.mxu0 0.0
  %5714 = vmatprep.subr.mxu0 0.0
  %5715 = vmatpush1.msra.mxu0 0.0
  %5716 = vmatprep.subr.mxu0 0.0
  %5717 = vmatpush1.msra.mxu0 0.0
  %5718 = vmatprep.subr.mxu0 0.0
  %5719 = vmatpush1.msra.mxu0 0.0
  %5720 = vmatprep.subr.mxu0 0.0
  %5721 = vmatpush1.msra.mxu0 0.0
  %5722 = vmatprep.subr.mxu0 0.0
  %5723 = vmatpush1.msra.mxu0 0.0
  %5724 = vmatprep.subr.mxu0 0.0
  %5725 = vmatpush1.msra.mxu0 0.0
  %5726 = vmatprep.subr.mxu0 0.0
  %5727 = vmatpush1.msra.mxu0 0.0
  %5728 = vmatprep.subr.mxu0 0.0
  %5729 = vmatpush1.msra.mxu0 0.0
  %5730 = vmatprep.subr.mxu0 0.0
  %5731 = vmatpush1.msra.mxu0 0.0
  %5732 = vmatprep.subr.mxu0 0.0
  %5733 = vmatpush1.msra.mxu0 0.0
  %5734 = vmatprep.subr.mxu0 0.0
  %5735 = vmatpush1.msra.mxu0 0.0
  %5736 = vmatprep.subr.mxu0 0.0
  %5737 = vmatpush1.msra.mxu0 0.0
  %5738 = vmatprep.mubr.f32.mxu0 0.0
  %5739 = vmatmul.mubr.f32.gmra.mrb[0].mxu0 %v5265
  %v5740 = vpop.f32.mrb[0].mxu0
  %v5741 = vadd.f32 0.0, %v5740
  %v5742 = vpop.f32.mrb[0].mxu0
  %5743 = vdwg.mxu0
  %v5745 = vsel %vm68, %v5673, 0
  %5747 = vmatprep.subr.mxu0 0.0
  %5748 = vmatpush1.msra.mxu0 %v2358
  %5749 = vmatprep.subr.mxu0 0.0
  %5750 = vmatpush1.msra.mxu0 %v2359
  %5751 = vmatprep.subr.mxu0 0.0
  %5752 = vmatpush1.msra.mxu0 %v2360
  %5753 = vmatprep.subr.mxu0 0.0
  %5754 = vmatpush1.msra.mxu0 %v2361
  %5755 = vmatprep.subr.mxu0 0.0
  %5756 = vmatpush1.msra.mxu0 0.0
  %5757 = vmatprep.subr.mxu0 0.0
  %5758 = vmatpush1.msra.mxu0 0.0
  %5759 = vmatprep.subr.mxu0 0.0
  %5760 = vmatpush1.msra.mxu0 0.0
  %5761 = vmatprep.subr.mxu0 0.0
  %5762 = vmatpush1.msra.mxu0 0.0
  %5763 = vmatprep.subr.mxu0 0.0
  %5764 = vmatpush1.msra.mxu0 0.0
  %5765 = vmatprep.subr.mxu0 0.0
  %5766 = vmatpush1.msra.mxu0 0.0
  %5767 = vmatprep.subr.mxu0 0.0
  %5768 = vmatpush1.msra.mxu0 0.0
  %5769 = vmatprep.subr.mxu0 0.0
  %5770 = vmatpush1.msra.mxu0 0.0
  %5771 = vmatprep.subr.mxu0 0.0
  %5772 = vmatpush1.msra.mxu0 0.0
  %5773 = vmatprep.subr.mxu0 0.0
  %5774 = vmatpush1.msra.mxu0 0.0
  %5775 = vmatprep.subr.mxu0 0.0
  %5776 = vmatpush1.msra.mxu0 0.0
  %5777 = vmatprep.subr.mxu0 0.0
  %5778 = vmatpush1.msra.mxu0 0.0
  %5779 = vmatprep.subr.mxu0 0.0
  %5780 = vmatpush1.msra.mxu0 0.0
  %5781 = vmatprep.subr.mxu0 0.0
  %5782 = vmatpush1.msra.mxu0 0.0
  %5783 = vmatprep.subr.mxu0 0.0
  %5784 = vmatpush1.msra.mxu0 0.0
  %5785 = vmatprep.subr.mxu0 0.0
  %5786 = vmatpush1.msra.mxu0 0.0
  %5787 = vmatprep.subr.mxu0 0.0
  %5788 = vmatpush1.msra.mxu0 0.0
  %5789 = vmatprep.subr.mxu0 0.0
  %5790 = vmatpush1.msra.mxu0 0.0
  %5791 = vmatprep.subr.mxu0 0.0
  %5792 = vmatpush1.msra.mxu0 0.0
  %5793 = vmatprep.subr.mxu0 0.0
  %5794 = vmatpush1.msra.mxu0 0.0
  %5795 = vmatprep.subr.mxu0 0.0
  %5796 = vmatpush1.msra.mxu0 0.0
  %5797 = vmatprep.subr.mxu0 0.0
  %5798 = vmatpush1.msra.mxu0 0.0
  %5799 = vmatprep.subr.mxu0 0.0
  %5800 = vmatpush1.msra.mxu0 0.0
  %5801 = vmatprep.subr.mxu0 0.0
  %5802 = vmatpush1.msra.mxu0 0.0
  %5803 = vmatprep.subr.mxu0 0.0
  %5804 = vmatpush1.msra.mxu0 0.0
  %5805 = vmatprep.subr.mxu0 0.0
  %5806 = vmatpush1.msra.mxu0 0.0
  %5807 = vmatprep.subr.mxu0 0.0
  %5808 = vmatpush1.msra.mxu0 0.0
  %5809 = vmatprep.subr.mxu0 0.0
  %5810 = vmatpush1.msra.mxu0 0.0
  %5811 = vmatprep.mubr.f32.mxu0 0.0
  %5812 = vmatmul.mubr.f32.gmra.mrb[0].mxu0 %v5745
  %v5813 = vpop.f32.mrb[0].mxu0
  %v5814 = vadd.f32 %v5741, %v5813
  %v5815 = vpop.f32.mrb[0].mxu0
  %5816 = vdwg.mxu0
  %v5817 = vadd.f32 %v5814, %v2513
  %v5819 = vrot.slane %v2342, 2
  %v5821 = vadd.f32 %v5817, %v5819
  %v5822 = vxor.u32 %v5821, 2147483648
  %v5823 = vmul.f32 %v5822, 1.442695
  %v5824 = vpow.pop %v5823
  %v5825 = vadd.f32 %v5824, 1.0
  %v5826 = vrcp.pop %v5825
  %v5827 = vmul.f32 1.0, %v5826
  %v5828 = vtanh.pop %v5821
  %v5829 = vmul.f32 %v5827, %v5185
  %5831 = vrot.lane.b32.xlu0 %v5828, 64
  %v5832 = vpop.permute.xlu0 %5831
  %v5834 = vmul.f32 %v5827, %v5832
  %5836 = vrot.lane.b32.xlu0 %v5834, 32
  %v5837 = vpop.permute.xlu0 %5836
  %v5839 = vadd.f32 %v5829, %v5837
  %v5840 = vtanh.pop %v5839
  %5842 = vrot.lane.b32.xlu0 %v5840, 64
  %v5843 = vpop.permute.xlu0 %5842
  %v5845 = vmul.f32 %v5827, %v5843
  %5846 = vmatprep.subr.mxu0 0.0
  %5847 = vmatpush1.msra.mxu0 %v2550
  %5848 = vmatprep.subr.mxu0 0.0
  %5849 = vmatpush1.msra.mxu0 %v2551
  %5850 = vmatprep.subr.mxu0 0.0
  %5851 = vmatpush1.msra.mxu0 %v2552
  %5852 = vmatprep.subr.mxu0 0.0
  %5853 = vmatpush1.msra.mxu0 %v2553
  %5854 = vmatprep.subr.mxu0 0.0
  %5855 = vmatpush1.msra.mxu0 0.0
  %5856 = vmatprep.subr.mxu0 0.0
  %5857 = vmatpush1.msra.mxu0 0.0
  %5858 = vmatprep.subr.mxu0 0.0
  %5859 = vmatpush1.msra.mxu0 0.0
  %5860 = vmatprep.subr.mxu0 0.0
  %5861 = vmatpush1.msra.mxu0 0.0
  %5862 = vmatprep.subr.mxu0 0.0
  %5863 = vmatpush1.msra.mxu0 0.0
  %5864 = vmatprep.subr.mxu0 0.0
  %5865 = vmatpush1.msra.mxu0 0.0
  %5866 = vmatprep.subr.mxu0 0.0
  %5867 = vmatpush1.msra.mxu0 0.0
  %5868 = vmatprep.subr.mxu0 0.0
  %5869 = vmatpush1.msra.mxu0 0.0
  %5870 = vmatprep.subr.mxu0 0.0
  %5871 = vmatpush1.msra.mxu0 0.0
  %5872 = vmatprep.subr.mxu0 0.0
  %5873 = vmatpush1.msra.mxu0 0.0
  %5874 = vmatprep.subr.mxu0 0.0
  %5875 = vmatpush1.msra.mxu0 0.0
  %5876 = vmatprep.subr.mxu0 0.0
  %5877 = vmatpush1.msra.mxu0 0.0
  %5878 = vmatprep.subr.mxu0 0.0
  %5879 = vmatpush1.msra.mxu0 0.0
  %5880 = vmatprep.subr.mxu0 0.0
  %5881 = vmatpush1.msra.mxu0 0.0
  %5882 = vmatprep.subr.mxu0 0.0
  %5883 = vmatpush1.msra.mxu0 0.0
  %5884 = vmatprep.subr.mxu0 0.0
  %5885 = vmatpush1.msra.mxu0 0.0
  %5886 = vmatprep.subr.mxu0 0.0
  %5887 = vmatpush1.msra.mxu0 0.0
  %5888 = vmatprep.subr.mxu0 0.0
  %5889 = vmatpush1.msra.mxu0 0.0
  %5890 = vmatprep.subr.mxu0 0.0
  %5891 = vmatpush1.msra.mxu0 0.0
  %5892 = vmatprep.subr.mxu0 0.0
  %5893 = vmatpush1.msra.mxu0 0.0
  %5894 = vmatprep.subr.mxu0 0.0
  %5895 = vmatpush1.msra.mxu0 0.0
  %5896 = vmatprep.subr.mxu0 0.0
  %5897 = vmatpush1.msra.mxu0 0.0
  %5898 = vmatprep.subr.mxu0 0.0
  %5899 = vmatpush1.msra.mxu0 0.0
  %5900 = vmatprep.subr.mxu0 0.0
  %5901 = vmatpush1.msra.mxu0 0.0
  %5902 = vmatprep.subr.mxu0 0.0
  %5903 = vmatpush1.msra.mxu0 0.0
  %5904 = vmatprep.subr.mxu0 0.0
  %5905 = vmatpush1.msra.mxu0 0.0
  %5906 = vmatprep.subr.mxu0 0.0
  %5907 = vmatpush1.msra.mxu0 0.0
  %5908 = vmatprep.subr.mxu0 0.0
  %5909 = vmatpush1.msra.mxu0 0.0
  %5910 = vmatprep.mubr.f32.mxu0 0.0
  %5911 = vmatmul.mubr.f32.gmra.mrb[0].mxu0 %v5365
  %v5912 = vpop.f32.mrb[0].mxu0
  %v5913 = vadd.f32 0.0, %v5912
  %v5914 = vpop.f32.mrb[0].mxu0
  %5915 = vdwg.mxu0
  %5917 = vrot.lane.b32.xlu0 %v5845, 32
  %v5918 = vpop.permute.xlu0 %5917
  %v5919 = vsel %vm68, %v5918, 0
  %5921 = vmatprep.subr.mxu0 0.0
  %5922 = vmatpush1.msra.mxu0 %v2545
  %5923 = vmatprep.subr.mxu0 0.0
  %5924 = vmatpush1.msra.mxu0 %v2546
  %5925 = vmatprep.subr.mxu0 0.0
  %5926 = vmatpush1.msra.mxu0 %v2547
  %5927 = vmatprep.subr.mxu0 0.0
  %5928 = vmatpush1.msra.mxu0 %v2548
  %5929 = vmatprep.subr.mxu0 0.0
  %5930 = vmatpush1.msra.mxu0 0.0
  %5931 = vmatprep.subr.mxu0 0.0
  %5932 = vmatpush1.msra.mxu0 0.0
  %5933 = vmatprep.subr.mxu0 0.0
  %5934 = vmatpush1.msra.mxu0 0.0
  %5935 = vmatprep.subr.mxu0 0.0
  %5936 = vmatpush1.msra.mxu0 0.0
  %5937 = vmatprep.subr.mxu0 0.0
  %5938 = vmatpush1.msra.mxu0 0.0
  %5939 = vmatprep.subr.mxu0 0.0
  %5940 = vmatpush1.msra.mxu0 0.0
  %5941 = vmatprep.subr.mxu0 0.0
  %5942 = vmatpush1.msra.mxu0 0.0
  %5943 = vmatprep.subr.mxu0 0.0
  %5944 = vmatpush1.msra.mxu0 0.0
  %5945 = vmatprep.subr.mxu0 0.0
  %5946 = vmatpush1.msra.mxu0 0.0
  %5947 = vmatprep.subr.mxu0 0.0
  %5948 = vmatpush1.msra.mxu0 0.0
  %5949 = vmatprep.subr.mxu0 0.0
  %5950 = vmatpush1.msra.mxu0 0.0
  %5951 = vmatprep.subr.mxu0 0.0
  %5952 = vmatpush1.msra.mxu0 0.0
  %5953 = vmatprep.subr.mxu0 0.0
  %5954 = vmatpush1.msra.mxu0 0.0
  %5955 = vmatprep.subr.mxu0 0.0
  %5956 = vmatpush1.msra.mxu0 0.0
  %5957 = vmatprep.subr.mxu0 0.0
  %5958 = vmatpush1.msra.mxu0 0.0
  %5959 = vmatprep.subr.mxu0 0.0
  %5960 = vmatpush1.msra.mxu0 0.0
  %5961 = vmatprep.subr.mxu0 0.0
  %5962 = vmatpush1.msra.mxu0 0.0
  %5963 = vmatprep.subr.mxu0 0.0
  %5964 = vmatpush1.msra.mxu0 0.0
  %5965 = vmatprep.subr.mxu0 0.0
  %5966 = vmatpush1.msra.mxu0 0.0
  %5967 = vmatprep.subr.mxu0 0.0
  %5968 = vmatpush1.msra.mxu0 0.0
  %5969 = vmatprep.subr.mxu0 0.0
  %5970 = vmatpush1.msra.mxu0 0.0
  %5971 = vmatprep.subr.mxu0 0.0
  %5972 = vmatpush1.msra.mxu0 0.0
  %5973 = vmatprep.subr.mxu0 0.0
  %5974 = vmatpush1.msra.mxu0 0.0
  %5975 = vmatprep.subr.mxu0 0.0
  %5976 = vmatpush1.msra.mxu0 0.0
  %5977 = vmatprep.subr.mxu0 0.0
  %5978 = vmatpush1.msra.mxu0 0.0
  %5979 = vmatprep.subr.mxu0 0.0
  %5980 = vmatpush1.msra.mxu0 0.0
  %5981 = vmatprep.subr.mxu0 0.0
  %5982 = vmatpush1.msra.mxu0 0.0
  %5983 = vmatprep.subr.mxu0 0.0
  %5984 = vmatpush1.msra.mxu0 0.0
  %5985 = vmatprep.mubr.f32.mxu0 0.0
  %5986 = vmatmul.mubr.f32.gmra.mrb[0].mxu0 %v5919
  %v5987 = vpop.f32.mrb[0].mxu0
  %v5988 = vadd.f32 %v5913, %v5987
  %v5989 = vpop.f32.mrb[0].mxu0
  %5990 = vdwg.mxu0
  %v5991 = vadd.f32 %v5988, %v2707
  %v5992 = vxor.u32 %v5991, 2147483648
  %v5993 = vmul.f32 %v5992, 1.442695
  %v5994 = vpow.pop %v5993
  %v5995 = vadd.f32 %v5994, 1.0
  %v5996 = vrcp.pop %v5995
  %v5997 = vmul.f32 1.0, %v5996
  %v5998 = vtanh.pop %v5991
  %v5999 = vmul.f32 %v5997, %v5355
  %6001 = vrot.lane.b32.xlu0 %v5998, 64
  %v6002 = vpop.permute.xlu0 %6001
  %v6004 = vmul.f32 %v5997, %v6002
  %6006 = vrot.lane.b32.xlu0 %v6004, 32
  %v6007 = vpop.permute.xlu0 %6006
  %v6009 = vadd.f32 %v5999, %v6007
  %v6010 = vtanh.pop %v6009
  %6012 = vrot.lane.b32.xlu0 %v6010, 64
  %v6013 = vpop.permute.xlu0 %6012
  %v6015 = vmul.f32 %v5997, %v6013
  %6017 = vrot.lane.b32.xlu0 %v6015, 32
  %v6018 = vpop.permute.xlu0 %6017
  %v6019 = vsel %vm68, %v6018, 0
  %6021 = vmatprep.subr.mxu0 0.0
  %6022 = vmatpush1.msra.mxu0 %v2345
  %6023 = vmatprep.subr.mxu0 0.0
  %6024 = vmatpush1.msra.mxu0 %v2346
  %6025 = vmatprep.subr.mxu0 0.0
  %6026 = vmatpush1.msra.mxu0 %v2347
  %6027 = vmatprep.subr.mxu0 0.0
  %6028 = vmatpush1.msra.mxu0 %v2348
  %6029 = vmatprep.subr.mxu0 0.0
  %6030 = vmatpush1.msra.mxu0 0.0
  %6031 = vmatprep.subr.mxu0 0.0
  %6032 = vmatpush1.msra.mxu0 0.0
  %6033 = vmatprep.subr.mxu0 0.0
  %6034 = vmatpush1.msra.mxu0 0.0
  %6035 = vmatprep.subr.mxu0 0.0
  %6036 = vmatpush1.msra.mxu0 0.0
  %6037 = vmatprep.subr.mxu0 0.0
  %6038 = vmatpush1.msra.mxu0 0.0
  %6039 = vmatprep.subr.mxu0 0.0
  %6040 = vmatpush1.msra.mxu0 0.0
  %6041 = vmatprep.subr.mxu0 0.0
  %6042 = vmatpush1.msra.mxu0 0.0
  %6043 = vmatprep.subr.mxu0 0.0
  %6044 = vmatpush1.msra.mxu0 0.0
  %6045 = vmatprep.subr.mxu0 0.0
  %6046 = vmatpush1.msra.mxu0 0.0
  %6047 = vmatprep.subr.mxu0 0.0
  %6048 = vmatpush1.msra.mxu0 0.0
  %6049 = vmatprep.subr.mxu0 0.0
  %6050 = vmatpush1.msra.mxu0 0.0
  %6051 = vmatprep.subr.mxu0 0.0
  %6052 = vmatpush1.msra.mxu0 0.0
  %6053 = vmatprep.subr.mxu0 0.0
  %6054 = vmatpush1.msra.mxu0 0.0
  %6055 = vmatprep.subr.mxu0 0.0
  %6056 = vmatpush1.msra.mxu0 0.0
  %6057 = vmatprep.subr.mxu0 0.0
  %6058 = vmatpush1.msra.mxu0 0.0
  %6059 = vmatprep.subr.mxu0 0.0
  %6060 = vmatpush1.msra.mxu0 0.0
  %6061 = vmatprep.subr.mxu0 0.0
  %6062 = vmatpush1.msra.mxu0 0.0
  %6063 = vmatprep.subr.mxu0 0.0
  %6064 = vmatpush1.msra.mxu0 0.0
  %6065 = vmatprep.subr.mxu0 0.0
  %6066 = vmatpush1.msra.mxu0 0.0
  %6067 = vmatprep.subr.mxu0 0.0
  %6068 = vmatpush1.msra.mxu0 0.0
  %6069 = vmatprep.subr.mxu0 0.0
  %6070 = vmatpush1.msra.mxu0 0.0
  %6071 = vmatprep.subr.mxu0 0.0
  %6072 = vmatpush1.msra.mxu0 0.0
  %6073 = vmatprep.subr.mxu0 0.0
  %6074 = vmatpush1.msra.mxu0 0.0
  %6075 = vmatprep.subr.mxu0 0.0
  %6076 = vmatpush1.msra.mxu0 0.0
  %6077 = vmatprep.subr.mxu0 0.0
  %6078 = vmatpush1.msra.mxu0 0.0
  %6079 = vmatprep.subr.mxu0 0.0
  %6080 = vmatpush1.msra.mxu0 0.0
  %6081 = vmatprep.subr.mxu0 0.0
  %6082 = vmatpush1.msra.mxu0 0.0
  %6083 = vmatprep.subr.mxu0 0.0
  %6084 = vmatpush1.msra.mxu0 0.0
  %6085 = vmatprep.mubr.f32.mxu0 0.0
  %6086 = vmatmul.mubr.f32.gmra.mrb[0].mxu0 %v6019
  %v6087 = vpop.f32.mrb[0].mxu0
  %v6088 = vadd.f32 0.0, %v6087
  %v6089 = vpop.f32.mrb[0].mxu0
  %6090 = vdwg.mxu0
  %v6092 = vsel %vm68, %v6088, 0
  %6094 = vmatprep.subr.mxu0 0.0
  %6095 = vmatpush1.xpose.msra.mxu0 %v2816
  %6096 = vmatprep.subr.mxu0 0.0
  %6097 = vmatpush1.xpose.msra.mxu0 %v2819
  %6098 = vmatprep.subr.mxu0 0.0
  %6099 = vmatpush1.xpose.msra.mxu0 0.0
  %6100 = vmatprep.subr.mxu0 0.0
  %6101 = vmatpush1.xpose.msra.mxu0 0.0
  %6102 = vmatprep.subr.mxu0 0.0
  %6103 = vmatpush1.xpose.msra.mxu0 0.0
  %6104 = vmatprep.subr.mxu0 0.0
  %6105 = vmatpush1.xpose.msra.mxu0 0.0
  %6106 = vmatprep.subr.mxu0 0.0
  %6107 = vmatpush1.xpose.msra.mxu0 0.0
  %6108 = vmatprep.subr.mxu0 0.0
  %6109 = vmatpush1.xpose.msra.mxu0 0.0
  %6110 = vmatprep.subr.mxu0 0.0
  %6111 = vmatpush1.xpose.msra.mxu0 0.0
  %6112 = vmatprep.subr.mxu0 0.0
  %6113 = vmatpush1.xpose.msra.mxu0 0.0
  %6114 = vmatprep.subr.mxu0 0.0
  %6115 = vmatpush1.xpose.msra.mxu0 0.0
  %6116 = vmatprep.subr.mxu0 0.0
  %6117 = vmatpush1.xpose.msra.mxu0 0.0
  %6118 = vmatprep.subr.mxu0 0.0
  %6119 = vmatpush1.xpose.msra.mxu0 0.0
  %6120 = vmatprep.subr.mxu0 0.0
  %6121 = vmatpush1.xpose.msra.mxu0 0.0
  %6122 = vmatprep.subr.mxu0 0.0
  %6123 = vmatpush1.xpose.msra.mxu0 0.0
  %6124 = vmatprep.subr.mxu0 0.0
  %6125 = vmatpush1.xpose.msra.mxu0 0.0
  %6126 = vmatprep.subr.mxu0 0.0
  %6127 = vmatpush1.xpose.msra.mxu0 0.0
  %6128 = vmatprep.subr.mxu0 0.0
  %6129 = vmatpush1.xpose.msra.mxu0 0.0
  %6130 = vmatprep.subr.mxu0 0.0
  %6131 = vmatpush1.xpose.msra.mxu0 0.0
  %6132 = vmatprep.subr.mxu0 0.0
  %6133 = vmatpush1.xpose.msra.mxu0 0.0
  %6134 = vmatprep.subr.mxu0 0.0
  %6135 = vmatpush1.xpose.msra.mxu0 0.0
  %6136 = vmatprep.subr.mxu0 0.0
  %6137 = vmatpush1.xpose.msra.mxu0 0.0
  %6138 = vmatprep.subr.mxu0 0.0
  %6139 = vmatpush1.xpose.msra.mxu0 0.0
  %6140 = vmatprep.subr.mxu0 0.0
  %6141 = vmatpush1.xpose.msra.mxu0 0.0
  %6142 = vmatprep.subr.mxu0 0.0
  %6143 = vmatpush1.xpose.msra.mxu0 0.0
  %6144 = vmatprep.subr.mxu0 0.0
  %6145 = vmatpush1.xpose.msra.mxu0 0.0
  %6146 = vmatprep.subr.mxu0 0.0
  %6147 = vmatpush1.xpose.msra.mxu0 0.0
  %6148 = vmatprep.subr.mxu0 0.0
  %6149 = vmatpush1.xpose.msra.mxu0 0.0
  %6150 = vmatprep.subr.mxu0 0.0
  %6151 = vmatpush1.xpose.msra.mxu0 0.0
  %6152 = vmatprep.subr.mxu0 0.0
  %6153 = vmatpush1.xpose.msra.mxu0 0.0
  %6154 = vmatprep.subr.mxu0 0.0
  %6155 = vmatpush1.xpose.msra.mxu0 0.0
  %6156 = vmatprep.subr.mxu0 0.0
  %6157 = vmatpush1.xpose.msra.mxu0 0.0
  %6158 = vmatprep.mubr.f32.mxu0 0.0
  %6159 = vmatmul.mubr.f32.gmra.mrb[0].mxu0 %v6092
  %v6160 = vpop.f32.mrb[0].mxu0
  %v6161 = vadd.f32 %v2259, %v6160
  %v6162 = vpop.f32.mrb[0].mxu0
  %6163 = vdwg.mxu0
  %v6164 = vsel %vm2891, %v6161, -inf
  %6165 = vmax.xlane.f32.xlu0 %v6164
  %v6166 = vpop.xlane.xlu0 %6165
  %v6167 = vsub.f32 %v6161, %v6166
  %v6168 = vmul.f32 %v6167, 1.442695
  %v6169 = vpow.pop %v6168
  %v6170 = vsel %vm2891, %v6169, 0.0
  %6171 = vadd.xlane.f32.xlu0 %v6170
  %v6172 = vpop.xlane.xlu0 %6171
  %v6173 = vrcp.pop %v6172
  %v6174 = vmul.f32 %v6169, %v6173
  %v6176 = vsel %vm1097, %v6174, 0
  %6178 = vmatprep.subr.mxu0 0.0
  %6179 = vmatpush1.msra.mxu0 %v2255
  %6180 = vmatprep.subr.mxu0 0.0
  %6181 = vmatpush1.msra.mxu0 %v2258
  %6182 = vmatprep.subr.mxu0 0.0
  %6183 = vmatpush1.msra.mxu0 0.0
  %6184 = vmatprep.subr.mxu0 0.0
  %6185 = vmatpush1.msra.mxu0 0.0
  %6186 = vmatprep.subr.mxu0 0.0
  %6187 = vmatpush1.msra.mxu0 0.0
  %6188 = vmatprep.subr.mxu0 0.0
  %6189 = vmatpush1.msra.mxu0 0.0
  %6190 = vmatprep.subr.mxu0 0.0
  %6191 = vmatpush1.msra.mxu0 0.0
  %6192 = vmatprep.subr.mxu0 0.0
  %6193 = vmatpush1.msra.mxu0 0.0
  %6194 = vmatprep.subr.mxu0 0.0
  %6195 = vmatpush1.msra.mxu0 0.0
  %6196 = vmatprep.subr.mxu0 0.0
  %6197 = vmatpush1.msra.mxu0 0.0
  %6198 = vmatprep.subr.mxu0 0.0
  %6199 = vmatpush1.msra.mxu0 0.0
  %6200 = vmatprep.subr.mxu0 0.0
  %6201 = vmatpush1.msra.mxu0 0.0
  %6202 = vmatprep.subr.mxu0 0.0
  %6203 = vmatpush1.msra.mxu0 0.0
  %6204 = vmatprep.subr.mxu0 0.0
  %6205 = vmatpush1.msra.mxu0 0.0
  %6206 = vmatprep.subr.mxu0 0.0
  %6207 = vmatpush1.msra.mxu0 0.0
  %6208 = vmatprep.subr.mxu0 0.0
  %6209 = vmatpush1.msra.mxu0 0.0
  %6210 = vmatprep.subr.mxu0 0.0
  %6211 = vmatpush1.msra.mxu0 0.0
  %6212 = vmatprep.subr.mxu0 0.0
  %6213 = vmatpush1.msra.mxu0 0.0
  %6214 = vmatprep.subr.mxu0 0.0
  %6215 = vmatpush1.msra.mxu0 0.0
  %6216 = vmatprep.subr.mxu0 0.0
  %6217 = vmatpush1.msra.mxu0 0.0
  %6218 = vmatprep.subr.mxu0 0.0
  %6219 = vmatpush1.msra.mxu0 0.0
  %6220 = vmatprep.subr.mxu0 0.0
  %6221 = vmatpush1.msra.mxu0 0.0
  %6222 = vmatprep.subr.mxu0 0.0
  %6223 = vmatpush1.msra.mxu0 0.0
  %6224 = vmatprep.subr.mxu0 0.0
  %6225 = vmatpush1.msra.mxu0 0.0
  %6226 = vmatprep.subr.mxu0 0.0
  %6227 = vmatpush1.msra.mxu0 0.0
  %6228 = vmatprep.subr.mxu0 0.0
  %6229 = vmatpush1.msra.mxu0 0.0
  %6230 = vmatprep.subr.mxu0 0.0
  %6231 = vmatpush1.msra.mxu0 0.0
  %6232 = vmatprep.subr.mxu0 0.0
  %6233 = vmatpush1.msra.mxu0 0.0
  %6234 = vmatprep.subr.mxu0 0.0
  %6235 = vmatpush1.msra.mxu0 0.0
  %6236 = vmatprep.subr.mxu0 0.0
  %6237 = vmatpush1.msra.mxu0 0.0
  %6238 = vmatprep.subr.mxu0 0.0
  %6239 = vmatpush1.msra.mxu0 0.0
  %6240 = vmatprep.subr.mxu0 0.0
  %6241 = vmatpush1.msra.mxu0 0.0
  %6242 = vmatprep.mubr.f32.mxu0 0.0
  %6243 = vmatmul.mubr.f32.gmra.mrb[0].mxu0 %v6176
  %v6244 = vpop.f32.mrb[0].mxu0
  %v6245 = vadd.f32 0.0, %v6244
  %v6246 = vpop.f32.mrb[0].mxu0
  %6247 = vdwg.mxu0
  %6250 = vrot.lane.b32.xlu0 %v6245, 32
  %v6251 = vpop.permute.xlu0 %6250
  %v6253 = vsel %vm68, %v6018, %v6251
  %v6255 = vsel %vm2988, %v6253, 0
  %6257 = vmatprep.subr.mxu0 0.0
  %6258 = vmatpush1.msra.mxu0 %v2349
  %6259 = vmatprep.subr.mxu0 0.0
  %6260 = vmatpush1.msra.mxu0 %v2350
  %6261 = vmatprep.subr.mxu0 0.0
  %6262 = vmatpush1.msra.mxu0 %v2351
  %6263 = vmatprep.subr.mxu0 0.0
  %6264 = vmatpush1.msra.mxu0 %v2352
  %6265 = vmatprep.subr.mxu0 0.0
  %6266 = vmatpush1.msra.mxu0 %v2353
  %6267 = vmatprep.subr.mxu0 0.0
  %6268 = vmatpush1.msra.mxu0 %v2354
  %6269 = vmatprep.subr.mxu0 0.0
  %6270 = vmatpush1.msra.mxu0 %v2355
  %6271 = vmatprep.subr.mxu0 0.0
  %6272 = vmatpush1.msra.mxu0 %v2356
  %6273 = vmatprep.subr.mxu0 0.0
  %6274 = vmatpush1.msra.mxu0 0.0
  %6275 = vmatprep.subr.mxu0 0.0
  %6276 = vmatpush1.msra.mxu0 0.0
  %6277 = vmatprep.subr.mxu0 0.0
  %6278 = vmatpush1.msra.mxu0 0.0
  %6279 = vmatprep.subr.mxu0 0.0
  %6280 = vmatpush1.msra.mxu0 0.0
  %6281 = vmatprep.subr.mxu0 0.0
  %6282 = vmatpush1.msra.mxu0 0.0
  %6283 = vmatprep.subr.mxu0 0.0
  %6284 = vmatpush1.msra.mxu0 0.0
  %6285 = vmatprep.subr.mxu0 0.0
  %6286 = vmatpush1.msra.mxu0 0.0
  %6287 = vmatprep.subr.mxu0 0.0
  %6288 = vmatpush1.msra.mxu0 0.0
  %6289 = vmatprep.subr.mxu0 0.0
  %6290 = vmatpush1.msra.mxu0 0.0
  %6291 = vmatprep.subr.mxu0 0.0
  %6292 = vmatpush1.msra.mxu0 0.0
  %6293 = vmatprep.subr.mxu0 0.0
  %6294 = vmatpush1.msra.mxu0 0.0
  %6295 = vmatprep.subr.mxu0 0.0
  %6296 = vmatpush1.msra.mxu0 0.0
  %6297 = vmatprep.subr.mxu0 0.0
  %6298 = vmatpush1.msra.mxu0 0.0
  %6299 = vmatprep.subr.mxu0 0.0
  %6300 = vmatpush1.msra.mxu0 0.0
  %6301 = vmatprep.subr.mxu0 0.0
  %6302 = vmatpush1.msra.mxu0 0.0
  %6303 = vmatprep.subr.mxu0 0.0
  %6304 = vmatpush1.msra.mxu0 0.0
  %6305 = vmatprep.subr.mxu0 0.0
  %6306 = vmatpush1.msra.mxu0 0.0
  %6307 = vmatprep.subr.mxu0 0.0
  %6308 = vmatpush1.msra.mxu0 0.0
  %6309 = vmatprep.subr.mxu0 0.0
  %6310 = vmatpush1.msra.mxu0 0.0
  %6311 = vmatprep.subr.mxu0 0.0
  %6312 = vmatpush1.msra.mxu0 0.0
  %6313 = vmatprep.subr.mxu0 0.0
  %6314 = vmatpush1.msra.mxu0 0.0
  %6315 = vmatprep.subr.mxu0 0.0
  %6316 = vmatpush1.msra.mxu0 0.0
  %6317 = vmatprep.subr.mxu0 0.0
  %6318 = vmatpush1.msra.mxu0 0.0
  %6319 = vmatprep.subr.mxu0 0.0
  %6320 = vmatpush1.msra.mxu0 0.0
  %6321 = vmatprep.mubr.f32.mxu0 0.0
  %6322 = vmatmul.mubr.f32.gmra.mrb[0].mxu0 %v6255
  %v6323 = vpop.f32.mrb[0].mxu0
  %v6324 = vadd.f32 %v2986, %v6323
  %v6325 = vpop.f32.mrb[0].mxu0
  %6326 = vdwg.mxu0
  %v6327 = vtanh.pop %v6324
  %6328 = vmatprep.subr.mxu0 0.0
  %6329 = vmatpush1.msra.mxu0 %v2362
  %6330 = vmatprep.subr.mxu0 0.0
  %6331 = vmatpush1.msra.mxu0 %v2363
  %6332 = vmatprep.subr.mxu0 0.0
  %6333 = vmatpush1.msra.mxu0 %v2364
  %6334 = vmatprep.subr.mxu0 0.0
  %6335 = vmatpush1.msra.mxu0 %v2365
  %6336 = vmatprep.subr.mxu0 0.0
  %6337 = vmatpush1.msra.mxu0 0.0
  %6338 = vmatprep.subr.mxu0 0.0
  %6339 = vmatpush1.msra.mxu0 0.0
  %6340 = vmatprep.subr.mxu0 0.0
  %6341 = vmatpush1.msra.mxu0 0.0
  %6342 = vmatprep.subr.mxu0 0.0
  %6343 = vmatpush1.msra.mxu0 0.0
  %6344 = vmatprep.subr.mxu0 0.0
  %6345 = vmatpush1.msra.mxu0 0.0
  %6346 = vmatprep.subr.mxu0 0.0
  %6347 = vmatpush1.msra.mxu0 0.0
  %6348 = vmatprep.subr.mxu0 0.0
  %6349 = vmatpush1.msra.mxu0 0.0
  %6350 = vmatprep.subr.mxu0 0.0
  %6351 = vmatpush1.msra.mxu0 0.0
  %6352 = vmatprep.subr.mxu0 0.0
  %6353 = vmatpush1.msra.mxu0 0.0
  %6354 = vmatprep.subr.mxu0 0.0
  %6355 = vmatpush1.msra.mxu0 0.0
  %6356 = vmatprep.subr.mxu0 0.0
  %6357 = vmatpush1.msra.mxu0 0.0
  %6358 = vmatprep.subr.mxu0 0.0
  %6359 = vmatpush1.msra.mxu0 0.0
  %6360 = vmatprep.subr.mxu0 0.0
  %6361 = vmatpush1.msra.mxu0 0.0
  %6362 = vmatprep.subr.mxu0 0.0
  %6363 = vmatpush1.msra.mxu0 0.0
  %6364 = vmatprep.subr.mxu0 0.0
  %6365 = vmatpush1.msra.mxu0 0.0
  %6366 = vmatprep.subr.mxu0 0.0
  %6367 = vmatpush1.msra.mxu0 0.0
  %6368 = vmatprep.subr.mxu0 0.0
  %6369 = vmatpush1.msra.mxu0 0.0
  %6370 = vmatprep.subr.mxu0 0.0
  %6371 = vmatpush1.msra.mxu0 0.0
  %6372 = vmatprep.subr.mxu0 0.0
  %6373 = vmatpush1.msra.mxu0 0.0
  %6374 = vmatprep.subr.mxu0 0.0
  %6375 = vmatpush1.msra.mxu0 0.0
  %6376 = vmatprep.subr.mxu0 0.0
  %6377 = vmatpush1.msra.mxu0 0.0
  %6378 = vmatprep.subr.mxu0 0.0
  %6379 = vmatpush1.msra.mxu0 0.0
  %6380 = vmatprep.subr.mxu0 0.0
  %6381 = vmatpush1.msra.mxu0 0.0
  %6382 = vmatprep.subr.mxu0 0.0
  %6383 = vmatpush1.msra.mxu0 0.0
  %6384 = vmatprep.subr.mxu0 0.0
  %6385 = vmatpush1.msra.mxu0 0.0
  %6386 = vmatprep.subr.mxu0 0.0
  %6387 = vmatpush1.msra.mxu0 0.0
  %6388 = vmatprep.subr.mxu0 0.0
  %6389 = vmatpush1.msra.mxu0 0.0
  %6390 = vmatprep.subr.mxu0 0.0
  %6391 = vmatpush1.msra.mxu0 0.0
  %6392 = vmatprep.mubr.f32.mxu0 0.0
  %6393 = vmatmul.mubr.f32.gmra.mrb[0].mxu0 %v5919
  %v6394 = vpop.f32.mrb[0].mxu0
  %v6395 = vadd.f32 0.0, %v6394
  %v6396 = vpop.f32.mrb[0].mxu0
  %6397 = vdwg.mxu0
  %v6399 = vsel %vm68, %v6327, 0
  %6401 = vmatprep.subr.mxu0 0.0
  %6402 = vmatpush1.msra.mxu0 %v2358
  %6403 = vmatprep.subr.mxu0 0.0
  %6404 = vmatpush1.msra.mxu0 %v2359
  %6405 = vmatprep.subr.mxu0 0.0
  %6406 = vmatpush1.msra.mxu0 %v2360
  %6407 = vmatprep.subr.mxu0 0.0
  %6408 = vmatpush1.msra.mxu0 %v2361
  %6409 = vmatprep.subr.mxu0 0.0
  %6410 = vmatpush1.msra.mxu0 0.0
  %6411 = vmatprep.subr.mxu0 0.0
  %6412 = vmatpush1.msra.mxu0 0.0
  %6413 = vmatprep.subr.mxu0 0.0
  %6414 = vmatpush1.msra.mxu0 0.0
  %6415 = vmatprep.subr.mxu0 0.0
  %6416 = vmatpush1.msra.mxu0 0.0
  %6417 = vmatprep.subr.mxu0 0.0
  %6418 = vmatpush1.msra.mxu0 0.0
  %6419 = vmatprep.subr.mxu0 0.0
  %6420 = vmatpush1.msra.mxu0 0.0
  %6421 = vmatprep.subr.mxu0 0.0
  %6422 = vmatpush1.msra.mxu0 0.0
  %6423 = vmatprep.subr.mxu0 0.0
  %6424 = vmatpush1.msra.mxu0 0.0
  %6425 = vmatprep.subr.mxu0 0.0
  %6426 = vmatpush1.msra.mxu0 0.0
  %6427 = vmatprep.subr.mxu0 0.0
  %6428 = vmatpush1.msra.mxu0 0.0
  %6429 = vmatprep.subr.mxu0 0.0
  %6430 = vmatpush1.msra.mxu0 0.0
  %6431 = vmatprep.subr.mxu0 0.0
  %6432 = vmatpush1.msra.mxu0 0.0
  %6433 = vmatprep.subr.mxu0 0.0
  %6434 = vmatpush1.msra.mxu0 0.0
  %6435 = vmatprep.subr.mxu0 0.0
  %6436 = vmatpush1.msra.mxu0 0.0
  %6437 = vmatprep.subr.mxu0 0.0
  %6438 = vmatpush1.msra.mxu0 0.0
  %6439 = vmatprep.subr.mxu0 0.0
  %6440 = vmatpush1.msra.mxu0 0.0
  %6441 = vmatprep.subr.mxu0 0.0
  %6442 = vmatpush1.msra.mxu0 0.0
  %6443 = vmatprep.subr.mxu0 0.0
  %6444 = vmatpush1.msra.mxu0 0.0
  %6445 = vmatprep.subr.mxu0 0.0
  %6446 = vmatpush1.msra.mxu0 0.0
  %6447 = vmatprep.subr.mxu0 0.0
  %6448 = vmatpush1.msra.mxu0 0.0
  %6449 = vmatprep.subr.mxu0 0.0
  %6450 = vmatpush1.msra.mxu0 0.0
  %6451 = vmatprep.subr.mxu0 0.0
  %6452 = vmatpush1.msra.mxu0 0.0
  %6453 = vmatprep.subr.mxu0 0.0
  %6454 = vmatpush1.msra.mxu0 0.0
  %6455 = vmatprep.subr.mxu0 0.0
  %6456 = vmatpush1.msra.mxu0 0.0
  %6457 = vmatprep.subr.mxu0 0.0
  %6458 = vmatpush1.msra.mxu0 0.0
  %6459 = vmatprep.subr.mxu0 0.0
  %6460 = vmatpush1.msra.mxu0 0.0
  %6461 = vmatprep.subr.mxu0 0.0
  %6462 = vmatpush1.msra.mxu0 0.0
  %6463 = vmatprep.subr.mxu0 0.0
  %6464 = vmatpush1.msra.mxu0 0.0
  %6465 = vmatprep.mubr.f32.mxu0 0.0
  %6466 = vmatmul.mubr.f32.gmra.mrb[0].mxu0 %v6399
  %v6467 = vpop.f32.mrb[0].mxu0
  %v6468 = vadd.f32 %v6395, %v6467
  %v6469 = vpop.f32.mrb[0].mxu0
  %6470 = vdwg.mxu0
  %v6471 = vadd.f32 %v6468, %v2513
  %v6472 = vrot.slane %v2342, 4
  %v6474 = vadd.f32 %v6471, %v6472
  %v6475 = vxor.u32 %v6474, 2147483648
  %v6476 = vmul.f32 %v6475, 1.442695
  %v6477 = vpow.pop %v6476
  %v6478 = vadd.f32 %v6477, 1.0
  %v6479 = vrcp.pop %v6478
  %v6480 = vmul.f32 1.0, %v6479
  %v6481 = vtanh.pop %v6474
  %v6482 = vmul.f32 %v6480, %v5839
  %6484 = vrot.lane.b32.xlu0 %v6481, 64
  %v6485 = vpop.permute.xlu0 %6484
  %v6487 = vmul.f32 %v6480, %v6485
  %6489 = vrot.lane.b32.xlu0 %v6487, 32
  %v6490 = vpop.permute.xlu0 %6489
  %v6492 = vadd.f32 %v6482, %v6490
  %v6493 = vtanh.pop %v6492
  %6495 = vrot.lane.b32.xlu0 %v6493, 64
  %v6496 = vpop.permute.xlu0 %6495
  %v6498 = vmul.f32 %v6480, %v6496
  %6499 = vmatprep.subr.mxu0 0.0
  %6500 = vmatpush1.msra.mxu0 %v2550
  %6501 = vmatprep.subr.mxu0 0.0
  %6502 = vmatpush1.msra.mxu0 %v2551
  %6503 = vmatprep.subr.mxu0 0.0
  %6504 = vmatpush1.msra.mxu0 %v2552
  %6505 = vmatprep.subr.mxu0 0.0
  %6506 = vmatpush1.msra.mxu0 %v2553
  %6507 = vmatprep.subr.mxu0 0.0
  %6508 = vmatpush1.msra.mxu0 0.0
  %6509 = vmatprep.subr.mxu0 0.0
  %6510 = vmatpush1.msra.mxu0 0.0
  %6511 = vmatprep.subr.mxu0 0.0
  %6512 = vmatpush1.msra.mxu0 0.0
  %6513 = vmatprep.subr.mxu0 0.0
  %6514 = vmatpush1.msra.mxu0 0.0
  %6515 = vmatprep.subr.mxu0 0.0
  %6516 = vmatpush1.msra.mxu0 0.0
  %6517 = vmatprep.subr.mxu0 0.0
  %6518 = vmatpush1.msra.mxu0 0.0
  %6519 = vmatprep.subr.mxu0 0.0
  %6520 = vmatpush1.msra.mxu0 0.0
  %6521 = vmatprep.subr.mxu0 0.0
  %6522 = vmatpush1.msra.mxu0 0.0
  %6523 = vmatprep.subr.mxu0 0.0
  %6524 = vmatpush1.msra.mxu0 0.0
  %6525 = vmatprep.subr.mxu0 0.0
  %6526 = vmatpush1.msra.mxu0 0.0
  %6527 = vmatprep.subr.mxu0 0.0
  %6528 = vmatpush1.msra.mxu0 0.0
  %6529 = vmatprep.subr.mxu0 0.0
  %6530 = vmatpush1.msra.mxu0 0.0
  %6531 = vmatprep.subr.mxu0 0.0
  %6532 = vmatpush1.msra.mxu0 0.0
  %6533 = vmatprep.subr.mxu0 0.0
  %6534 = vmatpush1.msra.mxu0 0.0
  %6535 = vmatprep.subr.mxu0 0.0
  %6536 = vmatpush1.msra.mxu0 0.0
  %6537 = vmatprep.subr.mxu0 0.0
  %6538 = vmatpush1.msra.mxu0 0.0
  %6539 = vmatprep.subr.mxu0 0.0
  %6540 = vmatpush1.msra.mxu0 0.0
  %6541 = vmatprep.subr.mxu0 0.0
  %6542 = vmatpush1.msra.mxu0 0.0
  %6543 = vmatprep.subr.mxu0 0.0
  %6544 = vmatpush1.msra.mxu0 0.0
  %6545 = vmatprep.subr.mxu0 0.0
  %6546 = vmatpush1.msra.mxu0 0.0
  %6547 = vmatprep.subr.mxu0 0.0
  %6548 = vmatpush1.msra.mxu0 0.0
  %6549 = vmatprep.subr.mxu0 0.0
  %6550 = vmatpush1.msra.mxu0 0.0
  %6551 = vmatprep.subr.mxu0 0.0
  %6552 = vmatpush1.msra.mxu0 0.0
  %6553 = vmatprep.subr.mxu0 0.0
  %6554 = vmatpush1.msra.mxu0 0.0
  %6555 = vmatprep.subr.mxu0 0.0
  %6556 = vmatpush1.msra.mxu0 0.0
  %6557 = vmatprep.subr.mxu0 0.0
  %6558 = vmatpush1.msra.mxu0 0.0
  %6559 = vmatprep.subr.mxu0 0.0
  %6560 = vmatpush1.msra.mxu0 0.0
  %6561 = vmatprep.subr.mxu0 0.0
  %6562 = vmatpush1.msra.mxu0 0.0
  %6563 = vmatprep.mubr.f32.mxu0 0.0
  %6564 = vmatmul.mubr.f32.gmra.mrb[0].mxu0 %v6019
  %v6565 = vpop.f32.mrb[0].mxu0
  %v6566 = vadd.f32 0.0, %v6565
  %v6567 = vpop.f32.mrb[0].mxu0
  %6568 = vdwg.mxu0
  %6570 = vrot.lane.b32.xlu0 %v6498, 32
  %v6571 = vpop.permute.xlu0 %6570
  %v6572 = vsel %vm68, %v6571, 0
  %6574 = vmatprep.subr.mxu0 0.0
  %6575 = vmatpush1.msra.mxu0 %v2545
  %6576 = vmatprep.subr.mxu0 0.0
  %6577 = vmatpush1.msra.mxu0 %v2546
  %6578 = vmatprep.subr.mxu0 0.0
  %6579 = vmatpush1.msra.mxu0 %v2547
  %6580 = vmatprep.subr.mxu0 0.0
  %6581 = vmatpush1.msra.mxu0 %v2548
  %6582 = vmatprep.subr.mxu0 0.0
  %6583 = vmatpush1.msra.mxu0 0.0
  %6584 = vmatprep.subr.mxu0 0.0
  %6585 = vmatpush1.msra.mxu0 0.0
  %6586 = vmatprep.subr.mxu0 0.0
  %6587 = vmatpush1.msra.mxu0 0.0
  %6588 = vmatprep.subr.mxu0 0.0
  %6589 = vmatpush1.msra.mxu0 0.0
  %6590 = vmatprep.subr.mxu0 0.0
  %6591 = vmatpush1.msra.mxu0 0.0
  %6592 = vmatprep.subr.mxu0 0.0
  %6593 = vmatpush1.msra.mxu0 0.0
  %6594 = vmatprep.subr.mxu0 0.0
  %6595 = vmatpush1.msra.mxu0 0.0
  %6596 = vmatprep.subr.mxu0 0.0
  %6597 = vmatpush1.msra.mxu0 0.0
  %6598 = vmatprep.subr.mxu0 0.0
  %6599 = vmatpush1.msra.mxu0 0.0
  %6600 = vmatprep.subr.mxu0 0.0
  %6601 = vmatpush1.msra.mxu0 0.0
  %6602 = vmatprep.subr.mxu0 0.0
  %6603 = vmatpush1.msra.mxu0 0.0
  %6604 = vmatprep.subr.mxu0 0.0
  %6605 = vmatpush1.msra.mxu0 0.0
  %6606 = vmatprep.subr.mxu0 0.0
  %6607 = vmatpush1.msra.mxu0 0.0
  %6608 = vmatprep.subr.mxu0 0.0
  %6609 = vmatpush1.msra.mxu0 0.0
  %6610 = vmatprep.subr.mxu0 0.0
  %6611 = vmatpush1.msra.mxu0 0.0
  %6612 = vmatprep.subr.mxu0 0.0
  %6613 = vmatpush1.msra.mxu0 0.0
  %6614 = vmatprep.subr.mxu0 0.0
  %6615 = vmatpush1.msra.mxu0 0.0
  %6616 = vmatprep.subr.mxu0 0.0
  %6617 = vmatpush1.msra.mxu0 0.0
  %6618 = vmatprep.subr.mxu0 0.0
  %6619 = vmatpush1.msra.mxu0 0.0
  %6620 = vmatprep.subr.mxu0 0.0
  %6621 = vmatpush1.msra.mxu0 0.0
  %6622 = vmatprep.subr.mxu0 0.0
  %6623 = vmatpush1.msra.mxu0 0.0
  %6624 = vmatprep.subr.mxu0 0.0
  %6625 = vmatpush1.msra.mxu0 0.0
  %6626 = vmatprep.subr.mxu0 0.0
  %6627 = vmatpush1.msra.mxu0 0.0
  %6628 = vmatprep.subr.mxu0 0.0
  %6629 = vmatpush1.msra.mxu0 0.0
  %6630 = vmatprep.subr.mxu0 0.0
  %6631 = vmatpush1.msra.mxu0 0.0
  %6632 = vmatprep.subr.mxu0 0.0
  %6633 = vmatpush1.msra.mxu0 0.0
  %6634 = vmatprep.subr.mxu0 0.0
  %6635 = vmatpush1.msra.mxu0 0.0
  %6636 = vmatprep.subr.mxu0 0.0
  %6637 = vmatpush1.msra.mxu0 0.0
  %6638 = vmatprep.mubr.f32.mxu0 0.0
  %6639 = vmatmul.mubr.f32.gmra.mrb[0].mxu0 %v6572
  %v6640 = vpop.f32.mrb[0].mxu0
  %v6641 = vadd.f32 %v6566, %v6640
  %v6642 = vpop.f32.mrb[0].mxu0
  %6643 = vdwg.mxu0
  %v6644 = vadd.f32 %v6641, %v2707
  %v6645 = vxor.u32 %v6644, 2147483648
  %v6646 = vmul.f32 %v6645, 1.442695
  %v6647 = vpow.pop %v6646
  %v6648 = vadd.f32 %v6647, 1.0
  %v6649 = vrcp.pop %v6648
  %v6650 = vmul.f32 1.0, %v6649
  %v6651 = vtanh.pop %v6644
  %v6652 = vmul.f32 %v6650, %v6009
  %6654 = vrot.lane.b32.xlu0 %v6651, 64
  %v6655 = vpop.permute.xlu0 %6654
  %v6657 = vmul.f32 %v6650, %v6655
  %6659 = vrot.lane.b32.xlu0 %v6657, 32
  %v6660 = vpop.permute.xlu0 %6659
  %v6662 = vadd.f32 %v6652, %v6660
  %v6663 = vtanh.pop %v6662
  %6665 = vrot.lane.b32.xlu0 %v6663, 64
  %v6666 = vpop.permute.xlu0 %6665
  %v6668 = vmul.f32 %v6650, %v6666
  %6670 = vrot.lane.b32.xlu0 %v6668, 32
  %v6671 = vpop.permute.xlu0 %6670
  %v6672 = vsel %vm68, %v6671, 0
  %6674 = vmatprep.subr.mxu0 0.0
  %6675 = vmatpush1.msra.mxu0 %v2345
  %6676 = vmatprep.subr.mxu0 0.0
  %6677 = vmatpush1.msra.mxu0 %v2346
  %6678 = vmatprep.subr.mxu0 0.0
  %6679 = vmatpush1.msra.mxu0 %v2347
  %6680 = vmatprep.subr.mxu0 0.0
  %6681 = vmatpush1.msra.mxu0 %v2348
  %6682 = vmatprep.subr.mxu0 0.0
  %6683 = vmatpush1.msra.mxu0 0.0
  %6684 = vmatprep.subr.mxu0 0.0
  %6685 = vmatpush1.msra.mxu0 0.0
  %6686 = vmatprep.subr.mxu0 0.0
  %6687 = vmatpush1.msra.mxu0 0.0
  %6688 = vmatprep.subr.mxu0 0.0
  %6689 = vmatpush1.msra.mxu0 0.0
  %6690 = vmatprep.subr.mxu0 0.0
  %6691 = vmatpush1.msra.mxu0 0.0
  %6692 = vmatprep.subr.mxu0 0.0
  %6693 = vmatpush1.msra.mxu0 0.0
  %6694 = vmatprep.subr.mxu0 0.0
  %6695 = vmatpush1.msra.mxu0 0.0
  %6696 = vmatprep.subr.mxu0 0.0
  %6697 = vmatpush1.msra.mxu0 0.0
  %6698 = vmatprep.subr.mxu0 0.0
  %6699 = vmatpush1.msra.mxu0 0.0
  %6700 = vmatprep.subr.mxu0 0.0
  %6701 = vmatpush1.msra.mxu0 0.0
  %6702 = vmatprep.subr.mxu0 0.0
  %6703 = vmatpush1.msra.mxu0 0.0
  %6704 = vmatprep.subr.mxu0 0.0
  %6705 = vmatpush1.msra.mxu0 0.0
  %6706 = vmatprep.subr.mxu0 0.0
  %6707 = vmatpush1.msra.mxu0 0.0
  %6708 = vmatprep.subr.mxu0 0.0
  %6709 = vmatpush1.msra.mxu0 0.0
  %6710 = vmatprep.subr.mxu0 0.0
  %6711 = vmatpush1.msra.mxu0 0.0
  %6712 = vmatprep.subr.mxu0 0.0
  %6713 = vmatpush1.msra.mxu0 0.0
  %6714 = vmatprep.subr.mxu0 0.0
  %6715 = vmatpush1.msra.mxu0 0.0
  %6716 = vmatprep.subr.mxu0 0.0
  %6717 = vmatpush1.msra.mxu0 0.0
  %6718 = vmatprep.subr.mxu0 0.0
  %6719 = vmatpush1.msra.mxu0 0.0
  %6720 = vmatprep.subr.mxu0 0.0
  %6721 = vmatpush1.msra.mxu0 0.0
  %6722 = vmatprep.subr.mxu0 0.0
  %6723 = vmatpush1.msra.mxu0 0.0
  %6724 = vmatprep.subr.mxu0 0.0
  %6725 = vmatpush1.msra.mxu0 0.0
  %6726 = vmatprep.subr.mxu0 0.0
  %6727 = vmatpush1.msra.mxu0 0.0
  %6728 = vmatprep.subr.mxu0 0.0
  %6729 = vmatpush1.msra.mxu0 0.0
  %6730 = vmatprep.subr.mxu0 0.0
  %6731 = vmatpush1.msra.mxu0 0.0
  %6732 = vmatprep.subr.mxu0 0.0
  %6733 = vmatpush1.msra.mxu0 0.0
  %6734 = vmatprep.subr.mxu0 0.0
  %6735 = vmatpush1.msra.mxu0 0.0
  %6736 = vmatprep.subr.mxu0 0.0
  %6737 = vmatpush1.msra.mxu0 0.0
  %6738 = vmatprep.mubr.f32.mxu0 0.0
  %6739 = vmatmul.mubr.f32.gmra.mrb[0].mxu0 %v6672
  %v6740 = vpop.f32.mrb[0].mxu0
  %v6741 = vadd.f32 0.0, %v6740
  %v6742 = vpop.f32.mrb[0].mxu0
  %6743 = vdwg.mxu0
  %v6745 = vsel %vm68, %v6741, 0
  %6747 = vmatprep.subr.mxu0 0.0
  %6748 = vmatpush1.xpose.msra.mxu0 %v2816
  %6749 = vmatprep.subr.mxu0 0.0
  %6750 = vmatpush1.xpose.msra.mxu0 %v2819
  %6751 = vmatprep.subr.mxu0 0.0
  %6752 = vmatpush1.xpose.msra.mxu0 0.0
  %6753 = vmatprep.subr.mxu0 0.0
  %6754 = vmatpush1.xpose.msra.mxu0 0.0
  %6755 = vmatprep.subr.mxu0 0.0
  %6756 = vmatpush1.xpose.msra.mxu0 0.0
  %6757 = vmatprep.subr.mxu0 0.0
  %6758 = vmatpush1.xpose.msra.mxu0 0.0
  %6759 = vmatprep.subr.mxu0 0.0
  %6760 = vmatpush1.xpose.msra.mxu0 0.0
  %6761 = vmatprep.subr.mxu0 0.0
  %6762 = vmatpush1.xpose.msra.mxu0 0.0
  %6763 = vmatprep.subr.mxu0 0.0
  %6764 = vmatpush1.xpose.msra.mxu0 0.0
  %6765 = vmatprep.subr.mxu0 0.0
  %6766 = vmatpush1.xpose.msra.mxu0 0.0
  %6767 = vmatprep.subr.mxu0 0.0
  %6768 = vmatpush1.xpose.msra.mxu0 0.0
  %6769 = vmatprep.subr.mxu0 0.0
  %6770 = vmatpush1.xpose.msra.mxu0 0.0
  %6771 = vmatprep.subr.mxu0 0.0
  %6772 = vmatpush1.xpose.msra.mxu0 0.0
  %6773 = vmatprep.subr.mxu0 0.0
  %6774 = vmatpush1.xpose.msra.mxu0 0.0
  %6775 = vmatprep.subr.mxu0 0.0
  %6776 = vmatpush1.xpose.msra.mxu0 0.0
  %6777 = vmatprep.subr.mxu0 0.0
  %6778 = vmatpush1.xpose.msra.mxu0 0.0
  %6779 = vmatprep.subr.mxu0 0.0
  %6780 = vmatpush1.xpose.msra.mxu0 0.0
  %6781 = vmatprep.subr.mxu0 0.0
  %6782 = vmatpush1.xpose.msra.mxu0 0.0
  %6783 = vmatprep.subr.mxu0 0.0
  %6784 = vmatpush1.xpose.msra.mxu0 0.0
  %6785 = vmatprep.subr.mxu0 0.0
  %6786 = vmatpush1.xpose.msra.mxu0 0.0
  %6787 = vmatprep.subr.mxu0 0.0
  %6788 = vmatpush1.xpose.msra.mxu0 0.0
  %6789 = vmatprep.subr.mxu0 0.0
  %6790 = vmatpush1.xpose.msra.mxu0 0.0
  %6791 = vmatprep.subr.mxu0 0.0
  %6792 = vmatpush1.xpose.msra.mxu0 0.0
  %6793 = vmatprep.subr.mxu0 0.0
  %6794 = vmatpush1.xpose.msra.mxu0 0.0
  %6795 = vmatprep.subr.mxu0 0.0
  %6796 = vmatpush1.xpose.msra.mxu0 0.0
  %6797 = vmatprep.subr.mxu0 0.0
  %6798 = vmatpush1.xpose.msra.mxu0 0.0
  %6799 = vmatprep.subr.mxu0 0.0
  %6800 = vmatpush1.xpose.msra.mxu0 0.0
  %6801 = vmatprep.subr.mxu0 0.0
  %6802 = vmatpush1.xpose.msra.mxu0 0.0
  %6803 = vmatprep.subr.mxu0 0.0
  %6804 = vmatpush1.xpose.msra.mxu0 0.0
  %6805 = vmatprep.subr.mxu0 0.0
  %6806 = vmatpush1.xpose.msra.mxu0 0.0
  %6807 = vmatprep.subr.mxu0 0.0
  %6808 = vmatpush1.xpose.msra.mxu0 0.0
  %6809 = vmatprep.subr.mxu0 0.0
  %6810 = vmatpush1.xpose.msra.mxu0 0.0
  %6811 = vmatprep.mubr.f32.mxu0 0.0
  %6812 = vmatmul.mubr.f32.gmra.mrb[0].mxu0 %v6745
  %v6813 = vpop.f32.mrb[0].mxu0
  %v6814 = vadd.f32 %v2259, %v6813
  %v6815 = vpop.f32.mrb[0].mxu0
  %6816 = vdwg.mxu0
  %v6817 = vsel %vm2891, %v6814, -inf
  %6818 = vmax.xlane.f32.xlu0 %v6817
  %v6819 = vpop.xlane.xlu0 %6818
  %v6820 = vsub.f32 %v6814, %v6819
  %v6821 = vmul.f32 %v6820, 1.442695
  %v6822 = vpow.pop %v6821
  %v6823 = vsel %vm2891, %v6822, 0.0
  %6824 = vadd.xlane.f32.xlu0 %v6823
  %v6825 = vpop.xlane.xlu0 %6824
  %v6826 = vrcp.pop %v6825
  %v6827 = vmul.f32 %v6822, %v6826
  %v6829 = vsel %vm1097, %v6827, 0
  %6831 = vmatprep.subr.mxu0 0.0
  %6832 = vmatpush1.msra.mxu0 %v2255
  %6833 = vmatprep.subr.mxu0 0.0
  %6834 = vmatpush1.msra.mxu0 %v2258
  %6835 = vmatprep.subr.mxu0 0.0
  %6836 = vmatpush1.msra.mxu0 0.0
  %6837 = vmatprep.subr.mxu0 0.0
  %6838 = vmatpush1.msra.mxu0 0.0
  %6839 = vmatprep.subr.mxu0 0.0
  %6840 = vmatpush1.msra.mxu0 0.0
  %6841 = vmatprep.subr.mxu0 0.0
  %6842 = vmatpush1.msra.mxu0 0.0
  %6843 = vmatprep.subr.mxu0 0.0
  %6844 = vmatpush1.msra.mxu0 0.0
  %6845 = vmatprep.subr.mxu0 0.0
  %6846 = vmatpush1.msra.mxu0 0.0
  %6847 = vmatprep.subr.mxu0 0.0
  %6848 = vmatpush1.msra.mxu0 0.0
  %6849 = vmatprep.subr.mxu0 0.0
  %6850 = vmatpush1.msra.mxu0 0.0
  %6851 = vmatprep.subr.mxu0 0.0
  %6852 = vmatpush1.msra.mxu0 0.0
  %6853 = vmatprep.subr.mxu0 0.0
  %6854 = vmatpush1.msra.mxu0 0.0
  %6855 = vmatprep.subr.mxu0 0.0
  %6856 = vmatpush1.msra.mxu0 0.0
  %6857 = vmatprep.subr.mxu0 0.0
  %6858 = vmatpush1.msra.mxu0 0.0
  %6859 = vmatprep.subr.mxu0 0.0
  %6860 = vmatpush1.msra.mxu0 0.0
  %6861 = vmatprep.subr.mxu0 0.0
  %6862 = vmatpush1.msra.mxu0 0.0
  %6863 = vmatprep.subr.mxu0 0.0
  %6864 = vmatpush1.msra.mxu0 0.0
  %6865 = vmatprep.subr.mxu0 0.0
  %6866 = vmatpush1.msra.mxu0 0.0
  %6867 = vmatprep.subr.mxu0 0.0
  %6868 = vmatpush1.msra.mxu0 0.0
  %6869 = vmatprep.subr.mxu0 0.0
  %6870 = vmatpush1.msra.mxu0 0.0
  %6871 = vmatprep.subr.mxu0 0.0
  %6872 = vmatpush1.msra.mxu0 0.0
  %6873 = vmatprep.subr.mxu0 0.0
  %6874 = vmatpush1.msra.mxu0 0.0
  %6875 = vmatprep.subr.mxu0 0.0
  %6876 = vmatpush1.msra.mxu0 0.0
  %6877 = vmatprep.subr.mxu0 0.0
  %6878 = vmatpush1.msra.mxu0 0.0
  %6879 = vmatprep.subr.mxu0 0.0
  %6880 = vmatpush1.msra.mxu0 0.0
  %6881 = vmatprep.subr.mxu0 0.0
  %6882 = vmatpush1.msra.mxu0 0.0
  %6883 = vmatprep.subr.mxu0 0.0
  %6884 = vmatpush1.msra.mxu0 0.0
  %6885 = vmatprep.subr.mxu0 0.0
  %6886 = vmatpush1.msra.mxu0 0.0
  %6887 = vmatprep.subr.mxu0 0.0
  %6888 = vmatpush1.msra.mxu0 0.0
  %6889 = vmatprep.subr.mxu0 0.0
  %6890 = vmatpush1.msra.mxu0 0.0
  %6891 = vmatprep.subr.mxu0 0.0
  %6892 = vmatpush1.msra.mxu0 0.0
  %6893 = vmatprep.subr.mxu0 0.0
  %6894 = vmatpush1.msra.mxu0 0.0
  %6895 = vmatprep.mubr.f32.mxu0 0.0
  %6896 = vmatmul.mubr.f32.gmra.mrb[0].mxu0 %v6829
  %v6897 = vpop.f32.mrb[0].mxu0
  %v6898 = vadd.f32 0.0, %v6897
  %v6899 = vpop.f32.mrb[0].mxu0
  %6900 = vdwg.mxu0
  %6903 = vrot.lane.b32.xlu0 %v6898, 32
  %v6904 = vpop.permute.xlu0 %6903
  %v6906 = vsel %vm68, %v6671, %v6904
  %v6908 = vsel %vm2988, %v6906, 0
  %6910 = vmatprep.subr.mxu0 0.0
  %6911 = vmatpush1.msra.mxu0 %v2349
  %6912 = vmatprep.subr.mxu0 0.0
  %6913 = vmatpush1.msra.mxu0 %v2350
  %6914 = vmatprep.subr.mxu0 0.0
  %6915 = vmatpush1.msra.mxu0 %v2351
  %6916 = vmatprep.subr.mxu0 0.0
  %6917 = vmatpush1.msra.mxu0 %v2352
  %6918 = vmatprep.subr.mxu0 0.0
  %6919 = vmatpush1.msra.mxu0 %v2353
  %6920 = vmatprep.subr.mxu0 0.0
  %6921 = vmatpush1.msra.mxu0 %v2354
  %6922 = vmatprep.subr.mxu0 0.0
  %6923 = vmatpush1.msra.mxu0 %v2355
  %6924 = vmatprep.subr.mxu0 0.0
  %6925 = vmatpush1.msra.mxu0 %v2356
  %6926 = vmatprep.subr.mxu0 0.0
  %6927 = vmatpush1.msra.mxu0 0.0
  %6928 = vmatprep.subr.mxu0 0.0
  %6929 = vmatpush1.msra.mxu0 0.0
  %6930 = vmatprep.subr.mxu0 0.0
  %6931 = vmatpush1.msra.mxu0 0.0
  %6932 = vmatprep.subr.mxu0 0.0
  %6933 = vmatpush1.msra.mxu0 0.0
  %6934 = vmatprep.subr.mxu0 0.0
  %6935 = vmatpush1.msra.mxu0 0.0
  %6936 = vmatprep.subr.mxu0 0.0
  %6937 = vmatpush1.msra.mxu0 0.0
  %6938 = vmatprep.subr.mxu0 0.0
  %6939 = vmatpush1.msra.mxu0 0.0
  %6940 = vmatprep.subr.mxu0 0.0
  %6941 = vmatpush1.msra.mxu0 0.0
  %6942 = vmatprep.subr.mxu0 0.0
  %6943 = vmatpush1.msra.mxu0 0.0
  %6944 = vmatprep.subr.mxu0 0.0
  %6945 = vmatpush1.msra.mxu0 0.0
  %6946 = vmatprep.subr.mxu0 0.0
  %6947 = vmatpush1.msra.mxu0 0.0
  %6948 = vmatprep.subr.mxu0 0.0
  %6949 = vmatpush1.msra.mxu0 0.0
  %6950 = vmatprep.subr.mxu0 0.0
  %6951 = vmatpush1.msra.mxu0 0.0
  %6952 = vmatprep.subr.mxu0 0.0
  %6953 = vmatpush1.msra.mxu0 0.0
  %6954 = vmatprep.subr.mxu0 0.0
  %6955 = vmatpush1.msra.mxu0 0.0
  %6956 = vmatprep.subr.mxu0 0.0
  %6957 = vmatpush1.msra.mxu0 0.0
  %6958 = vmatprep.subr.mxu0 0.0
  %6959 = vmatpush1.msra.mxu0 0.0
  %6960 = vmatprep.subr.mxu0 0.0
  %6961 = vmatpush1.msra.mxu0 0.0
  %6962 = vmatprep.subr.mxu0 0.0
  %6963 = vmatpush1.msra.mxu0 0.0
  %6964 = vmatprep.subr.mxu0 0.0
  %6965 = vmatpush1.msra.mxu0 0.0
  %6966 = vmatprep.subr.mxu0 0.0
  %6967 = vmatpush1.msra.mxu0 0.0
  %6968 = vmatprep.subr.mxu0 0.0
  %6969 = vmatpush1.msra.mxu0 0.0
  %6970 = vmatprep.subr.mxu0 0.0
  %6971 = vmatpush1.msra.mxu0 0.0
  %6972 = vmatprep.subr.mxu0 0.0
  %6973 = vmatpush1.msra.mxu0 0.0
  %6974 = vmatprep.mubr.f32.mxu0 0.0
  %6975 = vmatmul.mubr.f32.gmra.mrb[0].mxu0 %v6908
  %v6976 = vpop.f32.mrb[0].mxu0
  %v6977 = vadd.f32 %v2986, %v6976
  %v6978 = vpop.f32.mrb[0].mxu0
  %6979 = vdwg.mxu0
  %v6980 = vtanh.pop %v6977
  %6981 = vmatprep.subr.mxu0 0.0
  %6982 = vmatpush1.msra.mxu0 %v2362
  %6983 = vmatprep.subr.mxu0 0.0
  %6984 = vmatpush1.msra.mxu0 %v2363
  %6985 = vmatprep.subr.mxu0 0.0
  %6986 = vmatpush1.msra.mxu0 %v2364
  %6987 = vmatprep.subr.mxu0 0.0
  %6988 = vmatpush1.msra.mxu0 %v2365
  %6989 = vmatprep.subr.mxu0 0.0
  %6990 = vmatpush1.msra.mxu0 0.0
  %6991 = vmatprep.subr.mxu0 0.0
  %6992 = vmatpush1.msra.mxu0 0.0
  %6993 = vmatprep.subr.mxu0 0.0
  %6994 = vmatpush1.msra.mxu0 0.0
  %6995 = vmatprep.subr.mxu0 0.0
  %6996 = vmatpush1.msra.mxu0 0.0
  %6997 = vmatprep.subr.mxu0 0.0
  %6998 = vmatpush1.msra.mxu0 0.0
  %6999 = vmatprep.subr.mxu0 0.0
  %7000 = vmatpush1.msra.mxu0 0.0
  %7001 = vmatprep.subr.mxu0 0.0
  %7002 = vmatpush1.msra.mxu0 0.0
  %7003 = vmatprep.subr.mxu0 0.0
  %7004 = vmatpush1.msra.mxu0 0.0
  %7005 = vmatprep.subr.mxu0 0.0
  %7006 = vmatpush1.msra.mxu0 0.0
  %7007 = vmatprep.subr.mxu0 0.0
  %7008 = vmatpush1.msra.mxu0 0.0
  %7009 = vmatprep.subr.mxu0 0.0
  %7010 = vmatpush1.msra.mxu0 0.0
  %7011 = vmatprep.subr.mxu0 0.0
  %7012 = vmatpush1.msra.mxu0 0.0
  %7013 = vmatprep.subr.mxu0 0.0
  %7014 = vmatpush1.msra.mxu0 0.0
  %7015 = vmatprep.subr.mxu0 0.0
  %7016 = vmatpush1.msra.mxu0 0.0
  %7017 = vmatprep.subr.mxu0 0.0
  %7018 = vmatpush1.msra.mxu0 0.0
  %7019 = vmatprep.subr.mxu0 0.0
  %7020 = vmatpush1.msra.mxu0 0.0
  %7021 = vmatprep.subr.mxu0 0.0
  %7022 = vmatpush1.msra.mxu0 0.0
  %7023 = vmatprep.subr.mxu0 0.0
  %7024 = vmatpush1.msra.mxu0 0.0
  %7025 = vmatprep.subr.mxu0 0.0
  %7026 = vmatpush1.msra.mxu0 0.0
  %7027 = vmatprep.subr.mxu0 0.0
  %7028 = vmatpush1.msra.mxu0 0.0
  %7029 = vmatprep.subr.mxu0 0.0
  %7030 = vmatpush1.msra.mxu0 0.0
  %7031 = vmatprep.subr.mxu0 0.0
  %7032 = vmatpush1.msra.mxu0 0.0
  %7033 = vmatprep.subr.mxu0 0.0
  %7034 = vmatpush1.msra.mxu0 0.0
  %7035 = vmatprep.subr.mxu0 0.0
  %7036 = vmatpush1.msra.mxu0 0.0
  %7037 = vmatprep.subr.mxu0 0.0
  %7038 = vmatpush1.msra.mxu0 0.0
  %7039 = vmatprep.subr.mxu0 0.0
  %7040 = vmatpush1.msra.mxu0 0.0
  %7041 = vmatprep.subr.mxu0 0.0
  %7042 = vmatpush1.msra.mxu0 0.0
  %7043 = vmatprep.subr.mxu0 0.0
  %7044 = vmatpush1.msra.mxu0 0.0
  %7045 = vmatprep.mubr.f32.mxu0 0.0
  %7046 = vmatmul.mubr.f32.gmra.mrb[0].mxu0 %v6572
  %v7047 = vpop.f32.mrb[0].mxu0
  %v7048 = vadd.f32 0.0, %v7047
  %v7049 = vpop.f32.mrb[0].mxu0
  %7050 = vdwg.mxu0
  %v7052 = vsel %vm68, %v6980, 0
  %7054 = vmatprep.subr.mxu0 0.0
  %7055 = vmatpush1.msra.mxu0 %v2358
  %7056 = vmatprep.subr.mxu0 0.0
  %7057 = vmatpush1.msra.mxu0 %v2359
  %7058 = vmatprep.subr.mxu0 0.0
  %7059 = vmatpush1.msra.mxu0 %v2360
  %7060 = vmatprep.subr.mxu0 0.0
  %7061 = vmatpush1.msra.mxu0 %v2361
  %7062 = vmatprep.subr.mxu0 0.0
  %7063 = vmatpush1.msra.mxu0 0.0
  %7064 = vmatprep.subr.mxu0 0.0
  %7065 = vmatpush1.msra.mxu0 0.0
  %7066 = vmatprep.subr.mxu0 0.0
  %7067 = vmatpush1.msra.mxu0 0.0
  %7068 = vmatprep.subr.mxu0 0.0
  %7069 = vmatpush1.msra.mxu0 0.0
  %7070 = vmatprep.subr.mxu0 0.0
  %7071 = vmatpush1.msra.mxu0 0.0
  %7072 = vmatprep.subr.mxu0 0.0
  %7073 = vmatpush1.msra.mxu0 0.0
  %7074 = vmatprep.subr.mxu0 0.0
  %7075 = vmatpush1.msra.mxu0 0.0
  %7076 = vmatprep.subr.mxu0 0.0
  %7077 = vmatpush1.msra.mxu0 0.0
  %7078 = vmatprep.subr.mxu0 0.0
  %7079 = vmatpush1.msra.mxu0 0.0
  %7080 = vmatprep.subr.mxu0 0.0
  %7081 = vmatpush1.msra.mxu0 0.0
  %7082 = vmatprep.subr.mxu0 0.0
  %7083 = vmatpush1.msra.mxu0 0.0
  %7084 = vmatprep.subr.mxu0 0.0
  %7085 = vmatpush1.msra.mxu0 0.0
  %7086 = vmatprep.subr.mxu0 0.0
  %7087 = vmatpush1.msra.mxu0 0.0
  %7088 = vmatprep.subr.mxu0 0.0
  %7089 = vmatpush1.msra.mxu0 0.0
  %7090 = vmatprep.subr.mxu0 0.0
  %7091 = vmatpush1.msra.mxu0 0.0
  %7092 = vmatprep.subr.mxu0 0.0
  %7093 = vmatpush1.msra.mxu0 0.0
  %7094 = vmatprep.subr.mxu0 0.0
  %7095 = vmatpush1.msra.mxu0 0.0
  %7096 = vmatprep.subr.mxu0 0.0
  %7097 = vmatpush1.msra.mxu0 0.0
  %7098 = vmatprep.subr.mxu0 0.0
  %7099 = vmatpush1.msra.mxu0 0.0
  %7100 = vmatprep.subr.mxu0 0.0
  %7101 = vmatpush1.msra.mxu0 0.0
  %7102 = vmatprep.subr.mxu0 0.0
  %7103 = vmatpush1.msra.mxu0 0.0
  %7104 = vmatprep.subr.mxu0 0.0
  %7105 = vmatpush1.msra.mxu0 0.0
  %7106 = vmatprep.subr.mxu0 0.0
  %7107 = vmatpush1.msra.mxu0 0.0
  %7108 = vmatprep.subr.mxu0 0.0
  %7109 = vmatpush1.msra.mxu0 0.0
  %7110 = vmatprep.subr.mxu0 0.0
  %7111 = vmatpush1.msra.mxu0 0.0
  %7112 = vmatprep.subr.mxu0 0.0
  %7113 = vmatpush1.msra.mxu0 0.0
  %7114 = vmatprep.subr.mxu0 0.0
  %7115 = vmatpush1.msra.mxu0 0.0
  %7116 = vmatprep.subr.mxu0 0.0
  %7117 = vmatpush1.msra.mxu0 0.0
  %7118 = vmatprep.mubr.f32.mxu0 0.0
  %7119 = vmatmul.mubr.f32.gmra.mrb[0].mxu0 %v7052
  %v7120 = vpop.f32.mrb[0].mxu0
  %v7121 = vadd.f32 %v7048, %v7120
  %v7122 = vpop.f32.mrb[0].mxu0
  %7123 = vdwg.mxu0
  %v7124 = vadd.f32 %v7121, %v2513
  %v7125 = vrot.slane %v2342, 6
  %v7127 = vadd.f32 %v7124, %v7125
  %v7128 = vxor.u32 %v7127, 2147483648
  %v7129 = vmul.f32 %v7128, 1.442695
  %v7130 = vpow.pop %v7129
  %v7131 = vadd.f32 %v7130, 1.0
  %v7132 = vrcp.pop %v7131
  %v7133 = vmul.f32 1.0, %v7132
  %v7134 = vtanh.pop %v7127
  %v7135 = vmul.f32 %v7133, %v6492
  %7137 = vrot.lane.b32.xlu0 %v7134, 64
  %v7138 = vpop.permute.xlu0 %7137
  %v7140 = vmul.f32 %v7133, %v7138
  %7142 = vrot.lane.b32.xlu0 %v7140, 32
  %v7143 = vpop.permute.xlu0 %7142
  %v7145 = vadd.f32 %v7135, %v7143
  %v7146 = vtanh.pop %v7145
  %7148 = vrot.lane.b32.xlu0 %v7146, 64
  %v7149 = vpop.permute.xlu0 %7148
  %v7151 = vmul.f32 %v7133, %v7149
  %7152 = vmatprep.subr.mxu0 0.0
  %7153 = vmatpush1.msra.mxu0 %v2550
  %7154 = vmatprep.subr.mxu0 0.0
  %7155 = vmatpush1.msra.mxu0 %v2551
  %7156 = vmatprep.subr.mxu0 0.0
  %7157 = vmatpush1.msra.mxu0 %v2552
  %7158 = vmatprep.subr.mxu0 0.0
  %7159 = vmatpush1.msra.mxu0 %v2553
  %7160 = vmatprep.subr.mxu0 0.0
  %7161 = vmatpush1.msra.mxu0 0.0
  %7162 = vmatprep.subr.mxu0 0.0
  %7163 = vmatpush1.msra.mxu0 0.0
  %7164 = vmatprep.subr.mxu0 0.0
  %7165 = vmatpush1.msra.mxu0 0.0
  %7166 = vmatprep.subr.mxu0 0.0
  %7167 = vmatpush1.msra.mxu0 0.0
  %7168 = vmatprep.subr.mxu0 0.0
  %7169 = vmatpush1.msra.mxu0 0.0
  %7170 = vmatprep.subr.mxu0 0.0
  %7171 = vmatpush1.msra.mxu0 0.0
  %7172 = vmatprep.subr.mxu0 0.0
  %7173 = vmatpush1.msra.mxu0 0.0
  %7174 = vmatprep.subr.mxu0 0.0
  %7175 = vmatpush1.msra.mxu0 0.0
  %7176 = vmatprep.subr.mxu0 0.0
  %7177 = vmatpush1.msra.mxu0 0.0
  %7178 = vmatprep.subr.mxu0 0.0
  %7179 = vmatpush1.msra.mxu0 0.0
  %7180 = vmatprep.subr.mxu0 0.0
  %7181 = vmatpush1.msra.mxu0 0.0
  %7182 = vmatprep.subr.mxu0 0.0
  %7183 = vmatpush1.msra.mxu0 0.0
  %7184 = vmatprep.subr.mxu0 0.0
  %7185 = vmatpush1.msra.mxu0 0.0
  %7186 = vmatprep.subr.mxu0 0.0
  %7187 = vmatpush1.msra.mxu0 0.0
  %7188 = vmatprep.subr.mxu0 0.0
  %7189 = vmatpush1.msra.mxu0 0.0
  %7190 = vmatprep.subr.mxu0 0.0
  %7191 = vmatpush1.msra.mxu0 0.0
  %7192 = vmatprep.subr.mxu0 0.0
  %7193 = vmatpush1.msra.mxu0 0.0
  %7194 = vmatprep.subr.mxu0 0.0
  %7195 = vmatpush1.msra.mxu0 0.0
  %7196 = vmatprep.subr.mxu0 0.0
  %7197 = vmatpush1.msra.mxu0 0.0
  %7198 = vmatprep.subr.mxu0 0.0
  %7199 = vmatpush1.msra.mxu0 0.0
  %7200 = vmatprep.subr.mxu0 0.0
  %7201 = vmatpush1.msra.mxu0 0.0
  %7202 = vmatprep.subr.mxu0 0.0
  %7203 = vmatpush1.msra.mxu0 0.0
  %7204 = vmatprep.subr.mxu0 0.0
  %7205 = vmatpush1.msra.mxu0 0.0
  %7206 = vmatprep.subr.mxu0 0.0
  %7207 = vmatpush1.msra.mxu0 0.0
  %7208 = vmatprep.subr.mxu0 0.0
  %7209 = vmatpush1.msra.mxu0 0.0
  %7210 = vmatprep.subr.mxu0 0.0
  %7211 = vmatpush1.msra.mxu0 0.0
  %7212 = vmatprep.subr.mxu0 0.0
  %7213 = vmatpush1.msra.mxu0 0.0
  %7214 = vmatprep.subr.mxu0 0.0
  %7215 = vmatpush1.msra.mxu0 0.0
  %7216 = vmatprep.mubr.f32.mxu0 0.0
  %7217 = vmatmul.mubr.f32.gmra.mrb[0].mxu0 %v6672
  %v7218 = vpop.f32.mrb[0].mxu0
  %v7219 = vadd.f32 0.0, %v7218
  %v7220 = vpop.f32.mrb[0].mxu0
  %7221 = vdwg.mxu0
  %7223 = vrot.lane.b32.xlu0 %v7151, 32
  %v7224 = vpop.permute.xlu0 %7223
  %v7225 = vsel %vm68, %v7224, 0
  %7227 = vmatprep.subr.mxu0 0.0
  %7228 = vmatpush1.msra.mxu0 %v2545
  %7229 = vmatprep.subr.mxu0 0.0
  %7230 = vmatpush1.msra.mxu0 %v2546
  %7231 = vmatprep.subr.mxu0 0.0
  %7232 = vmatpush1.msra.mxu0 %v2547
  %7233 = vmatprep.subr.mxu0 0.0
  %7234 = vmatpush1.msra.mxu0 %v2548
  %7235 = vmatprep.subr.mxu0 0.0
  %7236 = vmatpush1.msra.mxu0 0.0
  %7237 = vmatprep.subr.mxu0 0.0
  %7238 = vmatpush1.msra.mxu0 0.0
  %7239 = vmatprep.subr.mxu0 0.0
  %7240 = vmatpush1.msra.mxu0 0.0
  %7241 = vmatprep.subr.mxu0 0.0
  %7242 = vmatpush1.msra.mxu0 0.0
  %7243 = vmatprep.subr.mxu0 0.0
  %7244 = vmatpush1.msra.mxu0 0.0
  %7245 = vmatprep.subr.mxu0 0.0
  %7246 = vmatpush1.msra.mxu0 0.0
  %7247 = vmatprep.subr.mxu0 0.0
  %7248 = vmatpush1.msra.mxu0 0.0
  %7249 = vmatprep.subr.mxu0 0.0
  %7250 = vmatpush1.msra.mxu0 0.0
  %7251 = vmatprep.subr.mxu0 0.0
  %7252 = vmatpush1.msra.mxu0 0.0
  %7253 = vmatprep.subr.mxu0 0.0
  %7254 = vmatpush1.msra.mxu0 0.0
  %7255 = vmatprep.subr.mxu0 0.0
  %7256 = vmatpush1.msra.mxu0 0.0
  %7257 = vmatprep.subr.mxu0 0.0
  %7258 = vmatpush1.msra.mxu0 0.0
  %7259 = vmatprep.subr.mxu0 0.0
  %7260 = vmatpush1.msra.mxu0 0.0
  %7261 = vmatprep.subr.mxu0 0.0
  %7262 = vmatpush1.msra.mxu0 0.0
  %7263 = vmatprep.subr.mxu0 0.0
  %7264 = vmatpush1.msra.mxu0 0.0
  %7265 = vmatprep.subr.mxu0 0.0
  %7266 = vmatpush1.msra.mxu0 0.0
  %7267 = vmatprep.subr.mxu0 0.0
  %7268 = vmatpush1.msra.mxu0 0.0
  %7269 = vmatprep.subr.mxu0 0.0
  %7270 = vmatpush1.msra.mxu0 0.0
  %7271 = vmatprep.subr.mxu0 0.0
  %7272 = vmatpush1.msra.mxu0 0.0
  %7273 = vmatprep.subr.mxu0 0.0
  %7274 = vmatpush1.msra.mxu0 0.0
  %7275 = vmatprep.subr.mxu0 0.0
  %7276 = vmatpush1.msra.mxu0 0.0
  %7277 = vmatprep.subr.mxu0 0.0
  %7278 = vmatpush1.msra.mxu0 0.0
  %7279 = vmatprep.subr.mxu0 0.0
  %7280 = vmatpush1.msra.mxu0 0.0
  %7281 = vmatprep.subr.mxu0 0.0
  %7282 = vmatpush1.msra.mxu0 0.0
  %7283 = vmatprep.subr.mxu0 0.0
  %7284 = vmatpush1.msra.mxu0 0.0
  %7285 = vmatprep.subr.mxu0 0.0
  %7286 = vmatpush1.msra.mxu0 0.0
  %7287 = vmatprep.subr.mxu0 0.0
  %7288 = vmatpush1.msra.mxu0 0.0
  %7289 = vmatprep.subr.mxu0 0.0
  %7290 = vmatpush1.msra.mxu0 0.0
  %7291 = vmatprep.mubr.f32.mxu0 0.0
  %7292 = vmatmul.mubr.f32.gmra.mrb[0].mxu0 %v7225
  %v7293 = vpop.f32.mrb[0].mxu0
  %v7294 = vadd.f32 %v7219, %v7293
  %v7295 = vpop.f32.mrb[0].mxu0
  %7296 = vdwg.mxu0
  %v7297 = vadd.f32 %v7294, %v2707
  %v7298 = vxor.u32 %v7297, 2147483648
  %v7299 = vmul.f32 %v7298, 1.442695
  %v7300 = vpow.pop %v7299
  %v7301 = vadd.f32 %v7300, 1.0
  %v7302 = vrcp.pop %v7301
  %v7303 = vmul.f32 1.0, %v7302
  %v7304 = vtanh.pop %v7297
  %v7305 = vmul.f32 %v7303, %v6662
  %7307 = vrot.lane.b32.xlu0 %v7304, 64
  %v7308 = vpop.permute.xlu0 %7307
  %v7310 = vmul.f32 %v7303, %v7308
  %7312 = vrot.lane.b32.xlu0 %v7310, 32
  %v7313 = vpop.permute.xlu0 %7312
  %v7315 = vadd.f32 %v7305, %v7313
  %v7316 = vtanh.pop %v7315
  %7318 = vrot.lane.b32.xlu0 %v7316, 64
  %v7319 = vpop.permute.xlu0 %7318
  %v7321 = vmul.f32 %v7303, %v7319
  %7323 = vrot.lane.b32.xlu0 %v7321, 32
  %v7324 = vpop.permute.xlu0 %7323
  %v7325 = vsel %vm68, %v7324, 0
  %7327 = vmatprep.subr.mxu0 0.0
  %7328 = vmatpush1.msra.mxu0 %v2345
  %7329 = vmatprep.subr.mxu0 0.0
  %7330 = vmatpush1.msra.mxu0 %v2346
  %7331 = vmatprep.subr.mxu0 0.0
  %7332 = vmatpush1.msra.mxu0 %v2347
  %7333 = vmatprep.subr.mxu0 0.0
  %7334 = vmatpush1.msra.mxu0 %v2348
  %7335 = vmatprep.subr.mxu0 0.0
  %7336 = vmatpush1.msra.mxu0 0.0
  %7337 = vmatprep.subr.mxu0 0.0
  %7338 = vmatpush1.msra.mxu0 0.0
  %7339 = vmatprep.subr.mxu0 0.0
  %7340 = vmatpush1.msra.mxu0 0.0
  %7341 = vmatprep.subr.mxu0 0.0
  %7342 = vmatpush1.msra.mxu0 0.0
  %7343 = vmatprep.subr.mxu0 0.0
  %7344 = vmatpush1.msra.mxu0 0.0
  %7345 = vmatprep.subr.mxu0 0.0
  %7346 = vmatpush1.msra.mxu0 0.0
  %7347 = vmatprep.subr.mxu0 0.0
  %7348 = vmatpush1.msra.mxu0 0.0
  %7349 = vmatprep.subr.mxu0 0.0
  %7350 = vmatpush1.msra.mxu0 0.0
  %7351 = vmatprep.subr.mxu0 0.0
  %7352 = vmatpush1.msra.mxu0 0.0
  %7353 = vmatprep.subr.mxu0 0.0
  %7354 = vmatpush1.msra.mxu0 0.0
  %7355 = vmatprep.subr.mxu0 0.0
  %7356 = vmatpush1.msra.mxu0 0.0
  %7357 = vmatprep.subr.mxu0 0.0
  %7358 = vmatpush1.msra.mxu0 0.0
  %7359 = vmatprep.subr.mxu0 0.0
  %7360 = vmatpush1.msra.mxu0 0.0
  %7361 = vmatprep.subr.mxu0 0.0
  %7362 = vmatpush1.msra.mxu0 0.0
  %7363 = vmatprep.subr.mxu0 0.0
  %7364 = vmatpush1.msra.mxu0 0.0
  %7365 = vmatprep.subr.mxu0 0.0
  %7366 = vmatpush1.msra.mxu0 0.0
  %7367 = vmatprep.subr.mxu0 0.0
  %7368 = vmatpush1.msra.mxu0 0.0
  %7369 = vmatprep.subr.mxu0 0.0
  %7370 = vmatpush1.msra.mxu0 0.0
  %7371 = vmatprep.subr.mxu0 0.0
  %7372 = vmatpush1.msra.mxu0 0.0
  %7373 = vmatprep.subr.mxu0 0.0
  %7374 = vmatpush1.msra.mxu0 0.0
  %7375 = vmatprep.subr.mxu0 0.0
  %7376 = vmatpush1.msra.mxu0 0.0
  %7377 = vmatprep.subr.mxu0 0.0
  %7378 = vmatpush1.msra.mxu0 0.0
  %7379 = vmatprep.subr.mxu0 0.0
  %7380 = vmatpush1.msra.mxu0 0.0
  %7381 = vmatprep.subr.mxu0 0.0
  %7382 = vmatpush1.msra.mxu0 0.0
  %7383 = vmatprep.subr.mxu0 0.0
  %7384 = vmatpush1.msra.mxu0 0.0
  %7385 = vmatprep.subr.mxu0 0.0
  %7386 = vmatpush1.msra.mxu0 0.0
  %7387 = vmatprep.subr.mxu0 0.0
  %7388 = vmatpush1.msra.mxu0 0.0
  %7389 = vmatprep.subr.mxu0 0.0
  %7390 = vmatpush1.msra.mxu0 0.0
  %7391 = vmatprep.mubr.f32.mxu0 0.0
  %7392 = vmatmul.mubr.f32.gmra.mrb[0].mxu0 %v7325
  %v7393 = vpop.f32.mrb[0].mxu0
  %v7394 = vadd.f32 0.0, %v7393
  %v7395 = vpop.f32.mrb[0].mxu0
  %7396 = vdwg.mxu0
  %v7398 = vsel %vm68, %v7394, 0
  %7400 = vmatprep.subr.mxu0 0.0
  %7401 = vmatpush1.xpose.msra.mxu0 %v2816
  %7402 = vmatprep.subr.mxu0 0.0
  %7403 = vmatpush1.xpose.msra.mxu0 %v2819
  %7404 = vmatprep.subr.mxu0 0.0
  %7405 = vmatpush1.xpose.msra.mxu0 0.0
  %7406 = vmatprep.subr.mxu0 0.0
  %7407 = vmatpush1.xpose.msra.mxu0 0.0
  %7408 = vmatprep.subr.mxu0 0.0
  %7409 = vmatpush1.xpose.msra.mxu0 0.0
  %7410 = vmatprep.subr.mxu0 0.0
  %7411 = vmatpush1.xpose.msra.mxu0 0.0
  %7412 = vmatprep.subr.mxu0 0.0
  %7413 = vmatpush1.xpose.msra.mxu0 0.0
  %7414 = vmatprep.subr.mxu0 0.0
  %7415 = vmatpush1.xpose.msra.mxu0 0.0
  %7416 = vmatprep.subr.mxu0 0.0
  %7417 = vmatpush1.xpose.msra.mxu0 0.0
  %7418 = vmatprep.subr.mxu0 0.0
  %7419 = vmatpush1.xpose.msra.mxu0 0.0
  %7420 = vmatprep.subr.mxu0 0.0
  %7421 = vmatpush1.xpose.msra.mxu0 0.0
  %7422 = vmatprep.subr.mxu0 0.0
  %7423 = vmatpush1.xpose.msra.mxu0 0.0
  %7424 = vmatprep.subr.mxu0 0.0
  %7425 = vmatpush1.xpose.msra.mxu0 0.0
  %7426 = vmatprep.subr.mxu0 0.0
  %7427 = vmatpush1.xpose.msra.mxu0 0.0
  %7428 = vmatprep.subr.mxu0 0.0
  %7429 = vmatpush1.xpose.msra.mxu0 0.0
  %7430 = vmatprep.subr.mxu0 0.0
  %7431 = vmatpush1.xpose.msra.mxu0 0.0
  %7432 = vmatprep.subr.mxu0 0.0
  %7433 = vmatpush1.xpose.msra.mxu0 0.0
  %7434 = vmatprep.subr.mxu0 0.0
  %7435 = vmatpush1.xpose.msra.mxu0 0.0
  %7436 = vmatprep.subr.mxu0 0.0
  %7437 = vmatpush1.xpose.msra.mxu0 0.0
  %7438 = vmatprep.subr.mxu0 0.0
  %7439 = vmatpush1.xpose.msra.mxu0 0.0
  %7440 = vmatprep.subr.mxu0 0.0
  %7441 = vmatpush1.xpose.msra.mxu0 0.0
  %7442 = vmatprep.subr.mxu0 0.0
  %7443 = vmatpush1.xpose.msra.mxu0 0.0
  %7444 = vmatprep.subr.mxu0 0.0
  %7445 = vmatpush1.xpose.msra.mxu0 0.0
  %7446 = vmatprep.subr.mxu0 0.0
  %7447 = vmatpush1.xpose.msra.mxu0 0.0
  %7448 = vmatprep.subr.mxu0 0.0
  %7449 = vmatpush1.xpose.msra.mxu0 0.0
  %7450 = vmatprep.subr.mxu0 0.0
  %7451 = vmatpush1.xpose.msra.mxu0 0.0
  %7452 = vmatprep.subr.mxu0 0.0
  %7453 = vmatpush1.xpose.msra.mxu0 0.0
  %7454 = vmatprep.subr.mxu0 0.0
  %7455 = vmatpush1.xpose.msra.mxu0 0.0
  %7456 = vmatprep.subr.mxu0 0.0
  %7457 = vmatpush1.xpose.msra.mxu0 0.0
  %7458 = vmatprep.subr.mxu0 0.0
  %7459 = vmatpush1.xpose.msra.mxu0 0.0
  %7460 = vmatprep.subr.mxu0 0.0
  %7461 = vmatpush1.xpose.msra.mxu0 0.0
  %7462 = vmatprep.subr.mxu0 0.0
  %7463 = vmatpush1.xpose.msra.mxu0 0.0
  %7464 = vmatprep.mubr.f32.mxu0 0.0
  %7465 = vmatmul.mubr.f32.gmra.mrb[0].mxu0 %v7398
  %v7466 = vpop.f32.mrb[0].mxu0
  %v7467 = vadd.f32 %v2259, %v7466
  %v7468 = vpop.f32.mrb[0].mxu0
  %7469 = vdwg.mxu0
  %v7470 = vsel %vm2891, %v7467, -inf
  %7471 = vmax.xlane.f32.xlu0 %v7470
  %v7472 = vpop.xlane.xlu0 %7471
  %v7473 = vsub.f32 %v7467, %v7472
  %v7474 = vmul.f32 %v7473, 1.442695
  %v7475 = vpow.pop %v7474
  %v7476 = vsel %vm2891, %v7475, 0.0
  %7477 = vadd.xlane.f32.xlu0 %v7476
  %v7478 = vpop.xlane.xlu0 %7477
  %v7479 = vrcp.pop %v7478
  %v7480 = vmul.f32 %v7475, %v7479
  %v7482 = vsel %vm1097, %v7480, 0
  %7484 = vmatprep.subr.mxu0 0.0
  %7485 = vmatpush1.msra.mxu0 %v2255
  %7486 = vmatprep.subr.mxu0 0.0
  %7487 = vmatpush1.msra.mxu0 %v2258
  %7488 = vmatprep.subr.mxu0 0.0
  %7489 = vmatpush1.msra.mxu0 0.0
  %7490 = vmatprep.subr.mxu0 0.0
  %7491 = vmatpush1.msra.mxu0 0.0
  %7492 = vmatprep.subr.mxu0 0.0
  %7493 = vmatpush1.msra.mxu0 0.0
  %7494 = vmatprep.subr.mxu0 0.0
  %7495 = vmatpush1.msra.mxu0 0.0
  %7496 = vmatprep.subr.mxu0 0.0
  %7497 = vmatpush1.msra.mxu0 0.0
  %7498 = vmatprep.subr.mxu0 0.0
  %7499 = vmatpush1.msra.mxu0 0.0
  %7500 = vmatprep.subr.mxu0 0.0
  %7501 = vmatpush1.msra.mxu0 0.0
  %7502 = vmatprep.subr.mxu0 0.0
  %7503 = vmatpush1.msra.mxu0 0.0
  %7504 = vmatprep.subr.mxu0 0.0
  %7505 = vmatpush1.msra.mxu0 0.0
  %7506 = vmatprep.subr.mxu0 0.0
  %7507 = vmatpush1.msra.mxu0 0.0
  %7508 = vmatprep.subr.mxu0 0.0
  %7509 = vmatpush1.msra.mxu0 0.0
  %7510 = vmatprep.subr.mxu0 0.0
  %7511 = vmatpush1.msra.mxu0 0.0
  %7512 = vmatprep.subr.mxu0 0.0
  %7513 = vmatpush1.msra.mxu0 0.0
  %7514 = vmatprep.subr.mxu0 0.0
  %7515 = vmatpush1.msra.mxu0 0.0
  %7516 = vmatprep.subr.mxu0 0.0
  %7517 = vmatpush1.msra.mxu0 0.0
  %7518 = vmatprep.subr.mxu0 0.0
  %7519 = vmatpush1.msra.mxu0 0.0
  %7520 = vmatprep.subr.mxu0 0.0
  %7521 = vmatpush1.msra.mxu0 0.0
  %7522 = vmatprep.subr.mxu0 0.0
  %7523 = vmatpush1.msra.mxu0 0.0
  %7524 = vmatprep.subr.mxu0 0.0
  %7525 = vmatpush1.msra.mxu0 0.0
  %7526 = vmatprep.subr.mxu0 0.0
  %7527 = vmatpush1.msra.mxu0 0.0
  %7528 = vmatprep.subr.mxu0 0.0
  %7529 = vmatpush1.msra.mxu0 0.0
  %7530 = vmatprep.subr.mxu0 0.0
  %7531 = vmatpush1.msra.mxu0 0.0
  %7532 = vmatprep.subr.mxu0 0.0
  %7533 = vmatpush1.msra.mxu0 0.0
  %7534 = vmatprep.subr.mxu0 0.0
  %7535 = vmatpush1.msra.mxu0 0.0
  %7536 = vmatprep.subr.mxu0 0.0
  %7537 = vmatpush1.msra.mxu0 0.0
  %7538 = vmatprep.subr.mxu0 0.0
  %7539 = vmatpush1.msra.mxu0 0.0
  %7540 = vmatprep.subr.mxu0 0.0
  %7541 = vmatpush1.msra.mxu0 0.0
  %7542 = vmatprep.subr.mxu0 0.0
  %7543 = vmatpush1.msra.mxu0 0.0
  %7544 = vmatprep.subr.mxu0 0.0
  %7545 = vmatpush1.msra.mxu0 0.0
  %7546 = vmatprep.subr.mxu0 0.0
  %7547 = vmatpush1.msra.mxu0 0.0
  %7548 = vmatprep.mubr.f32.mxu0 0.0
  %7549 = vmatmul.mubr.f32.gmra.mrb[0].mxu0 %v7482
  %v7550 = vpop.f32.mrb[0].mxu0
  %v7551 = vadd.f32 0.0, %v7550
  %v7552 = vpop.f32.mrb[0].mxu0
  %7553 = vdwg.mxu0
  %7556 = vrot.lane.b32.xlu0 %v7551, 32
  %v7557 = vpop.permute.xlu0 %7556
  %v7559 = vsel %vm68, %v7324, %v7557
  %v7561 = vsel %vm2988, %v7559, 0
  %7563 = vmatprep.subr.mxu0 0.0
  %7564 = vmatpush1.msra.mxu0 %v2349
  %7565 = vmatprep.subr.mxu0 0.0
  %7566 = vmatpush1.msra.mxu0 %v2350
  %7567 = vmatprep.subr.mxu0 0.0
  %7568 = vmatpush1.msra.mxu0 %v2351
  %7569 = vmatprep.subr.mxu0 0.0
  %7570 = vmatpush1.msra.mxu0 %v2352
  %7571 = vmatprep.subr.mxu0 0.0
  %7572 = vmatpush1.msra.mxu0 %v2353
  %7573 = vmatprep.subr.mxu0 0.0
  %7574 = vmatpush1.msra.mxu0 %v2354
  %7575 = vmatprep.subr.mxu0 0.0
  %7576 = vmatpush1.msra.mxu0 %v2355
  %7577 = vmatprep.subr.mxu0 0.0
  %7578 = vmatpush1.msra.mxu0 %v2356
  %7579 = vmatprep.subr.mxu0 0.0
  %7580 = vmatpush1.msra.mxu0 0.0
  %7581 = vmatprep.subr.mxu0 0.0
  %7582 = vmatpush1.msra.mxu0 0.0
  %7583 = vmatprep.subr.mxu0 0.0
  %7584 = vmatpush1.msra.mxu0 0.0
  %7585 = vmatprep.subr.mxu0 0.0
  %7586 = vmatpush1.msra.mxu0 0.0
  %7587 = vmatprep.subr.mxu0 0.0
  %7588 = vmatpush1.msra.mxu0 0.0
  %7589 = vmatprep.subr.mxu0 0.0
  %7590 = vmatpush1.msra.mxu0 0.0
  %7591 = vmatprep.subr.mxu0 0.0
  %7592 = vmatpush1.msra.mxu0 0.0
  %7593 = vmatprep.subr.mxu0 0.0
  %7594 = vmatpush1.msra.mxu0 0.0
  %7595 = vmatprep.subr.mxu0 0.0
  %7596 = vmatpush1.msra.mxu0 0.0
  %7597 = vmatprep.subr.mxu0 0.0
  %7598 = vmatpush1.msra.mxu0 0.0
  %7599 = vmatprep.subr.mxu0 0.0
  %7600 = vmatpush1.msra.mxu0 0.0
  %7601 = vmatprep.subr.mxu0 0.0
  %7602 = vmatpush1.msra.mxu0 0.0
  %7603 = vmatprep.subr.mxu0 0.0
  %7604 = vmatpush1.msra.mxu0 0.0
  %7605 = vmatprep.subr.mxu0 0.0
  %7606 = vmatpush1.msra.mxu0 0.0
  %7607 = vmatprep.subr.mxu0 0.0
  %7608 = vmatpush1.msra.mxu0 0.0
  %7609 = vmatprep.subr.mxu0 0.0
  %7610 = vmatpush1.msra.mxu0 0.0
  %7611 = vmatprep.subr.mxu0 0.0
  %7612 = vmatpush1.msra.mxu0 0.0
  %7613 = vmatprep.subr.mxu0 0.0
  %7614 = vmatpush1.msra.mxu0 0.0
  %7615 = vmatprep.subr.mxu0 0.0
  %7616 = vmatpush1.msra.mxu0 0.0
  %7617 = vmatprep.subr.mxu0 0.0
  %7618 = vmatpush1.msra.mxu0 0.0
  %7619 = vmatprep.subr.mxu0 0.0
  %7620 = vmatpush1.msra.mxu0 0.0
  %7621 = vmatprep.subr.mxu0 0.0
  %7622 = vmatpush1.msra.mxu0 0.0
  %7623 = vmatprep.subr.mxu0 0.0
  %7624 = vmatpush1.msra.mxu0 0.0
  %7625 = vmatprep.subr.mxu0 0.0
  %7626 = vmatpush1.msra.mxu0 0.0
  %7627 = vmatprep.mubr.f32.mxu0 0.0
  %7628 = vmatmul.mubr.f32.gmra.mrb[0].mxu0 %v7561
  %v7629 = vpop.f32.mrb[0].mxu0
  %v7630 = vadd.f32 %v2986, %v7629
  %v7631 = vpop.f32.mrb[0].mxu0
  %7632 = vdwg.mxu0
  %v7633 = vtanh.pop %v7630
  %v7634 = vrot.slane %v3716, 6
  %v7636 = vrot.slane %v4369, 4
  %v7638 = vrot.slane %v5022, 2
  %v7640 = vrot.slane %v6327, 6
  %v7642 = vrot.slane %v6980, 4
  %v7645 = vrot.slane %v7633, 2
  %v7647 = vsel %vm1150, %v3062, %v7634
  %v7648 = vsel %vm1152, %v7647, %v7636
  %v7649 = vsel %vm1154, %v7648, %v7638
  %v7650 = vsel %vm1150, %v5673, %v7640
  %v7651 = vsel %vm1152, %v7650, %v7642
  %v7652 = vsel %vm1154, %v7651, %v7645
  %v7653 = vld [vmem:[%s14] sm:$0xff]
  %v7654 = vld [vmem:[%s14 + $0x8] sm:$0xff]
  %v7655 = vld [vmem:[%s14 + $0x10] sm:$0xff]
  %v7656 = vld [vmem:[%s14 + $0x18] sm:$0xff]
  %v7657 = vld [vmem:[%s15] sm:$0x1]
  %v7659 = vlaneseq
  %v7660 = vshrl.u32 %v7659, 7
  %v7661 = vsub.s32 0, %v7660
  %v7662 = vrot.slane %v7657, %v7661
  %v7665 = vsel %vm68, %v7649, 0
  %v7668 = vsel %vm68, %v7652, 0
  %7670 = vmatprep.subr.mxu0 0.0
  %7671 = vmatpush1.msra.mxu0 %v7653
  %7672 = vmatprep.subr.mxu0 0.0
  %7673 = vmatpush1.msra.mxu0 %v7654
  %7674 = vmatprep.subr.mxu0 0.0
  %7675 = vmatpush1.msra.mxu0 %v7655
  %7676 = vmatprep.subr.mxu0 0.0
  %7677 = vmatpush1.msra.mxu0 %v7656
  %7678 = vmatprep.subr.mxu0 0.0
  %7679 = vmatpush1.msra.mxu0 0.0
  %7680 = vmatprep.subr.mxu0 0.0
  %7681 = vmatpush1.msra.mxu0 0.0
  %7682 = vmatprep.subr.mxu0 0.0
  %7683 = vmatpush1.msra.mxu0 0.0
  %7684 = vmatprep.subr.mxu0 0.0
  %7685 = vmatpush1.msra.mxu0 0.0
  %7686 = vmatprep.subr.mxu0 0.0
  %7687 = vmatpush1.msra.mxu0 0.0
  %7688 = vmatprep.subr.mxu0 0.0
  %7689 = vmatpush1.msra.mxu0 0.0
  %7690 = vmatprep.subr.mxu0 0.0
  %7691 = vmatpush1.msra.mxu0 0.0
  %7692 = vmatprep.subr.mxu0 0.0
  %7693 = vmatpush1.msra.mxu0 0.0
  %7694 = vmatprep.subr.mxu0 0.0
  %7695 = vmatpush1.msra.mxu0 0.0
  %7696 = vmatprep.subr.mxu0 0.0
  %7697 = vmatpush1.msra.mxu0 0.0
  %7698 = vmatprep.subr.mxu0 0.0
  %7699 = vmatpush1.msra.mxu0 0.0
  %7700 = vmatprep.subr.mxu0 0.0
  %7701 = vmatpush1.msra.mxu0 0.0
  %7702 = vmatprep.subr.mxu0 0.0
  %7703 = vmatpush1.msra.mxu0 0.0
  %7704 = vmatprep.subr.mxu0 0.0
  %7705 = vmatpush1.msra.mxu0 0.0
  %7706 = vmatprep.subr.mxu0 0.0
  %7707 = vmatpush1.msra.mxu0 0.0
  %7708 = vmatprep.subr.mxu0 0.0
  %7709 = vmatpush1.msra.mxu0 0.0
  %7710 = vmatprep.subr.mxu0 0.0
  %7711 = vmatpush1.msra.mxu0 0.0
  %7712 = vmatprep.subr.mxu0 0.0
  %7713 = vmatpush1.msra.mxu0 0.0
  %7714 = vmatprep.subr.mxu0 0.0
  %7715 = vmatpush1.msra.mxu0 0.0
  %7716 = vmatprep.subr.mxu0 0.0
  %7717 = vmatpush1.msra.mxu0 0.0
  %7718 = vmatprep.subr.mxu0 0.0
  %7719 = vmatpush1.msra.mxu0 0.0
  %7720 = vmatprep.subr.mxu0 0.0
  %7721 = vmatpush1.msra.mxu0 0.0
  %7722 = vmatprep.subr.mxu0 0.0
  %7723 = vmatpush1.msra.mxu0 0.0
  %7724 = vmatprep.subr.mxu0 0.0
  %7725 = vmatpush1.msra.mxu0 0.0
  %7726 = vmatprep.subr.mxu0 0.0
  %7727 = vmatpush1.msra.mxu0 0.0
  %7728 = vmatprep.subr.mxu0 0.0
  %7729 = vmatpush1.msra.mxu0 0.0
  %7730 = vmatprep.subr.mxu0 0.0
  %7731 = vmatpush1.msra.mxu0 0.0
  %7732 = vmatprep.subr.mxu0 0.0
  %7733 = vmatpush1.msra.mxu0 0.0
  %7734 = vmatprep.mubr.f32.mxu0 0.0
  %7735 = vmatmul.mubr.f32.gmra.mrb[0].mxu0 %v7665
  %v7736 = vpop.f32.mrb[0].mxu0
  %v7737 = vadd.f32 %v7662, %v7736
  %v7738 = vpop.f32.mrb[0].mxu0
  %7739 = vmatprep.mubr.f32.mxu0 0.0
  %7740 = vmatmul.mubr.f32.gmra.mrb[0].mxu0 %v7668
  %v7741 = vpop.f32.mrb[0].mxu0
  %v7742 = vadd.f32 %v7662, %v7741
  %v7743 = vpop.f32.mrb[0].mxu0
  %7744 = vdwg.mxu0
  %vm7745 = vcmask 392192
  %v7746 = vsel %vm7745, %v7737, -inf
  %7747 = vmax.xlane.f32.xlu0 %v7746
  %v7748 = vpop.xlane.xlu0 %7747
  %v7749 = vsel %vm7745, %v7742, -inf
  %7750 = vmax.xlane.f32.xlu0 %v7749
  %v7751 = vpop.xlane.xlu0 %7750
  %v7752 = vsub.f32 %v7737, %v7748
  %v7753 = vsub.f32 %v7742, %v7751
  %v7754 = vmul.f32 %v7752, 1.442695
  %v7755 = vpow.pop %v7754
  %v7756 = vmul.f32 %v7753, 1.442695
  %v7757 = vpow.pop %v7756
  %v7758 = vsel %vm7745, %v7755, 0.0
  %7759 = vadd.xlane.f32.xlu0 %v7758
  %v7760 = vpop.xlane.xlu0 %7759
  %v7761 = vsel %vm7745, %v7757, 0.0
  %7762 = vadd.xlane.f32.xlu0 %v7761
  %v7763 = vpop.xlane.xlu0 %7762
  %v7764 = vlog2.pop %v7760
  %v7765 = vmul.f32 %v7764, 0.6931472
  %v7766 = vlog2.pop %v7763
  %v7767 = vmul.f32 %v7766, 0.6931472
  %v7768 = vsub.f32 %v7752, %v7765
  %v7769 = vsub.f32 %v7753, %v7767
  %7770 = vst.msk [vmem:[%s16] sm:$0xff] %vm7745, %v7768
  %7771 = vst.msk [vmem:[%s16 + $0x8] sm:$0xff] %vm7745, %v7769
  // Predicated region
  $region66: #{seq2seq_forward.1} parent=0 // pred_check
    _
  $region67: #{seq2seq_forward.1} parent=0 // pred_check_branch
    %7773 = sbr.rel (0) target = $region69
  $region68: #{seq2seq_forward.1} parent=0 // pred_region
    _
  $region69: #{seq2seq_forward.1} parent=0 // pred_fallthru
    _
  // Predicated region
  $region70: #{seq2seq_forward.1} parent=0 // pred_check
    _
  $region71: #{seq2seq_forward.1} parent=0 // pred_check_branch
    %7775 = sbr.rel (0) target = $region73
  $region72: #{seq2seq_forward.1} parent=0 // pred_region
    _
  $region73: #{seq2seq_forward.1} parent=0 // pred_fallthru
    _

</llo_original>
